<compile_context>
chip_gen: v5e
topology: v5e:2x2
jax: 0.10.0
libtpu: 0.0.40
codegen_flags: <defaults>
</compile_context>

<pallas_src>
import functools

import jax
import jax.numpy as jnp
from jax import lax
from jax.experimental import pallas as pl
from jax.experimental.pallas import tpu as pltpu


# ---------------------------------------------------------------------------
# In-kernel helpers (traced inside Pallas kernels)
# ---------------------------------------------------------------------------

def _layernorm(x, g, b, eps=1e-5):
    mu = jnp.mean(x, axis=-1, keepdims=True)
    var = jnp.mean(jnp.square(x - mu), axis=-1, keepdims=True)
    return (x - mu) * lax.rsqrt(var + eps) * g + b


def _softmax_rows(s):
    s = s - jnp.max(s, axis=-1, keepdims=True)
    p = jnp.exp(s)
    return p * pl.reciprocal(jnp.sum(p, axis=-1, keepdims=True), approx=True)


def _cross_attend_one(cls_tok, ctx, pin_w, pin_b, ln_g, ln_b, wq, wkv, wo, bo,
                      pout_w, pout_b, *, heads, dim_head):
    """ProjectInOut(PreNorm(Attention(kv_include_self=True))) + residual.

    cls_tok: (1, dim_in), ctx: (M, dim_ctx).  wq: (H, dim_ctx, Dh),
    wkv: (2*H, dim_ctx, Dh) head-major [K heads | V heads], wo: (H, Dh, dim_ctx).
    kv_include_self handled as two softmax segments (self / context) — no concat.
    """
    f32 = jnp.float32
    x = jnp.dot(cls_tok, pin_w, preferred_element_type=f32) + pin_b  # (1, dim_ctx)
    xn = _layernorm(x, ln_g, ln_b)

    scale = float(dim_head) ** -0.5
    acc = jnp.zeros_like(x)                                          # (1, dim_ctx)
    for h in range(heads):
        q = jnp.dot(xn, wq[h], preferred_element_type=f32) * scale   # (1, Dh)
        k_self = jnp.dot(xn, wkv[h], preferred_element_type=f32)     # (1, Dh)
        v_self = jnp.dot(xn, wkv[heads + h], preferred_element_type=f32)
        k_ctx = jnp.dot(ctx, wkv[h], preferred_element_type=f32)     # (M, Dh)
        v_ctx = jnp.dot(ctx, wkv[heads + h], preferred_element_type=f32)

        s_self = jnp.sum(q * k_self, axis=-1, keepdims=True)         # (1, 1)
        s_ctx = lax.dot_general(q, k_ctx, (((1,), (1,)), ((), ())),
                                preferred_element_type=f32)          # (1, M)
        m = jnp.maximum(s_self, jnp.max(s_ctx, axis=-1, keepdims=True))
        p_self = jnp.exp(s_self - m)
        p_ctx = jnp.exp(s_ctx - m)
        inv = pl.reciprocal(p_self + jnp.sum(p_ctx, axis=-1, keepdims=True),
                            approx=True)
        o_h = (p_self * v_self
               + jnp.dot(p_ctx, v_ctx, preferred_element_type=f32)) * inv
        acc = acc + jnp.dot(o_h, wo[h], preferred_element_type=f32)  # (1, dim_ctx)

    attn = acc + bo
    return cls_tok + jnp.dot(attn, pout_w, preferred_element_type=f32) + pout_b


# ---------------------------------------------------------------------------
# Fused Pallas kernels
# ---------------------------------------------------------------------------

def _seq_embed_kernel(win_ref, conv_w_ref, conv_b_ref, cls_ref, pos_ref, o_ref,
                      *, token_size):
    """SeqEmbedder fused: conv(im2col matmul)+ReLU -> MaxPool1d -> cls -> +pos."""
    f32 = jnp.float32
    win = win_ref[0].astype(f32)                                   # (L, k*E)
    conv = jnp.dot(win, conv_w_ref[...].astype(f32),
                   preferred_element_type=f32) + conv_b_ref[...].astype(f32)
    conv = jnp.maximum(conv, 0.0)                                  # (L, dim)
    L = win.shape[0]
    n = L // token_size
    pieces = [cls_ref[...].astype(f32)]                            # (1, dim)
    for i in range(n):                                             # static slices
        chunk = conv[i * token_size:(i + 1) * token_size, :]
        pieces.append(jnp.max(chunk, axis=0, keepdims=True))
    x = jnp.concatenate(pieces, axis=0)                            # (n+1, dim)
    o_ref[0] = (x + pos_ref[0].astype(f32)).astype(o_ref.dtype)


def _encoder_layer_kernel(x_ref, ln1_g_ref, ln1_b_ref, wqkv_ref, wo_ref, bo_ref,
                          ln2_g_ref, ln2_b_ref, w1_ref, b1_ref, w2_ref, b2_ref,
                          o_ref, *, heads, dim_head):
    """Fused pre-norm transformer layer for one batch element.

    x: (1, N, D).  wqkv: (3*H, D, Dh) head-major [Q heads | K heads | V heads].
    wo: (H, Dh, D).  Output = x + Attn(LN(x)) then + FFN(LN(.)).
    """
    f32 = jnp.float32
    x = x_ref[0].astype(f32)                                       # (N, D)

    # ---- pre-norm multi-head self-attention --------------------------------
    xn = _layernorm(x, ln1_g_ref[...].astype(f32), ln1_b_ref[...].astype(f32))
    scale = float(dim_head) ** -0.5
    acc = jnp.zeros_like(x)
    for h in range(heads):
        q = jnp.dot(xn, wqkv_ref[h].astype(f32),
                    preferred_element_type=f32) * scale            # (N, Dh)
        k = jnp.dot(xn, wqkv_ref[heads + h].astype(f32),
                    preferred_element_type=f32)                    # (N, Dh)
        v = jnp.dot(xn, wqkv_ref[2 * heads + h].astype(f32),
                    preferred_element_type=f32)                    # (N, Dh)
        s = lax.dot_general(q, k, (((1,), (1,)), ((), ())),
                            preferred_element_type=f32)            # (N, N)
        p = _softmax_rows(s)
        o_h = jnp.dot(p, v, preferred_element_type=f32)            # (N, Dh)
        acc = acc + jnp.dot(o_h, wo_ref[h].astype(f32),
                            preferred_element_type=f32)            # (N, D)
    x = x + acc + bo_ref[...].astype(f32)                          # residual folded

    # ---- pre-norm feed-forward ----------------------------------------------
    xn2 = _layernorm(x, ln2_g_ref[...].astype(f32), ln2_b_ref[...].astype(f32))
    hdn = jnp.dot(xn2, w1_ref[...].astype(f32),
                  preferred_element_type=f32) + b1_ref[...].astype(f32)
    hdn = jax.nn.gelu(hdn, approximate=True)   # TODO(synk): exact erf GELU
    x = x + jnp.dot(hdn, w2_ref[...].astype(f32),
                    preferred_element_type=f32) + b2_ref[...].astype(f32)

    o_ref[0] = x.astype(o_ref.dtype)


def _dual_cross_kernel(sm_cls_ref, lg_patch_ref, lg_cls_ref, sm_patch_ref,
                       *refs, heads, dim_head):
    """Both CrossTransformer blocks of one layer fused (they are independent).

    refs = 10 params (sm_attend_lg) + 10 params (lg_attend_sm) + 2 output refs.
    """
    f32 = jnp.float32
    p1 = [r[...].astype(f32) for r in refs[:10]]
    p2 = [r[...].astype(f32) for r in refs[10:20]]
    sm_out_ref, lg_out_ref = refs[20], refs[21]

    sm_cls = sm_cls_ref[0].astype(f32)                             # (1, sm_dim)
    lg_patch = lg_patch_ref[0].astype(f32)                         # (M_lg, lg_dim)
    lg_cls = lg_cls_ref[0].astype(f32)                             # (1, lg_dim)
    sm_patch = sm_patch_ref[0].astype(f32)                         # (M_sm, sm_dim)

    sm_new = _cross_attend_one(sm_cls, lg_patch, *p1,
                               heads=heads, dim_head=dim_head)
    lg_new = _cross_attend_one(lg_cls, sm_patch, *p2,
                               heads=heads, dim_head=dim_head)
    sm_out_ref[0] = sm_new.astype(sm_out_ref.dtype)
    lg_out_ref[0] = lg_new.astype(lg_out_ref.dtype)


def _dual_head_kernel(sm_ref, lg_ref, sg_ref, sb_ref, sw_ref, sbias_ref,
                      lgg_ref, lgb_ref, lw_ref, lbias_ref, o_ref):
    """sm_mlp_head(sm_cls) + lg_mlp_head(lg_cls) fused (LN + Linear, summed)."""
    f32 = jnp.float32
    sm = _layernorm(sm_ref[...].astype(f32), sg_ref[...].astype(f32),
                    sb_ref[...].astype(f32))
    lg = _layernorm(lg_ref[...].astype(f32), lgg_ref[...].astype(f32),
                    lgb_ref[...].astype(f32))
    y = (jnp.dot(sm, sw_ref[...].astype(f32), preferred_element_type=f32)
         + sbias_ref[...].astype(f32)
         + jnp.dot(lg, lw_ref[...].astype(f32), preferred_element_type=f32)
         + lbias_ref[...].astype(f32))
    o_ref[...] = y.astype(o_ref.dtype)


# ---------------------------------------------------------------------------
# Pallas wrappers
# ---------------------------------------------------------------------------

def _vmem_spec():
    return pl.BlockSpec(memory_space=pltpu.MemorySpace.VMEM)


def _full_spec(shape):
    zeros = (0,) * len(shape)
    return pl.BlockSpec(shape, lambda b: zeros)


_CROSS_KEYS = ("pin_w", "pin_b", "ln_g", "ln_b", "wq", "wkv", "wo", "bo",
               "pout_w", "pout_b")


def seq_embedder_fwd(p, x_emb, token_size, kernel_size):
    """SeqEmbedder: fused Conv1d(im2col) + ReLU + MaxPool1d + cls + pos."""
    B, L, E = x_emb.shape
    pad = (kernel_size - 1) // 2
    xp = jnp.pad(x_emb, ((0, 0), (pad, pad), (0, 0)))
    # im2col window extraction (pure data movement, plain JAX).
    windows = jnp.concatenate([xp[:, j:j + L, :] for j in range(kernel_size)],
                              axis=-1)                              # (B, L, k*E)
    dim = p["conv_w"].shape[1]
    n = L // token_size
    kernel = functools.partial(_seq_embed_kernel, token_size=token_size)
    return pl.pallas_call(
        kernel,
        grid=(B,),
        in_specs=[
            pl.BlockSpec((1, L, kernel_size * E), lambda b: (b, 0, 0)),
            _full_spec(p["conv_w"].shape), _full_spec(p["conv_b"].shape),
            _full_spec(p["cls_token"].shape), _full_spec(p["pos_embedding"].shape),
        ],
        out_specs=pl.BlockSpec((1, n + 1, dim), lambda b: (b, 0, 0)),
        out_shape=jax.ShapeDtypeStruct((B, n + 1, dim), x_emb.dtype),
        compiler_params=pltpu.CompilerParams(dimension_semantics=("parallel",)),
    )(windows, p["conv_w"], p["conv_b"], p["cls_token"], p["pos_embedding"])


def encoder_layer(x, p, heads, dim_head):
    """One fused pre-norm transformer layer (attention + FFN + residuals)."""
    B, N, D = x.shape
    kernel = functools.partial(_encoder_layer_kernel, heads=heads, dim_head=dim_head)
    return pl.pallas_call(
        kernel,
        grid=(B,),
        in_specs=[
            pl.BlockSpec((1, N, D), lambda b: (b, 0, 0)),
            _full_spec(p["ln1_g"].shape), _full_spec(p["ln1_b"].shape),
            _full_spec(p["wqkv"].shape), _full_spec(p["wo"].shape),
            _full_spec(p["bo"].shape),
            _full_spec(p["ln2_g"].shape), _full_spec(p["ln2_b"].shape),
            _full_spec(p["w1"].shape), _full_spec(p["b1"].shape),
            _full_spec(p["w2"].shape), _full_spec(p["b2"].shape),
        ],
        out_specs=pl.BlockSpec((1, N, D), lambda b: (b, 0, 0)),
        out_shape=jax.ShapeDtypeStruct((B, N, D), x.dtype),
        compiler_params=pltpu.CompilerParams(dimension_semantics=("parallel",)),
    )(x, p["ln1_g"], p["ln1_b"], p["wqkv"], p["wo"], p["bo"],
      p["ln2_g"], p["ln2_b"], p["w1"], p["b1"], p["w2"], p["b2"])


def dual_cross_attend(sm_cls, lg_patch, lg_cls, sm_patch, p_sm2lg, p_lg2sm,
                      heads, dim_head):
    """Both cross-attention directions of one CrossTransformer layer, one kernel."""
    B, _, sm_dim = sm_cls.shape
    _, M_lg, lg_dim = lg_patch.shape
    _, M_sm, _ = sm_patch.shape
    p1 = [p_sm2lg[k] for k in _CROSS_KEYS]
    p2 = [p_lg2sm[k] for k in _CROSS_KEYS]
    kernel = functools.partial(_dual_cross_kernel, heads=heads, dim_head=dim_head)
    in_specs = ([
        pl.BlockSpec((1, 1, sm_dim), lambda b: (b, 0, 0)),
        pl.BlockSpec((1, M_lg, lg_dim), lambda b: (b, 0, 0)),
        pl.BlockSpec((1, 1, lg_dim), lambda b: (b, 0, 0)),
        pl.BlockSpec((1, M_sm, sm_dim), lambda b: (b, 0, 0)),
    ] + [_full_spec(a.shape) for a in p1] + [_full_spec(a.shape) for a in p2])
    out_specs = [
        pl.BlockSpec((1, 1, sm_dim), lambda b: (b, 0, 0)),
        pl.BlockSpec((1, 1, lg_dim), lambda b: (b, 0, 0)),
    ]
    out_shape = (jax.ShapeDtypeStruct((B, 1, sm_dim), sm_cls.dtype),
                 jax.ShapeDtypeStruct((B, 1, lg_dim), lg_cls.dtype))
    return pl.pallas_call(
        kernel, grid=(B,), in_specs=in_specs, out_specs=out_specs,
        out_shape=out_shape,
        compiler_params=pltpu.CompilerParams(dimension_semantics=("parallel",)),
    )(sm_cls, lg_patch, lg_cls, sm_patch, *p1, *p2)


def pallas_dual_head(sm_cls, lg_cls, sm_head, lg_head):
    """Fused LayerNorm+Linear for both heads, summed logits."""
    B = sm_cls.shape[0]
    C = sm_head["w"].shape[1]
    return pl.pallas_call(
        _dual_head_kernel,
        out_shape=jax.ShapeDtypeStruct((B, C), sm_cls.dtype),
        in_specs=[_vmem_spec()] * 10,
        out_specs=_vmem_spec(),
    )(sm_cls, lg_cls,
      sm_head["ln_g"], sm_head["ln_b"], sm_head["w"], sm_head["b"],
      lg_head["ln_g"], lg_head["ln_b"], lg_head["w"], lg_head["b"])


# ---------------------------------------------------------------------------
# Module forward passes
# ---------------------------------------------------------------------------

def performer_fwd(p, x, heads, dim_head):
    # TODO(synk): Performer (FAVOR+) source not provided; exact softmax
    # pre-norm transformer layers of the same interface are used instead.
    for layer in p["layers"]:
        x = encoder_layer(x, layer, heads, dim_head)
    return x


def cross_transformer_fwd(p, sm_tokens, lg_tokens, heads, dim_head):
    sm_cls, sm_patch = sm_tokens[:, :1], sm_tokens[:, 1:]
    lg_cls, lg_patch = lg_tokens[:, :1], lg_tokens[:, 1:]
    for layer in p["layers"]:
        # Both directions read only the (fixed) patch tokens -> fuse in one kernel;
        # residual (+ cls) is folded inside.
        sm_cls, lg_cls = dual_cross_attend(sm_cls, lg_patch, lg_cls, sm_patch,
                                           layer["sm_attend_lg"],
                                           layer["lg_attend_sm"],
                                           heads, dim_head)
    sm_tokens = jnp.concatenate([sm_cls, sm_patch], axis=1)
    lg_tokens = jnp.concatenate([lg_cls, lg_patch], axis=1)
    return sm_tokens, lg_tokens


def multi_scale_encoder_fwd(params, sm_tokens, lg_tokens, cfg):
    for layer in params["layers"]:
        sm_tokens = performer_fwd(layer["sm_enc"], sm_tokens,
                                  cfg["sm_enc_heads"], cfg["sm_enc_dim_head"])
        lg_tokens = performer_fwd(layer["lg_enc"], lg_tokens,
                                  cfg["lg_enc_heads"], cfg["lg_enc_dim_head"])
        sm_tokens, lg_tokens = cross_transformer_fwd(
            layer["cross"], sm_tokens, lg_tokens,
            cfg["cross_attn_heads"], cfg["cross_attn_dim_head"])
    return sm_tokens, lg_tokens


def xmp_forward(params, series, cfg):
    # byte embedding lookup (gather) stays in plain JAX
    emb = jnp.take(params["embedding"], series, axis=0)          # (B, L, E)
    sm_tokens = seq_embedder_fwd(params["sm_embed"], emb,
                                 cfg["sm_token_size"], cfg["sm_cnn_kernel_size"])
    lg_tokens = seq_embedder_fwd(params["lg_embed"], emb,
                                 cfg["lg_token_size"], cfg["lg_cnn_kernel_size"])
    sm_tokens, lg_tokens = multi_scale_encoder_fwd(params["encoder"],
                                                   sm_tokens, lg_tokens, cfg)
    sm_cls = sm_tokens[:, 0]                                     # (B, sm_dim)
    lg_cls = lg_tokens[:, 0]                                     # (B, lg_dim)
    return pallas_dual_head(sm_cls, lg_cls, params["sm_head"], params["lg_head"])


# ---------------------------------------------------------------------------
# Deterministic parameter initialization (shapes follow the PyTorch __init__)
# ---------------------------------------------------------------------------

def _dense(key, din, dout, scale=0.02):
    return jax.random.normal(key, (din, dout), jnp.float32) * scale


def init_seq_embedder(key, emb_dim, dim, kernel_size, num_patches):
    k1, k2, k3 = jax.random.split(key, 3)
    return dict(conv_w=_dense(k1, kernel_size * emb_dim, dim),
                conv_b=jnp.zeros((1, dim), jnp.float32),
                pos_embedding=jax.random.normal(k2, (1, num_patches + 1, dim),
                                                jnp.float32) * 0.02,
                cls_token=jax.random.normal(k3, (1, dim), jnp.float32) * 0.02)


def init_encoder_layer(key, dim, heads, dim_head, mlp_mult=4):
    k1, k2, k3, k4 = jax.random.split(key, 4)
    hidden = mlp_mult * dim
    return dict(
        ln1_g=jnp.ones((1, dim), jnp.float32), ln1_b=jnp.zeros((1, dim), jnp.float32),
        # head-major [Q heads | K heads | V heads], bias-free (as in CrossViT to_q/to_kv)
        wqkv=jax.random.normal(k1, (3 * heads, dim, dim_head), jnp.float32) * 0.02,
        wo=jax.random.normal(k2, (heads, dim_head, dim), jnp.float32) * 0.02,
        bo=jnp.zeros((1, dim), jnp.float32),
        ln2_g=jnp.ones((1, dim), jnp.float32), ln2_b=jnp.zeros((1, dim), jnp.float32),
        w1=_dense(k3, dim, hidden), b1=jnp.zeros((1, hidden), jnp.float32),
        w2=_dense(k4, hidden, dim), b2=jnp.zeros((1, dim), jnp.float32))


def init_cross_block(key, dim_in, dim_out, heads, dim_head):
    k1, k2, k3, k4, k5 = jax.random.split(key, 5)
    return dict(
        pin_w=_dense(k1, dim_in, dim_out), pin_b=jnp.zeros((1, dim_out), jnp.float32),
        ln_g=jnp.ones((1, dim_out), jnp.float32), ln_b=jnp.zeros((1, dim_out), jnp.float32),
        wq=jax.random.normal(k2, (heads, dim_out, dim_head), jnp.float32) * 0.02,
        wkv=jax.random.normal(k3, (2 * heads, dim_out, dim_head), jnp.float32) * 0.02,
        wo=jax.random.normal(k4, (heads, dim_head, dim_out), jnp.float32) * 0.02,
        bo=jnp.zeros((1, dim_out), jnp.float32),
        pout_w=_dense(k5, dim_out, dim_in), pout_b=jnp.zeros((1, dim_in), jnp.float32))


def init_performer(key, dim, depth, heads, dim_head):
    layers = []
    for _ in range(depth):
        k, key = jax.random.split(key)
        layers.append(init_encoder_layer(k, dim, heads, dim_head))
    return dict(layers=layers)


def init_cross_transformer(key, sm_dim, lg_dim, depth, heads, dim_head):
    layers = []
    for _ in range(depth):
        k1, k2, key = jax.random.split(key, 3)
        layers.append(dict(
            sm_attend_lg=init_cross_block(k1, sm_dim, lg_dim, heads, dim_head),
            lg_attend_sm=init_cross_block(k2, lg_dim, sm_dim, heads, dim_head)))
    return dict(layers=layers)


def init_multi_scale_encoder(key, cfg):
    layers = []
    for _ in range(cfg["depth"]):
        k1, k2, k3, key = jax.random.split(key, 4)
        layers.append(dict(
            sm_enc=init_performer(k1, cfg["sm_dim"], cfg["sm_enc_depth"],
                                  cfg["sm_enc_heads"], cfg["sm_enc_dim_head"]),
            lg_enc=init_performer(k2, cfg["lg_dim"], cfg["lg_enc_depth"],
                                  cfg["lg_enc_heads"], cfg["lg_enc_dim_head"]),
            cross=init_cross_transformer(k3, cfg["sm_dim"], cfg["lg_dim"],
                                         cfg["cross_attn_depth"],
                                         cfg["cross_attn_heads"],
                                         cfg["cross_attn_dim_head"])))
    return dict(layers=layers)


def init_head(key, dim, num_classes):
    return dict(ln_g=jnp.ones((1, dim), jnp.float32),
                ln_b=jnp.zeros((1, dim), jnp.float32),
                w=_dense(key, dim, num_classes),
                b=jnp.zeros((1, num_classes), jnp.float32))


def init_xmp(key, cfg):
    k_emb, k_sm, k_lg, k_enc, k_h1, k_h2 = jax.random.split(key, 6)
    return dict(
        embedding=jax.random.normal(k_emb, (256, cfg["emb_dim"]), jnp.float32),
        sm_embed=init_seq_embedder(k_sm, cfg["emb_dim"], cfg["sm_dim"],
                                   cfg["sm_cnn_kernel_size"],
                                   cfg["seq_len"] // cfg["sm_token_size"]),
        lg_embed=init_seq_embedder(k_lg, cfg["emb_dim"], cfg["lg_dim"],
                                   cfg["lg_cnn_kernel_size"],
                                   cfg["seq_len"] // cfg["lg_token_size"]),
        encoder=init_multi_scale_encoder(k_enc, cfg),
        sm_head=init_head(k_h1, cfg["sm_dim"], cfg["num_classes"]),
        lg_head=init_head(k_h2, cfg["lg_dim"], cfg["num_classes"]))


# ---------------------------------------------------------------------------
# Main
# ---------------------------------------------------------------------------

if __name__ == "__main__":
    cfg = dict(
        seq_len=64, emb_dim=8, num_classes=10,
        sm_cnn_kernel_size=3, lg_cnn_kernel_size=5, stride=1,
        sm_dim=32, lg_dim=64,
        sm_token_size=8, lg_token_size=16,
        sm_enc_depth=1, sm_enc_heads=2, sm_enc_dim_head=16,
        lg_enc_depth=1, lg_enc_heads=2, lg_enc_dim_head=16,
        cross_attn_depth=1, cross_attn_heads=2, cross_attn_dim_head=16,
        depth=1,
    )

    key = jax.random.PRNGKey(0)
    kp, kd = jax.random.split(key)
    params = init_xmp(kp, cfg)

    B = 2
    series = jax.random.randint(kd, (B, cfg["seq_len"]), 0, 256, dtype=jnp.int32)

    fwd = jax.jit(functools.partial(xmp_forward, cfg=cfg))
    logits = fwd(params, series)
    logits = jax.block_until_ready(logits)

    assert logits.shape == (B, cfg["num_classes"]), logits.shape
    assert bool(jnp.all(jnp.isfinite(logits)))
    print("KERNEL_OK")
</pallas_src>

<mosaic_0001>
module attributes {stable_mosaic.version = 11 : i64} {
  func.func @_seq_embed_kernel(%arg0: i32, %arg1: memref<1x64x24xf32, #tpu.memory_space<vmem>>, %arg2: memref<24x32xf32, #tpu.memory_space<vmem>>, %arg3: memref<1x32xf32, #tpu.memory_space<vmem>>, %arg4: memref<1x32xf32, #tpu.memory_space<vmem>>, %arg5: memref<1x9x32xf32, #tpu.memory_space<vmem>>, %arg6: memref<1x9x32xf32, #tpu.memory_space<vmem>>) attributes {dimension_semantics = [#tpu.dimension_semantics<parallel>], iteration_bounds = array<i64: 2>, scalar_prefetch = 0 : i64, scratch_operands = 0 : i64, tpu.core_type = #tpu.core_type<tc>, window_params = [{transform_indices = @transform_0, window_bounds = array<i64: 1, 64, 24>}, {pipeline_mode = #tpu.pipeline_mode<synchronous>, transform_indices = @transform_1, window_bounds = array<i64: 24, 32>}, {pipeline_mode = #tpu.pipeline_mode<synchronous>, transform_indices = @transform_2, window_bounds = array<i64: 1, 32>}, {pipeline_mode = #tpu.pipeline_mode<synchronous>, transform_indices = @transform_3, window_bounds = array<i64: 1, 32>}, {pipeline_mode = #tpu.pipeline_mode<synchronous>, transform_indices = @transform_4, window_bounds = array<i64: 1, 9, 32>}, {transform_indices = @transform_5, window_bounds = array<i64: 1, 9, 32>}]} {
    %c0 = arith.constant 0 : index
    %c0_0 = arith.constant 0 : index
    %c0_1 = arith.constant 0 : index
    %0 = vector.load %arg1[%c0, %c0_0, %c0_1] : memref<1x64x24xf32, #tpu.memory_space<vmem>>, vector<1x64x24xf32>
    %1 = vector.shape_cast %0 : vector<1x64x24xf32> to vector<64x24xf32>
    %c0_2 = arith.constant 0 : index
    %c0_3 = arith.constant 0 : index
    %2 = vector.load %arg2[%c0_2, %c0_3] : memref<24x32xf32, #tpu.memory_space<vmem>>, vector<24x32xf32>
    %cst = arith.constant dense<0.000000e+00> : vector<64x32xf32>
    %3 = tpu.matmul %1, %2, %cst {dimension_numbers = #tpu.dot_dimension_numbers<[1], [0], [0], [1], [0, 0, 1, 1], [], []>} : vector<64x24xf32>, vector<24x32xf32>, vector<64x32xf32> -> vector<64x32xf32>
    %c0_4 = arith.constant 0 : index
    %c0_5 = arith.constant 0 : index
    %4 = vector.load %arg3[%c0_4, %c0_5] : memref<1x32xf32, #tpu.memory_space<vmem>>, vector<1x32xf32>
    %5 = vector.broadcast %4 : vector<1x32xf32> to vector<64x32xf32>
    %6 = arith.addf %3, %5 : vector<64x32xf32>
    %cst_6 = arith.constant 0.000000e+00 : f32
    %7 = vector.broadcast %cst_6 : f32 to vector<64x32xf32>
    %8 = arith.maximumf %6, %7 : vector<64x32xf32>
    %c0_7 = arith.constant 0 : index
    %c0_8 = arith.constant 0 : index
    %9 = vector.load %arg4[%c0_7, %c0_8] : memref<1x32xf32, #tpu.memory_space<vmem>>, vector<1x32xf32>
    %10 = vector.extract_strided_slice %8 {offsets = [0, 0], sizes = [8, 32], strides = [1, 1]} : vector<64x32xf32> to vector<8x32xf32>
    %cst_9 = arith.constant dense<0xFF800000> : vector<32xf32>
    %11 = vector.multi_reduction <maximumf>, %10, %cst_9 [0] : vector<8x32xf32> to vector<32xf32>
    %12 = vector.shape_cast %11 : vector<32xf32> to vector<1x32xf32>
    %13 = vector.extract_strided_slice %8 {offsets = [8, 0], sizes = [8, 32], strides = [1, 1]} : vector<64x32xf32> to vector<8x32xf32>
    %cst_10 = arith.constant dense<0xFF800000> : vector<32xf32>
    %14 = vector.multi_reduction <maximumf>, %13, %cst_10 [0] : vector<8x32xf32> to vector<32xf32>
    %15 = vector.shape_cast %14 : vector<32xf32> to vector<1x32xf32>
    %16 = vector.extract_strided_slice %8 {offsets = [16, 0], sizes = [8, 32], strides = [1, 1]} : vector<64x32xf32> to vector<8x32xf32>
    %cst_11 = arith.constant dense<0xFF800000> : vector<32xf32>
    %17 = vector.multi_reduction <maximumf>, %16, %cst_11 [0] : vector<8x32xf32> to vector<32xf32>
    %18 = vector.shape_cast %17 : vector<32xf32> to vector<1x32xf32>
    %19 = vector.extract_strided_slice %8 {offsets = [24, 0], sizes = [8, 32], strides = [1, 1]} : vector<64x32xf32> to vector<8x32xf32>
    %cst_12 = arith.constant dense<0xFF800000> : vector<32xf32>
    %20 = vector.multi_reduction <maximumf>, %19, %cst_12 [0] : vector<8x32xf32> to vector<32xf32>
    %21 = vector.shape_cast %20 : vector<32xf32> to vector<1x32xf32>
    %22 = vector.extract_strided_slice %8 {offsets = [32, 0], sizes = [8, 32], strides = [1, 1]} : vector<64x32xf32> to vector<8x32xf32>
    %cst_13 = arith.constant dense<0xFF800000> : vector<32xf32>
    %23 = vector.multi_reduction <maximumf>, %22, %cst_13 [0] : vector<8x32xf32> to vector<32xf32>
    %24 = vector.shape_cast %23 : vector<32xf32> to vector<1x32xf32>
    %25 = vector.extract_strided_slice %8 {offsets = [40, 0], sizes = [8, 32], strides = [1, 1]} : vector<64x32xf32> to vector<8x32xf32>
    %cst_14 = arith.constant dense<0xFF800000> : vector<32xf32>
    %26 = vector.multi_reduction <maximumf>, %25, %cst_14 [0] : vector<8x32xf32> to vector<32xf32>
    %27 = vector.shape_cast %26 : vector<32xf32> to vector<1x32xf32>
    %28 = vector.extract_strided_slice %8 {offsets = [48, 0], sizes = [8, 32], strides = [1, 1]} : vector<64x32xf32> to vector<8x32xf32>
    %cst_15 = arith.constant dense<0xFF800000> : vector<32xf32>
    %29 = vector.multi_reduction <maximumf>, %28, %cst_15 [0] : vector<8x32xf32> to vector<32xf32>
    %30 = vector.shape_cast %29 : vector<32xf32> to vector<1x32xf32>
    %31 = vector.extract_strided_slice %8 {offsets = [56, 0], sizes = [8, 32], strides = [1, 1]} : vector<64x32xf32> to vector<8x32xf32>
    %cst_16 = arith.constant dense<0xFF800000> : vector<32xf32>
    %32 = vector.multi_reduction <maximumf>, %31, %cst_16 [0] : vector<8x32xf32> to vector<32xf32>
    %33 = vector.shape_cast %32 : vector<32xf32> to vector<1x32xf32>
    %34 = tpu.concatenate %9, %12, %15, %18, %21, %24, %27, %30, %33 in 0 : vector<1x32xf32>, vector<1x32xf32>, vector<1x32xf32>, vector<1x32xf32>, vector<1x32xf32>, vector<1x32xf32>, vector<1x32xf32>, vector<1x32xf32>, vector<1x32xf32> -> vector<9x32xf32>
    %c0_17 = arith.constant 0 : index
    %c0_18 = arith.constant 0 : index
    %c0_19 = arith.constant 0 : index
    %35 = vector.load %arg5[%c0_17, %c0_18, %c0_19] : memref<1x9x32xf32, #tpu.memory_space<vmem>>, vector<1x9x32xf32>
    %36 = vector.shape_cast %35 : vector<1x9x32xf32> to vector<9x32xf32>
    %37 = arith.addf %34, %36 : vector<9x32xf32>
    %c0_20 = arith.constant 0 : index
    %c0_21 = arith.constant 0 : index
    %c0_22 = arith.constant 0 : index
    %38 = vector.load %arg6[%c0_20, %c0_21, %c0_22] : memref<1x9x32xf32, #tpu.memory_space<vmem>>, vector<1x9x32xf32>
    %39 = vector.shape_cast %38 : vector<1x9x32xf32> to vector<9x32xf32>
    %40 = vector.shape_cast %37 : vector<9x32xf32> to vector<1x9x32xf32>
    tpu.vector_store %arg6[%c0_20, %c0_21, %c0_22], %40 {strides = array<i32>} : memref<1x9x32xf32, #tpu.memory_space<vmem>>, vector<1x9x32xf32>,
    return
  }
  func.func @transform_0(%arg0: i32) -> (i32, i32, i32) {
    %c0_i32 = arith.constant 0 : i32
    %c0_i32_0 = arith.constant 0 : i32
    %c0_i32_1 = arith.constant 0 : i32
    return %arg0, %c0_i32, %c0_i32_0 : i32, i32, i32
  }
  func.func @transform_1(%arg0: i32) -> (i32, i32) {
    %c0_i32 = arith.constant 0 : i32
    %c0_i32_0 = arith.constant 0 : i32
    %c0_i32_1 = arith.constant 0 : i32
    return %c0_i32, %c0_i32_0 : i32, i32
  }
  func.func @transform_2(%arg0: i32) -> (i32, i32) {
    %c0_i32 = arith.constant 0 : i32
    %c0_i32_0 = arith.constant 0 : i32
    %c0_i32_1 = arith.constant 0 : i32
    return %c0_i32, %c0_i32_0 : i32, i32
  }
  func.func @transform_3(%arg0: i32) -> (i32, i32) {
    %c0_i32 = arith.constant 0 : i32
    %c0_i32_0 = arith.constant 0 : i32
    %c0_i32_1 = arith.constant 0 : i32
    return %c0_i32, %c0_i32_0 : i32, i32
  }
  func.func @transform_4(%arg0: i32) -> (i32, i32, i32) {
    %c0_i32 = arith.constant 0 : i32
    %c0_i32_0 = arith.constant 0 : i32
    %c0_i32_1 = arith.constant 0 : i32
    %c0_i32_2 = arith.constant 0 : i32
    return %c0_i32, %c0_i32_0, %c0_i32_1 : i32, i32, i32
  }
  func.func @transform_5(%arg0: i32) -> (i32, i32, i32) {
    %c0_i32 = arith.constant 0 : i32
    %c0_i32_0 = arith.constant 0 : i32
    %c0_i32_1 = arith.constant 0 : i32
    return %arg0, %c0_i32, %c0_i32_0 : i32, i32, i32
  }
}

module attributes {stable_mosaic.version = 11 : i64} {
  func.func @_seq_embed_kernel(%arg0: i32, %arg1: memref<1x64x40xf32, #tpu.memory_space<vmem>>, %arg2: memref<40x64xf32, #tpu.memory_space<vmem>>, %arg3: memref<1x64xf32, #tpu.memory_space<vmem>>, %arg4: memref<1x64xf32, #tpu.memory_space<vmem>>, %arg5: memref<1x5x64xf32, #tpu.memory_space<vmem>>, %arg6: memref<1x5x64xf32, #tpu.memory_space<vmem>>) attributes {dimension_semantics = [#tpu.dimension_semantics<parallel>], iteration_bounds = array<i64: 2>, scalar_prefetch = 0 : i64, scratch_operands = 0 : i64, tpu.core_type = #tpu.core_type<tc>, window_params = [{transform_indices = @transform_0, window_bounds = array<i64: 1, 64, 40>}, {pipeline_mode = #tpu.pipeline_mode<synchronous>, transform_indices = @transform_1, window_bounds = array<i64: 40, 64>}, {pipeline_mode = #tpu.pipeline_mode<synchronous>, transform_indices = @transform_2, window_bounds = array<i64: 1, 64>}, {pipeline_mode = #tpu.pipeline_mode<synchronous>, transform_indices = @transform_3, window_bounds = array<i64: 1, 64>}, {pipeline_mode = #tpu.pipeline_mode<synchronous>, transform_indices = @transform_4, window_bounds = array<i64: 1, 5, 64>}, {transform_indices = @transform_5, window_bounds = array<i64: 1, 5, 64>}]} {
    %c0 = arith.constant 0 : index
    %c0_0 = arith.constant 0 : index
    %c0_1 = arith.constant 0 : index
    %0 = vector.load %arg1[%c0, %c0_0, %c0_1] : memref<1x64x40xf32, #tpu.memory_space<vmem>>, vector<1x64x40xf32>
    %1 = vector.shape_cast %0 : vector<1x64x40xf32> to vector<64x40xf32>
    %c0_2 = arith.constant 0 : index
    %c0_3 = arith.constant 0 : index
    %2 = vector.load %arg2[%c0_2, %c0_3] : memref<40x64xf32, #tpu.memory_space<vmem>>, vector<40x64xf32>
    %cst = arith.constant dense<0.000000e+00> : vector<64x64xf32>
    %3 = tpu.matmul %1, %2, %cst {dimension_numbers = #tpu.dot_dimension_numbers<[1], [0], [0], [1], [0, 0, 1, 1], [], []>} : vector<64x40xf32>, vector<40x64xf32>, vector<64x64xf32> -> vector<64x64xf32>
    %c0_4 = arith.constant 0 : index
    %c0_5 = arith.constant 0 : index
    %4 = vector.load %arg3[%c0_4, %c0_5] : memref<1x64xf32, #tpu.memory_space<vmem>>, vector<1x64xf32>
    %5 = vector.broadcast %4 : vector<1x64xf32> to vector<64x64xf32>
    %6 = arith.addf %3, %5 : vector<64x64xf32>
    %cst_6 = arith.constant 0.000000e+00 : f32
    %7 = vector.broadcast %cst_6 : f32 to vector<64x64xf32>
    %8 = arith.maximumf %6, %7 : vector<64x64xf32>
    %c0_7 = arith.constant 0 : index
    %c0_8 = arith.constant 0 : index
    %9 = vector.load %arg4[%c0_7, %c0_8] : memref<1x64xf32, #tpu.memory_space<vmem>>, vector<1x64xf32>
    %10 = vector.extract_strided_slice %8 {offsets = [0, 0], sizes = [16, 64], strides = [1, 1]} : vector<64x64xf32> to vector<16x64xf32>
    %cst_9 = arith.constant dense<0xFF800000> : vector<64xf32>
    %11 = vector.multi_reduction <maximumf>, %10, %cst_9 [0] : vector<16x64xf32> to vector<64xf32>
    %12 = vector.shape_cast %11 : vector<64xf32> to vector<1x64xf32>
    %13 = vector.extract_strided_slice %8 {offsets = [16, 0], sizes = [16, 64], strides = [1, 1]} : vector<64x64xf32> to vector<16x64xf32>
    %cst_10 = arith.constant dense<0xFF800000> : vector<64xf32>
    %14 = vector.multi_reduction <maximumf>, %13, %cst_10 [0] : vector<16x64xf32> to vector<64xf32>
    %15 = vector.shape_cast %14 : vector<64xf32> to vector<1x64xf32>
    %16 = vector.extract_strided_slice %8 {offsets = [32, 0], sizes = [16, 64], strides = [1, 1]} : vector<64x64xf32> to vector<16x64xf32>
    %cst_11 = arith.constant dense<0xFF800000> : vector<64xf32>
    %17 = vector.multi_reduction <maximumf>, %16, %cst_11 [0] : vector<16x64xf32> to vector<64xf32>
    %18 = vector.shape_cast %17 : vector<64xf32> to vector<1x64xf32>
    %19 = vector.extract_strided_slice %8 {offsets = [48, 0], sizes = [16, 64], strides = [1, 1]} : vector<64x64xf32> to vector<16x64xf32>
    %cst_12 = arith.constant dense<0xFF800000> : vector<64xf32>
    %20 = vector.multi_reduction <maximumf>, %19, %cst_12 [0] : vector<16x64xf32> to vector<64xf32>
    %21 = vector.shape_cast %20 : vector<64xf32> to vector<1x64xf32>
    %22 = tpu.concatenate %9, %12, %15, %18, %21 in 0 : vector<1x64xf32>, vector<1x64xf32>, vector<1x64xf32>, vector<1x64xf32>, vector<1x64xf32> -> vector<5x64xf32>
    %c0_13 = arith.constant 0 : index
    %c0_14 = arith.constant 0 : index
    %c0_15 = arith.constant 0 : index
    %23 = vector.load %arg5[%c0_13, %c0_14, %c0_15] : memref<1x5x64xf32, #tpu.memory_space<vmem>>, vector<1x5x64xf32>
    %24 = vector.shape_cast %23 : vector<1x5x64xf32> to vector<5x64xf32>
    %25 = arith.addf %22, %24 : vector<5x64xf32>
    %c0_16 = arith.constant 0 : index
    %c0_17 = arith.constant 0 : index
    %c0_18 = arith.constant 0 : index
    %26 = vector.load %arg6[%c0_16, %c0_17, %c0_18] : memref<1x5x64xf32, #tpu.memory_space<vmem>>, vector<1x5x64xf32>
    %27 = vector.shape_cast %26 : vector<1x5x64xf32> to vector<5x64xf32>
    %28 = vector.shape_cast %25 : vector<5x64xf32> to vector<1x5x64xf32>
    tpu.vector_store %arg6[%c0_16, %c0_17, %c0_18], %28 {strides = array<i32>} : memref<1x5x64xf32, #tpu.memory_space<vmem>>, vector<1x5x64xf32>,
    return
  }
  func.func @transform_0(%arg0: i32) -> (i32, i32, i32) {
    %c0_i32 = arith.constant 0 : i32
    %c0_i32_0 = arith.constant 0 : i32
    %c0_i32_1 = arith.constant 0 : i32
    return %arg0, %c0_i32, %c0_i32_0 : i32, i32, i32
  }
  func.func @transform_1(%arg0: i32) -> (i32, i32) {
    %c0_i32 = arith.constant 0 : i32
    %c0_i32_0 = arith.constant 0 : i32
    %c0_i32_1 = arith.constant 0 : i32
    return %c0_i32, %c0_i32_0 : i32, i32
  }
  func.func @transform_2(%arg0: i32) -> (i32, i32) {
    %c0_i32 = arith.constant 0 : i32
    %c0_i32_0 = arith.constant 0 : i32
    %c0_i32_1 = arith.constant 0 : i32
    return %c0_i32, %c0_i32_0 : i32, i32
  }
  func.func @transform_3(%arg0: i32) -> (i32, i32) {
    %c0_i32 = arith.constant 0 : i32
    %c0_i32_0 = arith.constant 0 : i32
    %c0_i32_1 = arith.constant 0 : i32
    return %c0_i32, %c0_i32_0 : i32, i32
  }
  func.func @transform_4(%arg0: i32) -> (i32, i32, i32) {
    %c0_i32 = arith.constant 0 : i32
    %c0_i32_0 = arith.constant 0 : i32
    %c0_i32_1 = arith.constant 0 : i32
    %c0_i32_2 = arith.constant 0 : i32
    return %c0_i32, %c0_i32_0, %c0_i32_1 : i32, i32, i32
  }
  func.func @transform_5(%arg0: i32) -> (i32, i32, i32) {
    %c0_i32 = arith.constant 0 : i32
    %c0_i32_0 = arith.constant 0 : i32
    %c0_i32_1 = arith.constant 0 : i32
    return %arg0, %c0_i32, %c0_i32_0 : i32, i32, i32
  }
}

module attributes {stable_mosaic.version = 11 : i64} {
  func.func @_encoder_layer_kernel(%arg0: i32, %arg1: memref<1x9x32xf32, #tpu.memory_space<vmem>>, %arg2: memref<1x32xf32, #tpu.memory_space<vmem>>, %arg3: memref<1x32xf32, #tpu.memory_space<vmem>>, %arg4: memref<6x32x16xf32, #tpu.memory_space<vmem>>, %arg5: memref<2x16x32xf32, #tpu.memory_space<vmem>>, %arg6: memref<1x32xf32, #tpu.memory_space<vmem>>, %arg7: memref<1x32xf32, #tpu.memory_space<vmem>>, %arg8: memref<1x32xf32, #tpu.memory_space<vmem>>, %arg9: memref<32x128xf32, #tpu.memory_space<vmem>>, %arg10: memref<1x128xf32, #tpu.memory_space<vmem>>, %arg11: memref<128x32xf32, #tpu.memory_space<vmem>>, %arg12: memref<1x32xf32, #tpu.memory_space<vmem>>, %arg13: memref<1x9x32xf32, #tpu.memory_space<vmem>>) attributes {dimension_semantics = [#tpu.dimension_semantics<parallel>], iteration_bounds = array<i64: 2>, scalar_prefetch = 0 : i64, scratch_operands = 0 : i64, tpu.core_type = #tpu.core_type<tc>, window_params = [{transform_indices = @transform_0, window_bounds = array<i64: 1, 9, 32>}, {pipeline_mode = #tpu.pipeline_mode<synchronous>, transform_indices = @transform_1, window_bounds = array<i64: 1, 32>}, {pipeline_mode = #tpu.pipeline_mode<synchronous>, transform_indices = @transform_2, window_bounds = array<i64: 1, 32>}, {pipeline_mode = #tpu.pipeline_mode<synchronous>, transform_indices = @transform_3, window_bounds = array<i64: 6, 32, 16>}, {pipeline_mode = #tpu.pipeline_mode<synchronous>, transform_indices = @transform_4, window_bounds = array<i64: 2, 16, 32>}, {pipeline_mode = #tpu.pipeline_mode<synchronous>, transform_indices = @transform_5, window_bounds = array<i64: 1, 32>}, {pipeline_mode = #tpu.pipeline_mode<synchronous>, transform_indices = @transform_6, window_bounds = array<i64: 1, 32>}, {pipeline_mode = #tpu.pipeline_mode<synchronous>, transform_indices = @transform_7, window_bounds = array<i64: 1, 32>}, {pipeline_mode = #tpu.pipeline_mode<synchronous>, transform_indices = @transform_8, window_bounds = array<i64: 32, 128>}, {pipeline_mode = #tpu.pipeline_mode<synchronous>, transform_indices = @transform_9, window_bounds = array<i64: 1, 128>}, {pipeline_mode = #tpu.pipeline_mode<synchronous>, transform_indices = @transform_10, window_bounds = array<i64: 128, 32>}, {pipeline_mode = #tpu.pipeline_mode<synchronous>, transform_indices = @transform_11, window_bounds = array<i64: 1, 32>}, {transform_indices = @transform_12, window_bounds = array<i64: 1, 9, 32>}]} {
    %c0 = arith.constant 0 : index
    %c0_0 = arith.constant 0 : index
    %c0_1 = arith.constant 0 : index
    %0 = vector.load %arg1[%c0, %c0_0, %c0_1] : memref<1x9x32xf32, #tpu.memory_space<vmem>>, vector<1x9x32xf32>
    %1 = vector.shape_cast %0 : vector<1x9x32xf32> to vector<9x32xf32>
    %c0_2 = arith.constant 0 : index
    %c0_3 = arith.constant 0 : index
    %2 = vector.load %arg2[%c0_2, %c0_3] : memref<1x32xf32, #tpu.memory_space<vmem>>, vector<1x32xf32>
    %c0_4 = arith.constant 0 : index
    %c0_5 = arith.constant 0 : index
    %3 = vector.load %arg3[%c0_4, %c0_5] : memref<1x32xf32, #tpu.memory_space<vmem>>, vector<1x32xf32>
    %cst = arith.constant dense<0.000000e+00> : vector<9xf32>
    %4 = vector.multi_reduction <add>, %1, %cst [1] : vector<9x32xf32> to vector<9xf32>
    %5 = vector.shape_cast %4 : vector<9xf32> to vector<9x1xf32>
    %cst_6 = arith.constant 3.200000e+01 : f32
    %6 = vector.broadcast %cst_6 : f32 to vector<9x1xf32>
    %7 = arith.divf %5, %6 : vector<9x1xf32>
    %8 = vector.broadcast %7 : vector<9x1xf32> to vector<9x32xf32>
    %9 = arith.subf %1, %8 : vector<9x32xf32>
    %10 = arith.mulf %9, %9 : vector<9x32xf32>
    %cst_7 = arith.constant dense<0.000000e+00> : vector<9xf32>
    %11 = vector.multi_reduction <add>, %10, %cst_7 [1] : vector<9x32xf32> to vector<9xf32>
    %12 = vector.shape_cast %11 : vector<9xf32> to vector<9x1xf32>
    %cst_8 = arith.constant 3.200000e+01 : f32
    %13 = vector.broadcast %cst_8 : f32 to vector<9x1xf32>
    %14 = arith.divf %12, %13 : vector<9x1xf32>
    %15 = vector.broadcast %7 : vector<9x1xf32> to vector<9x32xf32>
    %16 = arith.subf %1, %15 : vector<9x32xf32>
    %cst_9 = arith.constant 9.99999974E-6 : f32
    %17 = vector.broadcast %cst_9 : f32 to vector<9x1xf32>
    %18 = arith.addf %14, %17 : vector<9x1xf32>
    %19 = math.rsqrt %18 : vector<9x1xf32>
    %20 = vector.broadcast %19 : vector<9x1xf32> to vector<9x32xf32>
    %21 = arith.mulf %16, %20 : vector<9x32xf32>
    %22 = vector.broadcast %2 : vector<1x32xf32> to vector<9x32xf32>
    %23 = arith.mulf %21, %22 : vector<9x32xf32>
    %24 = vector.broadcast %3 : vector<1x32xf32> to vector<9x32xf32>
    %25 = arith.addf %23, %24 : vector<9x32xf32>
    %cst_10 = arith.constant 0.000000e+00 : f32
    %26 = vector.broadcast %cst_10 : f32 to vector<9x32xf32>
    %c0_11 = arith.constant 0 : index
    %c0_12 = arith.constant 0 : index
    %c0_13 = arith.constant 0 : index
    %27 = vector.load %arg4[%c0_11, %c0_12, %c0_13] : memref<6x32x16xf32, #tpu.memory_space<vmem>>, vector<1x32x16xf32>
    %28 = vector.shape_cast %27 : vector<1x32x16xf32> to vector<32x16xf32>
    %cst_14 = arith.constant dense<0.000000e+00> : vector<9x16xf32>
    %29 = tpu.matmul %25, %28, %cst_14 {dimension_numbers = #tpu.dot_dimension_numbers<[1], [0], [0], [1], [0, 0, 1, 1], [], []>} : vector<9x32xf32>, vector<32x16xf32>, vector<9x16xf32> -> vector<9x16xf32>
    %cst_15 = arith.constant 2.500000e-01 : f32
    %30 = vector.broadcast %cst_15 : f32 to vector<9x16xf32>
    %31 = arith.mulf %29, %30 : vector<9x16xf32>
    %c2 = arith.constant 2 : index
    %c0_16 = arith.constant 0 : index
    %c0_17 = arith.constant 0 : index
    %32 = vector.load %arg4[%c2, %c0_16, %c0_17] : memref<6x32x16xf32, #tpu.memory_space<vmem>>, vector<1x32x16xf32>
    %33 = vector.shape_cast %32 : vector<1x32x16xf32> to vector<32x16xf32>
    %cst_18 = arith.constant dense<0.000000e+00> : vector<9x16xf32>
    %34 = tpu.matmul %25, %33, %cst_18 {dimension_numbers = #tpu.dot_dimension_numbers<[1], [0], [0], [1], [0, 0, 1, 1], [], []>} : vector<9x32xf32>, vector<32x16xf32>, vector<9x16xf32> -> vector<9x16xf32>
    %c4 = arith.constant 4 : index
    %c0_19 = arith.constant 0 : index
    %c0_20 = arith.constant 0 : index
    %35 = vector.load %arg4[%c4, %c0_19, %c0_20] : memref<6x32x16xf32, #tpu.memory_space<vmem>>, vector<1x32x16xf32>
    %36 = vector.shape_cast %35 : vector<1x32x16xf32> to vector<32x16xf32>
    %cst_21 = arith.constant dense<0.000000e+00> : vector<9x16xf32>
    %37 = tpu.matmul %25, %36, %cst_21 {dimension_numbers = #tpu.dot_dimension_numbers<[1], [0], [0], [1], [0, 0, 1, 1], [], []>} : vector<9x32xf32>, vector<32x16xf32>, vector<9x16xf32> -> vector<9x16xf32>
    %cst_22 = arith.constant dense<0.000000e+00> : vector<9x9xf32>
    %38 = tpu.matmul %31, %34, %cst_22 {dimension_numbers = #tpu.dot_dimension_numbers<[1], [1], [0], [0], [0, 0, 1, 0], [], []>} : vector<9x16xf32>, vector<9x16xf32>, vector<9x9xf32> -> vector<9x9xf32>
    %cst_23 = arith.constant dense<0xFF800000> : vector<9xf32>
    %39 = vector.multi_reduction <maximumf>, %38, %cst_23 [1] : vector<9x9xf32> to vector<9xf32>
    %40 = vector.shape_cast %39 : vector<9xf32> to vector<9x1xf32>
    %41 = vector.broadcast %40 : vector<9x1xf32> to vector<9x9xf32>
    %42 = arith.subf %38, %41 : vector<9x9xf32>
    %43 = math.exp %42 : vector<9x9xf32>
    %cst_24 = arith.constant dense<0.000000e+00> : vector<9xf32>
    %44 = vector.multi_reduction <add>, %43, %cst_24 [1] : vector<9x9xf32> to vector<9xf32>
    %45 = vector.shape_cast %44 : vector<9xf32> to vector<9x1xf32>
    %46 = tpu.reciprocal %45 {approx = true} : vector<9x1xf32> -> vector<9x1xf32>
    %47 = vector.broadcast %46 : vector<9x1xf32> to vector<9x9xf32>
    %48 = arith.mulf %43, %47 : vector<9x9xf32>
    %cst_25 = arith.constant dense<0.000000e+00> : vector<9x16xf32>
    %49 = tpu.matmul %48, %37, %cst_25 {dimension_numbers = #tpu.dot_dimension_numbers<[1], [0], [0], [1], [0, 0, 1, 1], [], []>} : vector<9x9xf32>, vector<9x16xf32>, vector<9x16xf32> -> vector<9x16xf32>
    %c0_26 = arith.constant 0 : index
    %c0_27 = arith.constant 0 : index
    %c0_28 = arith.constant 0 : index
    %50 = vector.load %arg5[%c0_26, %c0_27, %c0_28] : memref<2x16x32xf32, #tpu.memory_space<vmem>>, vector<1x16x32xf32>
    %51 = vector.shape_cast %50 : vector<1x16x32xf32> to vector<16x32xf32>
    %cst_29 = arith.constant dense<0.000000e+00> : vector<9x32xf32>
    %52 = tpu.matmul %49, %51, %cst_29 {dimension_numbers = #tpu.dot_dimension_numbers<[1], [0], [0], [1], [0, 0, 1, 1], [], []>} : vector<9x16xf32>, vector<16x32xf32>, vector<9x32xf32> -> vector<9x32xf32>
    %53 = arith.addf %26, %52 : vector<9x32xf32>
    %c1 = arith.constant 1 : index
    %c0_30 = arith.constant 0 : index
    %c0_31 = arith.constant 0 : index
    %54 = vector.load %arg4[%c1, %c0_30, %c0_31] : memref<6x32x16xf32, #tpu.memory_space<vmem>>, vector<1x32x16xf32>
    %55 = vector.shape_cast %54 : vector<1x32x16xf32> to vector<32x16xf32>
    %cst_32 = arith.constant dense<0.000000e+00> : vector<9x16xf32>
    %56 = tpu.matmul %25, %55, %cst_32 {dimension_numbers = #tpu.dot_dimension_numbers<[1], [0], [0], [1], [0, 0, 1, 1], [], []>} : vector<9x32xf32>, vector<32x16xf32>, vector<9x16xf32> -> vector<9x16xf32>
    %cst_33 = arith.constant 2.500000e-01 : f32
    %57 = vector.broadcast %cst_33 : f32 to vector<9x16xf32>
    %58 = arith.mulf %56, %57 : vector<9x16xf32>
    %c3 = arith.constant 3 : index
    %c0_34 = arith.constant 0 : index
    %c0_35 = arith.constant 0 : index
    %59 = vector.load %arg4[%c3, %c0_34, %c0_35] : memref<6x32x16xf32, #tpu.memory_space<vmem>>, vector<1x32x16xf32>
    %60 = vector.shape_cast %59 : vector<1x32x16xf32> to vector<32x16xf32>
    %cst_36 = arith.constant dense<0.000000e+00> : vector<9x16xf32>
    %61 = tpu.matmul %25, %60, %cst_36 {dimension_numbers = #tpu.dot_dimension_numbers<[1], [0], [0], [1], [0, 0, 1, 1], [], []>} : vector<9x32xf32>, vector<32x16xf32>, vector<9x16xf32> -> vector<9x16xf32>
    %c5 = arith.constant 5 : index
    %c0_37 = arith.constant 0 : index
    %c0_38 = arith.constant 0 : index
    %62 = vector.load %arg4[%c5, %c0_37, %c0_38] : memref<6x32x16xf32, #tpu.memory_space<vmem>>, vector<1x32x16xf32>
    %63 = vector.shape_cast %62 : vector<1x32x16xf32> to vector<32x16xf32>
    %cst_39 = arith.constant dense<0.000000e+00> : vector<9x16xf32>
    %64 = tpu.matmul %25, %63, %cst_39 {dimension_numbers = #tpu.dot_dimension_numbers<[1], [0], [0], [1], [0, 0, 1, 1], [], []>} : vector<9x32xf32>, vector<32x16xf32>, vector<9x16xf32> -> vector<9x16xf32>
    %cst_40 = arith.constant dense<0.000000e+00> : vector<9x9xf32>
    %65 = tpu.matmul %58, %61, %cst_40 {dimension_numbers = #tpu.dot_dimension_numbers<[1], [1], [0], [0], [0, 0, 1, 0], [], []>} : vector<9x16xf32>, vector<9x16xf32>, vector<9x9xf32> -> vector<9x9xf32>
    %cst_41 = arith.constant dense<0xFF800000> : vector<9xf32>
    %66 = vector.multi_reduction <maximumf>, %65, %cst_41 [1] : vector<9x9xf32> to vector<9xf32>
    %67 = vector.shape_cast %66 : vector<9xf32> to vector<9x1xf32>
    %68 = vector.broadcast %67 : vector<9x1xf32> to vector<9x9xf32>
    %69 = arith.subf %65, %68 : vector<9x9xf32>
    %70 = math.exp %69 : vector<9x9xf32>
    %cst_42 = arith.constant dense<0.000000e+00> : vector<9xf32>
    %71 = vector.multi_reduction <add>, %70, %cst_42 [1] : vector<9x9xf32> to vector<9xf32>
    %72 = vector.shape_cast %71 : vector<9xf32> to vector<9x1xf32>
    %73 = tpu.reciprocal %72 {approx = true} : vector<9x1xf32> -> vector<9x1xf32>
    %74 = vector.broadcast %73 : vector<9x1xf32> to vector<9x9xf32>
    %75 = arith.mulf %70, %74 : vector<9x9xf32>
    %cst_43 = arith.constant dense<0.000000e+00> : vector<9x16xf32>
    %76 = tpu.matmul %75, %64, %cst_43 {dimension_numbers = #tpu.dot_dimension_numbers<[1], [0], [0], [1], [0, 0, 1, 1], [], []>} : vector<9x9xf32>, vector<9x16xf32>, vector<9x16xf32> -> vector<9x16xf32>
    %c1_44 = arith.constant 1 : index
    %c0_45 = arith.constant 0 : index
    %c0_46 = arith.constant 0 : index
    %77 = vector.load %arg5[%c1_44, %c0_45, %c0_46] : memref<2x16x32xf32, #tpu.memory_space<vmem>>, vector<1x16x32xf32>
    %78 = vector.shape_cast %77 : vector<1x16x32xf32> to vector<16x32xf32>
    %cst_47 = arith.constant dense<0.000000e+00> : vector<9x32xf32>
    %79 = tpu.matmul %76, %78, %cst_47 {dimension_numbers = #tpu.dot_dimension_numbers<[1], [0], [0], [1], [0, 0, 1, 1], [], []>} : vector<9x16xf32>, vector<16x32xf32>, vector<9x32xf32> -> vector<9x32xf32>
    %80 = arith.addf %53, %79 : vector<9x32xf32>
    %81 = arith.addf %1, %80 : vector<9x32xf32>
    %c0_48 = arith.constant 0 : index
    %c0_49 = arith.constant 0 : index
    %82 = vector.load %arg6[%c0_48, %c0_49] : memref<1x32xf32, #tpu.memory_space<vmem>>, vector<1x32xf32>
    %83 = vector.broadcast %82 : vector<1x32xf32> to vector<9x32xf32>
    %84 = arith.addf %81, %83 : vector<9x32xf32>
    %c0_50 = arith.constant 0 : index
    %c0_51 = arith.constant 0 : index
    %85 = vector.load %arg7[%c0_50, %c0_51] : memref<1x32xf32, #tpu.memory_space<vmem>>, vector<1x32xf32>
    %c0_52 = arith.constant 0 : index
    %c0_53 = arith.constant 0 : index
    %86 = vector.load %arg8[%c0_52, %c0_53] : memref<1x32xf32, #tpu.memory_space<vmem>>, vector<1x32xf32>
    %cst_54 = arith.constant dense<0.000000e+00> : vector<9xf32>
    %87 = vector.multi_reduction <add>, %84, %cst_54 [1] : vector<9x32xf32> to vector<9xf32>
    %88 = vector.shape_cast %87 : vector<9xf32> to vector<9x1xf32>
    %cst_55 = arith.constant 3.200000e+01 : f32
    %89 = vector.broadcast %cst_55 : f32 to vector<9x1xf32>
    %90 = arith.divf %88, %89 : vector<9x1xf32>
    %91 = vector.broadcast %90 : vector<9x1xf32> to vector<9x32xf32>
    %92 = arith.subf %84, %91 : vector<9x32xf32>
    %93 = arith.mulf %92, %92 : vector<9x32xf32>
    %cst_56 = arith.constant dense<0.000000e+00> : vector<9xf32>
    %94 = vector.multi_reduction <add>, %93, %cst_56 [1] : vector<9x32xf32> to vector<9xf32>
    %95 = vector.shape_cast %94 : vector<9xf32> to vector<9x1xf32>
    %cst_57 = arith.constant 3.200000e+01 : f32
    %96 = vector.broadcast %cst_57 : f32 to vector<9x1xf32>
    %97 = arith.divf %95, %96 : vector<9x1xf32>
    %98 = vector.broadcast %90 : vector<9x1xf32> to vector<9x32xf32>
    %99 = arith.subf %84, %98 : vector<9x32xf32>
    %cst_58 = arith.constant 9.99999974E-6 : f32
    %100 = vector.broadcast %cst_58 : f32 to vector<9x1xf32>
    %101 = arith.addf %97, %100 : vector<9x1xf32>
    %102 = math.rsqrt %101 : vector<9x1xf32>
    %103 = vector.broadcast %102 : vector<9x1xf32> to vector<9x32xf32>
    %104 = arith.mulf %99, %103 : vector<9x32xf32>
    %105 = vector.broadcast %85 : vector<1x32xf32> to vector<9x32xf32>
    %106 = arith.mulf %104, %105 : vector<9x32xf32>
    %107 = vector.broadcast %86 : vector<1x32xf32> to vector<9x32xf32>
    %108 = arith.addf %106, %107 : vector<9x32xf32>
    %c0_59 = arith.constant 0 : index
    %c0_60 = arith.constant 0 : index
    %109 = vector.load %arg9[%c0_59, %c0_60] : memref<32x128xf32, #tpu.memory_space<vmem>>, vector<32x128xf32>
    %cst_61 = arith.constant dense<0.000000e+00> : vector<9x128xf32>
    %110 = tpu.matmul %108, %109, %cst_61 {dimension_numbers = #tpu.dot_dimension_numbers<[1], [0], [0], [1], [0, 0, 1, 1], [], []>} : vector<9x32xf32>, vector<32x128xf32>, vector<9x128xf32> -> vector<9x128xf32>
    %c0_62 = arith.constant 0 : index
    %c0_63 = arith.constant 0 : index
    %111 = vector.load %arg10[%c0_62, %c0_63] : memref<1x128xf32, #tpu.memory_space<vmem>>, vector<1x128xf32>
    %112 = vector.broadcast %111 : vector<1x128xf32> to vector<9x128xf32>
    %113 = arith.addf %110, %112 : vector<9x128xf32>
    %114 = arith.mulf %113, %113 : vector<9x128xf32>
    %115 = arith.mulf %113, %114 : vector<9x128xf32>
    %cst_64 = arith.constant 4.471500e-02 : f32
    %116 = vector.broadcast %cst_64 : f32 to vector<9x128xf32>
    %117 = arith.mulf %116, %115 : vector<9x128xf32>
    %118 = arith.addf %113, %117 : vector<9x128xf32>
    %cst_65 = arith.constant 0.797884583 : f32
    %119 = vector.broadcast %cst_65 : f32 to vector<9x128xf32>
    %120 = arith.mulf %119, %118 : vector<9x128xf32>
    %121 = math.tanh %120 : vector<9x128xf32>
    %cst_66 = arith.constant 1.000000e+00 : f32
    %122 = vector.broadcast %cst_66 : f32 to vector<9x128xf32>
    %123 = arith.addf %122, %121 : vector<9x128xf32>
    %cst_67 = arith.constant 5.000000e-01 : f32
    %124 = vector.broadcast %cst_67 : f32 to vector<9x128xf32>
    %125 = arith.mulf %124, %123 : vector<9x128xf32>
    %126 = arith.mulf %113, %125 : vector<9x128xf32>
    %c0_68 = arith.constant 0 : index
    %c0_69 = arith.constant 0 : index
    %127 = vector.load %arg11[%c0_68, %c0_69] : memref<128x32xf32, #tpu.memory_space<vmem>>, vector<128x32xf32>
    %cst_70 = arith.constant dense<0.000000e+00> : vector<9x32xf32>
    %128 = tpu.matmul %126, %127, %cst_70 {dimension_numbers = #tpu.dot_dimension_numbers<[1], [0], [0], [1], [0, 0, 1, 1], [], []>} : vector<9x128xf32>, vector<128x32xf32>, vector<9x32xf32> -> vector<9x32xf32>
    %129 = arith.addf %84, %128 : vector<9x32xf32>
    %c0_71 = arith.constant 0 : index
    %c0_72 = arith.constant 0 : index
    %130 = vector.load %arg12[%c0_71, %c0_72] : memref<1x32xf32, #tpu.memory_space<vmem>>, vector<1x32xf32>
    %131 = vector.broadcast %130 : vector<1x32xf32> to vector<9x32xf32>
    %132 = arith.addf %129, %131 : vector<9x32xf32>
    %c0_73 = arith.constant 0 : index
    %c0_74 = arith.constant 0 : index
    %c0_75 = arith.constant 0 : index
    %133 = vector.load %arg13[%c0_73, %c0_74, %c0_75] : memref<1x9x32xf32, #tpu.memory_space<vmem>>, vector<1x9x32xf32>
    %134 = vector.shape_cast %133 : vector<1x9x32xf32> to vector<9x32xf32>
    %135 = vector.shape_cast %132 : vector<9x32xf32> to vector<1x9x32xf32>
    tpu.vector_store %arg13[%c0_73, %c0_74, %c0_75], %135 {strides = array<i32>} : memref<1x9x32xf32, #tpu.memory_space<vmem>>, vector<1x9x32xf32>,
    return
  }
  func.func @transform_0(%arg0: i32) -> (i32, i32, i32) {
    %c0_i32 = arith.constant 0 : i32
    %c0_i32_0 = arith.constant 0 : i32
    %c0_i32_1 = arith.constant 0 : i32
    return %arg0, %c0_i32, %c0_i32_0 : i32, i32, i32
  }
  func.func @transform_1(%arg0: i32) -> (i32, i32) {
    %c0_i32 = arith.constant 0 : i32
    %c0_i32_0 = arith.constant 0 : i32
    %c0_i32_1 = arith.constant 0 : i32
    return %c0_i32, %c0_i32_0 : i32, i32
  }
  func.func @transform_2(%arg0: i32) -> (i32, i32) {
    %c0_i32 = arith.constant 0 : i32
    %c0_i32_0 = arith.constant 0 : i32
    %c0_i32_1 = arith.constant 0 : i32
    return %c0_i32, %c0_i32_0 : i32, i32
  }
  func.func @transform_3(%arg0: i32) -> (i32, i32, i32) {
    %c0_i32 = arith.constant 0 : i32
    %c0_i32_0 = arith.constant 0 : i32
    %c0_i32_1 = arith.constant 0 : i32
    %c0_i32_2 = arith.constant 0 : i32
    return %c0_i32, %c0_i32_0, %c0_i32_1 : i32, i32, i32
  }
  func.func @transform_4(%arg0: i32) -> (i32, i32, i32) {
    %c0_i32 = arith.constant 0 : i32
    %c0_i32_0 = arith.constant 0 : i32
    %c0_i32_1 = arith.constant 0 : i32
    %c0_i32_2 = arith.constant 0 : i32
    return %c0_i32, %c0_i32_0, %c0_i32_1 : i32, i32, i32
  }
  func.func @transform_5(%arg0: i32) -> (i32, i32) {
    %c0_i32 = arith.constant 0 : i32
    %c0_i32_0 = arith.constant 0 : i32
    %c0_i32_1 = arith.constant 0 : i32
    return %c0_i32, %c0_i32_0 : i32, i32
  }
  func.func @transform_6(%arg0: i32) -> (i32, i32) {
    %c0_i32 = arith.constant 0 : i32
    %c0_i32_0 = arith.constant 0 : i32
    %c0_i32_1 = arith.constant 0 : i32
    return %c0_i32, %c0_i32_0 : i32, i32
  }
  func.func @transform_7(%arg0: i32) -> (i32, i32) {
    %c0_i32 = arith.constant 0 : i32
    %c0_i32_0 = arith.constant 0 : i32
    %c0_i32_1 = arith.constant 0 : i32
    return %c0_i32, %c0_i32_0 : i32, i32
  }
  func.func @transform_8(%arg0: i32) -> (i32, i32) {
    %c0_i32 = arith.constant 0 : i32
    %c0_i32_0 = arith.constant 0 : i32
    %c0_i32_1 = arith.constant 0 : i32
    return %c0_i32, %c0_i32_0 : i32, i32
  }
  func.func @transform_9(%arg0: i32) -> (i32, i32) {
    %c0_i32 = arith.constant 0 : i32
    %c0_i32_0 = arith.constant 0 : i32
    %c0_i32_1 = arith.constant 0 : i32
    return %c0_i32, %c0_i32_0 : i32, i32
  }
  func.func @transform_10(%arg0: i32) -> (i32, i32) {
    %c0_i32 = arith.constant 0 : i32
    %c0_i32_0 = arith.constant 0 : i32
    %c0_i32_1 = arith.constant 0 : i32
    return %c0_i32, %c0_i32_0 : i32, i32
  }
  func.func @transform_11(%arg0: i32) -> (i32, i32) {
    %c0_i32 = arith.constant 0 : i32
    %c0_i32_0 = arith.constant 0 : i32
    %c0_i32_1 = arith.constant 0 : i32
    return %c0_i32, %c0_i32_0 : i32, i32
  }
  func.func @transform_12(%arg0: i32) -> (i32, i32, i32) {
    %c0_i32 = arith.constant 0 : i32
    %c0_i32_0 = arith.constant 0 : i32
    %c0_i32_1 = arith.constant 0 : i32
    return %arg0, %c0_i32, %c0_i32_0 : i32, i32, i32
  }
}

module attributes {stable_mosaic.version = 11 : i64} {
  func.func @_encoder_layer_kernel(%arg0: i32, %arg1: memref<1x5x64xf32, #tpu.memory_space<vmem>>, %arg2: memref<1x64xf32, #tpu.memory_space<vmem>>, %arg3: memref<1x64xf32, #tpu.memory_space<vmem>>, %arg4: memref<6x64x16xf32, #tpu.memory_space<vmem>>, %arg5: memref<2x16x64xf32, #tpu.memory_space<vmem>>, %arg6: memref<1x64xf32, #tpu.memory_space<vmem>>, %arg7: memref<1x64xf32, #tpu.memory_space<vmem>>, %arg8: memref<1x64xf32, #tpu.memory_space<vmem>>, %arg9: memref<64x256xf32, #tpu.memory_space<vmem>>, %arg10: memref<1x256xf32, #tpu.memory_space<vmem>>, %arg11: memref<256x64xf32, #tpu.memory_space<vmem>>, %arg12: memref<1x64xf32, #tpu.memory_space<vmem>>, %arg13: memref<1x5x64xf32, #tpu.memory_space<vmem>>) attributes {dimension_semantics = [#tpu.dimension_semantics<parallel>], iteration_bounds = array<i64: 2>, scalar_prefetch = 0 : i64, scratch_operands = 0 : i64, tpu.core_type = #tpu.core_type<tc>, window_params = [{transform_indices = @transform_0, window_bounds = array<i64: 1, 5, 64>}, {pipeline_mode = #tpu.pipeline_mode<synchronous>, transform_indices = @transform_1, window_bounds = array<i64: 1, 64>}, {pipeline_mode = #tpu.pipeline_mode<synchronous>, transform_indices = @transform_2, window_bounds = array<i64: 1, 64>}, {pipeline_mode = #tpu.pipeline_mode<synchronous>, transform_indices = @transform_3, window_bounds = array<i64: 6, 64, 16>}, {pipeline_mode = #tpu.pipeline_mode<synchronous>, transform_indices = @transform_4, window_bounds = array<i64: 2, 16, 64>}, {pipeline_mode = #tpu.pipeline_mode<synchronous>, transform_indices = @transform_5, window_bounds = array<i64: 1, 64>}, {pipeline_mode = #tpu.pipeline_mode<synchronous>, transform_indices = @transform_6, window_bounds = array<i64: 1, 64>}, {pipeline_mode = #tpu.pipeline_mode<synchronous>, transform_indices = @transform_7, window_bounds = array<i64: 1, 64>}, {pipeline_mode = #tpu.pipeline_mode<synchronous>, transform_indices = @transform_8, window_bounds = array<i64: 64, 256>}, {pipeline_mode = #tpu.pipeline_mode<synchronous>, transform_indices = @transform_9, window_bounds = array<i64: 1, 256>}, {pipeline_mode = #tpu.pipeline_mode<synchronous>, transform_indices = @transform_10, window_bounds = array<i64: 256, 64>}, {pipeline_mode = #tpu.pipeline_mode<synchronous>, transform_indices = @transform_11, window_bounds = array<i64: 1, 64>}, {transform_indices = @transform_12, window_bounds = array<i64: 1, 5, 64>}]} {
    %c0 = arith.constant 0 : index
    %c0_0 = arith.constant 0 : index
    %c0_1 = arith.constant 0 : index
    %0 = vector.load %arg1[%c0, %c0_0, %c0_1] : memref<1x5x64xf32, #tpu.memory_space<vmem>>, vector<1x5x64xf32>
    %1 = vector.shape_cast %0 : vector<1x5x64xf32> to vector<5x64xf32>
    %c0_2 = arith.constant 0 : index
    %c0_3 = arith.constant 0 : index
    %2 = vector.load %arg2[%c0_2, %c0_3] : memref<1x64xf32, #tpu.memory_space<vmem>>, vector<1x64xf32>
    %c0_4 = arith.constant 0 : index
    %c0_5 = arith.constant 0 : index
    %3 = vector.load %arg3[%c0_4, %c0_5] : memref<1x64xf32, #tpu.memory_space<vmem>>, vector<1x64xf32>
    %cst = arith.constant dense<0.000000e+00> : vector<5xf32>
    %4 = vector.multi_reduction <add>, %1, %cst [1] : vector<5x64xf32> to vector<5xf32>
    %5 = vector.shape_cast %4 : vector<5xf32> to vector<5x1xf32>
    %cst_6 = arith.constant 6.400000e+01 : f32
    %6 = vector.broadcast %cst_6 : f32 to vector<5x1xf32>
    %7 = arith.divf %5, %6 : vector<5x1xf32>
    %8 = vector.broadcast %7 : vector<5x1xf32> to vector<5x64xf32>
    %9 = arith.subf %1, %8 : vector<5x64xf32>
    %10 = arith.mulf %9, %9 : vector<5x64xf32>
    %cst_7 = arith.constant dense<0.000000e+00> : vector<5xf32>
    %11 = vector.multi_reduction <add>, %10, %cst_7 [1] : vector<5x64xf32> to vector<5xf32>
    %12 = vector.shape_cast %11 : vector<5xf32> to vector<5x1xf32>
    %cst_8 = arith.constant 6.400000e+01 : f32
    %13 = vector.broadcast %cst_8 : f32 to vector<5x1xf32>
    %14 = arith.divf %12, %13 : vector<5x1xf32>
    %15 = vector.broadcast %7 : vector<5x1xf32> to vector<5x64xf32>
    %16 = arith.subf %1, %15 : vector<5x64xf32>
    %cst_9 = arith.constant 9.99999974E-6 : f32
    %17 = vector.broadcast %cst_9 : f32 to vector<5x1xf32>
    %18 = arith.addf %14, %17 : vector<5x1xf32>
    %19 = math.rsqrt %18 : vector<5x1xf32>
    %20 = vector.broadcast %19 : vector<5x1xf32> to vector<5x64xf32>
    %21 = arith.mulf %16, %20 : vector<5x64xf32>
    %22 = vector.broadcast %2 : vector<1x64xf32> to vector<5x64xf32>
    %23 = arith.mulf %21, %22 : vector<5x64xf32>
    %24 = vector.broadcast %3 : vector<1x64xf32> to vector<5x64xf32>
    %25 = arith.addf %23, %24 : vector<5x64xf32>
    %cst_10 = arith.constant 0.000000e+00 : f32
    %26 = vector.broadcast %cst_10 : f32 to vector<5x64xf32>
    %c0_11 = arith.constant 0 : index
    %c0_12 = arith.constant 0 : index
    %c0_13 = arith.constant 0 : index
    %27 = vector.load %arg4[%c0_11, %c0_12, %c0_13] : memref<6x64x16xf32, #tpu.memory_space<vmem>>, vector<1x64x16xf32>
    %28 = vector.shape_cast %27 : vector<1x64x16xf32> to vector<64x16xf32>
    %cst_14 = arith.constant dense<0.000000e+00> : vector<5x16xf32>
    %29 = tpu.matmul %25, %28, %cst_14 {dimension_numbers = #tpu.dot_dimension_numbers<[1], [0], [0], [1], [0, 0, 1, 1], [], []>} : vector<5x64xf32>, vector<64x16xf32>, vector<5x16xf32> -> vector<5x16xf32>
    %cst_15 = arith.constant 2.500000e-01 : f32
    %30 = vector.broadcast %cst_15 : f32 to vector<5x16xf32>
    %31 = arith.mulf %29, %30 : vector<5x16xf32>
    %c2 = arith.constant 2 : index
    %c0_16 = arith.constant 0 : index
    %c0_17 = arith.constant 0 : index
    %32 = vector.load %arg4[%c2, %c0_16, %c0_17] : memref<6x64x16xf32, #tpu.memory_space<vmem>>, vector<1x64x16xf32>
    %33 = vector.shape_cast %32 : vector<1x64x16xf32> to vector<64x16xf32>
    %cst_18 = arith.constant dense<0.000000e+00> : vector<5x16xf32>
    %34 = tpu.matmul %25, %33, %cst_18 {dimension_numbers = #tpu.dot_dimension_numbers<[1], [0], [0], [1], [0, 0, 1, 1], [], []>} : vector<5x64xf32>, vector<64x16xf32>, vector<5x16xf32> -> vector<5x16xf32>
    %c4 = arith.constant 4 : index
    %c0_19 = arith.constant 0 : index
    %c0_20 = arith.constant 0 : index
    %35 = vector.load %arg4[%c4, %c0_19, %c0_20] : memref<6x64x16xf32, #tpu.memory_space<vmem>>, vector<1x64x16xf32>
    %36 = vector.shape_cast %35 : vector<1x64x16xf32> to vector<64x16xf32>
    %cst_21 = arith.constant dense<0.000000e+00> : vector<5x16xf32>
    %37 = tpu.matmul %25, %36, %cst_21 {dimension_numbers = #tpu.dot_dimension_numbers<[1], [0], [0], [1], [0, 0, 1, 1], [], []>} : vector<5x64xf32>, vector<64x16xf32>, vector<5x16xf32> -> vector<5x16xf32>
    %cst_22 = arith.constant dense<0.000000e+00> : vector<5x5xf32>
    %38 = tpu.matmul %31, %34, %cst_22 {dimension_numbers = #tpu.dot_dimension_numbers<[1], [1], [0], [0], [0, 0, 1, 0], [], []>} : vector<5x16xf32>, vector<5x16xf32>, vector<5x5xf32> -> vector<5x5xf32>
    %cst_23 = arith.constant dense<0xFF800000> : vector<5xf32>
    %39 = vector.multi_reduction <maximumf>, %38, %cst_23 [1] : vector<5x5xf32> to vector<5xf32>
    %40 = vector.shape_cast %39 : vector<5xf32> to vector<5x1xf32>
    %41 = vector.broadcast %40 : vector<5x1xf32> to vector<5x5xf32>
    %42 = arith.subf %38, %41 : vector<5x5xf32>
    %43 = math.exp %42 : vector<5x5xf32>
    %cst_24 = arith.constant dense<0.000000e+00> : vector<5xf32>
    %44 = vector.multi_reduction <add>, %43, %cst_24 [1] : vector<5x5xf32> to vector<5xf32>
    %45 = vector.shape_cast %44 : vector<5xf32> to vector<5x1xf32>
    %46 = tpu.reciprocal %45 {approx = true} : vector<5x1xf32> -> vector<5x1xf32>
    %47 = vector.broadcast %46 : vector<5x1xf32> to vector<5x5xf32>
    %48 = arith.mulf %43, %47 : vector<5x5xf32>
    %cst_25 = arith.constant dense<0.000000e+00> : vector<5x16xf32>
    %49 = tpu.matmul %48, %37, %cst_25 {dimension_numbers = #tpu.dot_dimension_numbers<[1], [0], [0], [1], [0, 0, 1, 1], [], []>} : vector<5x5xf32>, vector<5x16xf32>, vector<5x16xf32> -> vector<5x16xf32>
    %c0_26 = arith.constant 0 : index
    %c0_27 = arith.constant 0 : index
    %c0_28 = arith.constant 0 : index
    %50 = vector.load %arg5[%c0_26, %c0_27, %c0_28] : memref<2x16x64xf32, #tpu.memory_space<vmem>>, vector<1x16x64xf32>
    %51 = vector.shape_cast %50 : vector<1x16x64xf32> to vector<16x64xf32>
    %cst_29 = arith.constant dense<0.000000e+00> : vector<5x64xf32>
    %52 = tpu.matmul %49, %51, %cst_29 {dimension_numbers = #tpu.dot_dimension_numbers<[1], [0], [0], [1], [0, 0, 1, 1], [], []>} : vector<5x16xf32>, vector<16x64xf32>, vector<5x64xf32> -> vector<5x64xf32>
    %53 = arith.addf %26, %52 : vector<5x64xf32>
    %c1 = arith.constant 1 : index
    %c0_30 = arith.constant 0 : index
    %c0_31 = arith.constant 0 : index
    %54 = vector.load %arg4[%c1, %c0_30, %c0_31] : memref<6x64x16xf32, #tpu.memory_space<vmem>>, vector<1x64x16xf32>
    %55 = vector.shape_cast %54 : vector<1x64x16xf32> to vector<64x16xf32>
    %cst_32 = arith.constant dense<0.000000e+00> : vector<5x16xf32>
    %56 = tpu.matmul %25, %55, %cst_32 {dimension_numbers = #tpu.dot_dimension_numbers<[1], [0], [0], [1], [0, 0, 1, 1], [], []>} : vector<5x64xf32>, vector<64x16xf32>, vector<5x16xf32> -> vector<5x16xf32>
    %cst_33 = arith.constant 2.500000e-01 : f32
    %57 = vector.broadcast %cst_33 : f32 to vector<5x16xf32>
    %58 = arith.mulf %56, %57 : vector<5x16xf32>
    %c3 = arith.constant 3 : index
    %c0_34 = arith.constant 0 : index
    %c0_35 = arith.constant 0 : index
    %59 = vector.load %arg4[%c3, %c0_34, %c0_35] : memref<6x64x16xf32, #tpu.memory_space<vmem>>, vector<1x64x16xf32>
    %60 = vector.shape_cast %59 : vector<1x64x16xf32> to vector<64x16xf32>
    %cst_36 = arith.constant dense<0.000000e+00> : vector<5x16xf32>
    %61 = tpu.matmul %25, %60, %cst_36 {dimension_numbers = #tpu.dot_dimension_numbers<[1], [0], [0], [1], [0, 0, 1, 1], [], []>} : vector<5x64xf32>, vector<64x16xf32>, vector<5x16xf32> -> vector<5x16xf32>
    %c5 = arith.constant 5 : index
    %c0_37 = arith.constant 0 : index
    %c0_38 = arith.constant 0 : index
    %62 = vector.load %arg4[%c5, %c0_37, %c0_38] : memref<6x64x16xf32, #tpu.memory_space<vmem>>, vector<1x64x16xf32>
    %63 = vector.shape_cast %62 : vector<1x64x16xf32> to vector<64x16xf32>
    %cst_39 = arith.constant dense<0.000000e+00> : vector<5x16xf32>
    %64 = tpu.matmul %25, %63, %cst_39 {dimension_numbers = #tpu.dot_dimension_numbers<[1], [0], [0], [1], [0, 0, 1, 1], [], []>} : vector<5x64xf32>, vector<64x16xf32>, vector<5x16xf32> -> vector<5x16xf32>
    %cst_40 = arith.constant dense<0.000000e+00> : vector<5x5xf32>
    %65 = tpu.matmul %58, %61, %cst_40 {dimension_numbers = #tpu.dot_dimension_numbers<[1], [1], [0], [0], [0, 0, 1, 0], [], []>} : vector<5x16xf32>, vector<5x16xf32>, vector<5x5xf32> -> vector<5x5xf32>
    %cst_41 = arith.constant dense<0xFF800000> : vector<5xf32>
    %66 = vector.multi_reduction <maximumf>, %65, %cst_41 [1] : vector<5x5xf32> to vector<5xf32>
    %67 = vector.shape_cast %66 : vector<5xf32> to vector<5x1xf32>
    %68 = vector.broadcast %67 : vector<5x1xf32> to vector<5x5xf32>
    %69 = arith.subf %65, %68 : vector<5x5xf32>
    %70 = math.exp %69 : vector<5x5xf32>
    %cst_42 = arith.constant dense<0.000000e+00> : vector<5xf32>
    %71 = vector.multi_reduction <add>, %70, %cst_42 [1] : vector<5x5xf32> to vector<5xf32>
    %72 = vector.shape_cast %71 : vector<5xf32> to vector<5x1xf32>
    %73 = tpu.reciprocal %72 {approx = true} : vector<5x1xf32> -> vector<5x1xf32>
    %74 = vector.broadcast %73 : vector<5x1xf32> to vector<5x5xf32>
    %75 = arith.mulf %70, %74 : vector<5x5xf32>
    %cst_43 = arith.constant dense<0.000000e+00> : vector<5x16xf32>
    %76 = tpu.matmul %75, %64, %cst_43 {dimension_numbers = #tpu.dot_dimension_numbers<[1], [0], [0], [1], [0, 0, 1, 1], [], []>} : vector<5x5xf32>, vector<5x16xf32>, vector<5x16xf32> -> vector<5x16xf32>
    %c1_44 = arith.constant 1 : index
    %c0_45 = arith.constant 0 : index
    %c0_46 = arith.constant 0 : index
    %77 = vector.load %arg5[%c1_44, %c0_45, %c0_46] : memref<2x16x64xf32, #tpu.memory_space<vmem>>, vector<1x16x64xf32>
    %78 = vector.shape_cast %77 : vector<1x16x64xf32> to vector<16x64xf32>
    %cst_47 = arith.constant dense<0.000000e+00> : vector<5x64xf32>
    %79 = tpu.matmul %76, %78, %cst_47 {dimension_numbers = #tpu.dot_dimension_numbers<[1], [0], [0], [1], [0, 0, 1, 1], [], []>} : vector<5x16xf32>, vector<16x64xf32>, vector<5x64xf32> -> vector<5x64xf32>
    %80 = arith.addf %53, %79 : vector<5x64xf32>
    %81 = arith.addf %1, %80 : vector<5x64xf32>
    %c0_48 = arith.constant 0 : index
    %c0_49 = arith.constant 0 : index
    %82 = vector.load %arg6[%c0_48, %c0_49] : memref<1x64xf32, #tpu.memory_space<vmem>>, vector<1x64xf32>
    %83 = vector.broadcast %82 : vector<1x64xf32> to vector<5x64xf32>
    %84 = arith.addf %81, %83 : vector<5x64xf32>
    %c0_50 = arith.constant 0 : index
    %c0_51 = arith.constant 0 : index
    %85 = vector.load %arg7[%c0_50, %c0_51] : memref<1x64xf32, #tpu.memory_space<vmem>>, vector<1x64xf32>
    %c0_52 = arith.constant 0 : index
    %c0_53 = arith.constant 0 : index
    %86 = vector.load %arg8[%c0_52, %c0_53] : memref<1x64xf32, #tpu.memory_space<vmem>>, vector<1x64xf32>
    %cst_54 = arith.constant dense<0.000000e+00> : vector<5xf32>
    %87 = vector.multi_reduction <add>, %84, %cst_54 [1] : vector<5x64xf32> to vector<5xf32>
    %88 = vector.shape_cast %87 : vector<5xf32> to vector<5x1xf32>
    %cst_55 = arith.constant 6.400000e+01 : f32
    %89 = vector.broadcast %cst_55 : f32 to vector<5x1xf32>
    %90 = arith.divf %88, %89 : vector<5x1xf32>
    %91 = vector.broadcast %90 : vector<5x1xf32> to vector<5x64xf32>
    %92 = arith.subf %84, %91 : vector<5x64xf32>
    %93 = arith.mulf %92, %92 : vector<5x64xf32>
    %cst_56 = arith.constant dense<0.000000e+00> : vector<5xf32>
    %94 = vector.multi_reduction <add>, %93, %cst_56 [1] : vector<5x64xf32> to vector<5xf32>
    %95 = vector.shape_cast %94 : vector<5xf32> to vector<5x1xf32>
    %cst_57 = arith.constant 6.400000e+01 : f32
    %96 = vector.broadcast %cst_57 : f32 to vector<5x1xf32>
    %97 = arith.divf %95, %96 : vector<5x1xf32>
    %98 = vector.broadcast %90 : vector<5x1xf32> to vector<5x64xf32>
    %99 = arith.subf %84, %98 : vector<5x64xf32>
    %cst_58 = arith.constant 9.99999974E-6 : f32
    %100 = vector.broadcast %cst_58 : f32 to vector<5x1xf32>
    %101 = arith.addf %97, %100 : vector<5x1xf32>
    %102 = math.rsqrt %101 : vector<5x1xf32>
    %103 = vector.broadcast %102 : vector<5x1xf32> to vector<5x64xf32>
    %104 = arith.mulf %99, %103 : vector<5x64xf32>
    %105 = vector.broadcast %85 : vector<1x64xf32> to vector<5x64xf32>
    %106 = arith.mulf %104, %105 : vector<5x64xf32>
    %107 = vector.broadcast %86 : vector<1x64xf32> to vector<5x64xf32>
    %108 = arith.addf %106, %107 : vector<5x64xf32>
    %c0_59 = arith.constant 0 : index
    %c0_60 = arith.constant 0 : index
    %109 = vector.load %arg9[%c0_59, %c0_60] : memref<64x256xf32, #tpu.memory_space<vmem>>, vector<64x256xf32>
    %cst_61 = arith.constant dense<0.000000e+00> : vector<5x256xf32>
    %110 = tpu.matmul %108, %109, %cst_61 {dimension_numbers = #tpu.dot_dimension_numbers<[1], [0], [0], [1], [0, 0, 1, 1], [], []>} : vector<5x64xf32>, vector<64x256xf32>, vector<5x256xf32> -> vector<5x256xf32>
    %c0_62 = arith.constant 0 : index
    %c0_63 = arith.constant 0 : index
    %111 = vector.load %arg10[%c0_62, %c0_63] : memref<1x256xf32, #tpu.memory_space<vmem>>, vector<1x256xf32>
    %112 = vector.broadcast %111 : vector<1x256xf32> to vector<5x256xf32>
    %113 = arith.addf %110, %112 : vector<5x256xf32>
    %114 = arith.mulf %113, %113 : vector<5x256xf32>
    %115 = arith.mulf %113, %114 : vector<5x256xf32>
    %cst_64 = arith.constant 4.471500e-02 : f32
    %116 = vector.broadcast %cst_64 : f32 to vector<5x256xf32>
    %117 = arith.mulf %116, %115 : vector<5x256xf32>
    %118 = arith.addf %113, %117 : vector<5x256xf32>
    %cst_65 = arith.constant 0.797884583 : f32
    %119 = vector.broadcast %cst_65 : f32 to vector<5x256xf32>
    %120 = arith.mulf %119, %118 : vector<5x256xf32>
    %121 = math.tanh %120 : vector<5x256xf32>
    %cst_66 = arith.constant 1.000000e+00 : f32
    %122 = vector.broadcast %cst_66 : f32 to vector<5x256xf32>
    %123 = arith.addf %122, %121 : vector<5x256xf32>
    %cst_67 = arith.constant 5.000000e-01 : f32
    %124 = vector.broadcast %cst_67 : f32 to vector<5x256xf32>
    %125 = arith.mulf %124, %123 : vector<5x256xf32>
    %126 = arith.mulf %113, %125 : vector<5x256xf32>
    %c0_68 = arith.constant 0 : index
    %c0_69 = arith.constant 0 : index
    %127 = vector.load %arg11[%c0_68, %c0_69] : memref<256x64xf32, #tpu.memory_space<vmem>>, vector<256x64xf32>
    %cst_70 = arith.constant dense<0.000000e+00> : vector<5x64xf32>
    %128 = tpu.matmul %126, %127, %cst_70 {dimension_numbers = #tpu.dot_dimension_numbers<[1], [0], [0], [1], [0, 0, 1, 1], [], []>} : vector<5x256xf32>, vector<256x64xf32>, vector<5x64xf32> -> vector<5x64xf32>
    %129 = arith.addf %84, %128 : vector<5x64xf32>
    %c0_71 = arith.constant 0 : index
    %c0_72 = arith.constant 0 : index
    %130 = vector.load %arg12[%c0_71, %c0_72] : memref<1x64xf32, #tpu.memory_space<vmem>>, vector<1x64xf32>
    %131 = vector.broadcast %130 : vector<1x64xf32> to vector<5x64xf32>
    %132 = arith.addf %129, %131 : vector<5x64xf32>
    %c0_73 = arith.constant 0 : index
    %c0_74 = arith.constant 0 : index
    %c0_75 = arith.constant 0 : index
    %133 = vector.load %arg13[%c0_73, %c0_74, %c0_75] : memref<1x5x64xf32, #tpu.memory_space<vmem>>, vector<1x5x64xf32>
    %134 = vector.shape_cast %133 : vector<1x5x64xf32> to vector<5x64xf32>
    %135 = vector.shape_cast %132 : vector<5x64xf32> to vector<1x5x64xf32>
    tpu.vector_store %arg13[%c0_73, %c0_74, %c0_75], %135 {strides = array<i32>} : memref<1x5x64xf32, #tpu.memory_space<vmem>>, vector<1x5x64xf32>,
    return
  }
  func.func @transform_0(%arg0: i32) -> (i32, i32, i32) {
    %c0_i32 = arith.constant 0 : i32
    %c0_i32_0 = arith.constant 0 : i32
    %c0_i32_1 = arith.constant 0 : i32
    return %arg0, %c0_i32, %c0_i32_0 : i32, i32, i32
  }
  func.func @transform_1(%arg0: i32) -> (i32, i32) {
    %c0_i32 = arith.constant 0 : i32
    %c0_i32_0 = arith.constant 0 : i32
    %c0_i32_1 = arith.constant 0 : i32
    return %c0_i32, %c0_i32_0 : i32, i32
  }
  func.func @transform_2(%arg0: i32) -> (i32, i32) {
    %c0_i32 = arith.constant 0 : i32
    %c0_i32_0 = arith.constant 0 : i32
    %c0_i32_1 = arith.constant 0 : i32
    return %c0_i32, %c0_i32_0 : i32, i32
  }
  func.func @transform_3(%arg0: i32) -> (i32, i32, i32) {
    %c0_i32 = arith.constant 0 : i32
    %c0_i32_0 = arith.constant 0 : i32
    %c0_i32_1 = arith.constant 0 : i32
    %c0_i32_2 = arith.constant 0 : i32
    return %c0_i32, %c0_i32_0, %c0_i32_1 : i32, i32, i32
  }
  func.func @transform_4(%arg0: i32) -> (i32, i32, i32) {
    %c0_i32 = arith.constant 0 : i32
    %c0_i32_0 = arith.constant 0 : i32
    %c0_i32_1 = arith.constant 0 : i32
    %c0_i32_2 = arith.constant 0 : i32
    return %c0_i32, %c0_i32_0, %c0_i32_1 : i32, i32, i32
  }
  func.func @transform_5(%arg0: i32) -> (i32, i32) {
    %c0_i32 = arith.constant 0 : i32
    %c0_i32_0 = arith.constant 0 : i32
    %c0_i32_1 = arith.constant 0 : i32
    return %c0_i32, %c0_i32_0 : i32, i32
  }
  func.func @transform_6(%arg0: i32) -> (i32, i32) {
    %c0_i32 = arith.constant 0 : i32
    %c0_i32_0 = arith.constant 0 : i32
    %c0_i32_1 = arith.constant 0 : i32
    return %c0_i32, %c0_i32_0 : i32, i32
  }
  func.func @transform_7(%arg0: i32) -> (i32, i32) {
    %c0_i32 = arith.constant 0 : i32
    %c0_i32_0 = arith.constant 0 : i32
    %c0_i32_1 = arith.constant 0 : i32
    return %c0_i32, %c0_i32_0 : i32, i32
  }
  func.func @transform_8(%arg0: i32) -> (i32, i32) {
    %c0_i32 = arith.constant 0 : i32
    %c0_i32_0 = arith.constant 0 : i32
    %c0_i32_1 = arith.constant 0 : i32
    return %c0_i32, %c0_i32_0 : i32, i32
  }
  func.func @transform_9(%arg0: i32) -> (i32, i32) {
    %c0_i32 = arith.constant 0 : i32
    %c0_i32_0 = arith.constant 0 : i32
    %c0_i32_1 = arith.constant 0 : i32
    return %c0_i32, %c0_i32_0 : i32, i32
  }
  func.func @transform_10(%arg0: i32) -> (i32, i32) {
    %c0_i32 = arith.constant 0 : i32
    %c0_i32_0 = arith.constant 0 : i32
    %c0_i32_1 = arith.constant 0 : i32
    return %c0_i32, %c0_i32_0 : i32, i32
  }
  func.func @transform_11(%arg0: i32) -> (i32, i32) {
    %c0_i32 = arith.constant 0 : i32
    %c0_i32_0 = arith.constant 0 : i32
    %c0_i32_1 = arith.constant 0 : i32
    return %c0_i32, %c0_i32_0 : i32, i32
  }
  func.func @transform_12(%arg0: i32) -> (i32, i32, i32) {
    %c0_i32 = arith.constant 0 : i32
    %c0_i32_0 = arith.constant 0 : i32
    %c0_i32_1 = arith.constant 0 : i32
    return %arg0, %c0_i32, %c0_i32_0 : i32, i32, i32
  }
}

module attributes {stable_mosaic.version = 11 : i64} {
  func.func @_dual_cross_kernel(%arg0: i32, %arg1: memref<1x1x32xf32, #tpu.memory_space<vmem>>, %arg2: memref<1x4x64xf32, #tpu.memory_space<vmem>>, %arg3: memref<1x1x64xf32, #tpu.memory_space<vmem>>, %arg4: memref<1x8x32xf32, #tpu.memory_space<vmem>>, %arg5: memref<32x64xf32, #tpu.memory_space<vmem>>, %arg6: memref<1x64xf32, #tpu.memory_space<vmem>>, %arg7: memref<1x64xf32, #tpu.memory_space<vmem>>, %arg8: memref<1x64xf32, #tpu.memory_space<vmem>>, %arg9: memref<2x64x16xf32, #tpu.memory_space<vmem>>, %arg10: memref<4x64x16xf32, #tpu.memory_space<vmem>>, %arg11: memref<2x16x64xf32, #tpu.memory_space<vmem>>, %arg12: memref<1x64xf32, #tpu.memory_space<vmem>>, %arg13: memref<64x32xf32, #tpu.memory_space<vmem>>, %arg14: memref<1x32xf32, #tpu.memory_space<vmem>>, %arg15: memref<64x32xf32, #tpu.memory_space<vmem>>, %arg16: memref<1x32xf32, #tpu.memory_space<vmem>>, %arg17: memref<1x32xf32, #tpu.memory_space<vmem>>, %arg18: memref<1x32xf32, #tpu.memory_space<vmem>>, %arg19: memref<2x32x16xf32, #tpu.memory_space<vmem>>, %arg20: memref<4x32x16xf32, #tpu.memory_space<vmem>>, %arg21: memref<2x16x32xf32, #tpu.memory_space<vmem>>, %arg22: memref<1x32xf32, #tpu.memory_space<vmem>>, %arg23: memref<32x64xf32, #tpu.memory_space<vmem>>, %arg24: memref<1x64xf32, #tpu.memory_space<vmem>>, %arg25: memref<1x1x32xf32, #tpu.memory_space<vmem>>, %arg26: memref<1x1x64xf32, #tpu.memory_space<vmem>>) attributes {dimension_semantics = [#tpu.dimension_semantics<parallel>], iteration_bounds = array<i64: 2>, scalar_prefetch = 0 : i64, scratch_operands = 0 : i64, tpu.core_type = #tpu.core_type<tc>, window_params = [{transform_indices = @transform_0, window_bounds = array<i64: 1, 1, 32>}, {transform_indices = @transform_1, window_bounds = array<i64: 1, 4, 64>}, {transform_indices = @transform_2, window_bounds = array<i64: 1, 1, 64>}, {transform_indices = @transform_3, window_bounds = array<i64: 1, 8, 32>}, {pipeline_mode = #tpu.pipeline_mode<synchronous>, transform_indices = @transform_4, window_bounds = array<i64: 32, 64>}, {pipeline_mode = #tpu.pipeline_mode<synchronous>, transform_indices = @transform_5, window_bounds = array<i64: 1, 64>}, {pipeline_mode = #tpu.pipeline_mode<synchronous>, transform_indices = @transform_6, window_bounds = array<i64: 1, 64>}, {pipeline_mode = #tpu.pipeline_mode<synchronous>, transform_indices = @transform_7, window_bounds = array<i64: 1, 64>}, {pipeline_mode = #tpu.pipeline_mode<synchronous>, transform_indices = @transform_8, window_bounds = array<i64: 2, 64, 16>}, {pipeline_mode = #tpu.pipeline_mode<synchronous>, transform_indices = @transform_9, window_bounds = array<i64: 4, 64, 16>}, {pipeline_mode = #tpu.pipeline_mode<synchronous>, transform_indices = @transform_10, window_bounds = array<i64: 2, 16, 64>}, {pipeline_mode = #tpu.pipeline_mode<synchronous>, transform_indices = @transform_11, window_bounds = array<i64: 1, 64>}, {pipeline_mode = #tpu.pipeline_mode<synchronous>, transform_indices = @transform_12, window_bounds = array<i64: 64, 32>}, {pipeline_mode = #tpu.pipeline_mode<synchronous>, transform_indices = @transform_13, window_bounds = array<i64: 1, 32>}, {pipeline_mode = #tpu.pipeline_mode<synchronous>, transform_indices = @transform_14, window_bounds = array<i64: 64, 32>}, {pipeline_mode = #tpu.pipeline_mode<synchronous>, transform_indices = @transform_15, window_bounds = array<i64: 1, 32>}, {pipeline_mode = #tpu.pipeline_mode<synchronous>, transform_indices = @transform_16, window_bounds = array<i64: 1, 32>}, {pipeline_mode = #tpu.pipeline_mode<synchronous>, transform_indices = @transform_17, window_bounds = array<i64: 1, 32>}, {pipeline_mode = #tpu.pipeline_mode<synchronous>, transform_indices = @transform_18, window_bounds = array<i64: 2, 32, 16>}, {pipeline_mode = #tpu.pipeline_mode<synchronous>, transform_indices = @transform_19, window_bounds = array<i64: 4, 32, 16>}, {pipeline_mode = #tpu.pipeline_mode<synchronous>, transform_indices = @transform_20, window_bounds = array<i64: 2, 16, 32>}, {pipeline_mode = #tpu.pipeline_mode<synchronous>, transform_indices = @transform_21, window_bounds = array<i64: 1, 32>}, {pipeline_mode = #tpu.pipeline_mode<synchronous>, transform_indices = @transform_22, window_bounds = array<i64: 32, 64>}, {pipeline_mode = #tpu.pipeline_mode<synchronous>, transform_indices = @transform_23, window_bounds = array<i64: 1, 64>}, {transform_indices = @transform_24, window_bounds = array<i64: 1, 1, 32>}, {transform_indices = @transform_25, window_bounds = array<i64: 1, 1, 64>}]} {
    %c0 = arith.constant 0 : index
    %c0_0 = arith.constant 0 : index
    %0 = vector.load %arg5[%c0, %c0_0] : memref<32x64xf32, #tpu.memory_space<vmem>>, vector<32x64xf32>
    %c0_1 = arith.constant 0 : index
    %c0_2 = arith.constant 0 : index
    %1 = vector.load %arg6[%c0_1, %c0_2] : memref<1x64xf32, #tpu.memory_space<vmem>>, vector<1x64xf32>
    %c0_3 = arith.constant 0 : index
    %c0_4 = arith.constant 0 : index
    %2 = vector.load %arg7[%c0_3, %c0_4] : memref<1x64xf32, #tpu.memory_space<vmem>>, vector<1x64xf32>
    %c0_5 = arith.constant 0 : index
    %c0_6 = arith.constant 0 : index
    %3 = vector.load %arg8[%c0_5, %c0_6] : memref<1x64xf32, #tpu.memory_space<vmem>>, vector<1x64xf32>
    %c0_7 = arith.constant 0 : index
    %c0_8 = arith.constant 0 : index
    %c0_9 = arith.constant 0 : index
    %4 = vector.load %arg9[%c0_7, %c0_8, %c0_9] : memref<2x64x16xf32, #tpu.memory_space<vmem>>, vector<2x64x16xf32>
    %c0_10 = arith.constant 0 : index
    %c0_11 = arith.constant 0 : index
    %c0_12 = arith.constant 0 : index
    %5 = vector.load %arg10[%c0_10, %c0_11, %c0_12] : memref<4x64x16xf32, #tpu.memory_space<vmem>>, vector<4x64x16xf32>
    %c0_13 = arith.constant 0 : index
    %c0_14 = arith.constant 0 : index
    %c0_15 = arith.constant 0 : index
    %6 = vector.load %arg11[%c0_13, %c0_14, %c0_15] : memref<2x16x64xf32, #tpu.memory_space<vmem>>, vector<2x16x64xf32>
    %c0_16 = arith.constant 0 : index
    %c0_17 = arith.constant 0 : index
    %7 = vector.load %arg12[%c0_16, %c0_17] : memref<1x64xf32, #tpu.memory_space<vmem>>, vector<1x64xf32>
    %c0_18 = arith.constant 0 : index
    %c0_19 = arith.constant 0 : index
    %8 = vector.load %arg13[%c0_18, %c0_19] : memref<64x32xf32, #tpu.memory_space<vmem>>, vector<64x32xf32>
    %c0_20 = arith.constant 0 : index
    %c0_21 = arith.constant 0 : index
    %9 = vector.load %arg14[%c0_20, %c0_21] : memref<1x32xf32, #tpu.memory_space<vmem>>, vector<1x32xf32>
    %c0_22 = arith.constant 0 : index
    %c0_23 = arith.constant 0 : index
    %10 = vector.load %arg15[%c0_22, %c0_23] : memref<64x32xf32, #tpu.memory_space<vmem>>, vector<64x32xf32>
    %c0_24 = arith.constant 0 : index
    %c0_25 = arith.constant 0 : index
    %11 = vector.load %arg16[%c0_24, %c0_25] : memref<1x32xf32, #tpu.memory_space<vmem>>, vector<1x32xf32>
    %c0_26 = arith.constant 0 : index
    %c0_27 = arith.constant 0 : index
    %12 = vector.load %arg17[%c0_26, %c0_27] : memref<1x32xf32, #tpu.memory_space<vmem>>, vector<1x32xf32>
    %c0_28 = arith.constant 0 : index
    %c0_29 = arith.constant 0 : index
    %13 = vector.load %arg18[%c0_28, %c0_29] : memref<1x32xf32, #tpu.memory_space<vmem>>, vector<1x32xf32>
    %c0_30 = arith.constant 0 : index
    %c0_31 = arith.constant 0 : index
    %c0_32 = arith.constant 0 : index
    %14 = vector.load %arg19[%c0_30, %c0_31, %c0_32] : memref<2x32x16xf32, #tpu.memory_space<vmem>>, vector<2x32x16xf32>
    %c0_33 = arith.constant 0 : index
    %c0_34 = arith.constant 0 : index
    %c0_35 = arith.constant 0 : index
    %15 = vector.load %arg20[%c0_33, %c0_34, %c0_35] : memref<4x32x16xf32, #tpu.memory_space<vmem>>, vector<4x32x16xf32>
    %c0_36 = arith.constant 0 : index
    %c0_37 = arith.constant 0 : index
    %c0_38 = arith.constant 0 : index
    %16 = vector.load %arg21[%c0_36, %c0_37, %c0_38] : memref<2x16x32xf32, #tpu.memory_space<vmem>>, vector<2x16x32xf32>
    %c0_39 = arith.constant 0 : index
    %c0_40 = arith.constant 0 : index
    %17 = vector.load %arg22[%c0_39, %c0_40] : memref<1x32xf32, #tpu.memory_space<vmem>>, vector<1x32xf32>
    %c0_41 = arith.constant 0 : index
    %c0_42 = arith.constant 0 : index
    %18 = vector.load %arg23[%c0_41, %c0_42] : memref<32x64xf32, #tpu.memory_space<vmem>>, vector<32x64xf32>
    %c0_43 = arith.constant 0 : index
    %c0_44 = arith.constant 0 : index
    %19 = vector.load %arg24[%c0_43, %c0_44] : memref<1x64xf32, #tpu.memory_space<vmem>>, vector<1x64xf32>
    %c0_45 = arith.constant 0 : index
    %c0_46 = arith.constant 0 : index
    %c0_47 = arith.constant 0 : index
    %20 = vector.load %arg1[%c0_45, %c0_46, %c0_47] : memref<1x1x32xf32, #tpu.memory_space<vmem>>, vector<1x1x32xf32>
    %21 = vector.shape_cast %20 : vector<1x1x32xf32> to vector<1x32xf32>
    %c0_48 = arith.constant 0 : index
    %c0_49 = arith.constant 0 : index
    %c0_50 = arith.constant 0 : index
    %22 = vector.load %arg2[%c0_48, %c0_49, %c0_50] : memref<1x4x64xf32, #tpu.memory_space<vmem>>, vector<1x4x64xf32>
    %23 = vector.shape_cast %22 : vector<1x4x64xf32> to vector<4x64xf32>
    %c0_51 = arith.constant 0 : index
    %c0_52 = arith.constant 0 : index
    %c0_53 = arith.constant 0 : index
    %24 = vector.load %arg3[%c0_51, %c0_52, %c0_53] : memref<1x1x64xf32, #tpu.memory_space<vmem>>, vector<1x1x64xf32>
    %25 = vector.shape_cast %24 : vector<1x1x64xf32> to vector<1x64xf32>
    %c0_54 = arith.constant 0 : index
    %c0_55 = arith.constant 0 : index
    %c0_56 = arith.constant 0 : index
    %26 = vector.load %arg4[%c0_54, %c0_55, %c0_56] : memref<1x8x32xf32, #tpu.memory_space<vmem>>, vector<1x8x32xf32>
    %27 = vector.shape_cast %26 : vector<1x8x32xf32> to vector<8x32xf32>
    %cst = arith.constant dense<0.000000e+00> : vector<1x64xf32>
    %28 = tpu.matmul %21, %0, %cst {dimension_numbers = #tpu.dot_dimension_numbers<[1], [0], [0], [1], [0, 0, 1, 1], [], []>} : vector<1x32xf32>, vector<32x64xf32>, vector<1x64xf32> -> vector<1x64xf32>
    %29 = arith.addf %28, %1 : vector<1x64xf32>
    %cst_57 = arith.constant dense<0.000000e+00> : vector<1xf32>
    %30 = vector.multi_reduction <add>, %29, %cst_57 [1] : vector<1x64xf32> to vector<1xf32>
    %31 = vector.shape_cast %30 : vector<1xf32> to vector<1x1xf32>
    %cst_58 = arith.constant 6.400000e+01 : f32
    %32 = vector.broadcast %cst_58 : f32 to vector<1x1xf32>
    %33 = arith.divf %31, %32 : vector<1x1xf32>
    %34 = vector.broadcast %33 : vector<1x1xf32> to vector<1x64xf32>
    %35 = arith.subf %29, %34 : vector<1x64xf32>
    %36 = arith.mulf %35, %35 : vector<1x64xf32>
    %cst_59 = arith.constant dense<0.000000e+00> : vector<1xf32>
    %37 = vector.multi_reduction <add>, %36, %cst_59 [1] : vector<1x64xf32> to vector<1xf32>
    %38 = vector.shape_cast %37 : vector<1xf32> to vector<1x1xf32>
    %cst_60 = arith.constant 6.400000e+01 : f32
    %39 = vector.broadcast %cst_60 : f32 to vector<1x1xf32>
    %40 = arith.divf %38, %39 : vector<1x1xf32>
    %41 = vector.broadcast %33 : vector<1x1xf32> to vector<1x64xf32>
    %42 = arith.subf %29, %41 : vector<1x64xf32>
    %cst_61 = arith.constant 9.99999974E-6 : f32
    %43 = vector.broadcast %cst_61 : f32 to vector<1x1xf32>
    %44 = arith.addf %40, %43 : vector<1x1xf32>
    %45 = math.rsqrt %44 : vector<1x1xf32>
    %46 = vector.broadcast %45 : vector<1x1xf32> to vector<1x64xf32>
    %47 = arith.mulf %42, %46 : vector<1x64xf32>
    %48 = arith.mulf %47, %2 : vector<1x64xf32>
    %49 = arith.addf %48, %3 : vector<1x64xf32>
    %cst_62 = arith.constant 0.000000e+00 : f32
    %50 = vector.broadcast %cst_62 : f32 to vector<1x64xf32>
    %51 = vector.extract_strided_slice %4 {offsets = [0, 0, 0], sizes = [1, 64, 16], strides = [1, 1, 1]} : vector<2x64x16xf32> to vector<1x64x16xf32>
    %52 = vector.shape_cast %51 : vector<1x64x16xf32> to vector<64x16xf32>
    %cst_63 = arith.constant dense<0.000000e+00> : vector<1x16xf32>
    %53 = tpu.matmul %49, %52, %cst_63 {dimension_numbers = #tpu.dot_dimension_numbers<[1], [0], [0], [1], [0, 0, 1, 1], [], []>} : vector<1x64xf32>, vector<64x16xf32>, vector<1x16xf32> -> vector<1x16xf32>
    %cst_64 = arith.constant 2.500000e-01 : f32
    %54 = vector.broadcast %cst_64 : f32 to vector<1x16xf32>
    %55 = arith.mulf %53, %54 : vector<1x16xf32>
    %56 = vector.extract_strided_slice %5 {offsets = [0, 0, 0], sizes = [1, 64, 16], strides = [1, 1, 1]} : vector<4x64x16xf32> to vector<1x64x16xf32>
    %57 = vector.shape_cast %56 : vector<1x64x16xf32> to vector<64x16xf32>
    %cst_65 = arith.constant dense<0.000000e+00> : vector<1x16xf32>
    %58 = tpu.matmul %49, %57, %cst_65 {dimension_numbers = #tpu.dot_dimension_numbers<[1], [0], [0], [1], [0, 0, 1, 1], [], []>} : vector<1x64xf32>, vector<64x16xf32>, vector<1x16xf32> -> vector<1x16xf32>
    %59 = vector.extract_strided_slice %5 {offsets = [2, 0, 0], sizes = [1, 64, 16], strides = [1, 1, 1]} : vector<4x64x16xf32> to vector<1x64x16xf32>
    %60 = vector.shape_cast %59 : vector<1x64x16xf32> to vector<64x16xf32>
    %cst_66 = arith.constant dense<0.000000e+00> : vector<1x16xf32>
    %61 = tpu.matmul %49, %60, %cst_66 {dimension_numbers = #tpu.dot_dimension_numbers<[1], [0], [0], [1], [0, 0, 1, 1], [], []>} : vector<1x64xf32>, vector<64x16xf32>, vector<1x16xf32> -> vector<1x16xf32>
    %62 = vector.extract_strided_slice %5 {offsets = [0, 0, 0], sizes = [1, 64, 16], strides = [1, 1, 1]} : vector<4x64x16xf32> to vector<1x64x16xf32>
    %63 = vector.shape_cast %62 : vector<1x64x16xf32> to vector<64x16xf32>
    %cst_67 = arith.constant dense<0.000000e+00> : vector<4x16xf32>
    %64 = tpu.matmul %23, %63, %cst_67 {dimension_numbers = #tpu.dot_dimension_numbers<[1], [0], [0], [1], [0, 0, 1, 1], [], []>} : vector<4x64xf32>, vector<64x16xf32>, vector<4x16xf32> -> vector<4x16xf32>
    %65 = vector.extract_strided_slice %5 {offsets = [2, 0, 0], sizes = [1, 64, 16], strides = [1, 1, 1]} : vector<4x64x16xf32> to vector<1x64x16xf32>
    %66 = vector.shape_cast %65 : vector<1x64x16xf32> to vector<64x16xf32>
    %cst_68 = arith.constant dense<0.000000e+00> : vector<4x16xf32>
    %67 = tpu.matmul %23, %66, %cst_68 {dimension_numbers = #tpu.dot_dimension_numbers<[1], [0], [0], [1], [0, 0, 1, 1], [], []>} : vector<4x64xf32>, vector<64x16xf32>, vector<4x16xf32> -> vector<4x16xf32>
    %68 = arith.mulf %55, %58 : vector<1x16xf32>
    %cst_69 = arith.constant dense<0.000000e+00> : vector<1xf32>
    %69 = vector.multi_reduction <add>, %68, %cst_69 [1] : vector<1x16xf32> to vector<1xf32>
    %70 = vector.shape_cast %69 : vector<1xf32> to vector<1x1xf32>
    %cst_70 = arith.constant dense<0.000000e+00> : vector<1x4xf32>
    %71 = tpu.matmul %55, %64, %cst_70 {dimension_numbers = #tpu.dot_dimension_numbers<[1], [1], [0], [0], [0, 0, 1, 0], [], []>} : vector<1x16xf32>, vector<4x16xf32>, vector<1x4xf32> -> vector<1x4xf32>
    %cst_71 = arith.constant dense<0xFF800000> : vector<1xf32>
    %72 = vector.multi_reduction <maximumf>, %71, %cst_71 [1] : vector<1x4xf32> to vector<1xf32>
    %73 = vector.shape_cast %72 : vector<1xf32> to vector<1x1xf32>
    %74 = arith.maximumf %70, %73 : vector<1x1xf32>
    %75 = arith.subf %70, %74 : vector<1x1xf32>
    %76 = math.exp %75 : vector<1x1xf32>
    %77 = vector.broadcast %74 : vector<1x1xf32> to vector<1x4xf32>
    %78 = arith.subf %71, %77 : vector<1x4xf32>
    %79 = math.exp %78 : vector<1x4xf32>
    %cst_72 = arith.constant dense<0.000000e+00> : vector<1xf32>
    %80 = vector.multi_reduction <add>, %79, %cst_72 [1] : vector<1x4xf32> to vector<1xf32>
    %81 = vector.shape_cast %80 : vector<1xf32> to vector<1x1xf32>
    %82 = arith.addf %76, %81 : vector<1x1xf32>
    %83 = tpu.reciprocal %82 {approx = true} : vector<1x1xf32> -> vector<1x1xf32>
    %84 = vector.broadcast %76 : vector<1x1xf32> to vector<1x16xf32>
    %85 = arith.mulf %84, %61 : vector<1x16xf32>
    %cst_73 = arith.constant dense<0.000000e+00> : vector<1x16xf32>
    %86 = tpu.matmul %79, %67, %cst_73 {dimension_numbers = #tpu.dot_dimension_numbers<[1], [0], [0], [1], [0, 0, 1, 1], [], []>} : vector<1x4xf32>, vector<4x16xf32>, vector<1x16xf32> -> vector<1x16xf32>
    %87 = arith.addf %85, %86 : vector<1x16xf32>
    %88 = vector.broadcast %83 : vector<1x1xf32> to vector<1x16xf32>
    %89 = arith.mulf %87, %88 : vector<1x16xf32>
    %90 = vector.extract_strided_slice %6 {offsets = [0, 0, 0], sizes = [1, 16, 64], strides = [1, 1, 1]} : vector<2x16x64xf32> to vector<1x16x64xf32>
    %91 = vector.shape_cast %90 : vector<1x16x64xf32> to vector<16x64xf32>
    %cst_74 = arith.constant dense<0.000000e+00> : vector<1x64xf32>
    %92 = tpu.matmul %89, %91, %cst_74 {dimension_numbers = #tpu.dot_dimension_numbers<[1], [0], [0], [1], [0, 0, 1, 1], [], []>} : vector<1x16xf32>, vector<16x64xf32>, vector<1x64xf32> -> vector<1x64xf32>
    %93 = arith.addf %50, %92 : vector<1x64xf32>
    %94 = vector.extract_strided_slice %4 {offsets = [1, 0, 0], sizes = [1, 64, 16], strides = [1, 1, 1]} : vector<2x64x16xf32> to vector<1x64x16xf32>
    %95 = vector.shape_cast %94 : vector<1x64x16xf32> to vector<64x16xf32>
    %cst_75 = arith.constant dense<0.000000e+00> : vector<1x16xf32>
    %96 = tpu.matmul %49, %95, %cst_75 {dimension_numbers = #tpu.dot_dimension_numbers<[1], [0], [0], [1], [0, 0, 1, 1], [], []>} : vector<1x64xf32>, vector<64x16xf32>, vector<1x16xf32> -> vector<1x16xf32>
    %cst_76 = arith.constant 2.500000e-01 : f32
    %97 = vector.broadcast %cst_76 : f32 to vector<1x16xf32>
    %98 = arith.mulf %96, %97 : vector<1x16xf32>
    %99 = vector.extract_strided_slice %5 {offsets = [1, 0, 0], sizes = [1, 64, 16], strides = [1, 1, 1]} : vector<4x64x16xf32> to vector<1x64x16xf32>
    %100 = vector.shape_cast %99 : vector<1x64x16xf32> to vector<64x16xf32>
    %cst_77 = arith.constant dense<0.000000e+00> : vector<1x16xf32>
    %101 = tpu.matmul %49, %100, %cst_77 {dimension_numbers = #tpu.dot_dimension_numbers<[1], [0], [0], [1], [0, 0, 1, 1], [], []>} : vector<1x64xf32>, vector<64x16xf32>, vector<1x16xf32> -> vector<1x16xf32>
    %102 = vector.extract_strided_slice %5 {offsets = [3, 0, 0], sizes = [1, 64, 16], strides = [1, 1, 1]} : vector<4x64x16xf32> to vector<1x64x16xf32>
    %103 = vector.shape_cast %102 : vector<1x64x16xf32> to vector<64x16xf32>
    %cst_78 = arith.constant dense<0.000000e+00> : vector<1x16xf32>
    %104 = tpu.matmul %49, %103, %cst_78 {dimension_numbers = #tpu.dot_dimension_numbers<[1], [0], [0], [1], [0, 0, 1, 1], [], []>} : vector<1x64xf32>, vector<64x16xf32>, vector<1x16xf32> -> vector<1x16xf32>
    %105 = vector.extract_strided_slice %5 {offsets = [1, 0, 0], sizes = [1, 64, 16], strides = [1, 1, 1]} : vector<4x64x16xf32> to vector<1x64x16xf32>
    %106 = vector.shape_cast %105 : vector<1x64x16xf32> to vector<64x16xf32>
    %cst_79 = arith.constant dense<0.000000e+00> : vector<4x16xf32>
    %107 = tpu.matmul %23, %106, %cst_79 {dimension_numbers = #tpu.dot_dimension_numbers<[1], [0], [0], [1], [0, 0, 1, 1], [], []>} : vector<4x64xf32>, vector<64x16xf32>, vector<4x16xf32> -> vector<4x16xf32>
    %108 = vector.extract_strided_slice %5 {offsets = [3, 0, 0], sizes = [1, 64, 16], strides = [1, 1, 1]} : vector<4x64x16xf32> to vector<1x64x16xf32>
    %109 = vector.shape_cast %108 : vector<1x64x16xf32> to vector<64x16xf32>
    %cst_80 = arith.constant dense<0.000000e+00> : vector<4x16xf32>
    %110 = tpu.matmul %23, %109, %cst_80 {dimension_numbers = #tpu.dot_dimension_numbers<[1], [0], [0], [1], [0, 0, 1, 1], [], []>} : vector<4x64xf32>, vector<64x16xf32>, vector<4x16xf32> -> vector<4x16xf32>
    %111 = arith.mulf %98, %101 : vector<1x16xf32>
    %cst_81 = arith.constant dense<0.000000e+00> : vector<1xf32>
    %112 = vector.multi_reduction <add>, %111, %cst_81 [1] : vector<1x16xf32> to vector<1xf32>
    %113 = vector.shape_cast %112 : vector<1xf32> to vector<1x1xf32>
    %cst_82 = arith.constant dense<0.000000e+00> : vector<1x4xf32>
    %114 = tpu.matmul %98, %107, %cst_82 {dimension_numbers = #tpu.dot_dimension_numbers<[1], [1], [0], [0], [0, 0, 1, 0], [], []>} : vector<1x16xf32>, vector<4x16xf32>, vector<1x4xf32> -> vector<1x4xf32>
    %cst_83 = arith.constant dense<0xFF800000> : vector<1xf32>
    %115 = vector.multi_reduction <maximumf>, %114, %cst_83 [1] : vector<1x4xf32> to vector<1xf32>
    %116 = vector.shape_cast %115 : vector<1xf32> to vector<1x1xf32>
    %117 = arith.maximumf %113, %116 : vector<1x1xf32>
    %118 = arith.subf %113, %117 : vector<1x1xf32>
    %119 = math.exp %118 : vector<1x1xf32>
    %120 = vector.broadcast %117 : vector<1x1xf32> to vector<1x4xf32>
    %121 = arith.subf %114, %120 : vector<1x4xf32>
    %122 = math.exp %121 : vector<1x4xf32>
    %cst_84 = arith.constant dense<0.000000e+00> : vector<1xf32>
    %123 = vector.multi_reduction <add>, %122, %cst_84 [1] : vector<1x4xf32> to vector<1xf32>
    %124 = vector.shape_cast %123 : vector<1xf32> to vector<1x1xf32>
    %125 = arith.addf %119, %124 : vector<1x1xf32>
    %126 = tpu.reciprocal %125 {approx = true} : vector<1x1xf32> -> vector<1x1xf32>
    %127 = vector.broadcast %119 : vector<1x1xf32> to vector<1x16xf32>
    %128 = arith.mulf %127, %104 : vector<1x16xf32>
    %cst_85 = arith.constant dense<0.000000e+00> : vector<1x16xf32>
    %129 = tpu.matmul %122, %110, %cst_85 {dimension_numbers = #tpu.dot_dimension_numbers<[1], [0], [0], [1], [0, 0, 1, 1], [], []>} : vector<1x4xf32>, vector<4x16xf32>, vector<1x16xf32> -> vector<1x16xf32>
    %130 = arith.addf %128, %129 : vector<1x16xf32>
    %131 = vector.broadcast %126 : vector<1x1xf32> to vector<1x16xf32>
    %132 = arith.mulf %130, %131 : vector<1x16xf32>
    %133 = vector.extract_strided_slice %6 {offsets = [1, 0, 0], sizes = [1, 16, 64], strides = [1, 1, 1]} : vector<2x16x64xf32> to vector<1x16x64xf32>
    %134 = vector.shape_cast %133 : vector<1x16x64xf32> to vector<16x64xf32>
    %cst_86 = arith.constant dense<0.000000e+00> : vector<1x64xf32>
    %135 = tpu.matmul %132, %134, %cst_86 {dimension_numbers = #tpu.dot_dimension_numbers<[1], [0], [0], [1], [0, 0, 1, 1], [], []>} : vector<1x16xf32>, vector<16x64xf32>, vector<1x64xf32> -> vector<1x64xf32>
    %136 = arith.addf %93, %135 : vector<1x64xf32>
    %137 = arith.addf %136, %7 : vector<1x64xf32>
    %cst_87 = arith.constant dense<0.000000e+00> : vector<1x32xf32>
    %138 = tpu.matmul %137, %8, %cst_87 {dimension_numbers = #tpu.dot_dimension_numbers<[1], [0], [0], [1], [0, 0, 1, 1], [], []>} : vector<1x64xf32>, vector<64x32xf32>, vector<1x32xf32> -> vector<1x32xf32>
    %139 = arith.addf %21, %138 : vector<1x32xf32>
    %140 = arith.addf %139, %9 : vector<1x32xf32>
    %cst_88 = arith.constant dense<0.000000e+00> : vector<1x32xf32>
    %141 = tpu.matmul %25, %10, %cst_88 {dimension_numbers = #tpu.dot_dimension_numbers<[1], [0], [0], [1], [0, 0, 1, 1], [], []>} : vector<1x64xf32>, vector<64x32xf32>, vector<1x32xf32> -> vector<1x32xf32>
    %142 = arith.addf %141, %11 : vector<1x32xf32>
    %cst_89 = arith.constant dense<0.000000e+00> : vector<1xf32>
    %143 = vector.multi_reduction <add>, %142, %cst_89 [1] : vector<1x32xf32> to vector<1xf32>
    %144 = vector.shape_cast %143 : vector<1xf32> to vector<1x1xf32>
    %cst_90 = arith.constant 3.200000e+01 : f32
    %145 = vector.broadcast %cst_90 : f32 to vector<1x1xf32>
    %146 = arith.divf %144, %145 : vector<1x1xf32>
    %147 = vector.broadcast %146 : vector<1x1xf32> to vector<1x32xf32>
    %148 = arith.subf %142, %147 : vector<1x32xf32>
    %149 = arith.mulf %148, %148 : vector<1x32xf32>
    %cst_91 = arith.constant dense<0.000000e+00> : vector<1xf32>
    %150 = vector.multi_reduction <add>, %149, %cst_91 [1] : vector<1x32xf32> to vector<1xf32>
    %151 = vector.shape_cast %150 : vector<1xf32> to vector<1x1xf32>
    %cst_92 = arith.constant 3.200000e+01 : f32
    %152 = vector.broadcast %cst_92 : f32 to vector<1x1xf32>
    %153 = arith.divf %151, %152 : vector<1x1xf32>
    %154 = vector.broadcast %146 : vector<1x1xf32> to vector<1x32xf32>
    %155 = arith.subf %142, %154 : vector<1x32xf32>
    %cst_93 = arith.constant 9.99999974E-6 : f32
    %156 = vector.broadcast %cst_93 : f32 to vector<1x1xf32>
    %157 = arith.addf %153, %156 : vector<1x1xf32>
    %158 = math.rsqrt %157 : vector<1x1xf32>
    %159 = vector.broadcast %158 : vector<1x1xf32> to vector<1x32xf32>
    %160 = arith.mulf %155, %159 : vector<1x32xf32>
    %161 = arith.mulf %160, %12 : vector<1x32xf32>
    %162 = arith.addf %161, %13 : vector<1x32xf32>
    %cst_94 = arith.constant 0.000000e+00 : f32
    %163 = vector.broadcast %cst_94 : f32 to vector<1x32xf32>
    %164 = vector.extract_strided_slice %14 {offsets = [0, 0, 0], sizes = [1, 32, 16], strides = [1, 1, 1]} : vector<2x32x16xf32> to vector<1x32x16xf32>
    %165 = vector.shape_cast %164 : vector<1x32x16xf32> to vector<32x16xf32>
    %cst_95 = arith.constant dense<0.000000e+00> : vector<1x16xf32>
    %166 = tpu.matmul %162, %165, %cst_95 {dimension_numbers = #tpu.dot_dimension_numbers<[1], [0], [0], [1], [0, 0, 1, 1], [], []>} : vector<1x32xf32>, vector<32x16xf32>, vector<1x16xf32> -> vector<1x16xf32>
    %cst_96 = arith.constant 2.500000e-01 : f32
    %167 = vector.broadcast %cst_96 : f32 to vector<1x16xf32>
    %168 = arith.mulf %166, %167 : vector<1x16xf32>
    %169 = vector.extract_strided_slice %15 {offsets = [0, 0, 0], sizes = [1, 32, 16], strides = [1, 1, 1]} : vector<4x32x16xf32> to vector<1x32x16xf32>
    %170 = vector.shape_cast %169 : vector<1x32x16xf32> to vector<32x16xf32>
    %cst_97 = arith.constant dense<0.000000e+00> : vector<1x16xf32>
    %171 = tpu.matmul %162, %170, %cst_97 {dimension_numbers = #tpu.dot_dimension_numbers<[1], [0], [0], [1], [0, 0, 1, 1], [], []>} : vector<1x32xf32>, vector<32x16xf32>, vector<1x16xf32> -> vector<1x16xf32>
    %172 = vector.extract_strided_slice %15 {offsets = [2, 0, 0], sizes = [1, 32, 16], strides = [1, 1, 1]} : vector<4x32x16xf32> to vector<1x32x16xf32>
    %173 = vector.shape_cast %172 : vector<1x32x16xf32> to vector<32x16xf32>
    %cst_98 = arith.constant dense<0.000000e+00> : vector<1x16xf32>
    %174 = tpu.matmul %162, %173, %cst_98 {dimension_numbers = #tpu.dot_dimension_numbers<[1], [0], [0], [1], [0, 0, 1, 1], [], []>} : vector<1x32xf32>, vector<32x16xf32>, vector<1x16xf32> -> vector<1x16xf32>
    %175 = vector.extract_strided_slice %15 {offsets = [0, 0, 0], sizes = [1, 32, 16], strides = [1, 1, 1]} : vector<4x32x16xf32> to vector<1x32x16xf32>
    %176 = vector.shape_cast %175 : vector<1x32x16xf32> to vector<32x16xf32>
    %cst_99 = arith.constant dense<0.000000e+00> : vector<8x16xf32>
    %177 = tpu.matmul %27, %176, %cst_99 {dimension_numbers = #tpu.dot_dimension_numbers<[1], [0], [0], [1], [0, 0, 1, 1], [], []>} : vector<8x32xf32>, vector<32x16xf32>, vector<8x16xf32> -> vector<8x16xf32>
    %178 = vector.extract_strided_slice %15 {offsets = [2, 0, 0], sizes = [1, 32, 16], strides = [1, 1, 1]} : vector<4x32x16xf32> to vector<1x32x16xf32>
    %179 = vector.shape_cast %178 : vector<1x32x16xf32> to vector<32x16xf32>
    %cst_100 = arith.constant dense<0.000000e+00> : vector<8x16xf32>
    %180 = tpu.matmul %27, %179, %cst_100 {dimension_numbers = #tpu.dot_dimension_numbers<[1], [0], [0], [1], [0, 0, 1, 1], [], []>} : vector<8x32xf32>, vector<32x16xf32>, vector<8x16xf32> -> vector<8x16xf32>
    %181 = arith.mulf %168, %171 : vector<1x16xf32>
    %cst_101 = arith.constant dense<0.000000e+00> : vector<1xf32>
    %182 = vector.multi_reduction <add>, %181, %cst_101 [1] : vector<1x16xf32> to vector<1xf32>
    %183 = vector.shape_cast %182 : vector<1xf32> to vector<1x1xf32>
    %cst_102 = arith.constant dense<0.000000e+00> : vector<1x8xf32>
    %184 = tpu.matmul %168, %177, %cst_102 {dimension_numbers = #tpu.dot_dimension_numbers<[1], [1], [0], [0], [0, 0, 1, 0], [], []>} : vector<1x16xf32>, vector<8x16xf32>, vector<1x8xf32> -> vector<1x8xf32>
    %cst_103 = arith.constant dense<0xFF800000> : vector<1xf32>
    %185 = vector.multi_reduction <maximumf>, %184, %cst_103 [1] : vector<1x8xf32> to vector<1xf32>
    %186 = vector.shape_cast %185 : vector<1xf32> to vector<1x1xf32>
    %187 = arith.maximumf %183, %186 : vector<1x1xf32>
    %188 = arith.subf %183, %187 : vector<1x1xf32>
    %189 = math.exp %188 : vector<1x1xf32>
    %190 = vector.broadcast %187 : vector<1x1xf32> to vector<1x8xf32>
    %191 = arith.subf %184, %190 : vector<1x8xf32>
    %192 = math.exp %191 : vector<1x8xf32>
    %cst_104 = arith.constant dense<0.000000e+00> : vector<1xf32>
    %193 = vector.multi_reduction <add>, %192, %cst_104 [1] : vector<1x8xf32> to vector<1xf32>
    %194 = vector.shape_cast %193 : vector<1xf32> to vector<1x1xf32>
    %195 = arith.addf %189, %194 : vector<1x1xf32>
    %196 = tpu.reciprocal %195 {approx = true} : vector<1x1xf32> -> vector<1x1xf32>
    %197 = vector.broadcast %189 : vector<1x1xf32> to vector<1x16xf32>
    %198 = arith.mulf %197, %174 : vector<1x16xf32>
    %cst_105 = arith.constant dense<0.000000e+00> : vector<1x16xf32>
    %199 = tpu.matmul %192, %180, %cst_105 {dimension_numbers = #tpu.dot_dimension_numbers<[1], [0], [0], [1], [0, 0, 1, 1], [], []>} : vector<1x8xf32>, vector<8x16xf32>, vector<1x16xf32> -> vector<1x16xf32>
    %200 = arith.addf %198, %199 : vector<1x16xf32>
    %201 = vector.broadcast %196 : vector<1x1xf32> to vector<1x16xf32>
    %202 = arith.mulf %200, %201 : vector<1x16xf32>
    %203 = vector.extract_strided_slice %16 {offsets = [0, 0, 0], sizes = [1, 16, 32], strides = [1, 1, 1]} : vector<2x16x32xf32> to vector<1x16x32xf32>
    %204 = vector.shape_cast %203 : vector<1x16x32xf32> to vector<16x32xf32>
    %cst_106 = arith.constant dense<0.000000e+00> : vector<1x32xf32>
    %205 = tpu.matmul %202, %204, %cst_106 {dimension_numbers = #tpu.dot_dimension_numbers<[1], [0], [0], [1], [0, 0, 1, 1], [], []>} : vector<1x16xf32>, vector<16x32xf32>, vector<1x32xf32> -> vector<1x32xf32>
    %206 = arith.addf %163, %205 : vector<1x32xf32>
    %207 = vector.extract_strided_slice %14 {offsets = [1, 0, 0], sizes = [1, 32, 16], strides = [1, 1, 1]} : vector<2x32x16xf32> to vector<1x32x16xf32>
    %208 = vector.shape_cast %207 : vector<1x32x16xf32> to vector<32x16xf32>
    %cst_107 = arith.constant dense<0.000000e+00> : vector<1x16xf32>
    %209 = tpu.matmul %162, %208, %cst_107 {dimension_numbers = #tpu.dot_dimension_numbers<[1], [0], [0], [1], [0, 0, 1, 1], [], []>} : vector<1x32xf32>, vector<32x16xf32>, vector<1x16xf32> -> vector<1x16xf32>
    %cst_108 = arith.constant 2.500000e-01 : f32
    %210 = vector.broadcast %cst_108 : f32 to vector<1x16xf32>
    %211 = arith.mulf %209, %210 : vector<1x16xf32>
    %212 = vector.extract_strided_slice %15 {offsets = [1, 0, 0], sizes = [1, 32, 16], strides = [1, 1, 1]} : vector<4x32x16xf32> to vector<1x32x16xf32>
    %213 = vector.shape_cast %212 : vector<1x32x16xf32> to vector<32x16xf32>
    %cst_109 = arith.constant dense<0.000000e+00> : vector<1x16xf32>
    %214 = tpu.matmul %162, %213, %cst_109 {dimension_numbers = #tpu.dot_dimension_numbers<[1], [0], [0], [1], [0, 0, 1, 1], [], []>} : vector<1x32xf32>, vector<32x16xf32>, vector<1x16xf32> -> vector<1x16xf32>
    %215 = vector.extract_strided_slice %15 {offsets = [3, 0, 0], sizes = [1, 32, 16], strides = [1, 1, 1]} : vector<4x32x16xf32> to vector<1x32x16xf32>
    %216 = vector.shape_cast %215 : vector<1x32x16xf32> to vector<32x16xf32>
    %cst_110 = arith.constant dense<0.000000e+00> : vector<1x16xf32>
    %217 = tpu.matmul %162, %216, %cst_110 {dimension_numbers = #tpu.dot_dimension_numbers<[1], [0], [0], [1], [0, 0, 1, 1], [], []>} : vector<1x32xf32>, vector<32x16xf32>, vector<1x16xf32> -> vector<1x16xf32>
    %218 = vector.extract_strided_slice %15 {offsets = [1, 0, 0], sizes = [1, 32, 16], strides = [1, 1, 1]} : vector<4x32x16xf32> to vector<1x32x16xf32>
    %219 = vector.shape_cast %218 : vector<1x32x16xf32> to vector<32x16xf32>
    %cst_111 = arith.constant dense<0.000000e+00> : vector<8x16xf32>
    %220 = tpu.matmul %27, %219, %cst_111 {dimension_numbers = #tpu.dot_dimension_numbers<[1], [0], [0], [1], [0, 0, 1, 1], [], []>} : vector<8x32xf32>, vector<32x16xf32>, vector<8x16xf32> -> vector<8x16xf32>
    %221 = vector.extract_strided_slice %15 {offsets = [3, 0, 0], sizes = [1, 32, 16], strides = [1, 1, 1]} : vector<4x32x16xf32> to vector<1x32x16xf32>
    %222 = vector.shape_cast %221 : vector<1x32x16xf32> to vector<32x16xf32>
    %cst_112 = arith.constant dense<0.000000e+00> : vector<8x16xf32>
    %223 = tpu.matmul %27, %222, %cst_112 {dimension_numbers = #tpu.dot_dimension_numbers<[1], [0], [0], [1], [0, 0, 1, 1], [], []>} : vector<8x32xf32>, vector<32x16xf32>, vector<8x16xf32> -> vector<8x16xf32>
    %224 = arith.mulf %211, %214 : vector<1x16xf32>
    %cst_113 = arith.constant dense<0.000000e+00> : vector<1xf32>
    %225 = vector.multi_reduction <add>, %224, %cst_113 [1] : vector<1x16xf32> to vector<1xf32>
    %226 = vector.shape_cast %225 : vector<1xf32> to vector<1x1xf32>
    %cst_114 = arith.constant dense<0.000000e+00> : vector<1x8xf32>
    %227 = tpu.matmul %211, %220, %cst_114 {dimension_numbers = #tpu.dot_dimension_numbers<[1], [1], [0], [0], [0, 0, 1, 0], [], []>} : vector<1x16xf32>, vector<8x16xf32>, vector<1x8xf32> -> vector<1x8xf32>
    %cst_115 = arith.constant dense<0xFF800000> : vector<1xf32>
    %228 = vector.multi_reduction <maximumf>, %227, %cst_115 [1] : vector<1x8xf32> to vector<1xf32>
    %229 = vector.shape_cast %228 : vector<1xf32> to vector<1x1xf32>
    %230 = arith.maximumf %226, %229 : vector<1x1xf32>
    %231 = arith.subf %226, %230 : vector<1x1xf32>
    %232 = math.exp %231 : vector<1x1xf32>
    %233 = vector.broadcast %230 : vector<1x1xf32> to vector<1x8xf32>
    %234 = arith.subf %227, %233 : vector<1x8xf32>
    %235 = math.exp %234 : vector<1x8xf32>
    %cst_116 = arith.constant dense<0.000000e+00> : vector<1xf32>
    %236 = vector.multi_reduction <add>, %235, %cst_116 [1] : vector<1x8xf32> to vector<1xf32>
    %237 = vector.shape_cast %236 : vector<1xf32> to vector<1x1xf32>
    %238 = arith.addf %232, %237 : vector<1x1xf32>
    %239 = tpu.reciprocal %238 {approx = true} : vector<1x1xf32> -> vector<1x1xf32>
    %240 = vector.broadcast %232 : vector<1x1xf32> to vector<1x16xf32>
    %241 = arith.mulf %240, %217 : vector<1x16xf32>
    %cst_117 = arith.constant dense<0.000000e+00> : vector<1x16xf32>
    %242 = tpu.matmul %235, %223, %cst_117 {dimension_numbers = #tpu.dot_dimension_numbers<[1], [0], [0], [1], [0, 0, 1, 1], [], []>} : vector<1x8xf32>, vector<8x16xf32>, vector<1x16xf32> -> vector<1x16xf32>
    %243 = arith.addf %241, %242 : vector<1x16xf32>
    %244 = vector.broadcast %239 : vector<1x1xf32> to vector<1x16xf32>
    %245 = arith.mulf %243, %244 : vector<1x16xf32>
    %246 = vector.extract_strided_slice %16 {offsets = [1, 0, 0], sizes = [1, 16, 32], strides = [1, 1, 1]} : vector<2x16x32xf32> to vector<1x16x32xf32>
    %247 = vector.shape_cast %246 : vector<1x16x32xf32> to vector<16x32xf32>
    %cst_118 = arith.constant dense<0.000000e+00> : vector<1x32xf32>
    %248 = tpu.matmul %245, %247, %cst_118 {dimension_numbers = #tpu.dot_dimension_numbers<[1], [0], [0], [1], [0, 0, 1, 1], [], []>} : vector<1x16xf32>, vector<16x32xf32>, vector<1x32xf32> -> vector<1x32xf32>
    %249 = arith.addf %206, %248 : vector<1x32xf32>
    %250 = arith.addf %249, %17 : vector<1x32xf32>
    %cst_119 = arith.constant dense<0.000000e+00> : vector<1x64xf32>
    %251 = tpu.matmul %250, %18, %cst_119 {dimension_numbers = #tpu.dot_dimension_numbers<[1], [0], [0], [1], [0, 0, 1, 1], [], []>} : vector<1x32xf32>, vector<32x64xf32>, vector<1x64xf32> -> vector<1x64xf32>
    %252 = arith.addf %25, %251 : vector<1x64xf32>
    %253 = arith.addf %252, %19 : vector<1x64xf32>
    %c0_120 = arith.constant 0 : index
    %c0_121 = arith.constant 0 : index
    %c0_122 = arith.constant 0 : index
    %254 = vector.load %arg25[%c0_120, %c0_121, %c0_122] : memref<1x1x32xf32, #tpu.memory_space<vmem>>, vector<1x1x32xf32>
    %255 = vector.shape_cast %254 : vector<1x1x32xf32> to vector<1x32xf32>
    %256 = vector.shape_cast %140 : vector<1x32xf32> to vector<1x1x32xf32>
    tpu.vector_store %arg25[%c0_120, %c0_121, %c0_122], %256 {strides = array<i32>} : memref<1x1x32xf32, #tpu.memory_space<vmem>>, vector<1x1x32xf32>,
    %c0_123 = arith.constant 0 : index
    %c0_124 = arith.constant 0 : index
    %c0_125 = arith.constant 0 : index
    %257 = vector.load %arg26[%c0_123, %c0_124, %c0_125] : memref<1x1x64xf32, #tpu.memory_space<vmem>>, vector<1x1x64xf32>
    %258 = vector.shape_cast %257 : vector<1x1x64xf32> to vector<1x64xf32>
    %259 = vector.shape_cast %253 : vector<1x64xf32> to vector<1x1x64xf32>
    tpu.vector_store %arg26[%c0_123, %c0_124, %c0_125], %259 {strides = array<i32>} : memref<1x1x64xf32, #tpu.memory_space<vmem>>, vector<1x1x64xf32>,
    return
  }
  func.func @transform_0(%arg0: i32) -> (i32, i32, i32) {
    %c0_i32 = arith.constant 0 : i32
    %c0_i32_0 = arith.constant 0 : i32
    %c0_i32_1 = arith.constant 0 : i32
    return %arg0, %c0_i32, %c0_i32_0 : i32, i32, i32
  }
  func.func @transform_1(%arg0: i32) -> (i32, i32, i32) {
    %c0_i32 = arith.constant 0 : i32
    %c0_i32_0 = arith.constant 0 : i32
    %c0_i32_1 = arith.constant 0 : i32
    return %arg0, %c0_i32, %c0_i32_0 : i32, i32, i32
  }
  func.func @transform_2(%arg0: i32) -> (i32, i32, i32) {
    %c0_i32 = arith.constant 0 : i32
    %c0_i32_0 = arith.constant 0 : i32
    %c0_i32_1 = arith.constant 0 : i32
    return %arg0, %c0_i32, %c0_i32_0 : i32, i32, i32
  }
  func.func @transform_3(%arg0: i32) -> (i32, i32, i32) {
    %c0_i32 = arith.constant 0 : i32
    %c0_i32_0 = arith.constant 0 : i32
    %c0_i32_1 = arith.constant 0 : i32
    return %arg0, %c0_i32, %c0_i32_0 : i32, i32, i32
  }
  func.func @transform_4(%arg0: i32) -> (i32, i32) {
    %c0_i32 = arith.constant 0 : i32
    %c0_i32_0 = arith.constant 0 : i32
    %c0_i32_1 = arith.constant 0 : i32
    return %c0_i32, %c0_i32_0 : i32, i32
  }
  func.func @transform_5(%arg0: i32) -> (i32, i32) {
    %c0_i32 = arith.constant 0 : i32
    %c0_i32_0 = arith.constant 0 : i32
    %c0_i32_1 = arith.constant 0 : i32
    return %c0_i32, %c0_i32_0 : i32, i32
  }
  func.func @transform_6(%arg0: i32) -> (i32, i32) {
    %c0_i32 = arith.constant 0 : i32
    %c0_i32_0 = arith.constant 0 : i32
    %c0_i32_1 = arith.constant 0 : i32
    return %c0_i32, %c0_i32_0 : i32, i32
  }
  func.func @transform_7(%arg0: i32) -> (i32, i32) {
    %c0_i32 = arith.constant 0 : i32
    %c0_i32_0 = arith.constant 0 : i32
    %c0_i32_1 = arith.constant 0 : i32
    return %c0_i32, %c0_i32_0 : i32, i32
  }
  func.func @transform_8(%arg0: i32) -> (i32, i32, i32) {
    %c0_i32 = arith.constant 0 : i32
    %c0_i32_0 = arith.constant 0 : i32
    %c0_i32_1 = arith.constant 0 : i32
    %c0_i32_2 = arith.constant 0 : i32
    return %c0_i32, %c0_i32_0, %c0_i32_1 : i32, i32, i32
  }
  func.func @transform_9(%arg0: i32) -> (i32, i32, i32) {
    %c0_i32 = arith.constant 0 : i32
    %c0_i32_0 = arith.constant 0 : i32
    %c0_i32_1 = arith.constant 0 : i32
    %c0_i32_2 = arith.constant 0 : i32
    return %c0_i32, %c0_i32_0, %c0_i32_1 : i32, i32, i32
  }
  func.func @transform_10(%arg0: i32) -> (i32, i32, i32) {
    %c0_i32 = arith.constant 0 : i32
    %c0_i32_0 = arith.constant 0 : i32
    %c0_i32_1 = arith.constant 0 : i32
    %c0_i32_2 = arith.constant 0 : i32
    return %c0_i32, %c0_i32_0, %c0_i32_1 : i32, i32, i32
  }
  func.func @transform_11(%arg0: i32) -> (i32, i32) {
    %c0_i32 = arith.constant 0 : i32
    %c0_i32_0 = arith.constant 0 : i32
    %c0_i32_1 = arith.constant 0 : i32
    return %c0_i32, %c0_i32_0 : i32, i32
  }
  func.func @transform_12(%arg0: i32) -> (i32, i32) {
    %c0_i32 = arith.constant 0 : i32
    %c0_i32_0 = arith.constant 0 : i32
    %c0_i32_1 = arith.constant 0 : i32
    return %c0_i32, %c0_i32_0 : i32, i32
  }
  func.func @transform_13(%arg0: i32) -> (i32, i32) {
    %c0_i32 = arith.constant 0 : i32
    %c0_i32_0 = arith.constant 0 : i32
    %c0_i32_1 = arith.constant 0 : i32
    return %c0_i32, %c0_i32_0 : i32, i32
  }
  func.func @transform_14(%arg0: i32) -> (i32, i32) {
    %c0_i32 = arith.constant 0 : i32
    %c0_i32_0 = arith.constant 0 : i32
    %c0_i32_1 = arith.constant 0 : i32
    return %c0_i32, %c0_i32_0 : i32, i32
  }
  func.func @transform_15(%arg0: i32) -> (i32, i32) {
    %c0_i32 = arith.constant 0 : i32
    %c0_i32_0 = arith.constant 0 : i32
    %c0_i32_1 = arith.constant 0 : i32
    return %c0_i32, %c0_i32_0 : i32, i32
  }
  func.func @transform_16(%arg0: i32) -> (i32, i32) {
    %c0_i32 = arith.constant 0 : i32
    %c0_i32_0 = arith.constant 0 : i32
    %c0_i32_1 = arith.constant 0 : i32
    return %c0_i32, %c0_i32_0 : i32, i32
  }
  func.func @transform_17(%arg0: i32) -> (i32, i32) {
    %c0_i32 = arith.constant 0 : i32
    %c0_i32_0 = arith.constant 0 : i32
    %c0_i32_1 = arith.constant 0 : i32
    return %c0_i32, %c0_i32_0 : i32, i32
  }
  func.func @transform_18(%arg0: i32) -> (i32, i32, i32) {
    %c0_i32 = arith.constant 0 : i32
    %c0_i32_0 = arith.constant 0 : i32
    %c0_i32_1 = arith.constant 0 : i32
    %c0_i32_2 = arith.constant 0 : i32
    return %c0_i32, %c0_i32_0, %c0_i32_1 : i32, i32, i32
  }
  func.func @transform_19(%arg0: i32) -> (i32, i32, i32) {
    %c0_i32 = arith.constant 0 : i32
    %c0_i32_0 = arith.constant 0 : i32
    %c0_i32_1 = arith.constant 0 : i32
    %c0_i32_2 = arith.constant 0 : i32
    return %c0_i32, %c0_i32_0, %c0_i32_1 : i32, i32, i32
  }
  func.func @transform_20(%arg0: i32) -> (i32, i32, i32) {
    %c0_i32 = arith.constant 0 : i32
    %c0_i32_0 = arith.constant 0 : i32
    %c0_i32_1 = arith.constant 0 : i32
    %c0_i32_2 = arith.constant 0 : i32
    return %c0_i32, %c0_i32_0, %c0_i32_1 : i32, i32, i32
  }
  func.func @transform_21(%arg0: i32) -> (i32, i32) {
    %c0_i32 = arith.constant 0 : i32
    %c0_i32_0 = arith.constant 0 : i32
    %c0_i32_1 = arith.constant 0 : i32
    return %c0_i32, %c0_i32_0 : i32, i32
  }
  func.func @transform_22(%arg0: i32) -> (i32, i32) {
    %c0_i32 = arith.constant 0 : i32
    %c0_i32_0 = arith.constant 0 : i32
    %c0_i32_1 = arith.constant 0 : i32
    return %c0_i32, %c0_i32_0 : i32, i32
  }
  func.func @transform_23(%arg0: i32) -> (i32, i32) {
    %c0_i32 = arith.constant 0 : i32
    %c0_i32_0 = arith.constant 0 : i32
    %c0_i32_1 = arith.constant 0 : i32
    return %c0_i32, %c0_i32_0 : i32, i32
  }
  func.func @transform_24(%arg0: i32) -> (i32, i32, i32) {
    %c0_i32 = arith.constant 0 : i32
    %c0_i32_0 = arith.constant 0 : i32
    %c0_i32_1 = arith.constant 0 : i32
    return %arg0, %c0_i32, %c0_i32_0 : i32, i32, i32
  }
  func.func @transform_25(%arg0: i32) -> (i32, i32, i32) {
    %c0_i32 = arith.constant 0 : i32
    %c0_i32_0 = arith.constant 0 : i32
    %c0_i32_1 = arith.constant 0 : i32
    return %arg0, %c0_i32, %c0_i32_0 : i32, i32, i32
  }
}

module attributes {stable_mosaic.version = 11 : i64} {
  func.func @_dual_head_kernel(%arg0: memref<2x32xf32, #tpu.memory_space<vmem>>, %arg1: memref<2x64xf32, #tpu.memory_space<vmem>>, %arg2: memref<1x32xf32, #tpu.memory_space<vmem>>, %arg3: memref<1x32xf32, #tpu.memory_space<vmem>>, %arg4: memref<32x10xf32, #tpu.memory_space<vmem>>, %arg5: memref<1x10xf32, #tpu.memory_space<vmem>>, %arg6: memref<1x64xf32, #tpu.memory_space<vmem>>, %arg7: memref<1x64xf32, #tpu.memory_space<vmem>>, %arg8: memref<64x10xf32, #tpu.memory_space<vmem>>, %arg9: memref<1x10xf32, #tpu.memory_space<vmem>>, %arg10: memref<2x10xf32, #tpu.memory_space<vmem>>) attributes {dimension_semantics = [], scalar_prefetch = 0 : i64, scratch_operands = 0 : i64, tpu.core_type = #tpu.core_type<tc>} {
    %c0 = arith.constant 0 : index
    %c0_0 = arith.constant 0 : index
    %0 = vector.load %arg0[%c0, %c0_0] : memref<2x32xf32, #tpu.memory_space<vmem>>, vector<2x32xf32>
    %c0_1 = arith.constant 0 : index
    %c0_2 = arith.constant 0 : index
    %1 = vector.load %arg2[%c0_1, %c0_2] : memref<1x32xf32, #tpu.memory_space<vmem>>, vector<1x32xf32>
    %c0_3 = arith.constant 0 : index
    %c0_4 = arith.constant 0 : index
    %2 = vector.load %arg3[%c0_3, %c0_4] : memref<1x32xf32, #tpu.memory_space<vmem>>, vector<1x32xf32>
    %cst = arith.constant dense<0.000000e+00> : vector<2xf32>
    %3 = vector.multi_reduction <add>, %0, %cst [1] : vector<2x32xf32> to vector<2xf32>
    %4 = vector.shape_cast %3 : vector<2xf32> to vector<2x1xf32>
    %cst_5 = arith.constant 3.200000e+01 : f32
    %5 = vector.broadcast %cst_5 : f32 to vector<2x1xf32>
    %6 = arith.divf %4, %5 : vector<2x1xf32>
    %7 = vector.broadcast %6 : vector<2x1xf32> to vector<2x32xf32>
    %8 = arith.subf %0, %7 : vector<2x32xf32>
    %9 = arith.mulf %8, %8 : vector<2x32xf32>
    %cst_6 = arith.constant dense<0.000000e+00> : vector<2xf32>
    %10 = vector.multi_reduction <add>, %9, %cst_6 [1] : vector<2x32xf32> to vector<2xf32>
    %11 = vector.shape_cast %10 : vector<2xf32> to vector<2x1xf32>
    %cst_7 = arith.constant 3.200000e+01 : f32
    %12 = vector.broadcast %cst_7 : f32 to vector<2x1xf32>
    %13 = arith.divf %11, %12 : vector<2x1xf32>
    %14 = vector.broadcast %6 : vector<2x1xf32> to vector<2x32xf32>
    %15 = arith.subf %0, %14 : vector<2x32xf32>
    %cst_8 = arith.constant 9.99999974E-6 : f32
    %16 = vector.broadcast %cst_8 : f32 to vector<2x1xf32>
    %17 = arith.addf %13, %16 : vector<2x1xf32>
    %18 = math.rsqrt %17 : vector<2x1xf32>
    %19 = vector.broadcast %18 : vector<2x1xf32> to vector<2x32xf32>
    %20 = arith.mulf %15, %19 : vector<2x32xf32>
    %21 = vector.broadcast %1 : vector<1x32xf32> to vector<2x32xf32>
    %22 = arith.mulf %20, %21 : vector<2x32xf32>
    %23 = vector.broadcast %2 : vector<1x32xf32> to vector<2x32xf32>
    %24 = arith.addf %22, %23 : vector<2x32xf32>
    %c0_9 = arith.constant 0 : index
    %c0_10 = arith.constant 0 : index
    %25 = vector.load %arg1[%c0_9, %c0_10] : memref<2x64xf32, #tpu.memory_space<vmem>>, vector<2x64xf32>
    %c0_11 = arith.constant 0 : index
    %c0_12 = arith.constant 0 : index
    %26 = vector.load %arg6[%c0_11, %c0_12] : memref<1x64xf32, #tpu.memory_space<vmem>>, vector<1x64xf32>
    %c0_13 = arith.constant 0 : index
    %c0_14 = arith.constant 0 : index
    %27 = vector.load %arg7[%c0_13, %c0_14] : memref<1x64xf32, #tpu.memory_space<vmem>>, vector<1x64xf32>
    %cst_15 = arith.constant dense<0.000000e+00> : vector<2xf32>
    %28 = vector.multi_reduction <add>, %25, %cst_15 [1] : vector<2x64xf32> to vector<2xf32>
    %29 = vector.shape_cast %28 : vector<2xf32> to vector<2x1xf32>
    %cst_16 = arith.constant 6.400000e+01 : f32
    %30 = vector.broadcast %cst_16 : f32 to vector<2x1xf32>
    %31 = arith.divf %29, %30 : vector<2x1xf32>
    %32 = vector.broadcast %31 : vector<2x1xf32> to vector<2x64xf32>
    %33 = arith.subf %25, %32 : vector<2x64xf32>
    %34 = arith.mulf %33, %33 : vector<2x64xf32>
    %cst_17 = arith.constant dense<0.000000e+00> : vector<2xf32>
    %35 = vector.multi_reduction <add>, %34, %cst_17 [1] : vector<2x64xf32> to vector<2xf32>
    %36 = vector.shape_cast %35 : vector<2xf32> to vector<2x1xf32>
    %cst_18 = arith.constant 6.400000e+01 : f32
    %37 = vector.broadcast %cst_18 : f32 to vector<2x1xf32>
    %38 = arith.divf %36, %37 : vector<2x1xf32>
    %39 = vector.broadcast %31 : vector<2x1xf32> to vector<2x64xf32>
    %40 = arith.subf %25, %39 : vector<2x64xf32>
    %cst_19 = arith.constant 9.99999974E-6 : f32
    %41 = vector.broadcast %cst_19 : f32 to vector<2x1xf32>
    %42 = arith.addf %38, %41 : vector<2x1xf32>
    %43 = math.rsqrt %42 : vector<2x1xf32>
    %44 = vector.broadcast %43 : vector<2x1xf32> to vector<2x64xf32>
    %45 = arith.mulf %40, %44 : vector<2x64xf32>
    %46 = vector.broadcast %26 : vector<1x64xf32> to vector<2x64xf32>
    %47 = arith.mulf %45, %46 : vector<2x64xf32>
    %48 = vector.broadcast %27 : vector<1x64xf32> to vector<2x64xf32>
    %49 = arith.addf %47, %48 : vector<2x64xf32>
    %c0_20 = arith.constant 0 : index
    %c0_21 = arith.constant 0 : index
    %50 = vector.load %arg4[%c0_20, %c0_21] : memref<32x10xf32, #tpu.memory_space<vmem>>, vector<32x10xf32>
    %cst_22 = arith.constant dense<0.000000e+00> : vector<2x10xf32>
    %51 = tpu.matmul %24, %50, %cst_22 {dimension_numbers = #tpu.dot_dimension_numbers<[1], [0], [0], [1], [0, 0, 1, 1], [], []>} : vector<2x32xf32>, vector<32x10xf32>, vector<2x10xf32> -> vector<2x10xf32>
    %c0_23 = arith.constant 0 : index
    %c0_24 = arith.constant 0 : index
    %52 = vector.load %arg5[%c0_23, %c0_24] : memref<1x10xf32, #tpu.memory_space<vmem>>, vector<1x10xf32>
    %53 = vector.broadcast %52 : vector<1x10xf32> to vector<2x10xf32>
    %54 = arith.addf %51, %53 : vector<2x10xf32>
    %c0_25 = arith.constant 0 : index
    %c0_26 = arith.constant 0 : index
    %55 = vector.load %arg8[%c0_25, %c0_26] : memref<64x10xf32, #tpu.memory_space<vmem>>, vector<64x10xf32>
    %cst_27 = arith.constant dense<0.000000e+00> : vector<2x10xf32>
    %56 = tpu.matmul %49, %55, %cst_27 {dimension_numbers = #tpu.dot_dimension_numbers<[1], [0], [0], [1], [0, 0, 1, 1], [], []>} : vector<2x64xf32>, vector<64x10xf32>, vector<2x10xf32> -> vector<2x10xf32>
    %57 = arith.addf %54, %56 : vector<2x10xf32>
    %c0_28 = arith.constant 0 : index
    %c0_29 = arith.constant 0 : index
    %58 = vector.load %arg9[%c0_28, %c0_29] : memref<1x10xf32, #tpu.memory_space<vmem>>, vector<1x10xf32>
    %59 = vector.broadcast %58 : vector<1x10xf32> to vector<2x10xf32>
    %60 = arith.addf %57, %59 : vector<2x10xf32>
    %c0_30 = arith.constant 0 : index
    %c0_31 = arith.constant 0 : index
    %61 = vector.load %arg10[%c0_30, %c0_31] : memref<2x10xf32, #tpu.memory_space<vmem>>, vector<2x10xf32>
    tpu.vector_store %arg10[%c0_30, %c0_31], %60 {strides = array<i32>} : memref<2x10xf32, #tpu.memory_space<vmem>>, vector<2x10xf32>,
    return
  }
}

</mosaic_0001>

<llo_original>
// kernel: xmp_forward.7
$region0: #{xmp_forward.7}
  #allocation0 [shape = 'u32[]', space=smem, size = 0x4, offset = 0x4, fixed_abs, tag = 'smem constant byte address 0x4 - core index']
  #allocation1 [shape = 'u32[72,128]{1,0:T(1,128)}', space=vmem, size = 0x9000, scoped, tag = 'internal scratch']
  %s0 = inlined_call_operand.vmem [shape: f32[2,64,40], index: 0, kind: input, shape index: {}]
  %s1 = inlined_call_operand.vmem [shape: f32[40,64], index: 1, kind: input, shape index: {}]
  %s2 = inlined_call_operand.vmem [shape: f32[1,64], index: 2, kind: input, shape index: {}]
  %s3 = inlined_call_operand.vmem [shape: f32[1,64], index: 3, kind: input, shape index: {}]
  %s4 = inlined_call_operand.vmem [shape: f32[1,5,64], index: 4, kind: input, shape index: {}]
  %s5 = inlined_call_operand.vmem [shape: f32[2,5,64], index: 5, kind: output, shape index: {}]
  %s6 = sld [smem:[#allocation0]]
  $region53: #{xmp_forward.7} parent=0
    _
  %s8 = ssub.s32 1, %s6
  %s9 = scalar_select 0, %s8, %s6
  loop: start=0, step=1, limit=4
  $region2: #{xmp_forward.7} parent=0 // loop_pre_header
    _
  $region3: #{xmp_forward.7} parent=0 // loop_header
    %s11 = sphi 0, %s15
    %p12 = scmp.ge.s32.totalorder %s11, 4
    %s21 = sphi 0, %s23
    %s24 = sphi 0, %s21
    %s25 = sphi 0, %s24
    %s41 = sphi 0, %s25
    %s45 = sphi 0, %s45
    %s47 = sphi 0, %s45
    %s48 = sphi 0, %s47
    %s62 = sphi 0, %s48
    %s66 = sphi 0, %s66
    %s68 = sphi 0, %s66
    %s69 = sphi 0, %s68
    %s83 = sphi 0, %s69
    %s87 = sphi 0, %s87
    %s89 = sphi 0, %s87
    %s90 = sphi 0, %s89
    %s104 = sphi 0, %s90
    %s108 = sphi 0, %s108
    %s110 = sphi 0, %s108
    %s111 = sphi 0, %s110
    %s125 = sphi 0, %s111
    %s131 = sphi 0, %s133
    %s134 = sphi 0, %s131
    %s135 = sphi 0, %s134
    %s151 = sphi 0, %s135
  $region4: #{xmp_forward.7} parent=0 // loop_header_branch
    %14 = sbr.rel (%p12) target = $region8
  $region5: #{xmp_forward.7} parent=0 // loop_body
    %s16 = ssub.s32 %s11, 1
    %s17 = ssub.s32 %s11, 2
    %s18 = sadd.s32 %s11, 1
    %s19 = ssub.s32 %s11, %s18
    %p20 = scmp.eq.s32.totalorder %s19, 0
    %s22 = sadd.s32 %s21, 1
    %s23 = scalar_select %p20, %s21, %s22
    %p26 = pneg %p20
    %p27 = scmp.eq.s32.totalorder %s11, 1
    %p28 = por %p26, %p27
    %p29 = scmp.ne.s32.totalorder %s21, %s24
    %p30 = scmp.eq.s32.totalorder %s11, 0
    %p31 = por %p29, %p30
    %p32 = scmp.ne.s32.totalorder %s21, %s24
    %p33 = scmp.eq.s32.totalorder %s16, 1
    %p34 = por %p32, %p33
    %p35 = scmp.ne.s32.totalorder %s24, %s25
    %p36 = scmp.eq.s32.totalorder %s16, 0
    %p37 = por %p35, %p36
    %p38 = scmp.ne.s32.totalorder %s24, %s25
    %p39 = scmp.eq.s32.totalorder %s17, 1
    %p40 = por %p38, %p39
    %p42 = scmp.ne.s32.totalorder %s25, %s41
    %p43 = scmp.eq.s32.totalorder %s17, 0
    %p44 = por %p42, %p43
    %s46 = sadd.s32 %s45, 1
    %p49 = scmp.eq.s32.totalorder %s11, 1
    %p50 = scmp.ne.s32.totalorder %s45, %s47
    %p51 = scmp.eq.s32.totalorder %s11, 0
    %p52 = por %p50, %p51
    %p53 = scmp.ne.s32.totalorder %s45, %s47
    %p54 = scmp.eq.s32.totalorder %s16, 1
    %p55 = por %p53, %p54
    %p56 = scmp.ne.s32.totalorder %s47, %s48
    %p57 = scmp.eq.s32.totalorder %s16, 0
    %p58 = por %p56, %p57
    %p59 = scmp.ne.s32.totalorder %s47, %s48
    %p60 = scmp.eq.s32.totalorder %s17, 1
    %p61 = por %p59, %p60
    %p63 = scmp.ne.s32.totalorder %s48, %s62
    %p64 = scmp.eq.s32.totalorder %s17, 0
    %p65 = por %p63, %p64
    %s67 = sadd.s32 %s66, 1
    %p70 = scmp.eq.s32.totalorder %s11, 1
    %p71 = scmp.ne.s32.totalorder %s66, %s68
    %p72 = scmp.eq.s32.totalorder %s11, 0
    %p73 = por %p71, %p72
    %p74 = scmp.ne.s32.totalorder %s66, %s68
    %p75 = scmp.eq.s32.totalorder %s16, 1
    %p76 = por %p74, %p75
    %p77 = scmp.ne.s32.totalorder %s68, %s69
    %p78 = scmp.eq.s32.totalorder %s16, 0
    %p79 = por %p77, %p78
    %p80 = scmp.ne.s32.totalorder %s68, %s69
    %p81 = scmp.eq.s32.totalorder %s17, 1
    %p82 = por %p80, %p81
    %p84 = scmp.ne.s32.totalorder %s69, %s83
    %p85 = scmp.eq.s32.totalorder %s17, 0
    %p86 = por %p84, %p85
    %s88 = sadd.s32 %s87, 1
    %p91 = scmp.eq.s32.totalorder %s11, 1
    %p92 = scmp.ne.s32.totalorder %s87, %s89
    %p93 = scmp.eq.s32.totalorder %s11, 0
    %p94 = por %p92, %p93
    %p95 = scmp.ne.s32.totalorder %s87, %s89
    %p96 = scmp.eq.s32.totalorder %s16, 1
    %p97 = por %p95, %p96
    %p98 = scmp.ne.s32.totalorder %s89, %s90
    %p99 = scmp.eq.s32.totalorder %s16, 0
    %p100 = por %p98, %p99
    %p101 = scmp.ne.s32.totalorder %s89, %s90
    %p102 = scmp.eq.s32.totalorder %s17, 1
    %p103 = por %p101, %p102
    %p105 = scmp.ne.s32.totalorder %s90, %s104
    %p106 = scmp.eq.s32.totalorder %s17, 0
    %p107 = por %p105, %p106
    %s109 = sadd.s32 %s108, 1
    %p112 = scmp.eq.s32.totalorder %s11, 1
    %p113 = scmp.ne.s32.totalorder %s108, %s110
    %p114 = scmp.eq.s32.totalorder %s11, 0
    %p115 = por %p113, %p114
    %p116 = scmp.ne.s32.totalorder %s108, %s110
    %p117 = scmp.eq.s32.totalorder %s16, 1
    %p118 = por %p116, %p117
    %p119 = scmp.ne.s32.totalorder %s110, %s111
    %p120 = scmp.eq.s32.totalorder %s16, 0
    %p121 = por %p119, %p120
    %p122 = scmp.ne.s32.totalorder %s110, %s111
    %p123 = scmp.eq.s32.totalorder %s17, 1
    %p124 = por %p122, %p123
    %p126 = scmp.ne.s32.totalorder %s111, %s125
    %p127 = scmp.eq.s32.totalorder %s17, 0
    %p128 = por %p126, %p127
    %s129 = ssub.s32 %s11, %s18
    %p130 = scmp.eq.s32.totalorder %s129, 0
    %s132 = sadd.s32 %s131, 1
    %s133 = scalar_select %p130, %s131, %s132
    %p136 = pneg %p130
    %p137 = scmp.eq.s32.totalorder %s11, 1
    %p138 = por %p136, %p137
    %p139 = scmp.ne.s32.totalorder %s131, %s134
    %p140 = scmp.eq.s32.totalorder %s11, 0
    %p141 = por %p139, %p140
    %p142 = scmp.ne.s32.totalorder %s131, %s134
    %p143 = scmp.eq.s32.totalorder %s16, 1
    %p144 = por %p142, %p143
    %p145 = scmp.ne.s32.totalorder %s134, %s135
    %p146 = scmp.eq.s32.totalorder %s16, 0
    %p147 = por %p145, %p146
    %p148 = scmp.ne.s32.totalorder %s134, %s135
    %p149 = scmp.eq.s32.totalorder %s17, 1
    %p150 = por %p148, %p149
    %p152 = scmp.ne.s32.totalorder %s135, %s151
    %p153 = scmp.eq.s32.totalorder %s17, 0
    %p154 = por %p152, %p153
    %p155 = scmp.le.s32.totalorder 1, %s11
    %p156 = scmp.lt.s32.totalorder %s11, 3
    %p157 = pnand %p155, %p156
    %p158 = pneg %p157
    // Predicated region
    $region9: #{xmp_forward.7} parent=5 // pred_check
      _
    $region10: #{xmp_forward.7} parent=5 // pred_check_branch
      %160 = sbr.rel (%p157) target = $region12
    $region11: #{xmp_forward.7} parent=5 // pred_region
      %s161 = ssub.s32 %s11, 1
      // Predicated region
      $region13: #{xmp_forward.7} parent=11 // pred_check
        %p162 = pneg %p58
      $region14: #{xmp_forward.7} parent=11 // pred_check_branch
        %164 = sbr.rel (%p162) target = $region16
      $region15: #{xmp_forward.7} parent=11 // pred_region
        _
      $region16: #{xmp_forward.7} parent=11 // pred_fallthru
        _
      // Predicated region
      $region17: #{xmp_forward.7} parent=11 // pred_check
        %p165 = pneg %p79
      $region18: #{xmp_forward.7} parent=11 // pred_check_branch
        %167 = sbr.rel (%p165) target = $region20
      $region19: #{xmp_forward.7} parent=11 // pred_region
        _
      $region20: #{xmp_forward.7} parent=11 // pred_fallthru
        _
      // Predicated region
      $region21: #{xmp_forward.7} parent=11 // pred_check
        %p168 = pneg %p100
      $region22: #{xmp_forward.7} parent=11 // pred_check_branch
        %170 = sbr.rel (%p168) target = $region24
      $region23: #{xmp_forward.7} parent=11 // pred_region
        _
      $region24: #{xmp_forward.7} parent=11 // pred_fallthru
        _
      // Predicated region
      $region25: #{xmp_forward.7} parent=11 // pred_check
        %p171 = pneg %p121
      $region26: #{xmp_forward.7} parent=11 // pred_check_branch
        %173 = sbr.rel (%p171) target = $region28
      $region27: #{xmp_forward.7} parent=11 // pred_region
        _
      $region28: #{xmp_forward.7} parent=11 // pred_fallthru
        _
    $region12: #{xmp_forward.7} parent=5 // pred_fallthru
      _
    %p174 = scmp.lt.s32.totalorder %s11, 2
    // Predicated region
    $region29: #{xmp_forward.7} parent=5 // pred_check
      %p175 = pneg %p174
    $region30: #{xmp_forward.7} parent=5 // pred_check_branch
      %177 = sbr.rel (%p175) target = $region32
    $region31: #{xmp_forward.7} parent=5 // pred_region
      // Predicated region
      $region33: #{xmp_forward.7} parent=31 // pred_check
        %p178 = pneg %p31
      $region34: #{xmp_forward.7} parent=31 // pred_check_branch
        %180 = sbr.rel (%p178) target = $region36
      $region35: #{xmp_forward.7} parent=31 // pred_region
        %p181 = scmp.lt.s32.totalorder %s11, 1
        %s182 = scalar_select %p181, %s11, 1
        %s183 = smul.addr %s182, 8
        %s184 = smul.addr %s183, 8
        %s185 = scalar_lea.vmem %s0, %s184
      $region36: #{xmp_forward.7} parent=31 // pred_fallthru
        _
    $region32: #{xmp_forward.7} parent=5 // pred_fallthru
      _
    %p186 = scmp.le.s32.totalorder 1, %s11
    %p187 = scmp.lt.s32.totalorder %s11, 3
    %p188 = pnand %p186, %p187
    %p189 = pneg %p188
    // Predicated region
    $region37: #{xmp_forward.7} parent=5 // pred_check
      _
    $region38: #{xmp_forward.7} parent=5 // pred_check_branch
      %191 = sbr.rel (%p188) target = $region40
    $region39: #{xmp_forward.7} parent=5 // pred_region
      %s192 = ssub.s32 %s11, 1
      %p193 = scmp.lt.s32.totalorder %s16, 1
      %s194 = scalar_select %p193, %s16, 1
      %s195 = smul.addr %s194, 8
      %s196 = smul.addr %s195, 8
      %s197 = scalar_lea.vmem %s0, %s196
      %p198 = pneg %p37
      %p199 = pneg %p34
      %p200 = pneg %p58
      %p201 = pneg %p55
      %p202 = pneg %p79
      %p203 = pneg %p76
      %p204 = pneg %p100
      %p205 = pneg %p97
      %p206 = pneg %p121
      %p207 = pneg %p118
      %p208 = pneg %p147
      %p209 = pneg %p144
      %p210 = scmp.lt.s32.totalorder %s16, 1
      %s211 = scalar_select %p210, %s16, 1
      %s212 = smul.addr %s211, 8
      %s213 = scalar_lea.vmem %s5, %s212
      %p214 = scmp.lt.s32.totalorder %s16, 1
      %s215 = scalar_select %p214, %s16, 1
      %s216 = smul.addr %s215, 8
      %s217 = smul.addr %s216, 8
      %s218 = scalar_lea.vmem %s0, %s217
      %p219 = scmp.lt.s32.totalorder %s16, 1
      %s220 = scalar_select %p219, %s16, 1
      %s221 = smul.addr %s220, 8
      %s222 = scalar_lea.vmem %s5, %s221
      %v223 = vld [vmem:[%s218] sm:$0xff]
      %v224 = vld [vmem:[%s218 + $0x8] sm:$0xff]
      %v225 = vld [vmem:[%s218 + $0x10] sm:$0xff]
      %v226 = vld [vmem:[%s218 + $0x18] sm:$0xff]
      %v227 = vld [vmem:[%s218 + $0x20] sm:$0xff]
      %v228 = vld [vmem:[%s218 + $0x28] sm:$0xff]
      %v229 = vld [vmem:[%s218 + $0x30] sm:$0xff]
      %v230 = vld [vmem:[%s218 + $0x38] sm:$0xff]
      %v231 = vld [vmem:[%s1] sm:$0xff]
      %v232 = vld [vmem:[%s1 + $0x8] sm:$0xff]
      %v233 = vld [vmem:[%s1 + $0x10] sm:$0xff]
      %v234 = vld [vmem:[%s1 + $0x18] sm:$0xff]
      %v235 = vld [vmem:[%s1 + $0x20] sm:$0xff]
      %v236 = vld [vmem:[%s2] sm:$0x1]
      %v238 = vperm.slane %v236, 0
      %vm240 = vcmask 326656
      %v242 = vsel %vm240, %v223, 0
      %v245 = vsel %vm240, %v224, 0
      %v248 = vsel %vm240, %v225, 0
      %v251 = vsel %vm240, %v226, 0
      %v254 = vsel %vm240, %v227, 0
      %v257 = vsel %vm240, %v228, 0
      %v260 = vsel %vm240, %v229, 0
      %v263 = vsel %vm240, %v230, 0
      %265 = vmatpush.msra.mxu0 0.0
      %266 = vmatpush.msra.mxu0 0.0
      %267 = vmatpush.msra.mxu0 0.0
      %268 = vmatpush.msra.mxu0 0.0
      %269 = vmatpush.msra.mxu0 0.0
      %270 = vmatpush.msra.mxu0 0.0
      %271 = vmatpush.msra.mxu0 0.0
      %272 = vmatpush.msra.mxu0 0.0
      %273 = vmatpush.msra.mxu0 0.0
      %274 = vmatpush.msra.mxu0 0.0
      %275 = vmatpush.msra.mxu0 0.0
      %276 = vmatpush.msra.mxu0 %v235
      %277 = vmatpush.msra.mxu0 %v234
      %278 = vmatpush.msra.mxu0 %v233
      %279 = vmatpush.msra.mxu0 %v232
      %280 = vmatpush.msra.mxu0 %v231
      %281 = vmatmul.f32.gmra.mxu0 %v242
      %v282 = vpop.f32.mrf.mxu0
      %v283 = vadd.f32 %v238, %v282
      %284 = vmatmul.f32.gmra.mxu0 %v245
      %v285 = vpop.f32.mrf.mxu0
      %v286 = vadd.f32 %v238, %v285
      %287 = vmatmul.f32.gmra.mxu0 %v248
      %v288 = vpop.f32.mrf.mxu0
      %v289 = vadd.f32 %v238, %v288
      %290 = vmatmul.f32.gmra.mxu0 %v251
      %v291 = vpop.f32.mrf.mxu0
      %v292 = vadd.f32 %v238, %v291
      %293 = vmatmul.f32.gmra.mxu0 %v254
      %v294 = vpop.f32.mrf.mxu0
      %v295 = vadd.f32 %v238, %v294
      %296 = vmatmul.f32.gmra.mxu0 %v257
      %v297 = vpop.f32.mrf.mxu0
      %v298 = vadd.f32 %v238, %v297
      %299 = vmatmul.f32.gmra.mxu0 %v260
      %v300 = vpop.f32.mrf.mxu0
      %v301 = vadd.f32 %v238, %v300
      %302 = vmatmul.f32.gmra.mxu0 %v263
      %v303 = vpop.f32.mrf.mxu0
      %v304 = vadd.f32 %v238, %v303
      %305 = vdwg.mxu0
      %v306 = vmax.f32 %v283, 0.0
      %v307 = vmax.f32 %v286, 0.0
      %v308 = vmax.f32 %v289, 0.0
      %v309 = vmax.f32 %v292, 0.0
      %v310 = vmax.f32 %v295, 0.0
      %v311 = vmax.f32 %v298, 0.0
      %v312 = vmax.f32 %v301, 0.0
      %v313 = vmax.f32 %v304, 0.0
      %v314 = vld [vmem:[%s3] sm:$0x1]
      %vm315 = vcmask 523264
      %v316 = vsel %vm315, %v306, -inf
      %v317 = vsel %vm315, %v307, -inf
      %v318 = vmax.f32 %v316, %v317
      %v319 = vrot.slane %v318, 4
      %v320 = vmax.f32 %v318, %v319
      %v321 = vrot.slane %v320, 2
      %v322 = vmax.f32 %v320, %v321
      %v323 = vrot.slane %v322, 1
      %v324 = vmax.f32 %v322, %v323
      %v325 = vsel %vm315, %v308, -inf
      %v326 = vsel %vm315, %v309, -inf
      %v327 = vmax.f32 %v325, %v326
      %v328 = vrot.slane %v327, 4
      %v329 = vmax.f32 %v327, %v328
      %v330 = vrot.slane %v329, 2
      %v331 = vmax.f32 %v329, %v330
      %v332 = vrot.slane %v331, 1
      %v333 = vmax.f32 %v331, %v332
      %v334 = vsel %vm315, %v310, -inf
      %v335 = vsel %vm315, %v311, -inf
      %v336 = vmax.f32 %v334, %v335
      %v337 = vrot.slane %v336, 4
      %v338 = vmax.f32 %v336, %v337
      %v339 = vrot.slane %v338, 2
      %v340 = vmax.f32 %v338, %v339
      %v341 = vrot.slane %v340, 1
      %v342 = vmax.f32 %v340, %v341
      %v343 = vsel %vm315, %v312, -inf
      %v344 = vsel %vm315, %v313, -inf
      %v345 = vmax.f32 %v343, %v344
      %v346 = vrot.slane %v345, 4
      %v347 = vmax.f32 %v345, %v346
      %v348 = vrot.slane %v347, 2
      %v349 = vmax.f32 %v347, %v348
      %v350 = vrot.slane %v349, 1
      %v351 = vmax.f32 %v349, %v350
      %vm352 = vcmask 1040384
      %v353 = vsel %vm352, %v314, %v324
      %vm354 = vcmask 1041408
      %v355 = vsel %vm354, %v353, %v333
      %vm356 = vcmask 1042432
      %v357 = vsel %vm356, %v355, %v342
      %vm358 = vcmask 1043456
      %v359 = vsel %vm358, %v357, %v351
      %v360 = vld [vmem:[%s4] sm:$0x1f]
      %v361 = vadd.f32 %v359, %v360
      %vm362 = vcmask 520192
      %363 = vst.msk [vmem:[%s222] sm:$0x1f] %vm362, %v361
      %p364 = scmp.lt.s32.totalorder %s16, 1
      %s365 = scalar_select %p364, %s16, 1
      %s366 = smul.addr %s365, 8
      %s367 = scalar_lea.vmem %s5, %s366
      // Predicated region
      $region41: #{xmp_forward.7} parent=39 // pred_check
        %p368 = pneg %p144
      $region42: #{xmp_forward.7} parent=39 // pred_check_branch
        %370 = sbr.rel (%p368) target = $region44
      $region43: #{xmp_forward.7} parent=39 // pred_region
        _
      $region44: #{xmp_forward.7} parent=39 // pred_fallthru
        _
    $region40: #{xmp_forward.7} parent=5 // pred_fallthru
      _
    %p371 = scmp.le.s32.totalorder 2, %s11
    // Predicated region
    $region45: #{xmp_forward.7} parent=5 // pred_check
      %p372 = pneg %p371
    $region46: #{xmp_forward.7} parent=5 // pred_check_branch
      %374 = sbr.rel (%p372) target = $region48
    $region47: #{xmp_forward.7} parent=5 // pred_region
      %s375 = ssub.s32 %s11, 2
      // Predicated region
      $region49: #{xmp_forward.7} parent=47 // pred_check
        %p376 = pneg %p150
      $region50: #{xmp_forward.7} parent=47 // pred_check_branch
        %378 = sbr.rel (%p376) target = $region52
      $region51: #{xmp_forward.7} parent=47 // pred_region
        %p379 = scmp.lt.s32.totalorder %s17, 1
        %s380 = scalar_select %p379, %s17, 1
        %s381 = smul.addr %s380, 8
        %s382 = scalar_lea.vmem %s5, %s381
      $region52: #{xmp_forward.7} parent=47 // pred_fallthru
        _
    $region48: #{xmp_forward.7} parent=5 // pred_fallthru
      _
  $region6: #{xmp_forward.7} parent=0 // loop_footer
    %s15 = sadd.s32 1, %s11
  $region7: #{xmp_forward.7} parent=0 // loop_footer_branch
    %10 = sbr.rel target = $region3
  $region8: #{xmp_forward.7} parent=0 // loop_exit
    _

// kernel: xmp_forward.6
$region0: #{xmp_forward.6}
  #allocation0 [shape = 'u32[]', space=smem, size = 0x4, offset = 0x4, fixed_abs, tag = 'smem constant byte address 0x4 - core index']
  #allocation1 [shape = 'u32[72,128]{1,0:T(1,128)}', space=vmem, size = 0x9000, scoped, tag = 'internal scratch']
  %s0 = inlined_call_operand.vmem [shape: f32[2,64,24], index: 0, kind: input, shape index: {}]
  %s1 = inlined_call_operand.vmem [shape: f32[24,32], index: 1, kind: input, shape index: {}]
  %s2 = inlined_call_operand.vmem [shape: f32[1,32], index: 2, kind: input, shape index: {}]
  %s3 = inlined_call_operand.vmem [shape: f32[1,32], index: 3, kind: input, shape index: {}]
  %s4 = inlined_call_operand.vmem [shape: f32[1,9,32], index: 4, kind: input, shape index: {}]
  %s5 = inlined_call_operand.vmem [shape: f32[2,9,32], index: 5, kind: output, shape index: {}]
  %s6 = sld [smem:[#allocation0]]
  $region53: #{xmp_forward.6} parent=0
    _
  %s8 = ssub.s32 1, %s6
  %s9 = scalar_select 0, %s8, %s6
  loop: start=0, step=1, limit=4
  $region2: #{xmp_forward.6} parent=0 // loop_pre_header
    _
  $region3: #{xmp_forward.6} parent=0 // loop_header
    %s11 = sphi 0, %s15
    %p12 = scmp.ge.s32.totalorder %s11, 4
    %s21 = sphi 0, %s23
    %s24 = sphi 0, %s21
    %s25 = sphi 0, %s24
    %s41 = sphi 0, %s25
    %s45 = sphi 0, %s45
    %s47 = sphi 0, %s45
    %s48 = sphi 0, %s47
    %s62 = sphi 0, %s48
    %s66 = sphi 0, %s66
    %s68 = sphi 0, %s66
    %s69 = sphi 0, %s68
    %s83 = sphi 0, %s69
    %s87 = sphi 0, %s87
    %s89 = sphi 0, %s87
    %s90 = sphi 0, %s89
    %s104 = sphi 0, %s90
    %s108 = sphi 0, %s108
    %s110 = sphi 0, %s108
    %s111 = sphi 0, %s110
    %s125 = sphi 0, %s111
    %s131 = sphi 0, %s133
    %s134 = sphi 0, %s131
    %s135 = sphi 0, %s134
    %s151 = sphi 0, %s135
  $region4: #{xmp_forward.6} parent=0 // loop_header_branch
    %14 = sbr.rel (%p12) target = $region8
  $region5: #{xmp_forward.6} parent=0 // loop_body
    %s16 = ssub.s32 %s11, 1
    %s17 = ssub.s32 %s11, 2
    %s18 = sadd.s32 %s11, 1
    %s19 = ssub.s32 %s11, %s18
    %p20 = scmp.eq.s32.totalorder %s19, 0
    %s22 = sadd.s32 %s21, 1
    %s23 = scalar_select %p20, %s21, %s22
    %p26 = pneg %p20
    %p27 = scmp.eq.s32.totalorder %s11, 1
    %p28 = por %p26, %p27
    %p29 = scmp.ne.s32.totalorder %s21, %s24
    %p30 = scmp.eq.s32.totalorder %s11, 0
    %p31 = por %p29, %p30
    %p32 = scmp.ne.s32.totalorder %s21, %s24
    %p33 = scmp.eq.s32.totalorder %s16, 1
    %p34 = por %p32, %p33
    %p35 = scmp.ne.s32.totalorder %s24, %s25
    %p36 = scmp.eq.s32.totalorder %s16, 0
    %p37 = por %p35, %p36
    %p38 = scmp.ne.s32.totalorder %s24, %s25
    %p39 = scmp.eq.s32.totalorder %s17, 1
    %p40 = por %p38, %p39
    %p42 = scmp.ne.s32.totalorder %s25, %s41
    %p43 = scmp.eq.s32.totalorder %s17, 0
    %p44 = por %p42, %p43
    %s46 = sadd.s32 %s45, 1
    %p49 = scmp.eq.s32.totalorder %s11, 1
    %p50 = scmp.ne.s32.totalorder %s45, %s47
    %p51 = scmp.eq.s32.totalorder %s11, 0
    %p52 = por %p50, %p51
    %p53 = scmp.ne.s32.totalorder %s45, %s47
    %p54 = scmp.eq.s32.totalorder %s16, 1
    %p55 = por %p53, %p54
    %p56 = scmp.ne.s32.totalorder %s47, %s48
    %p57 = scmp.eq.s32.totalorder %s16, 0
    %p58 = por %p56, %p57
    %p59 = scmp.ne.s32.totalorder %s47, %s48
    %p60 = scmp.eq.s32.totalorder %s17, 1
    %p61 = por %p59, %p60
    %p63 = scmp.ne.s32.totalorder %s48, %s62
    %p64 = scmp.eq.s32.totalorder %s17, 0
    %p65 = por %p63, %p64
    %s67 = sadd.s32 %s66, 1
    %p70 = scmp.eq.s32.totalorder %s11, 1
    %p71 = scmp.ne.s32.totalorder %s66, %s68
    %p72 = scmp.eq.s32.totalorder %s11, 0
    %p73 = por %p71, %p72
    %p74 = scmp.ne.s32.totalorder %s66, %s68
    %p75 = scmp.eq.s32.totalorder %s16, 1
    %p76 = por %p74, %p75
    %p77 = scmp.ne.s32.totalorder %s68, %s69
    %p78 = scmp.eq.s32.totalorder %s16, 0
    %p79 = por %p77, %p78
    %p80 = scmp.ne.s32.totalorder %s68, %s69
    %p81 = scmp.eq.s32.totalorder %s17, 1
    %p82 = por %p80, %p81
    %p84 = scmp.ne.s32.totalorder %s69, %s83
    %p85 = scmp.eq.s32.totalorder %s17, 0
    %p86 = por %p84, %p85
    %s88 = sadd.s32 %s87, 1
    %p91 = scmp.eq.s32.totalorder %s11, 1
    %p92 = scmp.ne.s32.totalorder %s87, %s89
    %p93 = scmp.eq.s32.totalorder %s11, 0
    %p94 = por %p92, %p93
    %p95 = scmp.ne.s32.totalorder %s87, %s89
    %p96 = scmp.eq.s32.totalorder %s16, 1
    %p97 = por %p95, %p96
    %p98 = scmp.ne.s32.totalorder %s89, %s90
    %p99 = scmp.eq.s32.totalorder %s16, 0
    %p100 = por %p98, %p99
    %p101 = scmp.ne.s32.totalorder %s89, %s90
    %p102 = scmp.eq.s32.totalorder %s17, 1
    %p103 = por %p101, %p102
    %p105 = scmp.ne.s32.totalorder %s90, %s104
    %p106 = scmp.eq.s32.totalorder %s17, 0
    %p107 = por %p105, %p106
    %s109 = sadd.s32 %s108, 1
    %p112 = scmp.eq.s32.totalorder %s11, 1
    %p113 = scmp.ne.s32.totalorder %s108, %s110
    %p114 = scmp.eq.s32.totalorder %s11, 0
    %p115 = por %p113, %p114
    %p116 = scmp.ne.s32.totalorder %s108, %s110
    %p117 = scmp.eq.s32.totalorder %s16, 1
    %p118 = por %p116, %p117
    %p119 = scmp.ne.s32.totalorder %s110, %s111
    %p120 = scmp.eq.s32.totalorder %s16, 0
    %p121 = por %p119, %p120
    %p122 = scmp.ne.s32.totalorder %s110, %s111
    %p123 = scmp.eq.s32.totalorder %s17, 1
    %p124 = por %p122, %p123
    %p126 = scmp.ne.s32.totalorder %s111, %s125
    %p127 = scmp.eq.s32.totalorder %s17, 0
    %p128 = por %p126, %p127
    %s129 = ssub.s32 %s11, %s18
    %p130 = scmp.eq.s32.totalorder %s129, 0
    %s132 = sadd.s32 %s131, 1
    %s133 = scalar_select %p130, %s131, %s132
    %p136 = pneg %p130
    %p137 = scmp.eq.s32.totalorder %s11, 1
    %p138 = por %p136, %p137
    %p139 = scmp.ne.s32.totalorder %s131, %s134
    %p140 = scmp.eq.s32.totalorder %s11, 0
    %p141 = por %p139, %p140
    %p142 = scmp.ne.s32.totalorder %s131, %s134
    %p143 = scmp.eq.s32.totalorder %s16, 1
    %p144 = por %p142, %p143
    %p145 = scmp.ne.s32.totalorder %s134, %s135
    %p146 = scmp.eq.s32.totalorder %s16, 0
    %p147 = por %p145, %p146
    %p148 = scmp.ne.s32.totalorder %s134, %s135
    %p149 = scmp.eq.s32.totalorder %s17, 1
    %p150 = por %p148, %p149
    %p152 = scmp.ne.s32.totalorder %s135, %s151
    %p153 = scmp.eq.s32.totalorder %s17, 0
    %p154 = por %p152, %p153
    %p155 = scmp.le.s32.totalorder 1, %s11
    %p156 = scmp.lt.s32.totalorder %s11, 3
    %p157 = pnand %p155, %p156
    %p158 = pneg %p157
    // Predicated region
    $region9: #{xmp_forward.6} parent=5 // pred_check
      _
    $region10: #{xmp_forward.6} parent=5 // pred_check_branch
      %160 = sbr.rel (%p157) target = $region12
    $region11: #{xmp_forward.6} parent=5 // pred_region
      %s161 = ssub.s32 %s11, 1
      // Predicated region
      $region13: #{xmp_forward.6} parent=11 // pred_check
        %p162 = pneg %p58
      $region14: #{xmp_forward.6} parent=11 // pred_check_branch
        %164 = sbr.rel (%p162) target = $region16
      $region15: #{xmp_forward.6} parent=11 // pred_region
        _
      $region16: #{xmp_forward.6} parent=11 // pred_fallthru
        _
      // Predicated region
      $region17: #{xmp_forward.6} parent=11 // pred_check
        %p165 = pneg %p79
      $region18: #{xmp_forward.6} parent=11 // pred_check_branch
        %167 = sbr.rel (%p165) target = $region20
      $region19: #{xmp_forward.6} parent=11 // pred_region
        _
      $region20: #{xmp_forward.6} parent=11 // pred_fallthru
        _
      // Predicated region
      $region21: #{xmp_forward.6} parent=11 // pred_check
        %p168 = pneg %p100
      $region22: #{xmp_forward.6} parent=11 // pred_check_branch
        %170 = sbr.rel (%p168) target = $region24
      $region23: #{xmp_forward.6} parent=11 // pred_region
        _
      $region24: #{xmp_forward.6} parent=11 // pred_fallthru
        _
      // Predicated region
      $region25: #{xmp_forward.6} parent=11 // pred_check
        %p171 = pneg %p121
      $region26: #{xmp_forward.6} parent=11 // pred_check_branch
        %173 = sbr.rel (%p171) target = $region28
      $region27: #{xmp_forward.6} parent=11 // pred_region
        _
      $region28: #{xmp_forward.6} parent=11 // pred_fallthru
        _
    $region12: #{xmp_forward.6} parent=5 // pred_fallthru
      _
    %p174 = scmp.lt.s32.totalorder %s11, 2
    // Predicated region
    $region29: #{xmp_forward.6} parent=5 // pred_check
      %p175 = pneg %p174
    $region30: #{xmp_forward.6} parent=5 // pred_check_branch
      %177 = sbr.rel (%p175) target = $region32
    $region31: #{xmp_forward.6} parent=5 // pred_region
      // Predicated region
      $region33: #{xmp_forward.6} parent=31 // pred_check
        %p178 = pneg %p31
      $region34: #{xmp_forward.6} parent=31 // pred_check_branch
        %180 = sbr.rel (%p178) target = $region36
      $region35: #{xmp_forward.6} parent=31 // pred_region
        %p181 = scmp.lt.s32.totalorder %s11, 1
        %s182 = scalar_select %p181, %s11, 1
        %s183 = smul.addr %s182, 8
        %s184 = smul.addr %s183, 8
        %s185 = scalar_lea.vmem %s0, %s184
      $region36: #{xmp_forward.6} parent=31 // pred_fallthru
        _
    $region32: #{xmp_forward.6} parent=5 // pred_fallthru
      _
    %p186 = scmp.le.s32.totalorder 1, %s11
    %p187 = scmp.lt.s32.totalorder %s11, 3
    %p188 = pnand %p186, %p187
    %p189 = pneg %p188
    // Predicated region
    $region37: #{xmp_forward.6} parent=5 // pred_check
      _
    $region38: #{xmp_forward.6} parent=5 // pred_check_branch
      %191 = sbr.rel (%p188) target = $region40
    $region39: #{xmp_forward.6} parent=5 // pred_region
      %s192 = ssub.s32 %s11, 1
      %p193 = scmp.lt.s32.totalorder %s16, 1
      %s194 = scalar_select %p193, %s16, 1
      %s195 = smul.addr %s194, 8
      %s196 = smul.addr %s195, 8
      %s197 = scalar_lea.vmem %s0, %s196
      %p198 = pneg %p37
      %p199 = pneg %p34
      %p200 = pneg %p58
      %p201 = pneg %p55
      %p202 = pneg %p79
      %p203 = pneg %p76
      %p204 = pneg %p100
      %p205 = pneg %p97
      %p206 = pneg %p121
      %p207 = pneg %p118
      %p208 = pneg %p147
      %p209 = pneg %p144
      %p210 = scmp.lt.s32.totalorder %s16, 1
      %s211 = scalar_select %p210, %s16, 1
      %s212 = smul.addr %s211, 2
      %s213 = smul.addr %s212, 8
      %s214 = scalar_lea.vmem %s5, %s213
      %p215 = scmp.lt.s32.totalorder %s16, 1
      %s216 = scalar_select %p215, %s16, 1
      %s217 = smul.addr %s216, 8
      %s218 = smul.addr %s217, 8
      %s219 = scalar_lea.vmem %s0, %s218
      %p220 = scmp.lt.s32.totalorder %s16, 1
      %s221 = scalar_select %p220, %s16, 1
      %s222 = smul.addr %s221, 2
      %s223 = smul.addr %s222, 8
      %s224 = scalar_lea.vmem %s5, %s223
      %v225 = vld [vmem:[%s219] sm:$0xff]
      %v226 = vld [vmem:[%s219 + $0x8] sm:$0xff]
      %v227 = vld [vmem:[%s219 + $0x10] sm:$0xff]
      %v228 = vld [vmem:[%s219 + $0x18] sm:$0xff]
      %v229 = vld [vmem:[%s219 + $0x20] sm:$0xff]
      %v230 = vld [vmem:[%s219 + $0x28] sm:$0xff]
      %v231 = vld [vmem:[%s219 + $0x30] sm:$0xff]
      %v232 = vld [vmem:[%s219 + $0x38] sm:$0xff]
      %v233 = vld [vmem:[%s1] sm:$0xff]
      %v234 = vld [vmem:[%s1 + $0x8] sm:$0xff]
      %v235 = vld [vmem:[%s1 + $0x10] sm:$0xff]
      %v236 = vld [vmem:[%s2] sm:$0x1]
      %v238 = vperm.slane %v236, 0
      %vm240 = vcmask 195584
      %v242 = vsel %vm240, %v225, 0
      %v245 = vsel %vm240, %v226, 0
      %v248 = vsel %vm240, %v227, 0
      %v251 = vsel %vm240, %v228, 0
      %v254 = vsel %vm240, %v229, 0
      %v257 = vsel %vm240, %v230, 0
      %v260 = vsel %vm240, %v231, 0
      %v263 = vsel %vm240, %v232, 0
      %265 = vmatpush.msra.mxu0 0.0
      %266 = vmatpush.msra.mxu0 0.0
      %267 = vmatpush.msra.mxu0 0.0
      %268 = vmatpush.msra.mxu0 0.0
      %269 = vmatpush.msra.mxu0 0.0
      %270 = vmatpush.msra.mxu0 0.0
      %271 = vmatpush.msra.mxu0 0.0
      %272 = vmatpush.msra.mxu0 0.0
      %273 = vmatpush.msra.mxu0 0.0
      %274 = vmatpush.msra.mxu0 0.0
      %275 = vmatpush.msra.mxu0 0.0
      %276 = vmatpush.msra.mxu0 0.0
      %277 = vmatpush.msra.mxu0 0.0
      %278 = vmatpush.msra.mxu0 %v235
      %279 = vmatpush.msra.mxu0 %v234
      %280 = vmatpush.msra.mxu0 %v233
      %281 = vmatmul.f32.gmra.mxu0 %v242
      %v282 = vpop.f32.mrf.mxu0
      %v283 = vadd.f32 %v238, %v282
      %284 = vmatmul.f32.gmra.mxu0 %v245
      %v285 = vpop.f32.mrf.mxu0
      %v286 = vadd.f32 %v238, %v285
      %287 = vmatmul.f32.gmra.mxu0 %v248
      %v288 = vpop.f32.mrf.mxu0
      %v289 = vadd.f32 %v238, %v288
      %290 = vmatmul.f32.gmra.mxu0 %v251
      %v291 = vpop.f32.mrf.mxu0
      %v292 = vadd.f32 %v238, %v291
      %293 = vmatmul.f32.gmra.mxu0 %v254
      %v294 = vpop.f32.mrf.mxu0
      %v295 = vadd.f32 %v238, %v294
      %296 = vmatmul.f32.gmra.mxu0 %v257
      %v297 = vpop.f32.mrf.mxu0
      %v298 = vadd.f32 %v238, %v297
      %299 = vmatmul.f32.gmra.mxu0 %v260
      %v300 = vpop.f32.mrf.mxu0
      %v301 = vadd.f32 %v238, %v300
      %302 = vmatmul.f32.gmra.mxu0 %v263
      %v303 = vpop.f32.mrf.mxu0
      %v304 = vadd.f32 %v238, %v303
      %305 = vdwg.mxu0
      %v306 = vmax.f32 %v283, 0.0
      %v307 = vmax.f32 %v286, 0.0
      %v308 = vmax.f32 %v289, 0.0
      %v309 = vmax.f32 %v292, 0.0
      %v310 = vmax.f32 %v295, 0.0
      %v311 = vmax.f32 %v298, 0.0
      %v312 = vmax.f32 %v301, 0.0
      %v313 = vmax.f32 %v304, 0.0
      %v314 = vld [vmem:[%s3] sm:$0x1]
      %vm315 = vcmask 261120
      %v316 = vsel %vm315, %v306, -inf
      %v317 = vrot.slane %v316, 4
      %v318 = vmax.f32 %v316, %v317
      %v319 = vrot.slane %v318, 2
      %v320 = vmax.f32 %v318, %v319
      %v321 = vrot.slane %v320, 1
      %v322 = vmax.f32 %v320, %v321
      %v323 = vsel %vm315, %v307, -inf
      %v324 = vrot.slane %v323, 4
      %v325 = vmax.f32 %v323, %v324
      %v326 = vrot.slane %v325, 2
      %v327 = vmax.f32 %v325, %v326
      %v328 = vrot.slane %v327, 1
      %v329 = vmax.f32 %v327, %v328
      %v330 = vsel %vm315, %v308, -inf
      %v331 = vrot.slane %v330, 4
      %v332 = vmax.f32 %v330, %v331
      %v333 = vrot.slane %v332, 2
      %v334 = vmax.f32 %v332, %v333
      %v335 = vrot.slane %v334, 1
      %v336 = vmax.f32 %v334, %v335
      %v337 = vsel %vm315, %v309, -inf
      %v338 = vrot.slane %v337, 4
      %v339 = vmax.f32 %v337, %v338
      %v340 = vrot.slane %v339, 2
      %v341 = vmax.f32 %v339, %v340
      %v342 = vrot.slane %v341, 1
      %v343 = vmax.f32 %v341, %v342
      %v344 = vsel %vm315, %v310, -inf
      %v345 = vrot.slane %v344, 4
      %v346 = vmax.f32 %v344, %v345
      %v347 = vrot.slane %v346, 2
      %v348 = vmax.f32 %v346, %v347
      %v349 = vrot.slane %v348, 1
      %v350 = vmax.f32 %v348, %v349
      %v351 = vsel %vm315, %v311, -inf
      %v352 = vrot.slane %v351, 4
      %v353 = vmax.f32 %v351, %v352
      %v354 = vrot.slane %v353, 2
      %v355 = vmax.f32 %v353, %v354
      %v356 = vrot.slane %v355, 1
      %v357 = vmax.f32 %v355, %v356
      %v358 = vsel %vm315, %v312, -inf
      %v359 = vrot.slane %v358, 4
      %v360 = vmax.f32 %v358, %v359
      %v361 = vrot.slane %v360, 2
      %v362 = vmax.f32 %v360, %v361
      %v363 = vrot.slane %v362, 1
      %v364 = vmax.f32 %v362, %v363
      %v365 = vsel %vm315, %v313, -inf
      %v366 = vrot.slane %v365, 4
      %v367 = vmax.f32 %v365, %v366
      %v368 = vrot.slane %v367, 2
      %v369 = vmax.f32 %v367, %v368
      %v370 = vrot.slane %v369, 1
      %v371 = vmax.f32 %v369, %v370
      %vm372 = vcmask 1040384
      %v373 = vsel %vm372, %v314, %v322
      %vm374 = vcmask 1041408
      %v375 = vsel %vm374, %v373, %v329
      %vm376 = vcmask 1042432
      %v377 = vsel %vm376, %v375, %v336
      %vm378 = vcmask 1043456
      %v379 = vsel %vm378, %v377, %v343
      %vm380 = vcmask 1044480
      %v381 = vsel %vm380, %v379, %v350
      %vm382 = vcmask 1045504
      %v383 = vsel %vm382, %v381, %v357
      %vm384 = vcmask 1046528
      %v385 = vsel %vm384, %v383, %v364
      %v386 = vld [vmem:[%s4] sm:$0xff]
      %v387 = vld [vmem:[%s4 + $0x8] sm:$0x1]
      %v388 = vadd.f32 %v385, %v386
      %v389 = vadd.f32 %v371, %v387
      %390 = vst.msk [vmem:[%s224] sm:$0xff] %vm315, %v388
      %vm391 = vcmask 253952
      %392 = vst.msk [vmem:[%s224 + $0x8] sm:$0x1] %vm391, %v389
      %p393 = scmp.lt.s32.totalorder %s16, 1
      %s394 = scalar_select %p393, %s16, 1
      %s395 = smul.addr %s394, 2
      %s396 = smul.addr %s395, 8
      %s397 = scalar_lea.vmem %s5, %s396
      // Predicated region
      $region41: #{xmp_forward.6} parent=39 // pred_check
        %p398 = pneg %p144
      $region42: #{xmp_forward.6} parent=39 // pred_check_branch
        %400 = sbr.rel (%p398) target = $region44
      $region43: #{xmp_forward.6} parent=39 // pred_region
        _
      $region44: #{xmp_forward.6} parent=39 // pred_fallthru
        _
    $region40: #{xmp_forward.6} parent=5 // pred_fallthru
      _
    %p401 = scmp.le.s32.totalorder 2, %s11
    // Predicated region
    $region45: #{xmp_forward.6} parent=5 // pred_check
      %p402 = pneg %p401
    $region46: #{xmp_forward.6} parent=5 // pred_check_branch
      %404 = sbr.rel (%p402) target = $region48
    $region47: #{xmp_forward.6} parent=5 // pred_region
      %s405 = ssub.s32 %s11, 2
      // Predicated region
      $region49: #{xmp_forward.6} parent=47 // pred_check
        %p406 = pneg %p150
      $region50: #{xmp_forward.6} parent=47 // pred_check_branch
        %408 = sbr.rel (%p406) target = $region52
      $region51: #{xmp_forward.6} parent=47 // pred_region
        %p409 = scmp.lt.s32.totalorder %s17, 1
        %s410 = scalar_select %p409, %s17, 1
        %s411 = smul.addr %s410, 2
        %s412 = smul.addr %s411, 8
        %s413 = scalar_lea.vmem %s5, %s412
      $region52: #{xmp_forward.6} parent=47 // pred_fallthru
        _
    $region48: #{xmp_forward.6} parent=5 // pred_fallthru
      _
  $region6: #{xmp_forward.6} parent=0 // loop_footer
    %s15 = sadd.s32 1, %s11
  $region7: #{xmp_forward.6} parent=0 // loop_footer_branch
    %10 = sbr.rel target = $region3
  $region8: #{xmp_forward.6} parent=0 // loop_exit
    _

// kernel: xmp_forward.8
$region0: #{xmp_forward.8}
  #allocation0 [shape = 'u32[]', space=smem, size = 0x4, offset = 0x4, fixed_abs, tag = 'smem constant byte address 0x4 - core index']
  #allocation1 [shape = 'u32[72,128]{1,0:T(1,128)}', space=vmem, size = 0x9000, scoped, tag = 'internal scratch']
  %s0 = inlined_call_operand.vmem [shape: f32[2,9,32], index: 0, kind: input, shape index: {}]
  %s1 = inlined_call_operand.vmem [shape: f32[1,32], index: 1, kind: input, shape index: {}]
  %s2 = inlined_call_operand.vmem [shape: f32[1,32], index: 2, kind: input, shape index: {}]
  %s3 = inlined_call_operand.vmem [shape: f32[6,32,16], index: 3, kind: input, shape index: {}]
  %s4 = inlined_call_operand.vmem [shape: f32[2,16,32], index: 4, kind: input, shape index: {}]
  %s5 = inlined_call_operand.vmem [shape: f32[1,32], index: 5, kind: input, shape index: {}]
  %s6 = inlined_call_operand.vmem [shape: f32[1,32], index: 6, kind: input, shape index: {}]
  %s7 = inlined_call_operand.vmem [shape: f32[1,32], index: 7, kind: input, shape index: {}]
  %s8 = inlined_call_operand.vmem [shape: f32[32,128], index: 8, kind: input, shape index: {}]
  %s9 = inlined_call_operand.vmem [shape: f32[1,128], index: 9, kind: input, shape index: {}]
  %s10 = inlined_call_operand.vmem [shape: f32[128,32], index: 10, kind: input, shape index: {}]
  %s11 = inlined_call_operand.vmem [shape: f32[1,32], index: 11, kind: input, shape index: {}]
  %s12 = inlined_call_operand.vmem [shape: f32[2,9,32], index: 12, kind: output, shape index: {}]
  %s13 = sld [smem:[#allocation0]]
  $region81: #{xmp_forward.8} parent=0
    _
  %s15 = ssub.s32 1, %s13
  %s16 = scalar_select 0, %s15, %s13
  loop: start=0, step=1, limit=4
  $region2: #{xmp_forward.8} parent=0 // loop_pre_header
    _
  $region3: #{xmp_forward.8} parent=0 // loop_header
    %s18 = sphi 0, %s22
    %p19 = scmp.ge.s32.totalorder %s18, 4
    %s28 = sphi 0, %s30
    %s31 = sphi 0, %s28
    %s32 = sphi 0, %s31
    %s48 = sphi 0, %s32
    %s52 = sphi 0, %s52
    %s54 = sphi 0, %s52
    %s55 = sphi 0, %s54
    %s69 = sphi 0, %s55
    %s73 = sphi 0, %s73
    %s75 = sphi 0, %s73
    %s76 = sphi 0, %s75
    %s90 = sphi 0, %s76
    %s94 = sphi 0, %s94
    %s96 = sphi 0, %s94
    %s97 = sphi 0, %s96
    %s111 = sphi 0, %s97
    %s115 = sphi 0, %s115
    %s117 = sphi 0, %s115
    %s118 = sphi 0, %s117
    %s132 = sphi 0, %s118
    %s136 = sphi 0, %s136
    %s138 = sphi 0, %s136
    %s139 = sphi 0, %s138
    %s153 = sphi 0, %s139
    %s157 = sphi 0, %s157
    %s159 = sphi 0, %s157
    %s160 = sphi 0, %s159
    %s174 = sphi 0, %s160
    %s178 = sphi 0, %s178
    %s180 = sphi 0, %s178
    %s181 = sphi 0, %s180
    %s195 = sphi 0, %s181
    %s199 = sphi 0, %s199
    %s201 = sphi 0, %s199
    %s202 = sphi 0, %s201
    %s216 = sphi 0, %s202
    %s220 = sphi 0, %s220
    %s222 = sphi 0, %s220
    %s223 = sphi 0, %s222
    %s237 = sphi 0, %s223
    %s241 = sphi 0, %s241
    %s243 = sphi 0, %s241
    %s244 = sphi 0, %s243
    %s258 = sphi 0, %s244
    %s262 = sphi 0, %s262
    %s264 = sphi 0, %s262
    %s265 = sphi 0, %s264
    %s279 = sphi 0, %s265
    %s285 = sphi 0, %s287
    %s288 = sphi 0, %s285
    %s289 = sphi 0, %s288
    %s305 = sphi 0, %s289
  $region4: #{xmp_forward.8} parent=0 // loop_header_branch
    %21 = sbr.rel (%p19) target = $region8
  $region5: #{xmp_forward.8} parent=0 // loop_body
    %s23 = ssub.s32 %s18, 1
    %s24 = ssub.s32 %s18, 2
    %s25 = sadd.s32 %s18, 1
    %s26 = ssub.s32 %s18, %s25
    %p27 = scmp.eq.s32.totalorder %s26, 0
    %s29 = sadd.s32 %s28, 1
    %s30 = scalar_select %p27, %s28, %s29
    %p33 = pneg %p27
    %p34 = scmp.eq.s32.totalorder %s18, 1
    %p35 = por %p33, %p34
    %p36 = scmp.ne.s32.totalorder %s28, %s31
    %p37 = scmp.eq.s32.totalorder %s18, 0
    %p38 = por %p36, %p37
    %p39 = scmp.ne.s32.totalorder %s28, %s31
    %p40 = scmp.eq.s32.totalorder %s23, 1
    %p41 = por %p39, %p40
    %p42 = scmp.ne.s32.totalorder %s31, %s32
    %p43 = scmp.eq.s32.totalorder %s23, 0
    %p44 = por %p42, %p43
    %p45 = scmp.ne.s32.totalorder %s31, %s32
    %p46 = scmp.eq.s32.totalorder %s24, 1
    %p47 = por %p45, %p46
    %p49 = scmp.ne.s32.totalorder %s32, %s48
    %p50 = scmp.eq.s32.totalorder %s24, 0
    %p51 = por %p49, %p50
    %s53 = sadd.s32 %s52, 1
    %p56 = scmp.eq.s32.totalorder %s18, 1
    %p57 = scmp.ne.s32.totalorder %s52, %s54
    %p58 = scmp.eq.s32.totalorder %s18, 0
    %p59 = por %p57, %p58
    %p60 = scmp.ne.s32.totalorder %s52, %s54
    %p61 = scmp.eq.s32.totalorder %s23, 1
    %p62 = por %p60, %p61
    %p63 = scmp.ne.s32.totalorder %s54, %s55
    %p64 = scmp.eq.s32.totalorder %s23, 0
    %p65 = por %p63, %p64
    %p66 = scmp.ne.s32.totalorder %s54, %s55
    %p67 = scmp.eq.s32.totalorder %s24, 1
    %p68 = por %p66, %p67
    %p70 = scmp.ne.s32.totalorder %s55, %s69
    %p71 = scmp.eq.s32.totalorder %s24, 0
    %p72 = por %p70, %p71
    %s74 = sadd.s32 %s73, 1
    %p77 = scmp.eq.s32.totalorder %s18, 1
    %p78 = scmp.ne.s32.totalorder %s73, %s75
    %p79 = scmp.eq.s32.totalorder %s18, 0
    %p80 = por %p78, %p79
    %p81 = scmp.ne.s32.totalorder %s73, %s75
    %p82 = scmp.eq.s32.totalorder %s23, 1
    %p83 = por %p81, %p82
    %p84 = scmp.ne.s32.totalorder %s75, %s76
    %p85 = scmp.eq.s32.totalorder %s23, 0
    %p86 = por %p84, %p85
    %p87 = scmp.ne.s32.totalorder %s75, %s76
    %p88 = scmp.eq.s32.totalorder %s24, 1
    %p89 = por %p87, %p88
    %p91 = scmp.ne.s32.totalorder %s76, %s90
    %p92 = scmp.eq.s32.totalorder %s24, 0
    %p93 = por %p91, %p92
    %s95 = sadd.s32 %s94, 1
    %p98 = scmp.eq.s32.totalorder %s18, 1
    %p99 = scmp.ne.s32.totalorder %s94, %s96
    %p100 = scmp.eq.s32.totalorder %s18, 0
    %p101 = por %p99, %p100
    %p102 = scmp.ne.s32.totalorder %s94, %s96
    %p103 = scmp.eq.s32.totalorder %s23, 1
    %p104 = por %p102, %p103
    %p105 = scmp.ne.s32.totalorder %s96, %s97
    %p106 = scmp.eq.s32.totalorder %s23, 0
    %p107 = por %p105, %p106
    %p108 = scmp.ne.s32.totalorder %s96, %s97
    %p109 = scmp.eq.s32.totalorder %s24, 1
    %p110 = por %p108, %p109
    %p112 = scmp.ne.s32.totalorder %s97, %s111
    %p113 = scmp.eq.s32.totalorder %s24, 0
    %p114 = por %p112, %p113
    %s116 = sadd.s32 %s115, 1
    %p119 = scmp.eq.s32.totalorder %s18, 1
    %p120 = scmp.ne.s32.totalorder %s115, %s117
    %p121 = scmp.eq.s32.totalorder %s18, 0
    %p122 = por %p120, %p121
    %p123 = scmp.ne.s32.totalorder %s115, %s117
    %p124 = scmp.eq.s32.totalorder %s23, 1
    %p125 = por %p123, %p124
    %p126 = scmp.ne.s32.totalorder %s117, %s118
    %p127 = scmp.eq.s32.totalorder %s23, 0
    %p128 = por %p126, %p127
    %p129 = scmp.ne.s32.totalorder %s117, %s118
    %p130 = scmp.eq.s32.totalorder %s24, 1
    %p131 = por %p129, %p130
    %p133 = scmp.ne.s32.totalorder %s118, %s132
    %p134 = scmp.eq.s32.totalorder %s24, 0
    %p135 = por %p133, %p134
    %s137 = sadd.s32 %s136, 1
    %p140 = scmp.eq.s32.totalorder %s18, 1
    %p141 = scmp.ne.s32.totalorder %s136, %s138
    %p142 = scmp.eq.s32.totalorder %s18, 0
    %p143 = por %p141, %p142
    %p144 = scmp.ne.s32.totalorder %s136, %s138
    %p145 = scmp.eq.s32.totalorder %s23, 1
    %p146 = por %p144, %p145
    %p147 = scmp.ne.s32.totalorder %s138, %s139
    %p148 = scmp.eq.s32.totalorder %s23, 0
    %p149 = por %p147, %p148
    %p150 = scmp.ne.s32.totalorder %s138, %s139
    %p151 = scmp.eq.s32.totalorder %s24, 1
    %p152 = por %p150, %p151
    %p154 = scmp.ne.s32.totalorder %s139, %s153
    %p155 = scmp.eq.s32.totalorder %s24, 0
    %p156 = por %p154, %p155
    %s158 = sadd.s32 %s157, 1
    %p161 = scmp.eq.s32.totalorder %s18, 1
    %p162 = scmp.ne.s32.totalorder %s157, %s159
    %p163 = scmp.eq.s32.totalorder %s18, 0
    %p164 = por %p162, %p163
    %p165 = scmp.ne.s32.totalorder %s157, %s159
    %p166 = scmp.eq.s32.totalorder %s23, 1
    %p167 = por %p165, %p166
    %p168 = scmp.ne.s32.totalorder %s159, %s160
    %p169 = scmp.eq.s32.totalorder %s23, 0
    %p170 = por %p168, %p169
    %p171 = scmp.ne.s32.totalorder %s159, %s160
    %p172 = scmp.eq.s32.totalorder %s24, 1
    %p173 = por %p171, %p172
    %p175 = scmp.ne.s32.totalorder %s160, %s174
    %p176 = scmp.eq.s32.totalorder %s24, 0
    %p177 = por %p175, %p176
    %s179 = sadd.s32 %s178, 1
    %p182 = scmp.eq.s32.totalorder %s18, 1
    %p183 = scmp.ne.s32.totalorder %s178, %s180
    %p184 = scmp.eq.s32.totalorder %s18, 0
    %p185 = por %p183, %p184
    %p186 = scmp.ne.s32.totalorder %s178, %s180
    %p187 = scmp.eq.s32.totalorder %s23, 1
    %p188 = por %p186, %p187
    %p189 = scmp.ne.s32.totalorder %s180, %s181
    %p190 = scmp.eq.s32.totalorder %s23, 0
    %p191 = por %p189, %p190
    %p192 = scmp.ne.s32.totalorder %s180, %s181
    %p193 = scmp.eq.s32.totalorder %s24, 1
    %p194 = por %p192, %p193
    %p196 = scmp.ne.s32.totalorder %s181, %s195
    %p197 = scmp.eq.s32.totalorder %s24, 0
    %p198 = por %p196, %p197
    %s200 = sadd.s32 %s199, 1
    %p203 = scmp.eq.s32.totalorder %s18, 1
    %p204 = scmp.ne.s32.totalorder %s199, %s201
    %p205 = scmp.eq.s32.totalorder %s18, 0
    %p206 = por %p204, %p205
    %p207 = scmp.ne.s32.totalorder %s199, %s201
    %p208 = scmp.eq.s32.totalorder %s23, 1
    %p209 = por %p207, %p208
    %p210 = scmp.ne.s32.totalorder %s201, %s202
    %p211 = scmp.eq.s32.totalorder %s23, 0
    %p212 = por %p210, %p211
    %p213 = scmp.ne.s32.totalorder %s201, %s202
    %p214 = scmp.eq.s32.totalorder %s24, 1
    %p215 = por %p213, %p214
    %p217 = scmp.ne.s32.totalorder %s202, %s216
    %p218 = scmp.eq.s32.totalorder %s24, 0
    %p219 = por %p217, %p218
    %s221 = sadd.s32 %s220, 1
    %p224 = scmp.eq.s32.totalorder %s18, 1
    %p225 = scmp.ne.s32.totalorder %s220, %s222
    %p226 = scmp.eq.s32.totalorder %s18, 0
    %p227 = por %p225, %p226
    %p228 = scmp.ne.s32.totalorder %s220, %s222
    %p229 = scmp.eq.s32.totalorder %s23, 1
    %p230 = por %p228, %p229
    %p231 = scmp.ne.s32.totalorder %s222, %s223
    %p232 = scmp.eq.s32.totalorder %s23, 0
    %p233 = por %p231, %p232
    %p234 = scmp.ne.s32.totalorder %s222, %s223
    %p235 = scmp.eq.s32.totalorder %s24, 1
    %p236 = por %p234, %p235
    %p238 = scmp.ne.s32.totalorder %s223, %s237
    %p239 = scmp.eq.s32.totalorder %s24, 0
    %p240 = por %p238, %p239
    %s242 = sadd.s32 %s241, 1
    %p245 = scmp.eq.s32.totalorder %s18, 1
    %p246 = scmp.ne.s32.totalorder %s241, %s243
    %p247 = scmp.eq.s32.totalorder %s18, 0
    %p248 = por %p246, %p247
    %p249 = scmp.ne.s32.totalorder %s241, %s243
    %p250 = scmp.eq.s32.totalorder %s23, 1
    %p251 = por %p249, %p250
    %p252 = scmp.ne.s32.totalorder %s243, %s244
    %p253 = scmp.eq.s32.totalorder %s23, 0
    %p254 = por %p252, %p253
    %p255 = scmp.ne.s32.totalorder %s243, %s244
    %p256 = scmp.eq.s32.totalorder %s24, 1
    %p257 = por %p255, %p256
    %p259 = scmp.ne.s32.totalorder %s244, %s258
    %p260 = scmp.eq.s32.totalorder %s24, 0
    %p261 = por %p259, %p260
    %s263 = sadd.s32 %s262, 1
    %p266 = scmp.eq.s32.totalorder %s18, 1
    %p267 = scmp.ne.s32.totalorder %s262, %s264
    %p268 = scmp.eq.s32.totalorder %s18, 0
    %p269 = por %p267, %p268
    %p270 = scmp.ne.s32.totalorder %s262, %s264
    %p271 = scmp.eq.s32.totalorder %s23, 1
    %p272 = por %p270, %p271
    %p273 = scmp.ne.s32.totalorder %s264, %s265
    %p274 = scmp.eq.s32.totalorder %s23, 0
    %p275 = por %p273, %p274
    %p276 = scmp.ne.s32.totalorder %s264, %s265
    %p277 = scmp.eq.s32.totalorder %s24, 1
    %p278 = por %p276, %p277
    %p280 = scmp.ne.s32.totalorder %s265, %s279
    %p281 = scmp.eq.s32.totalorder %s24, 0
    %p282 = por %p280, %p281
    %s283 = ssub.s32 %s18, %s25
    %p284 = scmp.eq.s32.totalorder %s283, 0
    %s286 = sadd.s32 %s285, 1
    %s287 = scalar_select %p284, %s285, %s286
    %p290 = pneg %p284
    %p291 = scmp.eq.s32.totalorder %s18, 1
    %p292 = por %p290, %p291
    %p293 = scmp.ne.s32.totalorder %s285, %s288
    %p294 = scmp.eq.s32.totalorder %s18, 0
    %p295 = por %p293, %p294
    %p296 = scmp.ne.s32.totalorder %s285, %s288
    %p297 = scmp.eq.s32.totalorder %s23, 1
    %p298 = por %p296, %p297
    %p299 = scmp.ne.s32.totalorder %s288, %s289
    %p300 = scmp.eq.s32.totalorder %s23, 0
    %p301 = por %p299, %p300
    %p302 = scmp.ne.s32.totalorder %s288, %s289
    %p303 = scmp.eq.s32.totalorder %s24, 1
    %p304 = por %p302, %p303
    %p306 = scmp.ne.s32.totalorder %s289, %s305
    %p307 = scmp.eq.s32.totalorder %s24, 0
    %p308 = por %p306, %p307
    %p309 = scmp.le.s32.totalorder 1, %s18
    %p310 = scmp.lt.s32.totalorder %s18, 3
    %p311 = pnand %p309, %p310
    %p312 = pneg %p311
    // Predicated region
    $region9: #{xmp_forward.8} parent=5 // pred_check
      _
    $region10: #{xmp_forward.8} parent=5 // pred_check_branch
      %314 = sbr.rel (%p311) target = $region12
    $region11: #{xmp_forward.8} parent=5 // pred_region
      %s315 = ssub.s32 %s18, 1
      // Predicated region
      $region13: #{xmp_forward.8} parent=11 // pred_check
        %p316 = pneg %p65
      $region14: #{xmp_forward.8} parent=11 // pred_check_branch
        %318 = sbr.rel (%p316) target = $region16
      $region15: #{xmp_forward.8} parent=11 // pred_region
        _
      $region16: #{xmp_forward.8} parent=11 // pred_fallthru
        _
      // Predicated region
      $region17: #{xmp_forward.8} parent=11 // pred_check
        %p319 = pneg %p86
      $region18: #{xmp_forward.8} parent=11 // pred_check_branch
        %321 = sbr.rel (%p319) target = $region20
      $region19: #{xmp_forward.8} parent=11 // pred_region
        _
      $region20: #{xmp_forward.8} parent=11 // pred_fallthru
        _
      // Predicated region
      $region21: #{xmp_forward.8} parent=11 // pred_check
        %p322 = pneg %p107
      $region22: #{xmp_forward.8} parent=11 // pred_check_branch
        %324 = sbr.rel (%p322) target = $region24
      $region23: #{xmp_forward.8} parent=11 // pred_region
        _
      $region24: #{xmp_forward.8} parent=11 // pred_fallthru
        _
      // Predicated region
      $region25: #{xmp_forward.8} parent=11 // pred_check
        %p325 = pneg %p128
      $region26: #{xmp_forward.8} parent=11 // pred_check_branch
        %327 = sbr.rel (%p325) target = $region28
      $region27: #{xmp_forward.8} parent=11 // pred_region
        _
      $region28: #{xmp_forward.8} parent=11 // pred_fallthru
        _
      // Predicated region
      $region29: #{xmp_forward.8} parent=11 // pred_check
        %p328 = pneg %p149
      $region30: #{xmp_forward.8} parent=11 // pred_check_branch
        %330 = sbr.rel (%p328) target = $region32
      $region31: #{xmp_forward.8} parent=11 // pred_region
        _
      $region32: #{xmp_forward.8} parent=11 // pred_fallthru
        _
      // Predicated region
      $region33: #{xmp_forward.8} parent=11 // pred_check
        %p331 = pneg %p170
      $region34: #{xmp_forward.8} parent=11 // pred_check_branch
        %333 = sbr.rel (%p331) target = $region36
      $region35: #{xmp_forward.8} parent=11 // pred_region
        _
      $region36: #{xmp_forward.8} parent=11 // pred_fallthru
        _
      // Predicated region
      $region37: #{xmp_forward.8} parent=11 // pred_check
        %p334 = pneg %p191
      $region38: #{xmp_forward.8} parent=11 // pred_check_branch
        %336 = sbr.rel (%p334) target = $region40
      $region39: #{xmp_forward.8} parent=11 // pred_region
        _
      $region40: #{xmp_forward.8} parent=11 // pred_fallthru
        _
      // Predicated region
      $region41: #{xmp_forward.8} parent=11 // pred_check
        %p337 = pneg %p212
      $region42: #{xmp_forward.8} parent=11 // pred_check_branch
        %339 = sbr.rel (%p337) target = $region44
      $region43: #{xmp_forward.8} parent=11 // pred_region
        _
      $region44: #{xmp_forward.8} parent=11 // pred_fallthru
        _
      // Predicated region
      $region45: #{xmp_forward.8} parent=11 // pred_check
        %p340 = pneg %p233
      $region46: #{xmp_forward.8} parent=11 // pred_check_branch
        %342 = sbr.rel (%p340) target = $region48
      $region47: #{xmp_forward.8} parent=11 // pred_region
        _
      $region48: #{xmp_forward.8} parent=11 // pred_fallthru
        _
      // Predicated region
      $region49: #{xmp_forward.8} parent=11 // pred_check
        %p343 = pneg %p254
      $region50: #{xmp_forward.8} parent=11 // pred_check_branch
        %345 = sbr.rel (%p343) target = $region52
      $region51: #{xmp_forward.8} parent=11 // pred_region
        _
      $region52: #{xmp_forward.8} parent=11 // pred_fallthru
        _
      // Predicated region
      $region53: #{xmp_forward.8} parent=11 // pred_check
        %p346 = pneg %p275
      $region54: #{xmp_forward.8} parent=11 // pred_check_branch
        %348 = sbr.rel (%p346) target = $region56
      $region55: #{xmp_forward.8} parent=11 // pred_region
        _
      $region56: #{xmp_forward.8} parent=11 // pred_fallthru
        _
    $region12: #{xmp_forward.8} parent=5 // pred_fallthru
      _
    %p349 = scmp.lt.s32.totalorder %s18, 2
    // Predicated region
    $region57: #{xmp_forward.8} parent=5 // pred_check
      %p350 = pneg %p349
    $region58: #{xmp_forward.8} parent=5 // pred_check_branch
      %352 = sbr.rel (%p350) target = $region60
    $region59: #{xmp_forward.8} parent=5 // pred_region
      // Predicated region
      $region61: #{xmp_forward.8} parent=59 // pred_check
        %p353 = pneg %p38
      $region62: #{xmp_forward.8} parent=59 // pred_check_branch
        %355 = sbr.rel (%p353) target = $region64
      $region63: #{xmp_forward.8} parent=59 // pred_region
        %p356 = scmp.lt.s32.totalorder %s18, 1
        %s357 = scalar_select %p356, %s18, 1
        %s358 = smul.addr %s357, 2
        %s359 = smul.addr %s358, 8
        %s360 = scalar_lea.vmem %s0, %s359
      $region64: #{xmp_forward.8} parent=59 // pred_fallthru
        _
    $region60: #{xmp_forward.8} parent=5 // pred_fallthru
      _
    %p361 = scmp.le.s32.totalorder 1, %s18
    %p362 = scmp.lt.s32.totalorder %s18, 3
    %p363 = pnand %p361, %p362
    %p364 = pneg %p363
    // Predicated region
    $region65: #{xmp_forward.8} parent=5 // pred_check
      _
    $region66: #{xmp_forward.8} parent=5 // pred_check_branch
      %366 = sbr.rel (%p363) target = $region68
    $region67: #{xmp_forward.8} parent=5 // pred_region
      %s367 = ssub.s32 %s18, 1
      %p368 = scmp.lt.s32.totalorder %s23, 1
      %s369 = scalar_select %p368, %s23, 1
      %s370 = smul.addr %s369, 2
      %s371 = smul.addr %s370, 8
      %s372 = scalar_lea.vmem %s0, %s371
      %p373 = pneg %p44
      %p374 = pneg %p41
      %p375 = pneg %p65
      %p376 = pneg %p62
      %p377 = pneg %p86
      %p378 = pneg %p83
      %p379 = pneg %p107
      %p380 = pneg %p104
      %p381 = pneg %p128
      %p382 = pneg %p125
      %p383 = pneg %p149
      %p384 = pneg %p146
      %p385 = pneg %p170
      %p386 = pneg %p167
      %p387 = pneg %p191
      %p388 = pneg %p188
      %p389 = pneg %p212
      %p390 = pneg %p209
      %p391 = pneg %p233
      %p392 = pneg %p230
      %p393 = pneg %p254
      %p394 = pneg %p251
      %p395 = pneg %p275
      %p396 = pneg %p272
      %p397 = pneg %p301
      %p398 = pneg %p298
      %p399 = scmp.lt.s32.totalorder %s23, 1
      %s400 = scalar_select %p399, %s23, 1
      %s401 = smul.addr %s400, 2
      %s402 = smul.addr %s401, 8
      %s403 = scalar_lea.vmem %s12, %s402
      %p404 = scmp.lt.s32.totalorder %s23, 1
      %s405 = scalar_select %p404, %s23, 1
      %s406 = smul.addr %s405, 2
      %s407 = smul.addr %s406, 8
      %s408 = scalar_lea.vmem %s0, %s407
      %p409 = scmp.lt.s32.totalorder %s23, 1
      %s410 = scalar_select %p409, %s23, 1
      %s411 = smul.addr %s410, 2
      %s412 = smul.addr %s411, 8
      %s413 = scalar_lea.vmem %s12, %s412
      %v414 = vld [vmem:[%s408] sm:$0xff]
      %v415 = vld [vmem:[%s408 + $0x8] sm:$0x1]
      %v416 = vld [vmem:[%s1] sm:$0x1]
      %v417 = vld [vmem:[%s2] sm:$0x1]
      %vm418 = vcmask 261120
      %v419 = vsel %vm418, %v414, 0.0
      %420 = vadd.xlane.f32.xlu0 %v419
      %v421 = vpop.xlane.xlu0 %420
      %vm422 = vcmask 253952
      %v423 = vsel %vm422, %v415, 0.0
      %424 = vadd.xlane.f32.xlu0 %v423
      %v425 = vpop.xlane.xlu0 %424
      %v426 = vrcp.pop 32.0
      %v427 = vmul.f32 32.0, %v426
      %v428 = vsub.f32 1.0, %v427
      %v429 = vmul.f32 %v426, %v428
      %v430 = vadd.f32 %v426, %v429
      %vm431 = vweird.f32 %v426
      %v432 = vsel %vm431, %v426, %v430
      %v433 = vmul.f32 %v421, %v432
      %v434 = vmul.f32 %v425, %v432
      %v435 = vsub.f32 %v414, %v433
      %v436 = vsub.f32 %v415, %v434
      %v437 = vmul.f32 %v435, %v435
      %v438 = vmul.f32 %v436, %v436
      %v439 = vsel %vm418, %v437, 0.0
      %440 = vadd.xlane.f32.xlu0 %v439
      %v441 = vpop.xlane.xlu0 %440
      %v442 = vsel %vm422, %v438, 0.0
      %443 = vadd.xlane.f32.xlu0 %v442
      %v444 = vpop.xlane.xlu0 %443
      %v445 = vmul.f32 %v441, %v432
      %v446 = vmul.f32 %v444, %v432
      %v447 = vadd.f32 %v445, 1e-05
      %v448 = vadd.f32 %v446, 1e-05
      %v449 = vrsqrt.pop %v447
      %v450 = vmul.f32 %v449, %v447
      %v451 = vmul.f32 %v450, %v449
      %v452 = vmul.f32 0.5, %v451
      %v453 = vsub.f32 1.5, %v452
      %v454 = vmul.f32 %v449, %v453
      %vm455 = vweird.f32 %v447
      %vm456 = vweird.f32 %v449
      %vm457 = vmor %vm455, %vm456
      %v458 = vsel %vm457, %v449, %v454
      %v459 = vrsqrt.pop %v448
      %v460 = vmul.f32 %v459, %v448
      %v461 = vmul.f32 %v460, %v459
      %v462 = vmul.f32 0.5, %v461
      %v463 = vsub.f32 1.5, %v462
      %v464 = vmul.f32 %v459, %v463
      %vm465 = vweird.f32 %v448
      %vm466 = vweird.f32 %v459
      %vm467 = vmor %vm465, %vm466
      %v468 = vsel %vm467, %v459, %v464
      %v469 = vmul.f32 %v435, %v458
      %v470 = vmul.f32 %v436, %v468
      %v472 = vperm.slane %v416, 0
      %v474 = vmul.f32 %v469, %v472
      %v475 = vmul.f32 %v470, %v472
      %v477 = vperm.slane %v417, 0
      %v479 = vadd.f32 %v474, %v477
      %v480 = vadd.f32 %v475, %v477
      %v481 = vld [vmem:[%s3] sm:$0xff]
      %v482 = vld [vmem:[%s3 + $0x8] sm:$0xff]
      %v483 = vld [vmem:[%s3 + $0x10] sm:$0xff]
      %v484 = vld [vmem:[%s3 + $0x18] sm:$0xff]
      %v486 = vsel %vm418, %v479, 0
      %v489 = vsel %vm418, %v480, 0
      %491 = vmatpush.msra.mxu0 0.0
      %492 = vmatpush.msra.mxu0 0.0
      %493 = vmatpush.msra.mxu0 0.0
      %494 = vmatpush.msra.mxu0 0.0
      %495 = vmatpush.msra.mxu0 0.0
      %496 = vmatpush.msra.mxu0 0.0
      %497 = vmatpush.msra.mxu0 0.0
      %498 = vmatpush.msra.mxu0 0.0
      %499 = vmatpush.msra.mxu0 0.0
      %500 = vmatpush.msra.mxu0 0.0
      %501 = vmatpush.msra.mxu0 0.0
      %502 = vmatpush.msra.mxu0 0.0
      %503 = vmatpush.msra.mxu0 %v484
      %504 = vmatpush.msra.mxu0 %v483
      %505 = vmatpush.msra.mxu0 %v482
      %506 = vmatpush.msra.mxu0 %v481
      %507 = vmatmul.f32.gmra.mxu0 %v486
      %v508 = vpop.f32.mrf.mxu0
      %v509 = vadd.f32 0.0, %v508
      %510 = vmatmul.f32.gmra.mxu0 %v489
      %v511 = vpop.f32.mrf.mxu0
      %v512 = vadd.f32 0.0, %v511
      %513 = vdwg.mxu0
      %v514 = vmul.f32 %v509, 0.25
      %v515 = vmul.f32 %v512, 0.25
      %s516 = scalar_lea.vmem %s3, 64
      %v517 = vld [vmem:[%s516] sm:$0xff]
      %v518 = vld [vmem:[%s516 + $0x8] sm:$0xff]
      %v519 = vld [vmem:[%s516 + $0x10] sm:$0xff]
      %v520 = vld [vmem:[%s516 + $0x18] sm:$0xff]
      %521 = vmatpush.msra.mxu0 0.0
      %522 = vmatpush.msra.mxu0 0.0
      %523 = vmatpush.msra.mxu0 0.0
      %524 = vmatpush.msra.mxu0 0.0
      %525 = vmatpush.msra.mxu0 0.0
      %526 = vmatpush.msra.mxu0 0.0
      %527 = vmatpush.msra.mxu0 0.0
      %528 = vmatpush.msra.mxu0 0.0
      %529 = vmatpush.msra.mxu0 0.0
      %530 = vmatpush.msra.mxu0 0.0
      %531 = vmatpush.msra.mxu0 0.0
      %532 = vmatpush.msra.mxu0 0.0
      %533 = vmatpush.msra.mxu0 %v520
      %534 = vmatpush.msra.mxu0 %v519
      %535 = vmatpush.msra.mxu0 %v518
      %536 = vmatpush.msra.mxu0 %v517
      %537 = vmatmul.f32.gmra.mxu0 %v486
      %v538 = vpop.f32.mrf.mxu0
      %v539 = vadd.f32 0.0, %v538
      %540 = vmatmul.f32.gmra.mxu0 %v489
      %v541 = vpop.f32.mrf.mxu0
      %v542 = vadd.f32 0.0, %v541
      %543 = vdwg.mxu0
      %s544 = scalar_lea.vmem %s3, 128
      %v545 = vld [vmem:[%s544] sm:$0xff]
      %v546 = vld [vmem:[%s544 + $0x8] sm:$0xff]
      %v547 = vld [vmem:[%s544 + $0x10] sm:$0xff]
      %v548 = vld [vmem:[%s544 + $0x18] sm:$0xff]
      %549 = vmatpush.msra.mxu0 0.0
      %550 = vmatpush.msra.mxu0 0.0
      %551 = vmatpush.msra.mxu0 0.0
      %552 = vmatpush.msra.mxu0 0.0
      %553 = vmatpush.msra.mxu0 0.0
      %554 = vmatpush.msra.mxu0 0.0
      %555 = vmatpush.msra.mxu0 0.0
      %556 = vmatpush.msra.mxu0 0.0
      %557 = vmatpush.msra.mxu0 0.0
      %558 = vmatpush.msra.mxu0 0.0
      %559 = vmatpush.msra.mxu0 0.0
      %560 = vmatpush.msra.mxu0 0.0
      %561 = vmatpush.msra.mxu0 %v548
      %562 = vmatpush.msra.mxu0 %v547
      %563 = vmatpush.msra.mxu0 %v546
      %564 = vmatpush.msra.mxu0 %v545
      %565 = vmatmul.f32.gmra.mxu0 %v486
      %v566 = vpop.f32.mrf.mxu0
      %v567 = vadd.f32 0.0, %v566
      %568 = vmatmul.f32.gmra.mxu0 %v489
      %v569 = vpop.f32.mrf.mxu0
      %v570 = vadd.f32 0.0, %v569
      %571 = vdwg.mxu0
      %vm572 = vcmask 130048
      %v574 = vsel %vm572, %v514, 0
      %v577 = vsel %vm572, %v515, 0
      %v580 = vsel %vm572, %v539, 0
      %v583 = vsel %vm572, %v542, 0
      %585 = vmatpush.xpose.msra.mxu0 0.0
      %586 = vmatpush.xpose.msra.mxu0 0.0
      %587 = vmatpush.xpose.msra.mxu0 0.0
      %588 = vmatpush.xpose.msra.mxu0 0.0
      %589 = vmatpush.xpose.msra.mxu0 0.0
      %590 = vmatpush.xpose.msra.mxu0 0.0
      %591 = vmatpush.xpose.msra.mxu0 0.0
      %592 = vmatpush.xpose.msra.mxu0 0.0
      %593 = vmatpush.xpose.msra.mxu0 0.0
      %594 = vmatpush.xpose.msra.mxu0 0.0
      %595 = vmatpush.xpose.msra.mxu0 0.0
      %596 = vmatpush.xpose.msra.mxu0 0.0
      %597 = vmatpush.xpose.msra.mxu0 0.0
      %598 = vmatpush.xpose.msra.mxu0 0.0
      %599 = vmatpush.xpose.msra.mxu0 %v583
      %600 = vmatpush.xpose.msra.mxu0 %v580
      %601 = vmatmul.f32.gmra.mxu0 %v574
      %v602 = vpop.f32.mrf.mxu0
      %v603 = vadd.f32 0.0, %v602
      %604 = vmatmul.f32.gmra.mxu0 %v577
      %v605 = vpop.f32.mrf.mxu0
      %v606 = vadd.f32 0.0, %v605
      %607 = vdwg.mxu0
      %vm608 = vcmask 72704
      %v609 = vsel %vm608, %v603, -inf
      %610 = vmax.xlane.f32.xlu0 %v609
      %v611 = vpop.xlane.xlu0 %610
      %vm612 = vcmask 65536
      %v613 = vsel %vm612, %v606, -inf
      %614 = vmax.xlane.f32.xlu0 %v613
      %v615 = vpop.xlane.xlu0 %614
      %v616 = vsub.f32 %v603, %v611
      %v617 = vsub.f32 %v606, %v615
      %v618 = vmul.f32 %v616, 1.442695
      %v619 = vpow.pop %v618
      %v620 = vmul.f32 %v617, 1.442695
      %v621 = vpow.pop %v620
      %v622 = vsel %vm608, %v619, 0.0
      %623 = vadd.xlane.f32.xlu0 %v622
      %v624 = vpop.xlane.xlu0 %623
      %v625 = vsel %vm612, %v621, 0.0
      %626 = vadd.xlane.f32.xlu0 %v625
      %v627 = vpop.xlane.xlu0 %626
      %v628 = vrcp.pop %v624
      %v629 = vrcp.pop %v627
      %v630 = vmul.f32 %v619, %v628
      %v631 = vmul.f32 %v621, %v629
      %v633 = vsel %vm608, %v630, 0
      %v636 = vsel %vm608, %v631, 0
      %vm638 = vcmask 1040384
      %v640 = vsel %vm638, %v570, 0
      %642 = vmatpush.msra.mxu0 0.0
      %643 = vmatpush.msra.mxu0 0.0
      %644 = vmatpush.msra.mxu0 0.0
      %645 = vmatpush.msra.mxu0 0.0
      %646 = vmatpush.msra.mxu0 0.0
      %647 = vmatpush.msra.mxu0 0.0
      %648 = vmatpush.msra.mxu0 0.0
      %649 = vmatpush.msra.mxu0 0.0
      %650 = vmatpush.msra.mxu0 0.0
      %651 = vmatpush.msra.mxu0 0.0
      %652 = vmatpush.msra.mxu0 0.0
      %653 = vmatpush.msra.mxu0 0.0
      %654 = vmatpush.msra.mxu0 0.0
      %655 = vmatpush.msra.mxu0 0.0
      %656 = vmatpush.msra.mxu0 %v640
      %657 = vmatpush.msra.mxu0 %v567
      %658 = vmatmul.f32.gmra.mxu0 %v633
      %v659 = vpop.f32.mrf.mxu0
      %v660 = vadd.f32 0.0, %v659
      %661 = vmatmul.f32.gmra.mxu0 %v636
      %v662 = vpop.f32.mrf.mxu0
      %v663 = vadd.f32 0.0, %v662
      %664 = vdwg.mxu0
      %v665 = vld [vmem:[%s4] sm:$0xff]
      %v666 = vld [vmem:[%s4 + $0x8] sm:$0xff]
      %s667 = scalar_lea.vmem %s3, 32
      %v668 = vld [vmem:[%s667] sm:$0xff]
      %v669 = vld [vmem:[%s667 + $0x8] sm:$0xff]
      %v670 = vld [vmem:[%s667 + $0x10] sm:$0xff]
      %v671 = vld [vmem:[%s667 + $0x18] sm:$0xff]
      %672 = vmatpush.msra.mxu0 0.0
      %673 = vmatpush.msra.mxu0 0.0
      %674 = vmatpush.msra.mxu0 0.0
      %675 = vmatpush.msra.mxu0 0.0
      %676 = vmatpush.msra.mxu0 0.0
      %677 = vmatpush.msra.mxu0 0.0
      %678 = vmatpush.msra.mxu0 0.0
      %679 = vmatpush.msra.mxu0 0.0
      %680 = vmatpush.msra.mxu0 0.0
      %681 = vmatpush.msra.mxu0 0.0
      %682 = vmatpush.msra.mxu0 0.0
      %683 = vmatpush.msra.mxu0 0.0
      %684 = vmatpush.msra.mxu0 %v671
      %685 = vmatpush.msra.mxu0 %v670
      %686 = vmatpush.msra.mxu0 %v669
      %687 = vmatpush.msra.mxu0 %v668
      %688 = vmatmul.f32.gmra.mxu0 %v486
      %v689 = vpop.f32.mrf.mxu0
      %v690 = vadd.f32 0.0, %v689
      %691 = vmatmul.f32.gmra.mxu0 %v489
      %v692 = vpop.f32.mrf.mxu0
      %v693 = vadd.f32 0.0, %v692
      %694 = vdwg.mxu0
      %v695 = vmul.f32 %v690, 0.25
      %v696 = vmul.f32 %v693, 0.25
      %s697 = scalar_lea.vmem %s3, 96
      %v698 = vld [vmem:[%s697] sm:$0xff]
      %v699 = vld [vmem:[%s697 + $0x8] sm:$0xff]
      %v700 = vld [vmem:[%s697 + $0x10] sm:$0xff]
      %v701 = vld [vmem:[%s697 + $0x18] sm:$0xff]
      %702 = vmatpush.msra.mxu0 0.0
      %703 = vmatpush.msra.mxu0 0.0
      %704 = vmatpush.msra.mxu0 0.0
      %705 = vmatpush.msra.mxu0 0.0
      %706 = vmatpush.msra.mxu0 0.0
      %707 = vmatpush.msra.mxu0 0.0
      %708 = vmatpush.msra.mxu0 0.0
      %709 = vmatpush.msra.mxu0 0.0
      %710 = vmatpush.msra.mxu0 0.0
      %711 = vmatpush.msra.mxu0 0.0
      %712 = vmatpush.msra.mxu0 0.0
      %713 = vmatpush.msra.mxu0 0.0
      %714 = vmatpush.msra.mxu0 %v701
      %715 = vmatpush.msra.mxu0 %v700
      %716 = vmatpush.msra.mxu0 %v699
      %717 = vmatpush.msra.mxu0 %v698
      %718 = vmatmul.f32.gmra.mxu0 %v486
      %v719 = vpop.f32.mrf.mxu0
      %v720 = vadd.f32 0.0, %v719
      %721 = vmatmul.f32.gmra.mxu0 %v489
      %v722 = vpop.f32.mrf.mxu0
      %v723 = vadd.f32 0.0, %v722
      %724 = vdwg.mxu0
      %s725 = scalar_lea.vmem %s3, 160
      %v726 = vld [vmem:[%s725] sm:$0xff]
      %v727 = vld [vmem:[%s725 + $0x8] sm:$0xff]
      %v728 = vld [vmem:[%s725 + $0x10] sm:$0xff]
      %v729 = vld [vmem:[%s725 + $0x18] sm:$0xff]
      %730 = vmatpush.msra.mxu0 0.0
      %731 = vmatpush.msra.mxu0 0.0
      %732 = vmatpush.msra.mxu0 0.0
      %733 = vmatpush.msra.mxu0 0.0
      %734 = vmatpush.msra.mxu0 0.0
      %735 = vmatpush.msra.mxu0 0.0
      %736 = vmatpush.msra.mxu0 0.0
      %737 = vmatpush.msra.mxu0 0.0
      %738 = vmatpush.msra.mxu0 0.0
      %739 = vmatpush.msra.mxu0 0.0
      %740 = vmatpush.msra.mxu0 0.0
      %741 = vmatpush.msra.mxu0 0.0
      %742 = vmatpush.msra.mxu0 %v729
      %743 = vmatpush.msra.mxu0 %v728
      %744 = vmatpush.msra.mxu0 %v727
      %745 = vmatpush.msra.mxu0 %v726
      %746 = vmatmul.f32.gmra.mxu0 %v486
      %v747 = vpop.f32.mrf.mxu0
      %v748 = vadd.f32 0.0, %v747
      %749 = vmatmul.f32.gmra.mxu0 %v489
      %v750 = vpop.f32.mrf.mxu0
      %v751 = vadd.f32 0.0, %v750
      %752 = vdwg.mxu0
      %v754 = vsel %vm572, %v695, 0
      %v757 = vsel %vm572, %v696, 0
      %v760 = vsel %vm572, %v720, 0
      %v763 = vsel %vm572, %v723, 0
      %765 = vmatpush.xpose.msra.mxu0 0.0
      %766 = vmatpush.xpose.msra.mxu0 0.0
      %767 = vmatpush.xpose.msra.mxu0 0.0
      %768 = vmatpush.xpose.msra.mxu0 0.0
      %769 = vmatpush.xpose.msra.mxu0 0.0
      %770 = vmatpush.xpose.msra.mxu0 0.0
      %771 = vmatpush.xpose.msra.mxu0 0.0
      %772 = vmatpush.xpose.msra.mxu0 0.0
      %773 = vmatpush.xpose.msra.mxu0 0.0
      %774 = vmatpush.xpose.msra.mxu0 0.0
      %775 = vmatpush.xpose.msra.mxu0 0.0
      %776 = vmatpush.xpose.msra.mxu0 0.0
      %777 = vmatpush.xpose.msra.mxu0 0.0
      %778 = vmatpush.xpose.msra.mxu0 0.0
      %779 = vmatpush.xpose.msra.mxu0 %v763
      %780 = vmatpush.xpose.msra.mxu0 %v760
      %781 = vmatmul.f32.gmra.mxu0 %v754
      %v782 = vpop.f32.mrf.mxu0
      %v783 = vadd.f32 0.0, %v782
      %784 = vmatmul.f32.gmra.mxu0 %v757
      %v785 = vpop.f32.mrf.mxu0
      %v786 = vadd.f32 0.0, %v785
      %787 = vdwg.mxu0
      %v788 = vsel %vm608, %v783, -inf
      %789 = vmax.xlane.f32.xlu0 %v788
      %v790 = vpop.xlane.xlu0 %789
      %v791 = vsel %vm612, %v786, -inf
      %792 = vmax.xlane.f32.xlu0 %v791
      %v793 = vpop.xlane.xlu0 %792
      %v794 = vsub.f32 %v783, %v790
      %v795 = vsub.f32 %v786, %v793
      %v796 = vmul.f32 %v794, 1.442695
      %v797 = vpow.pop %v796
      %v798 = vmul.f32 %v795, 1.442695
      %v799 = vpow.pop %v798
      %v800 = vsel %vm608, %v797, 0.0
      %801 = vadd.xlane.f32.xlu0 %v800
      %v802 = vpop.xlane.xlu0 %801
      %v803 = vsel %vm612, %v799, 0.0
      %804 = vadd.xlane.f32.xlu0 %v803
      %v805 = vpop.xlane.xlu0 %804
      %v806 = vrcp.pop %v802
      %v807 = vrcp.pop %v805
      %v808 = vmul.f32 %v797, %v806
      %v809 = vmul.f32 %v799, %v807
      %v811 = vsel %vm608, %v808, 0
      %v814 = vsel %vm608, %v809, 0
      %v817 = vsel %vm638, %v751, 0
      %819 = vmatpush.msra.mxu0 0.0
      %820 = vmatpush.msra.mxu0 0.0
      %821 = vmatpush.msra.mxu0 0.0
      %822 = vmatpush.msra.mxu0 0.0
      %823 = vmatpush.msra.mxu0 0.0
      %824 = vmatpush.msra.mxu0 0.0
      %825 = vmatpush.msra.mxu0 0.0
      %826 = vmatpush.msra.mxu0 0.0
      %827 = vmatpush.msra.mxu0 0.0
      %828 = vmatpush.msra.mxu0 0.0
      %829 = vmatpush.msra.mxu0 0.0
      %830 = vmatpush.msra.mxu0 0.0
      %831 = vmatpush.msra.mxu0 0.0
      %832 = vmatpush.msra.mxu0 0.0
      %833 = vmatpush.msra.mxu0 %v817
      %834 = vmatpush.msra.mxu0 %v748
      %835 = vmatmul.f32.gmra.mxu0 %v811
      %v836 = vpop.f32.mrf.mxu0
      %v837 = vadd.f32 0.0, %v836
      %838 = vmatmul.f32.gmra.mxu0 %v814
      %v839 = vpop.f32.mrf.mxu0
      %v840 = vadd.f32 0.0, %v839
      %841 = vdwg.mxu0
      %s842 = scalar_lea.vmem %s4, 16
      %v843 = vld [vmem:[%s842] sm:$0xff]
      %v844 = vld [vmem:[%s842 + $0x8] sm:$0xff]
      %v846 = vsel %vm572, %v837, 0
      %v849 = vsel %vm572, %v840, 0
      %851 = vmatpush.msra.mxu0 0.0
      %852 = vmatpush.msra.mxu0 0.0
      %853 = vmatpush.msra.mxu0 0.0
      %854 = vmatpush.msra.mxu0 0.0
      %855 = vmatpush.msra.mxu0 0.0
      %856 = vmatpush.msra.mxu0 0.0
      %857 = vmatpush.msra.mxu0 0.0
      %858 = vmatpush.msra.mxu0 0.0
      %859 = vmatpush.msra.mxu0 0.0
      %860 = vmatpush.msra.mxu0 0.0
      %861 = vmatpush.msra.mxu0 0.0
      %862 = vmatpush.msra.mxu0 0.0
      %863 = vmatpush.msra.mxu0 0.0
      %864 = vmatpush.msra.mxu0 0.0
      %865 = vmatpush.msra.mxu0 %v844
      %866 = vmatpush.msra.mxu0 %v843
      %867 = vmatmul.f32.gmra.mxu0 %v846
      %v868 = vpop.f32.mrf.mxu0
      %v869 = vadd.f32 0.0, %v868
      %870 = vmatmul.f32.gmra.mxu0 %v849
      %v871 = vpop.f32.mrf.mxu0
      %v872 = vadd.f32 0.0, %v871
      %873 = vdwg.mxu0
      %v875 = vsel %vm572, %v660, 0
      %v878 = vsel %vm572, %v663, 0
      %880 = vmatpush.msra.mxu0 0.0
      %881 = vmatpush.msra.mxu0 0.0
      %882 = vmatpush.msra.mxu0 0.0
      %883 = vmatpush.msra.mxu0 0.0
      %884 = vmatpush.msra.mxu0 0.0
      %885 = vmatpush.msra.mxu0 0.0
      %886 = vmatpush.msra.mxu0 0.0
      %887 = vmatpush.msra.mxu0 0.0
      %888 = vmatpush.msra.mxu0 0.0
      %889 = vmatpush.msra.mxu0 0.0
      %890 = vmatpush.msra.mxu0 0.0
      %891 = vmatpush.msra.mxu0 0.0
      %892 = vmatpush.msra.mxu0 0.0
      %893 = vmatpush.msra.mxu0 0.0
      %894 = vmatpush.msra.mxu0 %v666
      %895 = vmatpush.msra.mxu0 %v665
      %896 = vmatmul.f32.gmra.mxu0 %v875
      %v897 = vpop.f32.mrf.mxu0
      %v898 = vadd.f32 %v869, %v897
      %899 = vmatmul.f32.gmra.mxu0 %v878
      %v900 = vpop.f32.mrf.mxu0
      %v901 = vadd.f32 %v872, %v900
      %902 = vdwg.mxu0
      %v903 = vadd.f32 %v414, %v898
      %v904 = vadd.f32 %v415, %v901
      %v905 = vld [vmem:[%s5] sm:$0x1]
      %v907 = vperm.slane %v905, 0
      %v909 = vadd.f32 %v903, %v907
      %v910 = vadd.f32 %v904, %v907
      %v911 = vld [vmem:[%s6] sm:$0x1]
      %v912 = vld [vmem:[%s7] sm:$0x1]
      %v913 = vsel %vm418, %v909, 0.0
      %914 = vadd.xlane.f32.xlu0 %v913
      %v915 = vpop.xlane.xlu0 %914
      %v916 = vsel %vm422, %v910, 0.0
      %917 = vadd.xlane.f32.xlu0 %v916
      %v918 = vpop.xlane.xlu0 %917
      %v919 = vmul.f32 %v915, %v432
      %v920 = vmul.f32 %v918, %v432
      %v921 = vsub.f32 %v909, %v919
      %v922 = vsub.f32 %v910, %v920
      %v923 = vmul.f32 %v921, %v921
      %v924 = vmul.f32 %v922, %v922
      %v925 = vsel %vm418, %v923, 0.0
      %926 = vadd.xlane.f32.xlu0 %v925
      %v927 = vpop.xlane.xlu0 %926
      %v928 = vsel %vm422, %v924, 0.0
      %929 = vadd.xlane.f32.xlu0 %v928
      %v930 = vpop.xlane.xlu0 %929
      %v931 = vmul.f32 %v927, %v432
      %v932 = vmul.f32 %v930, %v432
      %v933 = vadd.f32 %v931, 1e-05
      %v934 = vadd.f32 %v932, 1e-05
      %v935 = vrsqrt.pop %v933
      %v936 = vmul.f32 %v935, %v933
      %v937 = vmul.f32 %v936, %v935
      %v938 = vmul.f32 0.5, %v937
      %v939 = vsub.f32 1.5, %v938
      %v940 = vmul.f32 %v935, %v939
      %vm941 = vweird.f32 %v933
      %vm942 = vweird.f32 %v935
      %vm943 = vmor %vm941, %vm942
      %v944 = vsel %vm943, %v935, %v940
      %v945 = vrsqrt.pop %v934
      %v946 = vmul.f32 %v945, %v934
      %v947 = vmul.f32 %v946, %v945
      %v948 = vmul.f32 0.5, %v947
      %v949 = vsub.f32 1.5, %v948
      %v950 = vmul.f32 %v945, %v949
      %vm951 = vweird.f32 %v934
      %vm952 = vweird.f32 %v945
      %vm953 = vmor %vm951, %vm952
      %v954 = vsel %vm953, %v945, %v950
      %v955 = vmul.f32 %v921, %v944
      %v956 = vmul.f32 %v922, %v954
      %v958 = vperm.slane %v911, 0
      %v960 = vmul.f32 %v955, %v958
      %v961 = vmul.f32 %v956, %v958
      %v963 = vperm.slane %v912, 0
      %v965 = vadd.f32 %v960, %v963
      %v966 = vadd.f32 %v961, %v963
      %v967 = vld [vmem:[%s8] sm:$0xff]
      %v968 = vld [vmem:[%s8 + $0x8] sm:$0xff]
      %v969 = vld [vmem:[%s8 + $0x10] sm:$0xff]
      %v970 = vld [vmem:[%s8 + $0x18] sm:$0xff]
      %v971 = vld [vmem:[%s9] sm:$0x1]
      %v973 = vperm.slane %v971, 0
      %v976 = vsel %vm418, %v965, 0
      %v979 = vsel %vm418, %v966, 0
      %981 = vmatpush.msra.mxu0 0.0
      %982 = vmatpush.msra.mxu0 0.0
      %983 = vmatpush.msra.mxu0 0.0
      %984 = vmatpush.msra.mxu0 0.0
      %985 = vmatpush.msra.mxu0 0.0
      %986 = vmatpush.msra.mxu0 0.0
      %987 = vmatpush.msra.mxu0 0.0
      %988 = vmatpush.msra.mxu0 0.0
      %989 = vmatpush.msra.mxu0 0.0
      %990 = vmatpush.msra.mxu0 0.0
      %991 = vmatpush.msra.mxu0 0.0
      %992 = vmatpush.msra.mxu0 0.0
      %993 = vmatpush.msra.mxu0 %v970
      %994 = vmatpush.msra.mxu0 %v969
      %995 = vmatpush.msra.mxu0 %v968
      %996 = vmatpush.msra.mxu0 %v967
      %997 = vmatmul.f32.gmra.mxu0 %v976
      %v998 = vpop.f32.mrf.mxu0
      %v999 = vadd.f32 %v973, %v998
      %1000 = vmatmul.f32.gmra.mxu0 %v979
      %v1001 = vpop.f32.mrf.mxu0
      %v1002 = vadd.f32 %v973, %v1001
      %1003 = vdwg.mxu0
      %v1004 = vmul.f32 %v999, %v999
      %v1005 = vmul.f32 %v1002, %v1002
      %v1006 = vmul.f32 %v999, %v1004
      %v1007 = vmul.f32 %v1002, %v1005
      %v1008 = vmul.f32 %v1006, 0.044715
      %v1009 = vmul.f32 %v1007, 0.044715
      %v1010 = vadd.f32 %v999, %v1008
      %v1011 = vadd.f32 %v1002, %v1009
      %v1012 = vmul.f32 %v1010, 0.7978846
      %v1013 = vmul.f32 %v1011, 0.7978846
      %v1014 = vtanh.pop %v1012
      %v1015 = vtanh.pop %v1013
      %v1016 = vadd.f32 %v1014, 1.0
      %v1017 = vadd.f32 %v1015, 1.0
      %v1018 = vmul.f32 %v1016, 0.5
      %v1019 = vmul.f32 %v1017, 0.5
      %v1020 = vmul.f32 %v999, %v1018
      %v1021 = vmul.f32 %v1002, %v1019
      %v1022 = vld [vmem:[%s10] sm:$0xff]
      %v1023 = vld [vmem:[%s10 + $0x8] sm:$0xff]
      %v1024 = vld [vmem:[%s10 + $0x10] sm:$0xff]
      %v1025 = vld [vmem:[%s10 + $0x18] sm:$0xff]
      %v1026 = vld [vmem:[%s10 + $0x20] sm:$0xff]
      %v1027 = vld [vmem:[%s10 + $0x28] sm:$0xff]
      %v1028 = vld [vmem:[%s10 + $0x30] sm:$0xff]
      %v1029 = vld [vmem:[%s10 + $0x38] sm:$0xff]
      %v1030 = vld [vmem:[%s10 + $0x40] sm:$0xff]
      %v1031 = vld [vmem:[%s10 + $0x48] sm:$0xff]
      %v1032 = vld [vmem:[%s10 + $0x50] sm:$0xff]
      %v1033 = vld [vmem:[%s10 + $0x58] sm:$0xff]
      %v1034 = vld [vmem:[%s10 + $0x60] sm:$0xff]
      %v1035 = vld [vmem:[%s10 + $0x68] sm:$0xff]
      %v1036 = vld [vmem:[%s10 + $0x70] sm:$0xff]
      %v1037 = vld [vmem:[%s10 + $0x78] sm:$0xff]
      %1038 = vmatpush.msra.mxu0 %v1037
      %1039 = vmatpush.msra.mxu0 %v1036
      %1040 = vmatpush.msra.mxu0 %v1035
      %1041 = vmatpush.msra.mxu0 %v1034
      %1042 = vmatpush.msra.mxu0 %v1033
      %1043 = vmatpush.msra.mxu0 %v1032
      %1044 = vmatpush.msra.mxu0 %v1031
      %1045 = vmatpush.msra.mxu0 %v1030
      %1046 = vmatpush.msra.mxu0 %v1029
      %1047 = vmatpush.msra.mxu0 %v1028
      %1048 = vmatpush.msra.mxu0 %v1027
      %1049 = vmatpush.msra.mxu0 %v1026
      %1050 = vmatpush.msra.mxu0 %v1025
      %1051 = vmatpush.msra.mxu0 %v1024
      %1052 = vmatpush.msra.mxu0 %v1023
      %1053 = vmatpush.msra.mxu0 %v1022
      %1054 = vmatmul.f32.gmra.mxu0 %v1020
      %v1055 = vpop.f32.mrf.mxu0
      %v1056 = vadd.f32 0.0, %v1055
      %1057 = vmatmul.f32.gmra.mxu0 %v1021
      %v1058 = vpop.f32.mrf.mxu0
      %v1059 = vadd.f32 0.0, %v1058
      %1060 = vdwg.mxu0
      %v1061 = vadd.f32 %v909, %v1056
      %v1062 = vadd.f32 %v910, %v1059
      %v1063 = vld [vmem:[%s11] sm:$0x1]
      %v1065 = vperm.slane %v1063, 0
      %v1067 = vadd.f32 %v1061, %v1065
      %v1068 = vadd.f32 %v1062, %v1065
      %1069 = vst.msk [vmem:[%s413] sm:$0xff] %vm418, %v1067
      %1070 = vst.msk [vmem:[%s413 + $0x8] sm:$0x1] %vm422, %v1068
      %p1071 = scmp.lt.s32.totalorder %s23, 1
      %s1072 = scalar_select %p1071, %s23, 1
      %s1073 = smul.addr %s1072, 2
      %s1074 = smul.addr %s1073, 8
      %s1075 = scalar_lea.vmem %s12, %s1074
      // Predicated region
      $region69: #{xmp_forward.8} parent=67 // pred_check
        %p1076 = pneg %p298
      $region70: #{xmp_forward.8} parent=67 // pred_check_branch
        %1078 = sbr.rel (%p1076) target = $region72
      $region71: #{xmp_forward.8} parent=67 // pred_region
        _
      $region72: #{xmp_forward.8} parent=67 // pred_fallthru
        _
    $region68: #{xmp_forward.8} parent=5 // pred_fallthru
      _
    %p1079 = scmp.le.s32.totalorder 2, %s18
    // Predicated region
    $region73: #{xmp_forward.8} parent=5 // pred_check
      %p1080 = pneg %p1079
    $region74: #{xmp_forward.8} parent=5 // pred_check_branch
      %1082 = sbr.rel (%p1080) target = $region76
    $region75: #{xmp_forward.8} parent=5 // pred_region
      %s1083 = ssub.s32 %s18, 2
      // Predicated region
      $region77: #{xmp_forward.8} parent=75 // pred_check
        %p1084 = pneg %p304
      $region78: #{xmp_forward.8} parent=75 // pred_check_branch
        %1086 = sbr.rel (%p1084) target = $region80
      $region79: #{xmp_forward.8} parent=75 // pred_region
        %p1087 = scmp.lt.s32.totalorder %s24, 1
        %s1088 = scalar_select %p1087, %s24, 1
        %s1089 = smul.addr %s1088, 2
        %s1090 = smul.addr %s1089, 8
        %s1091 = scalar_lea.vmem %s12, %s1090
      $region80: #{xmp_forward.8} parent=75 // pred_fallthru
        _
    $region76: #{xmp_forward.8} parent=5 // pred_fallthru
      _
  $region6: #{xmp_forward.8} parent=0 // loop_footer
    %s22 = sadd.s32 1, %s18
  $region7: #{xmp_forward.8} parent=0 // loop_footer_branch
    %17 = sbr.rel target = $region3
  $region8: #{xmp_forward.8} parent=0 // loop_exit
    _

// kernel: xmp_forward.9
$region0: #{xmp_forward.9}
  #allocation0 [shape = 'u32[]', space=smem, size = 0x4, offset = 0x4, fixed_abs, tag = 'smem constant byte address 0x4 - core index']
  #allocation1 [shape = 'u32[72,128]{1,0:T(1,128)}', space=vmem, size = 0x9000, scoped, tag = 'internal scratch']
  %s0 = inlined_call_operand.vmem [shape: f32[2,5,64], index: 0, kind: input, shape index: {}]
  %s1 = inlined_call_operand.vmem [shape: f32[1,64], index: 1, kind: input, shape index: {}]
  %s2 = inlined_call_operand.vmem [shape: f32[1,64], index: 2, kind: input, shape index: {}]
  %s3 = inlined_call_operand.vmem [shape: f32[6,64,16], index: 3, kind: input, shape index: {}]
  %s4 = inlined_call_operand.vmem [shape: f32[2,16,64], index: 4, kind: input, shape index: {}]
  %s5 = inlined_call_operand.vmem [shape: f32[1,64], index: 5, kind: input, shape index: {}]
  %s6 = inlined_call_operand.vmem [shape: f32[1,64], index: 6, kind: input, shape index: {}]
  %s7 = inlined_call_operand.vmem [shape: f32[1,64], index: 7, kind: input, shape index: {}]
  %s8 = inlined_call_operand.vmem [shape: f32[64,256], index: 8, kind: input, shape index: {}]
  %s9 = inlined_call_operand.vmem [shape: f32[1,256], index: 9, kind: input, shape index: {}]
  %s10 = inlined_call_operand.vmem [shape: f32[256,64], index: 10, kind: input, shape index: {}]
  %s11 = inlined_call_operand.vmem [shape: f32[1,64], index: 11, kind: input, shape index: {}]
  %s12 = inlined_call_operand.vmem [shape: f32[2,5,64], index: 12, kind: output, shape index: {}]
  %s13 = sld [smem:[#allocation0]]
  $region81: #{xmp_forward.9} parent=0
    _
  %s15 = ssub.s32 1, %s13
  %s16 = scalar_select 0, %s15, %s13
  loop: start=0, step=1, limit=4
  $region2: #{xmp_forward.9} parent=0 // loop_pre_header
    _
  $region3: #{xmp_forward.9} parent=0 // loop_header
    %s18 = sphi 0, %s22
    %p19 = scmp.ge.s32.totalorder %s18, 4
    %s28 = sphi 0, %s30
    %s31 = sphi 0, %s28
    %s32 = sphi 0, %s31
    %s48 = sphi 0, %s32
    %s52 = sphi 0, %s52
    %s54 = sphi 0, %s52
    %s55 = sphi 0, %s54
    %s69 = sphi 0, %s55
    %s73 = sphi 0, %s73
    %s75 = sphi 0, %s73
    %s76 = sphi 0, %s75
    %s90 = sphi 0, %s76
    %s94 = sphi 0, %s94
    %s96 = sphi 0, %s94
    %s97 = sphi 0, %s96
    %s111 = sphi 0, %s97
    %s115 = sphi 0, %s115
    %s117 = sphi 0, %s115
    %s118 = sphi 0, %s117
    %s132 = sphi 0, %s118
    %s136 = sphi 0, %s136
    %s138 = sphi 0, %s136
    %s139 = sphi 0, %s138
    %s153 = sphi 0, %s139
    %s157 = sphi 0, %s157
    %s159 = sphi 0, %s157
    %s160 = sphi 0, %s159
    %s174 = sphi 0, %s160
    %s178 = sphi 0, %s178
    %s180 = sphi 0, %s178
    %s181 = sphi 0, %s180
    %s195 = sphi 0, %s181
    %s199 = sphi 0, %s199
    %s201 = sphi 0, %s199
    %s202 = sphi 0, %s201
    %s216 = sphi 0, %s202
    %s220 = sphi 0, %s220
    %s222 = sphi 0, %s220
    %s223 = sphi 0, %s222
    %s237 = sphi 0, %s223
    %s241 = sphi 0, %s241
    %s243 = sphi 0, %s241
    %s244 = sphi 0, %s243
    %s258 = sphi 0, %s244
    %s262 = sphi 0, %s262
    %s264 = sphi 0, %s262
    %s265 = sphi 0, %s264
    %s279 = sphi 0, %s265
    %s285 = sphi 0, %s287
    %s288 = sphi 0, %s285
    %s289 = sphi 0, %s288
    %s305 = sphi 0, %s289
  $region4: #{xmp_forward.9} parent=0 // loop_header_branch
    %21 = sbr.rel (%p19) target = $region8
  $region5: #{xmp_forward.9} parent=0 // loop_body
    %s23 = ssub.s32 %s18, 1
    %s24 = ssub.s32 %s18, 2
    %s25 = sadd.s32 %s18, 1
    %s26 = ssub.s32 %s18, %s25
    %p27 = scmp.eq.s32.totalorder %s26, 0
    %s29 = sadd.s32 %s28, 1
    %s30 = scalar_select %p27, %s28, %s29
    %p33 = pneg %p27
    %p34 = scmp.eq.s32.totalorder %s18, 1
    %p35 = por %p33, %p34
    %p36 = scmp.ne.s32.totalorder %s28, %s31
    %p37 = scmp.eq.s32.totalorder %s18, 0
    %p38 = por %p36, %p37
    %p39 = scmp.ne.s32.totalorder %s28, %s31
    %p40 = scmp.eq.s32.totalorder %s23, 1
    %p41 = por %p39, %p40
    %p42 = scmp.ne.s32.totalorder %s31, %s32
    %p43 = scmp.eq.s32.totalorder %s23, 0
    %p44 = por %p42, %p43
    %p45 = scmp.ne.s32.totalorder %s31, %s32
    %p46 = scmp.eq.s32.totalorder %s24, 1
    %p47 = por %p45, %p46
    %p49 = scmp.ne.s32.totalorder %s32, %s48
    %p50 = scmp.eq.s32.totalorder %s24, 0
    %p51 = por %p49, %p50
    %s53 = sadd.s32 %s52, 1
    %p56 = scmp.eq.s32.totalorder %s18, 1
    %p57 = scmp.ne.s32.totalorder %s52, %s54
    %p58 = scmp.eq.s32.totalorder %s18, 0
    %p59 = por %p57, %p58
    %p60 = scmp.ne.s32.totalorder %s52, %s54
    %p61 = scmp.eq.s32.totalorder %s23, 1
    %p62 = por %p60, %p61
    %p63 = scmp.ne.s32.totalorder %s54, %s55
    %p64 = scmp.eq.s32.totalorder %s23, 0
    %p65 = por %p63, %p64
    %p66 = scmp.ne.s32.totalorder %s54, %s55
    %p67 = scmp.eq.s32.totalorder %s24, 1
    %p68 = por %p66, %p67
    %p70 = scmp.ne.s32.totalorder %s55, %s69
    %p71 = scmp.eq.s32.totalorder %s24, 0
    %p72 = por %p70, %p71
    %s74 = sadd.s32 %s73, 1
    %p77 = scmp.eq.s32.totalorder %s18, 1
    %p78 = scmp.ne.s32.totalorder %s73, %s75
    %p79 = scmp.eq.s32.totalorder %s18, 0
    %p80 = por %p78, %p79
    %p81 = scmp.ne.s32.totalorder %s73, %s75
    %p82 = scmp.eq.s32.totalorder %s23, 1
    %p83 = por %p81, %p82
    %p84 = scmp.ne.s32.totalorder %s75, %s76
    %p85 = scmp.eq.s32.totalorder %s23, 0
    %p86 = por %p84, %p85
    %p87 = scmp.ne.s32.totalorder %s75, %s76
    %p88 = scmp.eq.s32.totalorder %s24, 1
    %p89 = por %p87, %p88
    %p91 = scmp.ne.s32.totalorder %s76, %s90
    %p92 = scmp.eq.s32.totalorder %s24, 0
    %p93 = por %p91, %p92
    %s95 = sadd.s32 %s94, 1
    %p98 = scmp.eq.s32.totalorder %s18, 1
    %p99 = scmp.ne.s32.totalorder %s94, %s96
    %p100 = scmp.eq.s32.totalorder %s18, 0
    %p101 = por %p99, %p100
    %p102 = scmp.ne.s32.totalorder %s94, %s96
    %p103 = scmp.eq.s32.totalorder %s23, 1
    %p104 = por %p102, %p103
    %p105 = scmp.ne.s32.totalorder %s96, %s97
    %p106 = scmp.eq.s32.totalorder %s23, 0
    %p107 = por %p105, %p106
    %p108 = scmp.ne.s32.totalorder %s96, %s97
    %p109 = scmp.eq.s32.totalorder %s24, 1
    %p110 = por %p108, %p109
    %p112 = scmp.ne.s32.totalorder %s97, %s111
    %p113 = scmp.eq.s32.totalorder %s24, 0
    %p114 = por %p112, %p113
    %s116 = sadd.s32 %s115, 1
    %p119 = scmp.eq.s32.totalorder %s18, 1
    %p120 = scmp.ne.s32.totalorder %s115, %s117
    %p121 = scmp.eq.s32.totalorder %s18, 0
    %p122 = por %p120, %p121
    %p123 = scmp.ne.s32.totalorder %s115, %s117
    %p124 = scmp.eq.s32.totalorder %s23, 1
    %p125 = por %p123, %p124
    %p126 = scmp.ne.s32.totalorder %s117, %s118
    %p127 = scmp.eq.s32.totalorder %s23, 0
    %p128 = por %p126, %p127
    %p129 = scmp.ne.s32.totalorder %s117, %s118
    %p130 = scmp.eq.s32.totalorder %s24, 1
    %p131 = por %p129, %p130
    %p133 = scmp.ne.s32.totalorder %s118, %s132
    %p134 = scmp.eq.s32.totalorder %s24, 0
    %p135 = por %p133, %p134
    %s137 = sadd.s32 %s136, 1
    %p140 = scmp.eq.s32.totalorder %s18, 1
    %p141 = scmp.ne.s32.totalorder %s136, %s138
    %p142 = scmp.eq.s32.totalorder %s18, 0
    %p143 = por %p141, %p142
    %p144 = scmp.ne.s32.totalorder %s136, %s138
    %p145 = scmp.eq.s32.totalorder %s23, 1
    %p146 = por %p144, %p145
    %p147 = scmp.ne.s32.totalorder %s138, %s139
    %p148 = scmp.eq.s32.totalorder %s23, 0
    %p149 = por %p147, %p148
    %p150 = scmp.ne.s32.totalorder %s138, %s139
    %p151 = scmp.eq.s32.totalorder %s24, 1
    %p152 = por %p150, %p151
    %p154 = scmp.ne.s32.totalorder %s139, %s153
    %p155 = scmp.eq.s32.totalorder %s24, 0
    %p156 = por %p154, %p155
    %s158 = sadd.s32 %s157, 1
    %p161 = scmp.eq.s32.totalorder %s18, 1
    %p162 = scmp.ne.s32.totalorder %s157, %s159
    %p163 = scmp.eq.s32.totalorder %s18, 0
    %p164 = por %p162, %p163
    %p165 = scmp.ne.s32.totalorder %s157, %s159
    %p166 = scmp.eq.s32.totalorder %s23, 1
    %p167 = por %p165, %p166
    %p168 = scmp.ne.s32.totalorder %s159, %s160
    %p169 = scmp.eq.s32.totalorder %s23, 0
    %p170 = por %p168, %p169
    %p171 = scmp.ne.s32.totalorder %s159, %s160
    %p172 = scmp.eq.s32.totalorder %s24, 1
    %p173 = por %p171, %p172
    %p175 = scmp.ne.s32.totalorder %s160, %s174
    %p176 = scmp.eq.s32.totalorder %s24, 0
    %p177 = por %p175, %p176
    %s179 = sadd.s32 %s178, 1
    %p182 = scmp.eq.s32.totalorder %s18, 1
    %p183 = scmp.ne.s32.totalorder %s178, %s180
    %p184 = scmp.eq.s32.totalorder %s18, 0
    %p185 = por %p183, %p184
    %p186 = scmp.ne.s32.totalorder %s178, %s180
    %p187 = scmp.eq.s32.totalorder %s23, 1
    %p188 = por %p186, %p187
    %p189 = scmp.ne.s32.totalorder %s180, %s181
    %p190 = scmp.eq.s32.totalorder %s23, 0
    %p191 = por %p189, %p190
    %p192 = scmp.ne.s32.totalorder %s180, %s181
    %p193 = scmp.eq.s32.totalorder %s24, 1
    %p194 = por %p192, %p193
    %p196 = scmp.ne.s32.totalorder %s181, %s195
    %p197 = scmp.eq.s32.totalorder %s24, 0
    %p198 = por %p196, %p197
    %s200 = sadd.s32 %s199, 1
    %p203 = scmp.eq.s32.totalorder %s18, 1
    %p204 = scmp.ne.s32.totalorder %s199, %s201
    %p205 = scmp.eq.s32.totalorder %s18, 0
    %p206 = por %p204, %p205
    %p207 = scmp.ne.s32.totalorder %s199, %s201
    %p208 = scmp.eq.s32.totalorder %s23, 1
    %p209 = por %p207, %p208
    %p210 = scmp.ne.s32.totalorder %s201, %s202
    %p211 = scmp.eq.s32.totalorder %s23, 0
    %p212 = por %p210, %p211
    %p213 = scmp.ne.s32.totalorder %s201, %s202
    %p214 = scmp.eq.s32.totalorder %s24, 1
    %p215 = por %p213, %p214
    %p217 = scmp.ne.s32.totalorder %s202, %s216
    %p218 = scmp.eq.s32.totalorder %s24, 0
    %p219 = por %p217, %p218
    %s221 = sadd.s32 %s220, 1
    %p224 = scmp.eq.s32.totalorder %s18, 1
    %p225 = scmp.ne.s32.totalorder %s220, %s222
    %p226 = scmp.eq.s32.totalorder %s18, 0
    %p227 = por %p225, %p226
    %p228 = scmp.ne.s32.totalorder %s220, %s222
    %p229 = scmp.eq.s32.totalorder %s23, 1
    %p230 = por %p228, %p229
    %p231 = scmp.ne.s32.totalorder %s222, %s223
    %p232 = scmp.eq.s32.totalorder %s23, 0
    %p233 = por %p231, %p232
    %p234 = scmp.ne.s32.totalorder %s222, %s223
    %p235 = scmp.eq.s32.totalorder %s24, 1
    %p236 = por %p234, %p235
    %p238 = scmp.ne.s32.totalorder %s223, %s237
    %p239 = scmp.eq.s32.totalorder %s24, 0
    %p240 = por %p238, %p239
    %s242 = sadd.s32 %s241, 1
    %p245 = scmp.eq.s32.totalorder %s18, 1
    %p246 = scmp.ne.s32.totalorder %s241, %s243
    %p247 = scmp.eq.s32.totalorder %s18, 0
    %p248 = por %p246, %p247
    %p249 = scmp.ne.s32.totalorder %s241, %s243
    %p250 = scmp.eq.s32.totalorder %s23, 1
    %p251 = por %p249, %p250
    %p252 = scmp.ne.s32.totalorder %s243, %s244
    %p253 = scmp.eq.s32.totalorder %s23, 0
    %p254 = por %p252, %p253
    %p255 = scmp.ne.s32.totalorder %s243, %s244
    %p256 = scmp.eq.s32.totalorder %s24, 1
    %p257 = por %p255, %p256
    %p259 = scmp.ne.s32.totalorder %s244, %s258
    %p260 = scmp.eq.s32.totalorder %s24, 0
    %p261 = por %p259, %p260
    %s263 = sadd.s32 %s262, 1
    %p266 = scmp.eq.s32.totalorder %s18, 1
    %p267 = scmp.ne.s32.totalorder %s262, %s264
    %p268 = scmp.eq.s32.totalorder %s18, 0
    %p269 = por %p267, %p268
    %p270 = scmp.ne.s32.totalorder %s262, %s264
    %p271 = scmp.eq.s32.totalorder %s23, 1
    %p272 = por %p270, %p271
    %p273 = scmp.ne.s32.totalorder %s264, %s265
    %p274 = scmp.eq.s32.totalorder %s23, 0
    %p275 = por %p273, %p274
    %p276 = scmp.ne.s32.totalorder %s264, %s265
    %p277 = scmp.eq.s32.totalorder %s24, 1
    %p278 = por %p276, %p277
    %p280 = scmp.ne.s32.totalorder %s265, %s279
    %p281 = scmp.eq.s32.totalorder %s24, 0
    %p282 = por %p280, %p281
    %s283 = ssub.s32 %s18, %s25
    %p284 = scmp.eq.s32.totalorder %s283, 0
    %s286 = sadd.s32 %s285, 1
    %s287 = scalar_select %p284, %s285, %s286
    %p290 = pneg %p284
    %p291 = scmp.eq.s32.totalorder %s18, 1
    %p292 = por %p290, %p291
    %p293 = scmp.ne.s32.totalorder %s285, %s288
    %p294 = scmp.eq.s32.totalorder %s18, 0
    %p295 = por %p293, %p294
    %p296 = scmp.ne.s32.totalorder %s285, %s288
    %p297 = scmp.eq.s32.totalorder %s23, 1
    %p298 = por %p296, %p297
    %p299 = scmp.ne.s32.totalorder %s288, %s289
    %p300 = scmp.eq.s32.totalorder %s23, 0
    %p301 = por %p299, %p300
    %p302 = scmp.ne.s32.totalorder %s288, %s289
    %p303 = scmp.eq.s32.totalorder %s24, 1
    %p304 = por %p302, %p303
    %p306 = scmp.ne.s32.totalorder %s289, %s305
    %p307 = scmp.eq.s32.totalorder %s24, 0
    %p308 = por %p306, %p307
    %p309 = scmp.le.s32.totalorder 1, %s18
    %p310 = scmp.lt.s32.totalorder %s18, 3
    %p311 = pnand %p309, %p310
    %p312 = pneg %p311
    // Predicated region
    $region9: #{xmp_forward.9} parent=5 // pred_check
      _
    $region10: #{xmp_forward.9} parent=5 // pred_check_branch
      %314 = sbr.rel (%p311) target = $region12
    $region11: #{xmp_forward.9} parent=5 // pred_region
      %s315 = ssub.s32 %s18, 1
      // Predicated region
      $region13: #{xmp_forward.9} parent=11 // pred_check
        %p316 = pneg %p65
      $region14: #{xmp_forward.9} parent=11 // pred_check_branch
        %318 = sbr.rel (%p316) target = $region16
      $region15: #{xmp_forward.9} parent=11 // pred_region
        _
      $region16: #{xmp_forward.9} parent=11 // pred_fallthru
        _
      // Predicated region
      $region17: #{xmp_forward.9} parent=11 // pred_check
        %p319 = pneg %p86
      $region18: #{xmp_forward.9} parent=11 // pred_check_branch
        %321 = sbr.rel (%p319) target = $region20
      $region19: #{xmp_forward.9} parent=11 // pred_region
        _
      $region20: #{xmp_forward.9} parent=11 // pred_fallthru
        _
      // Predicated region
      $region21: #{xmp_forward.9} parent=11 // pred_check
        %p322 = pneg %p107
      $region22: #{xmp_forward.9} parent=11 // pred_check_branch
        %324 = sbr.rel (%p322) target = $region24
      $region23: #{xmp_forward.9} parent=11 // pred_region
        _
      $region24: #{xmp_forward.9} parent=11 // pred_fallthru
        _
      // Predicated region
      $region25: #{xmp_forward.9} parent=11 // pred_check
        %p325 = pneg %p128
      $region26: #{xmp_forward.9} parent=11 // pred_check_branch
        %327 = sbr.rel (%p325) target = $region28
      $region27: #{xmp_forward.9} parent=11 // pred_region
        _
      $region28: #{xmp_forward.9} parent=11 // pred_fallthru
        _
      // Predicated region
      $region29: #{xmp_forward.9} parent=11 // pred_check
        %p328 = pneg %p149
      $region30: #{xmp_forward.9} parent=11 // pred_check_branch
        %330 = sbr.rel (%p328) target = $region32
      $region31: #{xmp_forward.9} parent=11 // pred_region
        _
      $region32: #{xmp_forward.9} parent=11 // pred_fallthru
        _
      // Predicated region
      $region33: #{xmp_forward.9} parent=11 // pred_check
        %p331 = pneg %p170
      $region34: #{xmp_forward.9} parent=11 // pred_check_branch
        %333 = sbr.rel (%p331) target = $region36
      $region35: #{xmp_forward.9} parent=11 // pred_region
        _
      $region36: #{xmp_forward.9} parent=11 // pred_fallthru
        _
      // Predicated region
      $region37: #{xmp_forward.9} parent=11 // pred_check
        %p334 = pneg %p191
      $region38: #{xmp_forward.9} parent=11 // pred_check_branch
        %336 = sbr.rel (%p334) target = $region40
      $region39: #{xmp_forward.9} parent=11 // pred_region
        _
      $region40: #{xmp_forward.9} parent=11 // pred_fallthru
        _
      // Predicated region
      $region41: #{xmp_forward.9} parent=11 // pred_check
        %p337 = pneg %p212
      $region42: #{xmp_forward.9} parent=11 // pred_check_branch
        %339 = sbr.rel (%p337) target = $region44
      $region43: #{xmp_forward.9} parent=11 // pred_region
        _
      $region44: #{xmp_forward.9} parent=11 // pred_fallthru
        _
      // Predicated region
      $region45: #{xmp_forward.9} parent=11 // pred_check
        %p340 = pneg %p233
      $region46: #{xmp_forward.9} parent=11 // pred_check_branch
        %342 = sbr.rel (%p340) target = $region48
      $region47: #{xmp_forward.9} parent=11 // pred_region
        _
      $region48: #{xmp_forward.9} parent=11 // pred_fallthru
        _
      // Predicated region
      $region49: #{xmp_forward.9} parent=11 // pred_check
        %p343 = pneg %p254
      $region50: #{xmp_forward.9} parent=11 // pred_check_branch
        %345 = sbr.rel (%p343) target = $region52
      $region51: #{xmp_forward.9} parent=11 // pred_region
        _
      $region52: #{xmp_forward.9} parent=11 // pred_fallthru
        _
      // Predicated region
      $region53: #{xmp_forward.9} parent=11 // pred_check
        %p346 = pneg %p275
      $region54: #{xmp_forward.9} parent=11 // pred_check_branch
        %348 = sbr.rel (%p346) target = $region56
      $region55: #{xmp_forward.9} parent=11 // pred_region
        _
      $region56: #{xmp_forward.9} parent=11 // pred_fallthru
        _
    $region12: #{xmp_forward.9} parent=5 // pred_fallthru
      _
    %p349 = scmp.lt.s32.totalorder %s18, 2
    // Predicated region
    $region57: #{xmp_forward.9} parent=5 // pred_check
      %p350 = pneg %p349
    $region58: #{xmp_forward.9} parent=5 // pred_check_branch
      %352 = sbr.rel (%p350) target = $region60
    $region59: #{xmp_forward.9} parent=5 // pred_region
      // Predicated region
      $region61: #{xmp_forward.9} parent=59 // pred_check
        %p353 = pneg %p38
      $region62: #{xmp_forward.9} parent=59 // pred_check_branch
        %355 = sbr.rel (%p353) target = $region64
      $region63: #{xmp_forward.9} parent=59 // pred_region
        %p356 = scmp.lt.s32.totalorder %s18, 1
        %s357 = scalar_select %p356, %s18, 1
        %s358 = smul.addr %s357, 8
        %s359 = scalar_lea.vmem %s0, %s358
      $region64: #{xmp_forward.9} parent=59 // pred_fallthru
        _
    $region60: #{xmp_forward.9} parent=5 // pred_fallthru
      _
    %p360 = scmp.le.s32.totalorder 1, %s18
    %p361 = scmp.lt.s32.totalorder %s18, 3
    %p362 = pnand %p360, %p361
    %p363 = pneg %p362
    // Predicated region
    $region65: #{xmp_forward.9} parent=5 // pred_check
      _
    $region66: #{xmp_forward.9} parent=5 // pred_check_branch
      %365 = sbr.rel (%p362) target = $region68
    $region67: #{xmp_forward.9} parent=5 // pred_region
      %s366 = ssub.s32 %s18, 1
      %p367 = scmp.lt.s32.totalorder %s23, 1
      %s368 = scalar_select %p367, %s23, 1
      %s369 = smul.addr %s368, 8
      %s370 = scalar_lea.vmem %s0, %s369
      %p371 = pneg %p44
      %p372 = pneg %p41
      %p373 = pneg %p65
      %p374 = pneg %p62
      %p375 = pneg %p86
      %p376 = pneg %p83
      %p377 = pneg %p107
      %p378 = pneg %p104
      %p379 = pneg %p128
      %p380 = pneg %p125
      %p381 = pneg %p149
      %p382 = pneg %p146
      %p383 = pneg %p170
      %p384 = pneg %p167
      %p385 = pneg %p191
      %p386 = pneg %p188
      %p387 = pneg %p212
      %p388 = pneg %p209
      %p389 = pneg %p233
      %p390 = pneg %p230
      %p391 = pneg %p254
      %p392 = pneg %p251
      %p393 = pneg %p275
      %p394 = pneg %p272
      %p395 = pneg %p301
      %p396 = pneg %p298
      %p397 = scmp.lt.s32.totalorder %s23, 1
      %s398 = scalar_select %p397, %s23, 1
      %s399 = smul.addr %s398, 8
      %s400 = scalar_lea.vmem %s12, %s399
      %p401 = scmp.lt.s32.totalorder %s23, 1
      %s402 = scalar_select %p401, %s23, 1
      %s403 = smul.addr %s402, 8
      %s404 = scalar_lea.vmem %s0, %s403
      %p405 = scmp.lt.s32.totalorder %s23, 1
      %s406 = scalar_select %p405, %s23, 1
      %s407 = smul.addr %s406, 8
      %s408 = scalar_lea.vmem %s12, %s407
      %v409 = vld [vmem:[%s404] sm:$0x1f]
      %v410 = vld [vmem:[%s1] sm:$0x1]
      %v411 = vld [vmem:[%s2] sm:$0x1]
      %vm412 = vcmask 520192
      %v413 = vsel %vm412, %v409, 0.0
      %414 = vadd.xlane.f32.xlu0 %v413
      %v415 = vpop.xlane.xlu0 %414
      %v416 = vrcp.pop 64.0
      %v417 = vmul.f32 64.0, %v416
      %v418 = vsub.f32 1.0, %v417
      %v419 = vmul.f32 %v416, %v418
      %v420 = vadd.f32 %v416, %v419
      %vm421 = vweird.f32 %v416
      %v422 = vsel %vm421, %v416, %v420
      %v423 = vmul.f32 %v415, %v422
      %v424 = vsub.f32 %v409, %v423
      %v425 = vmul.f32 %v424, %v424
      %v426 = vsel %vm412, %v425, 0.0
      %427 = vadd.xlane.f32.xlu0 %v426
      %v428 = vpop.xlane.xlu0 %427
      %v429 = vmul.f32 %v428, %v422
      %v430 = vadd.f32 %v429, 1e-05
      %v431 = vrsqrt.pop %v430
      %v432 = vmul.f32 %v431, %v430
      %v433 = vmul.f32 %v432, %v431
      %v434 = vmul.f32 0.5, %v433
      %v435 = vsub.f32 1.5, %v434
      %v436 = vmul.f32 %v431, %v435
      %vm437 = vweird.f32 %v430
      %vm438 = vweird.f32 %v431
      %vm439 = vmor %vm437, %vm438
      %v440 = vsel %vm439, %v431, %v436
      %v441 = vmul.f32 %v424, %v440
      %v443 = vperm.slane %v410, 0
      %v445 = vmul.f32 %v441, %v443
      %v447 = vperm.slane %v411, 0
      %v449 = vadd.f32 %v445, %v447
      %v450 = vld [vmem:[%s3] sm:$0xff]
      %v451 = vld [vmem:[%s3 + $0x8] sm:$0xff]
      %v452 = vld [vmem:[%s3 + $0x10] sm:$0xff]
      %v453 = vld [vmem:[%s3 + $0x18] sm:$0xff]
      %v454 = vld [vmem:[%s3 + $0x20] sm:$0xff]
      %v455 = vld [vmem:[%s3 + $0x28] sm:$0xff]
      %v456 = vld [vmem:[%s3 + $0x30] sm:$0xff]
      %v457 = vld [vmem:[%s3 + $0x38] sm:$0xff]
      %vm458 = vcmask 523264
      %v460 = vsel %vm458, %v449, 0
      %462 = vmatpush.msra.mxu0 0.0
      %463 = vmatpush.msra.mxu0 0.0
      %464 = vmatpush.msra.mxu0 0.0
      %465 = vmatpush.msra.mxu0 0.0
      %466 = vmatpush.msra.mxu0 0.0
      %467 = vmatpush.msra.mxu0 0.0
      %468 = vmatpush.msra.mxu0 0.0
      %469 = vmatpush.msra.mxu0 0.0
      %470 = vmatpush.msra.mxu0 %v457
      %471 = vmatpush.msra.mxu0 %v456
      %472 = vmatpush.msra.mxu0 %v455
      %473 = vmatpush.msra.mxu0 %v454
      %474 = vmatpush.msra.mxu0 %v453
      %475 = vmatpush.msra.mxu0 %v452
      %476 = vmatpush.msra.mxu0 %v451
      %477 = vmatpush.msra.mxu0 %v450
      %478 = vmatmul.f32.gmra.mxu0 %v460
      %v479 = vpop.f32.mrf.mxu0
      %v480 = vadd.f32 0.0, %v479
      %481 = vdwg.mxu0
      %v482 = vmul.f32 %v480, 0.25
      %s483 = scalar_lea.vmem %s3, 128
      %v484 = vld [vmem:[%s483] sm:$0xff]
      %v485 = vld [vmem:[%s483 + $0x8] sm:$0xff]
      %v486 = vld [vmem:[%s483 + $0x10] sm:$0xff]
      %v487 = vld [vmem:[%s483 + $0x18] sm:$0xff]
      %v488 = vld [vmem:[%s483 + $0x20] sm:$0xff]
      %v489 = vld [vmem:[%s483 + $0x28] sm:$0xff]
      %v490 = vld [vmem:[%s483 + $0x30] sm:$0xff]
      %v491 = vld [vmem:[%s483 + $0x38] sm:$0xff]
      %492 = vmatpush.msra.mxu0 0.0
      %493 = vmatpush.msra.mxu0 0.0
      %494 = vmatpush.msra.mxu0 0.0
      %495 = vmatpush.msra.mxu0 0.0
      %496 = vmatpush.msra.mxu0 0.0
      %497 = vmatpush.msra.mxu0 0.0
      %498 = vmatpush.msra.mxu0 0.0
      %499 = vmatpush.msra.mxu0 0.0
      %500 = vmatpush.msra.mxu0 %v491
      %501 = vmatpush.msra.mxu0 %v490
      %502 = vmatpush.msra.mxu0 %v489
      %503 = vmatpush.msra.mxu0 %v488
      %504 = vmatpush.msra.mxu0 %v487
      %505 = vmatpush.msra.mxu0 %v486
      %506 = vmatpush.msra.mxu0 %v485
      %507 = vmatpush.msra.mxu0 %v484
      %508 = vmatmul.f32.gmra.mxu0 %v460
      %v509 = vpop.f32.mrf.mxu0
      %v510 = vadd.f32 0.0, %v509
      %511 = vdwg.mxu0
      %s512 = scalar_lea.vmem %s3, 256
      %v513 = vld [vmem:[%s512] sm:$0xff]
      %v514 = vld [vmem:[%s512 + $0x8] sm:$0xff]
      %v515 = vld [vmem:[%s512 + $0x10] sm:$0xff]
      %v516 = vld [vmem:[%s512 + $0x18] sm:$0xff]
      %v517 = vld [vmem:[%s512 + $0x20] sm:$0xff]
      %v518 = vld [vmem:[%s512 + $0x28] sm:$0xff]
      %v519 = vld [vmem:[%s512 + $0x30] sm:$0xff]
      %v520 = vld [vmem:[%s512 + $0x38] sm:$0xff]
      %521 = vmatpush.msra.mxu0 0.0
      %522 = vmatpush.msra.mxu0 0.0
      %523 = vmatpush.msra.mxu0 0.0
      %524 = vmatpush.msra.mxu0 0.0
      %525 = vmatpush.msra.mxu0 0.0
      %526 = vmatpush.msra.mxu0 0.0
      %527 = vmatpush.msra.mxu0 0.0
      %528 = vmatpush.msra.mxu0 0.0
      %529 = vmatpush.msra.mxu0 %v520
      %530 = vmatpush.msra.mxu0 %v519
      %531 = vmatpush.msra.mxu0 %v518
      %532 = vmatpush.msra.mxu0 %v517
      %533 = vmatpush.msra.mxu0 %v516
      %534 = vmatpush.msra.mxu0 %v515
      %535 = vmatpush.msra.mxu0 %v514
      %536 = vmatpush.msra.mxu0 %v513
      %537 = vmatmul.f32.gmra.mxu0 %v460
      %v538 = vpop.f32.mrf.mxu0
      %v539 = vadd.f32 0.0, %v538
      %540 = vdwg.mxu0
      %vm541 = vcmask 130048
      %v543 = vsel %vm541, %v482, 0
      %v546 = vsel %vm541, %v510, 0
      %548 = vmatpush.xpose.msra.mxu0 0.0
      %549 = vmatpush.xpose.msra.mxu0 0.0
      %550 = vmatpush.xpose.msra.mxu0 0.0
      %551 = vmatpush.xpose.msra.mxu0 0.0
      %552 = vmatpush.xpose.msra.mxu0 0.0
      %553 = vmatpush.xpose.msra.mxu0 0.0
      %554 = vmatpush.xpose.msra.mxu0 0.0
      %555 = vmatpush.xpose.msra.mxu0 0.0
      %556 = vmatpush.xpose.msra.mxu0 0.0
      %557 = vmatpush.xpose.msra.mxu0 0.0
      %558 = vmatpush.xpose.msra.mxu0 0.0
      %559 = vmatpush.xpose.msra.mxu0 0.0
      %560 = vmatpush.xpose.msra.mxu0 0.0
      %561 = vmatpush.xpose.msra.mxu0 0.0
      %562 = vmatpush.xpose.msra.mxu0 0.0
      %563 = vmatpush.xpose.msra.mxu0 %v546
      %564 = vmatmul.f32.gmra.mxu0 %v543
      %v565 = vpop.f32.mrf.mxu0
      %v566 = vadd.f32 0.0, %v565
      %567 = vdwg.mxu0
      %vm568 = vcmask 36864
      %v569 = vsel %vm568, %v566, -inf
      %570 = vmax.xlane.f32.xlu0 %v569
      %v571 = vpop.xlane.xlu0 %570
      %v572 = vsub.f32 %v566, %v571
      %v573 = vmul.f32 %v572, 1.442695
      %v574 = vpow.pop %v573
      %v575 = vsel %vm568, %v574, 0.0
      %576 = vadd.xlane.f32.xlu0 %v575
      %v577 = vpop.xlane.xlu0 %576
      %v578 = vrcp.pop %v577
      %v579 = vmul.f32 %v574, %v578
      %vm580 = vcmask 39936
      %v582 = vsel %vm580, %v579, 0
      %vm584 = vcmask 1044480
      %v586 = vsel %vm584, %v539, 0
      %588 = vmatpush.msra.mxu0 0.0
      %589 = vmatpush.msra.mxu0 0.0
      %590 = vmatpush.msra.mxu0 0.0
      %591 = vmatpush.msra.mxu0 0.0
      %592 = vmatpush.msra.mxu0 0.0
      %593 = vmatpush.msra.mxu0 0.0
      %594 = vmatpush.msra.mxu0 0.0
      %595 = vmatpush.msra.mxu0 0.0
      %596 = vmatpush.msra.mxu0 0.0
      %597 = vmatpush.msra.mxu0 0.0
      %598 = vmatpush.msra.mxu0 0.0
      %599 = vmatpush.msra.mxu0 0.0
      %600 = vmatpush.msra.mxu0 0.0
      %601 = vmatpush.msra.mxu0 0.0
      %602 = vmatpush.msra.mxu0 0.0
      %603 = vmatpush.msra.mxu0 %v586
      %604 = vmatmul.f32.gmra.mxu0 %v582
      %v605 = vpop.f32.mrf.mxu0
      %v606 = vadd.f32 0.0, %v605
      %607 = vdwg.mxu0
      %v608 = vld [vmem:[%s4] sm:$0xff]
      %v609 = vld [vmem:[%s4 + $0x8] sm:$0xff]
      %s610 = scalar_lea.vmem %s3, 64
      %v611 = vld [vmem:[%s610] sm:$0xff]
      %v612 = vld [vmem:[%s610 + $0x8] sm:$0xff]
      %v613 = vld [vmem:[%s610 + $0x10] sm:$0xff]
      %v614 = vld [vmem:[%s610 + $0x18] sm:$0xff]
      %v615 = vld [vmem:[%s610 + $0x20] sm:$0xff]
      %v616 = vld [vmem:[%s610 + $0x28] sm:$0xff]
      %v617 = vld [vmem:[%s610 + $0x30] sm:$0xff]
      %v618 = vld [vmem:[%s610 + $0x38] sm:$0xff]
      %619 = vmatpush.msra.mxu0 0.0
      %620 = vmatpush.msra.mxu0 0.0
      %621 = vmatpush.msra.mxu0 0.0
      %622 = vmatpush.msra.mxu0 0.0
      %623 = vmatpush.msra.mxu0 0.0
      %624 = vmatpush.msra.mxu0 0.0
      %625 = vmatpush.msra.mxu0 0.0
      %626 = vmatpush.msra.mxu0 0.0
      %627 = vmatpush.msra.mxu0 %v618
      %628 = vmatpush.msra.mxu0 %v617
      %629 = vmatpush.msra.mxu0 %v616
      %630 = vmatpush.msra.mxu0 %v615
      %631 = vmatpush.msra.mxu0 %v614
      %632 = vmatpush.msra.mxu0 %v613
      %633 = vmatpush.msra.mxu0 %v612
      %634 = vmatpush.msra.mxu0 %v611
      %635 = vmatmul.f32.gmra.mxu0 %v460
      %v636 = vpop.f32.mrf.mxu0
      %v637 = vadd.f32 0.0, %v636
      %638 = vdwg.mxu0
      %v639 = vmul.f32 %v637, 0.25
      %s640 = scalar_lea.vmem %s3, 192
      %v641 = vld [vmem:[%s640] sm:$0xff]
      %v642 = vld [vmem:[%s640 + $0x8] sm:$0xff]
      %v643 = vld [vmem:[%s640 + $0x10] sm:$0xff]
      %v644 = vld [vmem:[%s640 + $0x18] sm:$0xff]
      %v645 = vld [vmem:[%s640 + $0x20] sm:$0xff]
      %v646 = vld [vmem:[%s640 + $0x28] sm:$0xff]
      %v647 = vld [vmem:[%s640 + $0x30] sm:$0xff]
      %v648 = vld [vmem:[%s640 + $0x38] sm:$0xff]
      %649 = vmatpush.msra.mxu0 0.0
      %650 = vmatpush.msra.mxu0 0.0
      %651 = vmatpush.msra.mxu0 0.0
      %652 = vmatpush.msra.mxu0 0.0
      %653 = vmatpush.msra.mxu0 0.0
      %654 = vmatpush.msra.mxu0 0.0
      %655 = vmatpush.msra.mxu0 0.0
      %656 = vmatpush.msra.mxu0 0.0
      %657 = vmatpush.msra.mxu0 %v648
      %658 = vmatpush.msra.mxu0 %v647
      %659 = vmatpush.msra.mxu0 %v646
      %660 = vmatpush.msra.mxu0 %v645
      %661 = vmatpush.msra.mxu0 %v644
      %662 = vmatpush.msra.mxu0 %v643
      %663 = vmatpush.msra.mxu0 %v642
      %664 = vmatpush.msra.mxu0 %v641
      %665 = vmatmul.f32.gmra.mxu0 %v460
      %v666 = vpop.f32.mrf.mxu0
      %v667 = vadd.f32 0.0, %v666
      %668 = vdwg.mxu0
      %s669 = scalar_lea.vmem %s3, 320
      %v670 = vld [vmem:[%s669] sm:$0xff]
      %v671 = vld [vmem:[%s669 + $0x8] sm:$0xff]
      %v672 = vld [vmem:[%s669 + $0x10] sm:$0xff]
      %v673 = vld [vmem:[%s669 + $0x18] sm:$0xff]
      %v674 = vld [vmem:[%s669 + $0x20] sm:$0xff]
      %v675 = vld [vmem:[%s669 + $0x28] sm:$0xff]
      %v676 = vld [vmem:[%s669 + $0x30] sm:$0xff]
      %v677 = vld [vmem:[%s669 + $0x38] sm:$0xff]
      %678 = vmatpush.msra.mxu0 0.0
      %679 = vmatpush.msra.mxu0 0.0
      %680 = vmatpush.msra.mxu0 0.0
      %681 = vmatpush.msra.mxu0 0.0
      %682 = vmatpush.msra.mxu0 0.0
      %683 = vmatpush.msra.mxu0 0.0
      %684 = vmatpush.msra.mxu0 0.0
      %685 = vmatpush.msra.mxu0 0.0
      %686 = vmatpush.msra.mxu0 %v677
      %687 = vmatpush.msra.mxu0 %v676
      %688 = vmatpush.msra.mxu0 %v675
      %689 = vmatpush.msra.mxu0 %v674
      %690 = vmatpush.msra.mxu0 %v673
      %691 = vmatpush.msra.mxu0 %v672
      %692 = vmatpush.msra.mxu0 %v671
      %693 = vmatpush.msra.mxu0 %v670
      %694 = vmatmul.f32.gmra.mxu0 %v460
      %v695 = vpop.f32.mrf.mxu0
      %v696 = vadd.f32 0.0, %v695
      %697 = vdwg.mxu0
      %v699 = vsel %vm541, %v639, 0
      %v702 = vsel %vm541, %v667, 0
      %704 = vmatpush.xpose.msra.mxu0 0.0
      %705 = vmatpush.xpose.msra.mxu0 0.0
      %706 = vmatpush.xpose.msra.mxu0 0.0
      %707 = vmatpush.xpose.msra.mxu0 0.0
      %708 = vmatpush.xpose.msra.mxu0 0.0
      %709 = vmatpush.xpose.msra.mxu0 0.0
      %710 = vmatpush.xpose.msra.mxu0 0.0
      %711 = vmatpush.xpose.msra.mxu0 0.0
      %712 = vmatpush.xpose.msra.mxu0 0.0
      %713 = vmatpush.xpose.msra.mxu0 0.0
      %714 = vmatpush.xpose.msra.mxu0 0.0
      %715 = vmatpush.xpose.msra.mxu0 0.0
      %716 = vmatpush.xpose.msra.mxu0 0.0
      %717 = vmatpush.xpose.msra.mxu0 0.0
      %718 = vmatpush.xpose.msra.mxu0 0.0
      %719 = vmatpush.xpose.msra.mxu0 %v702
      %720 = vmatmul.f32.gmra.mxu0 %v699
      %v721 = vpop.f32.mrf.mxu0
      %v722 = vadd.f32 0.0, %v721
      %723 = vdwg.mxu0
      %v724 = vsel %vm568, %v722, -inf
      %725 = vmax.xlane.f32.xlu0 %v724
      %v726 = vpop.xlane.xlu0 %725
      %v727 = vsub.f32 %v722, %v726
      %v728 = vmul.f32 %v727, 1.442695
      %v729 = vpow.pop %v728
      %v730 = vsel %vm568, %v729, 0.0
      %731 = vadd.xlane.f32.xlu0 %v730
      %v732 = vpop.xlane.xlu0 %731
      %v733 = vrcp.pop %v732
      %v734 = vmul.f32 %v729, %v733
      %v736 = vsel %vm580, %v734, 0
      %v739 = vsel %vm584, %v696, 0
      %741 = vmatpush.msra.mxu0 0.0
      %742 = vmatpush.msra.mxu0 0.0
      %743 = vmatpush.msra.mxu0 0.0
      %744 = vmatpush.msra.mxu0 0.0
      %745 = vmatpush.msra.mxu0 0.0
      %746 = vmatpush.msra.mxu0 0.0
      %747 = vmatpush.msra.mxu0 0.0
      %748 = vmatpush.msra.mxu0 0.0
      %749 = vmatpush.msra.mxu0 0.0
      %750 = vmatpush.msra.mxu0 0.0
      %751 = vmatpush.msra.mxu0 0.0
      %752 = vmatpush.msra.mxu0 0.0
      %753 = vmatpush.msra.mxu0 0.0
      %754 = vmatpush.msra.mxu0 0.0
      %755 = vmatpush.msra.mxu0 0.0
      %756 = vmatpush.msra.mxu0 %v739
      %757 = vmatmul.f32.gmra.mxu0 %v736
      %v758 = vpop.f32.mrf.mxu0
      %v759 = vadd.f32 0.0, %v758
      %760 = vdwg.mxu0
      %s761 = scalar_lea.vmem %s4, 16
      %v762 = vld [vmem:[%s761] sm:$0xff]
      %v763 = vld [vmem:[%s761 + $0x8] sm:$0xff]
      %v765 = vsel %vm541, %v759, 0
      %767 = vmatpush.msra.mxu0 0.0
      %768 = vmatpush.msra.mxu0 0.0
      %769 = vmatpush.msra.mxu0 0.0
      %770 = vmatpush.msra.mxu0 0.0
      %771 = vmatpush.msra.mxu0 0.0
      %772 = vmatpush.msra.mxu0 0.0
      %773 = vmatpush.msra.mxu0 0.0
      %774 = vmatpush.msra.mxu0 0.0
      %775 = vmatpush.msra.mxu0 0.0
      %776 = vmatpush.msra.mxu0 0.0
      %777 = vmatpush.msra.mxu0 0.0
      %778 = vmatpush.msra.mxu0 0.0
      %779 = vmatpush.msra.mxu0 0.0
      %780 = vmatpush.msra.mxu0 0.0
      %781 = vmatpush.msra.mxu0 %v763
      %782 = vmatpush.msra.mxu0 %v762
      %783 = vmatmul.f32.gmra.mxu0 %v765
      %v784 = vpop.f32.mrf.mxu0
      %v785 = vadd.f32 0.0, %v784
      %786 = vdwg.mxu0
      %v788 = vsel %vm541, %v606, 0
      %790 = vmatpush.msra.mxu0 0.0
      %791 = vmatpush.msra.mxu0 0.0
      %792 = vmatpush.msra.mxu0 0.0
      %793 = vmatpush.msra.mxu0 0.0
      %794 = vmatpush.msra.mxu0 0.0
      %795 = vmatpush.msra.mxu0 0.0
      %796 = vmatpush.msra.mxu0 0.0
      %797 = vmatpush.msra.mxu0 0.0
      %798 = vmatpush.msra.mxu0 0.0
      %799 = vmatpush.msra.mxu0 0.0
      %800 = vmatpush.msra.mxu0 0.0
      %801 = vmatpush.msra.mxu0 0.0
      %802 = vmatpush.msra.mxu0 0.0
      %803 = vmatpush.msra.mxu0 0.0
      %804 = vmatpush.msra.mxu0 %v609
      %805 = vmatpush.msra.mxu0 %v608
      %806 = vmatmul.f32.gmra.mxu0 %v788
      %v807 = vpop.f32.mrf.mxu0
      %v808 = vadd.f32 %v785, %v807
      %809 = vdwg.mxu0
      %v810 = vadd.f32 %v409, %v808
      %v811 = vld [vmem:[%s5] sm:$0x1]
      %v813 = vperm.slane %v811, 0
      %v815 = vadd.f32 %v810, %v813
      %v816 = vld [vmem:[%s6] sm:$0x1]
      %v817 = vld [vmem:[%s7] sm:$0x1]
      %v818 = vsel %vm412, %v815, 0.0
      %819 = vadd.xlane.f32.xlu0 %v818
      %v820 = vpop.xlane.xlu0 %819
      %v821 = vmul.f32 %v820, %v422
      %v822 = vsub.f32 %v815, %v821
      %v823 = vmul.f32 %v822, %v822
      %v824 = vsel %vm412, %v823, 0.0
      %825 = vadd.xlane.f32.xlu0 %v824
      %v826 = vpop.xlane.xlu0 %825
      %v827 = vmul.f32 %v826, %v422
      %v828 = vadd.f32 %v827, 1e-05
      %v829 = vrsqrt.pop %v828
      %v830 = vmul.f32 %v829, %v828
      %v831 = vmul.f32 %v830, %v829
      %v832 = vmul.f32 0.5, %v831
      %v833 = vsub.f32 1.5, %v832
      %v834 = vmul.f32 %v829, %v833
      %vm835 = vweird.f32 %v828
      %vm836 = vweird.f32 %v829
      %vm837 = vmor %vm835, %vm836
      %v838 = vsel %vm837, %v829, %v834
      %v839 = vmul.f32 %v822, %v838
      %v841 = vperm.slane %v816, 0
      %v843 = vmul.f32 %v839, %v841
      %v845 = vperm.slane %v817, 0
      %v847 = vadd.f32 %v843, %v845
      %v848 = vld [vmem:[%s8] sm:$0xff]
      %v849 = vld [vmem:[%s8 + $0x8] sm:$0xff]
      %v850 = vld [vmem:[%s8 + $0x10] sm:$0xff]
      %v851 = vld [vmem:[%s8 + $0x18] sm:$0xff]
      %v852 = vld [vmem:[%s8 + $0x20] sm:$0xff]
      %v853 = vld [vmem:[%s8 + $0x28] sm:$0xff]
      %v854 = vld [vmem:[%s8 + $0x30] sm:$0xff]
      %v855 = vld [vmem:[%s8 + $0x38] sm:$0xff]
      %v856 = vld [vmem:[%s8 + $0x40] sm:$0xff]
      %v857 = vld [vmem:[%s8 + $0x48] sm:$0xff]
      %v858 = vld [vmem:[%s8 + $0x50] sm:$0xff]
      %v859 = vld [vmem:[%s8 + $0x58] sm:$0xff]
      %v860 = vld [vmem:[%s8 + $0x60] sm:$0xff]
      %v861 = vld [vmem:[%s8 + $0x68] sm:$0xff]
      %v862 = vld [vmem:[%s8 + $0x70] sm:$0xff]
      %v863 = vld [vmem:[%s8 + $0x78] sm:$0xff]
      %v864 = vld [vmem:[%s9] sm:$0x3]
      %v866 = vperm.slane %v864, 0
      %v867 = vperm.slane %v864, 1
      %v871 = vsel %vm458, %v847, 0
      %873 = vmatpush.msra.mxu0 0.0
      %874 = vmatpush.msra.mxu0 0.0
      %875 = vmatpush.msra.mxu0 0.0
      %876 = vmatpush.msra.mxu0 0.0
      %877 = vmatpush.msra.mxu0 0.0
      %878 = vmatpush.msra.mxu0 0.0
      %879 = vmatpush.msra.mxu0 0.0
      %880 = vmatpush.msra.mxu0 0.0
      %881 = vmatpush.msra.mxu0 %v862
      %882 = vmatpush.msra.mxu0 %v860
      %883 = vmatpush.msra.mxu0 %v858
      %884 = vmatpush.msra.mxu0 %v856
      %885 = vmatpush.msra.mxu0 %v854
      %886 = vmatpush.msra.mxu0 %v852
      %887 = vmatpush.msra.mxu0 %v850
      %888 = vmatpush.msra.mxu0 %v848
      %889 = vmatmul.f32.gmra.mxu0 %v871
      %v890 = vpop.f32.mrf.mxu0
      %v891 = vadd.f32 %v866, %v890
      %892 = vdwg.mxu0
      %893 = vmatpush.msra.mxu0 0.0
      %894 = vmatpush.msra.mxu0 0.0
      %895 = vmatpush.msra.mxu0 0.0
      %896 = vmatpush.msra.mxu0 0.0
      %897 = vmatpush.msra.mxu0 0.0
      %898 = vmatpush.msra.mxu0 0.0
      %899 = vmatpush.msra.mxu0 0.0
      %900 = vmatpush.msra.mxu0 0.0
      %901 = vmatpush.msra.mxu0 %v863
      %902 = vmatpush.msra.mxu0 %v861
      %903 = vmatpush.msra.mxu0 %v859
      %904 = vmatpush.msra.mxu0 %v857
      %905 = vmatpush.msra.mxu0 %v855
      %906 = vmatpush.msra.mxu0 %v853
      %907 = vmatpush.msra.mxu0 %v851
      %908 = vmatpush.msra.mxu0 %v849
      %909 = vmatmul.f32.gmra.mxu0 %v871
      %v910 = vpop.f32.mrf.mxu0
      %v911 = vadd.f32 %v867, %v910
      %912 = vdwg.mxu0
      %v913 = vmul.f32 %v891, %v891
      %v914 = vmul.f32 %v911, %v911
      %v915 = vmul.f32 %v891, %v913
      %v916 = vmul.f32 %v911, %v914
      %v917 = vmul.f32 %v915, 0.044715
      %v918 = vmul.f32 %v916, 0.044715
      %v919 = vadd.f32 %v891, %v917
      %v920 = vadd.f32 %v911, %v918
      %v921 = vmul.f32 %v919, 0.7978846
      %v922 = vmul.f32 %v920, 0.7978846
      %v923 = vtanh.pop %v921
      %v924 = vtanh.pop %v922
      %v925 = vadd.f32 %v923, 1.0
      %v926 = vadd.f32 %v924, 1.0
      %v927 = vmul.f32 %v925, 0.5
      %v928 = vmul.f32 %v926, 0.5
      %v929 = vmul.f32 %v891, %v927
      %v930 = vmul.f32 %v911, %v928
      %v931 = vld [vmem:[%s10] sm:$0xff]
      %v932 = vld [vmem:[%s10 + $0x8] sm:$0xff]
      %v933 = vld [vmem:[%s10 + $0x10] sm:$0xff]
      %v934 = vld [vmem:[%s10 + $0x18] sm:$0xff]
      %v935 = vld [vmem:[%s10 + $0x20] sm:$0xff]
      %v936 = vld [vmem:[%s10 + $0x28] sm:$0xff]
      %v937 = vld [vmem:[%s10 + $0x30] sm:$0xff]
      %v938 = vld [vmem:[%s10 + $0x38] sm:$0xff]
      %v939 = vld [vmem:[%s10 + $0x40] sm:$0xff]
      %v940 = vld [vmem:[%s10 + $0x48] sm:$0xff]
      %v941 = vld [vmem:[%s10 + $0x50] sm:$0xff]
      %v942 = vld [vmem:[%s10 + $0x58] sm:$0xff]
      %v943 = vld [vmem:[%s10 + $0x60] sm:$0xff]
      %v944 = vld [vmem:[%s10 + $0x68] sm:$0xff]
      %v945 = vld [vmem:[%s10 + $0x70] sm:$0xff]
      %v946 = vld [vmem:[%s10 + $0x78] sm:$0xff]
      %v947 = vld [vmem:[%s10 + $0x80] sm:$0xff]
      %v948 = vld [vmem:[%s10 + $0x88] sm:$0xff]
      %v949 = vld [vmem:[%s10 + $0x90] sm:$0xff]
      %v950 = vld [vmem:[%s10 + $0x98] sm:$0xff]
      %v951 = vld [vmem:[%s10 + $0xa0] sm:$0xff]
      %v952 = vld [vmem:[%s10 + $0xa8] sm:$0xff]
      %v953 = vld [vmem:[%s10 + $0xb0] sm:$0xff]
      %v954 = vld [vmem:[%s10 + $0xb8] sm:$0xff]
      %v955 = vld [vmem:[%s10 + $0xc0] sm:$0xff]
      %v956 = vld [vmem:[%s10 + $0xc8] sm:$0xff]
      %v957 = vld [vmem:[%s10 + $0xd0] sm:$0xff]
      %v958 = vld [vmem:[%s10 + $0xd8] sm:$0xff]
      %v959 = vld [vmem:[%s10 + $0xe0] sm:$0xff]
      %v960 = vld [vmem:[%s10 + $0xe8] sm:$0xff]
      %v961 = vld [vmem:[%s10 + $0xf0] sm:$0xff]
      %v962 = vld [vmem:[%s10 + $0xf8] sm:$0xff]
      %963 = vmatpush.msra.mxu0 %v946
      %964 = vmatpush.msra.mxu0 %v945
      %965 = vmatpush.msra.mxu0 %v944
      %966 = vmatpush.msra.mxu0 %v943
      %967 = vmatpush.msra.mxu0 %v942
      %968 = vmatpush.msra.mxu0 %v941
      %969 = vmatpush.msra.mxu0 %v940
      %970 = vmatpush.msra.mxu0 %v939
      %971 = vmatpush.msra.mxu0 %v938
      %972 = vmatpush.msra.mxu0 %v937
      %973 = vmatpush.msra.mxu0 %v936
      %974 = vmatpush.msra.mxu0 %v935
      %975 = vmatpush.msra.mxu0 %v934
      %976 = vmatpush.msra.mxu0 %v933
      %977 = vmatpush.msra.mxu0 %v932
      %978 = vmatpush.msra.mxu0 %v931
      %979 = vmatmul.f32.gmra.mxu0 %v929
      %v980 = vpop.f32.mrf.mxu0
      %v981 = vadd.f32 0.0, %v980
      %982 = vdwg.mxu0
      %983 = vmatpush.msra.mxu0 %v962
      %984 = vmatpush.msra.mxu0 %v961
      %985 = vmatpush.msra.mxu0 %v960
      %986 = vmatpush.msra.mxu0 %v959
      %987 = vmatpush.msra.mxu0 %v958
      %988 = vmatpush.msra.mxu0 %v957
      %989 = vmatpush.msra.mxu0 %v956
      %990 = vmatpush.msra.mxu0 %v955
      %991 = vmatpush.msra.mxu0 %v954
      %992 = vmatpush.msra.mxu0 %v953
      %993 = vmatpush.msra.mxu0 %v952
      %994 = vmatpush.msra.mxu0 %v951
      %995 = vmatpush.msra.mxu0 %v950
      %996 = vmatpush.msra.mxu0 %v949
      %997 = vmatpush.msra.mxu0 %v948
      %998 = vmatpush.msra.mxu0 %v947
      %999 = vmatmul.f32.gmra.mxu0 %v930
      %v1000 = vpop.f32.mrf.mxu0
      %v1001 = vadd.f32 %v981, %v1000
      %1002 = vdwg.mxu0
      %v1003 = vadd.f32 %v815, %v1001
      %v1004 = vld [vmem:[%s11] sm:$0x1]
      %v1006 = vperm.slane %v1004, 0
      %v1008 = vadd.f32 %v1003, %v1006
      %1009 = vst.msk [vmem:[%s408] sm:$0x1f] %vm412, %v1008
      %p1010 = scmp.lt.s32.totalorder %s23, 1
      %s1011 = scalar_select %p1010, %s23, 1
      %s1012 = smul.addr %s1011, 8
      %s1013 = scalar_lea.vmem %s12, %s1012
      // Predicated region
      $region69: #{xmp_forward.9} parent=67 // pred_check
        %p1014 = pneg %p298
      $region70: #{xmp_forward.9} parent=67 // pred_check_branch
        %1016 = sbr.rel (%p1014) target = $region72
      $region71: #{xmp_forward.9} parent=67 // pred_region
        _
      $region72: #{xmp_forward.9} parent=67 // pred_fallthru
        _
    $region68: #{xmp_forward.9} parent=5 // pred_fallthru
      _
    %p1017 = scmp.le.s32.totalorder 2, %s18
    // Predicated region
    $region73: #{xmp_forward.9} parent=5 // pred_check
      %p1018 = pneg %p1017
    $region74: #{xmp_forward.9} parent=5 // pred_check_branch
      %1020 = sbr.rel (%p1018) target = $region76
    $region75: #{xmp_forward.9} parent=5 // pred_region
      %s1021 = ssub.s32 %s18, 2
      // Predicated region
      $region77: #{xmp_forward.9} parent=75 // pred_check
        %p1022 = pneg %p304
      $region78: #{xmp_forward.9} parent=75 // pred_check_branch
        %1024 = sbr.rel (%p1022) target = $region80
      $region79: #{xmp_forward.9} parent=75 // pred_region
        %p1025 = scmp.lt.s32.totalorder %s24, 1
        %s1026 = scalar_select %p1025, %s24, 1
        %s1027 = smul.addr %s1026, 8
        %s1028 = scalar_lea.vmem %s12, %s1027
      $region80: #{xmp_forward.9} parent=75 // pred_fallthru
        _
    $region76: #{xmp_forward.9} parent=5 // pred_fallthru
      _
  $region6: #{xmp_forward.9} parent=0 // loop_footer
    %s22 = sadd.s32 1, %s18
  $region7: #{xmp_forward.9} parent=0 // loop_footer_branch
    %17 = sbr.rel target = $region3
  $region8: #{xmp_forward.9} parent=0 // loop_exit
    _

// kernel: xmp_forward.11
$region0: #{xmp_forward.11}
  #allocation0 [shape = 'u32[]', space=smem, size = 0x4, offset = 0x4, fixed_abs, tag = 'smem constant byte address 0x4 - core index']
  #allocation1 [shape = 'u32[72,128]{1,0:T(1,128)}', space=vmem, size = 0x9000, scoped, tag = 'internal scratch']
  %s0 = inlined_call_operand.vmem [shape: f32[2,32], index: 0, kind: input, shape index: {}]
  %s1 = inlined_call_operand.vmem [shape: f32[2,64], index: 1, kind: input, shape index: {}]
  %s2 = inlined_call_operand.vmem [shape: f32[1,32], index: 2, kind: input, shape index: {}]
  %s3 = inlined_call_operand.vmem [shape: f32[1,32], index: 3, kind: input, shape index: {}]
  %s4 = inlined_call_operand.vmem [shape: f32[32,10], index: 4, kind: input, shape index: {}]
  %s5 = inlined_call_operand.vmem [shape: f32[1,10], index: 5, kind: input, shape index: {}]
  %s6 = inlined_call_operand.vmem [shape: f32[1,64], index: 6, kind: input, shape index: {}]
  %s7 = inlined_call_operand.vmem [shape: f32[1,64], index: 7, kind: input, shape index: {}]
  %s8 = inlined_call_operand.vmem [shape: f32[64,10], index: 8, kind: input, shape index: {}]
  %s9 = inlined_call_operand.vmem [shape: f32[1,10], index: 9, kind: input, shape index: {}]
  %s10 = inlined_call_operand.hbm [shape: f32[2,10], index: 10, kind: output, shape index: {}]
  %s11 = sld [smem:[#allocation0]]
  $region50: #{xmp_forward.11} parent=0
    _
  %s13 = ssub.s32 1, %s11
  %s14 = scalar_select 0, %s13, %s11
  $region1: #{xmp_forward.11} parent=0
    #allocation2 [shape = 'u8[1024]{0}', space=vmem, size = 0x400, scoped, tag = 'output window, operand 0, single buffered']
    #allocation3 [shape = 's32[1]{0}', space=sflag, size = 0x4, scoped, tag = 'scoped memory for xmp_forward.11']
    %15 = vsyncpa [#allocation3], 0
    // Predicated region
    $region2: #{xmp_forward.11} parent=1 // pred_check
      _
    $region3: #{xmp_forward.11} parent=1 // pred_check_branch
      %17 = sbr.rel (0) target = $region5
    $region4: #{xmp_forward.11} parent=1 // pred_region
      _
    $region5: #{xmp_forward.11} parent=1 // pred_fallthru
      _
    // Predicated region
    $region6: #{xmp_forward.11} parent=1 // pred_check
      _
    $region7: #{xmp_forward.11} parent=1 // pred_check_branch
      %19 = sbr.rel (0) target = $region9
    $region8: #{xmp_forward.11} parent=1 // pred_region
      _
    $region9: #{xmp_forward.11} parent=1 // pred_fallthru
      _
    // Predicated region
    $region10: #{xmp_forward.11} parent=1 // pred_check
      _
    $region11: #{xmp_forward.11} parent=1 // pred_check_branch
      %21 = sbr.rel (0) target = $region13
    $region12: #{xmp_forward.11} parent=1 // pred_region
      _
    $region13: #{xmp_forward.11} parent=1 // pred_fallthru
      _
    // Predicated region
    $region14: #{xmp_forward.11} parent=1 // pred_check
      _
    $region15: #{xmp_forward.11} parent=1 // pred_check_branch
      %23 = sbr.rel (0) target = $region17
    $region16: #{xmp_forward.11} parent=1 // pred_region
      _
    $region17: #{xmp_forward.11} parent=1 // pred_fallthru
      _
    // Predicated region
    $region18: #{xmp_forward.11} parent=1 // pred_check
      _
    $region19: #{xmp_forward.11} parent=1 // pred_check_branch
      %25 = sbr.rel (0) target = $region21
    $region20: #{xmp_forward.11} parent=1 // pred_region
      _
    $region21: #{xmp_forward.11} parent=1 // pred_fallthru
      _
    // Predicated region
    $region22: #{xmp_forward.11} parent=1 // pred_check
      _
    $region23: #{xmp_forward.11} parent=1 // pred_check_branch
      %27 = sbr.rel (0) target = $region25
    $region24: #{xmp_forward.11} parent=1 // pred_region
      _
    $region25: #{xmp_forward.11} parent=1 // pred_fallthru
      _
    // Predicated region
    $region26: #{xmp_forward.11} parent=1 // pred_check
      _
    $region27: #{xmp_forward.11} parent=1 // pred_check_branch
      %29 = sbr.rel (0) target = $region29
    $region28: #{xmp_forward.11} parent=1 // pred_region
      _
    $region29: #{xmp_forward.11} parent=1 // pred_fallthru
      _
    // Predicated region
    $region30: #{xmp_forward.11} parent=1 // pred_check
      _
    $region31: #{xmp_forward.11} parent=1 // pred_check_branch
      %31 = sbr.rel (0) target = $region33
    $region32: #{xmp_forward.11} parent=1 // pred_region
      _
    $region33: #{xmp_forward.11} parent=1 // pred_fallthru
      _
    // Predicated region
    $region34: #{xmp_forward.11} parent=1 // pred_check
      _
    $region35: #{xmp_forward.11} parent=1 // pred_check_branch
      %33 = sbr.rel (0) target = $region37
    $region36: #{xmp_forward.11} parent=1 // pred_region
      _
    $region37: #{xmp_forward.11} parent=1 // pred_fallthru
      _
    // Predicated region
    $region38: #{xmp_forward.11} parent=1 // pred_check
      _
    $region39: #{xmp_forward.11} parent=1 // pred_check_branch
      %35 = sbr.rel (0) target = $region41
    $region40: #{xmp_forward.11} parent=1 // pred_region
      _
    $region41: #{xmp_forward.11} parent=1 // pred_fallthru
      _
    %v36 = vld [vmem:[%s0] sm:$0x3]
    %v37 = vld [vmem:[%s2] sm:$0x1]
    %v38 = vld [vmem:[%s3] sm:$0x1]
    %vm39 = vcmask 254976
    %v40 = vsel %vm39, %v36, 0.0
    %41 = vadd.xlane.f32.xlu0 %v40
    %v42 = vpop.xlane.xlu0 %41
    %v43 = vrcp.pop 32.0
    %v44 = vmul.f32 32.0, %v43
    %v45 = vsub.f32 1.0, %v44
    %v46 = vmul.f32 %v43, %v45
    %v47 = vadd.f32 %v43, %v46
    %vm48 = vweird.f32 %v43
    %v49 = vsel %vm48, %v43, %v47
    %v50 = vmul.f32 %v42, %v49
    %v51 = vsub.f32 %v36, %v50
    %v52 = vmul.f32 %v51, %v51
    %v53 = vsel %vm39, %v52, 0.0
    %54 = vadd.xlane.f32.xlu0 %v53
    %v55 = vpop.xlane.xlu0 %54
    %v56 = vmul.f32 %v55, %v49
    %v57 = vadd.f32 %v56, 1e-05
    %v58 = vrsqrt.pop %v57
    %v59 = vmul.f32 %v58, %v57
    %v60 = vmul.f32 %v59, %v58
    %v61 = vmul.f32 0.5, %v60
    %v62 = vsub.f32 1.5, %v61
    %v63 = vmul.f32 %v58, %v62
    %vm64 = vweird.f32 %v57
    %vm65 = vweird.f32 %v58
    %vm66 = vmor %vm64, %vm65
    %v67 = vsel %vm66, %v58, %v63
    %v68 = vmul.f32 %v51, %v67
    %v70 = vperm.slane %v37, 0
    %v72 = vmul.f32 %v68, %v70
    %v74 = vperm.slane %v38, 0
    %v76 = vadd.f32 %v72, %v74
    %v77 = vld [vmem:[%s1] sm:$0x3]
    %v78 = vld [vmem:[%s6] sm:$0x1]
    %v79 = vld [vmem:[%s7] sm:$0x1]
    %vm80 = vcmask 517120
    %v81 = vsel %vm80, %v77, 0.0
    %82 = vadd.xlane.f32.xlu0 %v81
    %v83 = vpop.xlane.xlu0 %82
    %v84 = vrcp.pop 64.0
    %v85 = vmul.f32 64.0, %v84
    %v86 = vsub.f32 1.0, %v85
    %v87 = vmul.f32 %v84, %v86
    %v88 = vadd.f32 %v84, %v87
    %vm89 = vweird.f32 %v84
    %v90 = vsel %vm89, %v84, %v88
    %v91 = vmul.f32 %v83, %v90
    %v92 = vsub.f32 %v77, %v91
    %v93 = vmul.f32 %v92, %v92
    %v94 = vsel %vm80, %v93, 0.0
    %95 = vadd.xlane.f32.xlu0 %v94
    %v96 = vpop.xlane.xlu0 %95
    %v97 = vmul.f32 %v96, %v90
    %v98 = vadd.f32 %v97, 1e-05
    %v99 = vrsqrt.pop %v98
    %v100 = vmul.f32 %v99, %v98
    %v101 = vmul.f32 %v100, %v99
    %v102 = vmul.f32 0.5, %v101
    %v103 = vsub.f32 1.5, %v102
    %v104 = vmul.f32 %v99, %v103
    %vm105 = vweird.f32 %v98
    %vm106 = vweird.f32 %v99
    %vm107 = vmor %vm105, %vm106
    %v108 = vsel %vm107, %v99, %v104
    %v109 = vmul.f32 %v92, %v108
    %v111 = vperm.slane %v78, 0
    %v113 = vmul.f32 %v109, %v111
    %v115 = vperm.slane %v79, 0
    %v117 = vadd.f32 %v113, %v115
    %v118 = vld [vmem:[%s4] sm:$0xff]
    %v119 = vld [vmem:[%s4 + $0x8] sm:$0xff]
    %v120 = vld [vmem:[%s4 + $0x10] sm:$0xff]
    %v121 = vld [vmem:[%s4 + $0x18] sm:$0xff]
    %v122 = vld [vmem:[%s5] sm:$0x1]
    %v124 = vperm.slane %v122, 0
    %vm126 = vcmask 261120
    %v128 = vsel %vm126, %v76, 0
    %130 = vmatpush.msra.mxu0 0.0
    %131 = vmatpush.msra.mxu0 0.0
    %132 = vmatpush.msra.mxu0 0.0
    %133 = vmatpush.msra.mxu0 0.0
    %134 = vmatpush.msra.mxu0 0.0
    %135 = vmatpush.msra.mxu0 0.0
    %136 = vmatpush.msra.mxu0 0.0
    %137 = vmatpush.msra.mxu0 0.0
    %138 = vmatpush.msra.mxu0 0.0
    %139 = vmatpush.msra.mxu0 0.0
    %140 = vmatpush.msra.mxu0 0.0
    %141 = vmatpush.msra.mxu0 0.0
    %142 = vmatpush.msra.mxu0 %v121
    %143 = vmatpush.msra.mxu0 %v120
    %144 = vmatpush.msra.mxu0 %v119
    %145 = vmatpush.msra.mxu0 %v118
    %146 = vmatmul.f32.gmra.mxu0 %v128
    %v147 = vpop.f32.mrf.mxu0
    %v148 = vadd.f32 %v124, %v147
    %149 = vdwg.mxu0
    %v150 = vld [vmem:[%s8] sm:$0xff]
    %v151 = vld [vmem:[%s8 + $0x8] sm:$0xff]
    %v152 = vld [vmem:[%s8 + $0x10] sm:$0xff]
    %v153 = vld [vmem:[%s8 + $0x18] sm:$0xff]
    %v154 = vld [vmem:[%s8 + $0x20] sm:$0xff]
    %v155 = vld [vmem:[%s8 + $0x28] sm:$0xff]
    %v156 = vld [vmem:[%s8 + $0x30] sm:$0xff]
    %v157 = vld [vmem:[%s8 + $0x38] sm:$0xff]
    %vm158 = vcmask 523264
    %v160 = vsel %vm158, %v117, 0
    %162 = vmatpush.msra.mxu0 0.0
    %163 = vmatpush.msra.mxu0 0.0
    %164 = vmatpush.msra.mxu0 0.0
    %165 = vmatpush.msra.mxu0 0.0
    %166 = vmatpush.msra.mxu0 0.0
    %167 = vmatpush.msra.mxu0 0.0
    %168 = vmatpush.msra.mxu0 0.0
    %169 = vmatpush.msra.mxu0 0.0
    %170 = vmatpush.msra.mxu0 %v157
    %171 = vmatpush.msra.mxu0 %v156
    %172 = vmatpush.msra.mxu0 %v155
    %173 = vmatpush.msra.mxu0 %v154
    %174 = vmatpush.msra.mxu0 %v153
    %175 = vmatpush.msra.mxu0 %v152
    %176 = vmatpush.msra.mxu0 %v151
    %177 = vmatpush.msra.mxu0 %v150
    %178 = vmatmul.f32.gmra.mxu0 %v160
    %v179 = vpop.f32.mrf.mxu0
    %v180 = vadd.f32 0.0, %v179
    %181 = vdwg.mxu0
    %v182 = vadd.f32 %v148, %v180
    %v183 = vld [vmem:[%s9] sm:$0x1]
    %v185 = vperm.slane %v183, 0
    %v187 = vadd.f32 %v182, %v185
    %vm188 = vcmask 74752
    %189 = vst.msk [vmem:[#allocation2] sm:$0x3] %vm188, %v187
    // Predicated region
    $region42: #{xmp_forward.11} parent=1 // pred_check
      _
    $region43: #{xmp_forward.11} parent=1 // pred_check_branch
      %191 = sbr.rel (0) target = $region45
    $region44: #{xmp_forward.11} parent=1 // pred_region
      %193 = vsyncadd [#allocation3], 0
      %s195 = sshll.u32 [#allocation2], 4
      %s196 = int_to_ptr.vmem [resolvable:$true] %s195
      %s197 = sshll.u32 %s10, 4
      %s198 = int_to_ptr.hbm [resolvable:$true] %s197
      %200 = dma.vmem_to_hbm [thread:$0]  %s196, 32, %s198, [#allocation3]
    $region45: #{xmp_forward.11} parent=1 // pred_fallthru
      _
    // Predicated region
    $region46: #{xmp_forward.11} parent=1 // pred_check
      _
    $region47: #{xmp_forward.11} parent=1 // pred_check_branch
      %202 = sbr.rel (0) target = $region49
    $region48: #{xmp_forward.11} parent=1 // pred_region
      %204 = dma.done [#allocation3], 32
    $region49: #{xmp_forward.11} parent=1 // pred_fallthru
      _
    %205 = vsyncpa [#allocation3], 1

// kernel: xmp_forward.10
$region0: #{xmp_forward.10}
  #allocation0 [shape = 'u32[]', space=smem, size = 0x4, offset = 0x4, fixed_abs, tag = 'smem constant byte address 0x4 - core index']
  #allocation1 [shape = 'u32[72,128]{1,0:T(1,128)}', space=vmem, size = 0x9000, scoped, tag = 'internal scratch']
  %s0 = inlined_call_operand.vmem [shape: f32[2,1,32], index: 0, kind: input, shape index: {}]
  %s1 = inlined_call_operand.vmem [shape: f32[2,4,64], index: 1, kind: input, shape index: {}]
  %s2 = inlined_call_operand.vmem [shape: f32[2,1,64], index: 2, kind: input, shape index: {}]
  %s3 = inlined_call_operand.vmem [shape: f32[2,8,32], index: 3, kind: input, shape index: {}]
  %s4 = inlined_call_operand.vmem [shape: f32[32,64], index: 4, kind: input, shape index: {}]
  %s5 = inlined_call_operand.vmem [shape: f32[1,64], index: 5, kind: input, shape index: {}]
  %s6 = inlined_call_operand.vmem [shape: f32[1,64], index: 6, kind: input, shape index: {}]
  %s7 = inlined_call_operand.vmem [shape: f32[1,64], index: 7, kind: input, shape index: {}]
  %s8 = inlined_call_operand.vmem [shape: f32[2,64,16], index: 8, kind: input, shape index: {}]
  %s9 = inlined_call_operand.vmem [shape: f32[4,64,16], index: 9, kind: input, shape index: {}]
  %s10 = inlined_call_operand.vmem [shape: f32[2,16,64], index: 10, kind: input, shape index: {}]
  %s11 = inlined_call_operand.vmem [shape: f32[1,64], index: 11, kind: input, shape index: {}]
  %s12 = inlined_call_operand.vmem [shape: f32[64,32], index: 12, kind: input, shape index: {}]
  %s13 = inlined_call_operand.vmem [shape: f32[1,32], index: 13, kind: input, shape index: {}]
  %s14 = inlined_call_operand.vmem [shape: f32[64,32], index: 14, kind: input, shape index: {}]
  %s15 = inlined_call_operand.vmem [shape: f32[1,32], index: 15, kind: input, shape index: {}]
  %s16 = inlined_call_operand.vmem [shape: f32[1,32], index: 16, kind: input, shape index: {}]
  %s17 = inlined_call_operand.vmem [shape: f32[1,32], index: 17, kind: input, shape index: {}]
  %s18 = inlined_call_operand.vmem [shape: f32[2,32,16], index: 18, kind: input, shape index: {}]
  %s19 = inlined_call_operand.vmem [shape: f32[4,32,16], index: 19, kind: input, shape index: {}]
  %s20 = inlined_call_operand.vmem [shape: f32[2,16,32], index: 20, kind: input, shape index: {}]
  %s21 = inlined_call_operand.vmem [shape: f32[1,32], index: 21, kind: input, shape index: {}]
  %s22 = inlined_call_operand.vmem [shape: f32[32,64], index: 22, kind: input, shape index: {}]
  %s23 = inlined_call_operand.vmem [shape: f32[1,64], index: 23, kind: input, shape index: {}]
  %s24 = inlined_call_operand.vmem [shape: f32[2,1,32], index: 24, kind: output, shape index: {0}]
  %s25 = inlined_call_operand.vmem [shape: f32[2,1,64], index: 25, kind: output, shape index: {1}]
  %26 = xla_tuple %s24, %s25
  %s27 = sld [smem:[#allocation0]]
  $region137: #{xmp_forward.10} parent=0
    _
  %s29 = ssub.s32 1, %s27
  %s30 = scalar_select 0, %s29, %s27
  loop: start=0, step=1, limit=4
  $region2: #{xmp_forward.10} parent=0 // loop_pre_header
    _
  $region3: #{xmp_forward.10} parent=0 // loop_header
    %s32 = sphi 0, %s36
    %p33 = scmp.ge.s32.totalorder %s32, 4
    %s42 = sphi 0, %s44
    %s45 = sphi 0, %s42
    %s46 = sphi 0, %s45
    %s62 = sphi 0, %s46
    %s68 = sphi 0, %s70
    %s71 = sphi 0, %s68
    %s72 = sphi 0, %s71
    %s88 = sphi 0, %s72
    %s94 = sphi 0, %s96
    %s97 = sphi 0, %s94
    %s98 = sphi 0, %s97
    %s114 = sphi 0, %s98
    %s120 = sphi 0, %s122
    %s123 = sphi 0, %s120
    %s124 = sphi 0, %s123
    %s140 = sphi 0, %s124
    %s144 = sphi 0, %s144
    %s146 = sphi 0, %s144
    %s147 = sphi 0, %s146
    %s161 = sphi 0, %s147
    %s165 = sphi 0, %s165
    %s167 = sphi 0, %s165
    %s168 = sphi 0, %s167
    %s182 = sphi 0, %s168
    %s186 = sphi 0, %s186
    %s188 = sphi 0, %s186
    %s189 = sphi 0, %s188
    %s203 = sphi 0, %s189
    %s207 = sphi 0, %s207
    %s209 = sphi 0, %s207
    %s210 = sphi 0, %s209
    %s224 = sphi 0, %s210
    %s228 = sphi 0, %s228
    %s230 = sphi 0, %s228
    %s231 = sphi 0, %s230
    %s245 = sphi 0, %s231
    %s249 = sphi 0, %s249
    %s251 = sphi 0, %s249
    %s252 = sphi 0, %s251
    %s266 = sphi 0, %s252
    %s270 = sphi 0, %s270
    %s272 = sphi 0, %s270
    %s273 = sphi 0, %s272
    %s287 = sphi 0, %s273
    %s291 = sphi 0, %s291
    %s293 = sphi 0, %s291
    %s294 = sphi 0, %s293
    %s308 = sphi 0, %s294
    %s312 = sphi 0, %s312
    %s314 = sphi 0, %s312
    %s315 = sphi 0, %s314
    %s329 = sphi 0, %s315
    %s333 = sphi 0, %s333
    %s335 = sphi 0, %s333
    %s336 = sphi 0, %s335
    %s350 = sphi 0, %s336
    %s354 = sphi 0, %s354
    %s356 = sphi 0, %s354
    %s357 = sphi 0, %s356
    %s371 = sphi 0, %s357
    %s375 = sphi 0, %s375
    %s377 = sphi 0, %s375
    %s378 = sphi 0, %s377
    %s392 = sphi 0, %s378
    %s396 = sphi 0, %s396
    %s398 = sphi 0, %s396
    %s399 = sphi 0, %s398
    %s413 = sphi 0, %s399
    %s417 = sphi 0, %s417
    %s419 = sphi 0, %s417
    %s420 = sphi 0, %s419
    %s434 = sphi 0, %s420
    %s438 = sphi 0, %s438
    %s440 = sphi 0, %s438
    %s441 = sphi 0, %s440
    %s455 = sphi 0, %s441
    %s459 = sphi 0, %s459
    %s461 = sphi 0, %s459
    %s462 = sphi 0, %s461
    %s476 = sphi 0, %s462
    %s480 = sphi 0, %s480
    %s482 = sphi 0, %s480
    %s483 = sphi 0, %s482
    %s497 = sphi 0, %s483
    %s501 = sphi 0, %s501
    %s503 = sphi 0, %s501
    %s504 = sphi 0, %s503
    %s518 = sphi 0, %s504
    %s522 = sphi 0, %s522
    %s524 = sphi 0, %s522
    %s525 = sphi 0, %s524
    %s539 = sphi 0, %s525
    %s543 = sphi 0, %s543
    %s545 = sphi 0, %s543
    %s546 = sphi 0, %s545
    %s560 = sphi 0, %s546
    %s566 = sphi 0, %s568
    %s569 = sphi 0, %s566
    %s570 = sphi 0, %s569
    %s586 = sphi 0, %s570
    %s592 = sphi 0, %s594
    %s595 = sphi 0, %s592
    %s596 = sphi 0, %s595
    %s612 = sphi 0, %s596
  $region4: #{xmp_forward.10} parent=0 // loop_header_branch
    %35 = sbr.rel (%p33) target = $region8
  $region5: #{xmp_forward.10} parent=0 // loop_body
    %s37 = ssub.s32 %s32, 1
    %s38 = ssub.s32 %s32, 2
    %s39 = sadd.s32 %s32, 1
    %s40 = ssub.s32 %s32, %s39
    %p41 = scmp.eq.s32.totalorder %s40, 0
    %s43 = sadd.s32 %s42, 1
    %s44 = scalar_select %p41, %s42, %s43
    %p47 = pneg %p41
    %p48 = scmp.eq.s32.totalorder %s32, 1
    %p49 = por %p47, %p48
    %p50 = scmp.ne.s32.totalorder %s42, %s45
    %p51 = scmp.eq.s32.totalorder %s32, 0
    %p52 = por %p50, %p51
    %p53 = scmp.ne.s32.totalorder %s42, %s45
    %p54 = scmp.eq.s32.totalorder %s37, 1
    %p55 = por %p53, %p54
    %p56 = scmp.ne.s32.totalorder %s45, %s46
    %p57 = scmp.eq.s32.totalorder %s37, 0
    %p58 = por %p56, %p57
    %p59 = scmp.ne.s32.totalorder %s45, %s46
    %p60 = scmp.eq.s32.totalorder %s38, 1
    %p61 = por %p59, %p60
    %p63 = scmp.ne.s32.totalorder %s46, %s62
    %p64 = scmp.eq.s32.totalorder %s38, 0
    %p65 = por %p63, %p64
    %s66 = ssub.s32 %s32, %s39
    %p67 = scmp.eq.s32.totalorder %s66, 0
    %s69 = sadd.s32 %s68, 1
    %s70 = scalar_select %p67, %s68, %s69
    %p73 = pneg %p67
    %p74 = scmp.eq.s32.totalorder %s32, 1
    %p75 = por %p73, %p74
    %p76 = scmp.ne.s32.totalorder %s68, %s71
    %p77 = scmp.eq.s32.totalorder %s32, 0
    %p78 = por %p76, %p77
    %p79 = scmp.ne.s32.totalorder %s68, %s71
    %p80 = scmp.eq.s32.totalorder %s37, 1
    %p81 = por %p79, %p80
    %p82 = scmp.ne.s32.totalorder %s71, %s72
    %p83 = scmp.eq.s32.totalorder %s37, 0
    %p84 = por %p82, %p83
    %p85 = scmp.ne.s32.totalorder %s71, %s72
    %p86 = scmp.eq.s32.totalorder %s38, 1
    %p87 = por %p85, %p86
    %p89 = scmp.ne.s32.totalorder %s72, %s88
    %p90 = scmp.eq.s32.totalorder %s38, 0
    %p91 = por %p89, %p90
    %s92 = ssub.s32 %s32, %s39
    %p93 = scmp.eq.s32.totalorder %s92, 0
    %s95 = sadd.s32 %s94, 1
    %s96 = scalar_select %p93, %s94, %s95
    %p99 = pneg %p93
    %p100 = scmp.eq.s32.totalorder %s32, 1
    %p101 = por %p99, %p100
    %p102 = scmp.ne.s32.totalorder %s94, %s97
    %p103 = scmp.eq.s32.totalorder %s32, 0
    %p104 = por %p102, %p103
    %p105 = scmp.ne.s32.totalorder %s94, %s97
    %p106 = scmp.eq.s32.totalorder %s37, 1
    %p107 = por %p105, %p106
    %p108 = scmp.ne.s32.totalorder %s97, %s98
    %p109 = scmp.eq.s32.totalorder %s37, 0
    %p110 = por %p108, %p109
    %p111 = scmp.ne.s32.totalorder %s97, %s98
    %p112 = scmp.eq.s32.totalorder %s38, 1
    %p113 = por %p111, %p112
    %p115 = scmp.ne.s32.totalorder %s98, %s114
    %p116 = scmp.eq.s32.totalorder %s38, 0
    %p117 = por %p115, %p116
    %s118 = ssub.s32 %s32, %s39
    %p119 = scmp.eq.s32.totalorder %s118, 0
    %s121 = sadd.s32 %s120, 1
    %s122 = scalar_select %p119, %s120, %s121
    %p125 = pneg %p119
    %p126 = scmp.eq.s32.totalorder %s32, 1
    %p127 = por %p125, %p126
    %p128 = scmp.ne.s32.totalorder %s120, %s123
    %p129 = scmp.eq.s32.totalorder %s32, 0
    %p130 = por %p128, %p129
    %p131 = scmp.ne.s32.totalorder %s120, %s123
    %p132 = scmp.eq.s32.totalorder %s37, 1
    %p133 = por %p131, %p132
    %p134 = scmp.ne.s32.totalorder %s123, %s124
    %p135 = scmp.eq.s32.totalorder %s37, 0
    %p136 = por %p134, %p135
    %p137 = scmp.ne.s32.totalorder %s123, %s124
    %p138 = scmp.eq.s32.totalorder %s38, 1
    %p139 = por %p137, %p138
    %p141 = scmp.ne.s32.totalorder %s124, %s140
    %p142 = scmp.eq.s32.totalorder %s38, 0
    %p143 = por %p141, %p142
    %s145 = sadd.s32 %s144, 1
    %p148 = scmp.eq.s32.totalorder %s32, 1
    %p149 = scmp.ne.s32.totalorder %s144, %s146
    %p150 = scmp.eq.s32.totalorder %s32, 0
    %p151 = por %p149, %p150
    %p152 = scmp.ne.s32.totalorder %s144, %s146
    %p153 = scmp.eq.s32.totalorder %s37, 1
    %p154 = por %p152, %p153
    %p155 = scmp.ne.s32.totalorder %s146, %s147
    %p156 = scmp.eq.s32.totalorder %s37, 0
    %p157 = por %p155, %p156
    %p158 = scmp.ne.s32.totalorder %s146, %s147
    %p159 = scmp.eq.s32.totalorder %s38, 1
    %p160 = por %p158, %p159
    %p162 = scmp.ne.s32.totalorder %s147, %s161
    %p163 = scmp.eq.s32.totalorder %s38, 0
    %p164 = por %p162, %p163
    %s166 = sadd.s32 %s165, 1
    %p169 = scmp.eq.s32.totalorder %s32, 1
    %p170 = scmp.ne.s32.totalorder %s165, %s167
    %p171 = scmp.eq.s32.totalorder %s32, 0
    %p172 = por %p170, %p171
    %p173 = scmp.ne.s32.totalorder %s165, %s167
    %p174 = scmp.eq.s32.totalorder %s37, 1
    %p175 = por %p173, %p174
    %p176 = scmp.ne.s32.totalorder %s167, %s168
    %p177 = scmp.eq.s32.totalorder %s37, 0
    %p178 = por %p176, %p177
    %p179 = scmp.ne.s32.totalorder %s167, %s168
    %p180 = scmp.eq.s32.totalorder %s38, 1
    %p181 = por %p179, %p180
    %p183 = scmp.ne.s32.totalorder %s168, %s182
    %p184 = scmp.eq.s32.totalorder %s38, 0
    %p185 = por %p183, %p184
    %s187 = sadd.s32 %s186, 1
    %p190 = scmp.eq.s32.totalorder %s32, 1
    %p191 = scmp.ne.s32.totalorder %s186, %s188
    %p192 = scmp.eq.s32.totalorder %s32, 0
    %p193 = por %p191, %p192
    %p194 = scmp.ne.s32.totalorder %s186, %s188
    %p195 = scmp.eq.s32.totalorder %s37, 1
    %p196 = por %p194, %p195
    %p197 = scmp.ne.s32.totalorder %s188, %s189
    %p198 = scmp.eq.s32.totalorder %s37, 0
    %p199 = por %p197, %p198
    %p200 = scmp.ne.s32.totalorder %s188, %s189
    %p201 = scmp.eq.s32.totalorder %s38, 1
    %p202 = por %p200, %p201
    %p204 = scmp.ne.s32.totalorder %s189, %s203
    %p205 = scmp.eq.s32.totalorder %s38, 0
    %p206 = por %p204, %p205
    %s208 = sadd.s32 %s207, 1
    %p211 = scmp.eq.s32.totalorder %s32, 1
    %p212 = scmp.ne.s32.totalorder %s207, %s209
    %p213 = scmp.eq.s32.totalorder %s32, 0
    %p214 = por %p212, %p213
    %p215 = scmp.ne.s32.totalorder %s207, %s209
    %p216 = scmp.eq.s32.totalorder %s37, 1
    %p217 = por %p215, %p216
    %p218 = scmp.ne.s32.totalorder %s209, %s210
    %p219 = scmp.eq.s32.totalorder %s37, 0
    %p220 = por %p218, %p219
    %p221 = scmp.ne.s32.totalorder %s209, %s210
    %p222 = scmp.eq.s32.totalorder %s38, 1
    %p223 = por %p221, %p222
    %p225 = scmp.ne.s32.totalorder %s210, %s224
    %p226 = scmp.eq.s32.totalorder %s38, 0
    %p227 = por %p225, %p226
    %s229 = sadd.s32 %s228, 1
    %p232 = scmp.eq.s32.totalorder %s32, 1
    %p233 = scmp.ne.s32.totalorder %s228, %s230
    %p234 = scmp.eq.s32.totalorder %s32, 0
    %p235 = por %p233, %p234
    %p236 = scmp.ne.s32.totalorder %s228, %s230
    %p237 = scmp.eq.s32.totalorder %s37, 1
    %p238 = por %p236, %p237
    %p239 = scmp.ne.s32.totalorder %s230, %s231
    %p240 = scmp.eq.s32.totalorder %s37, 0
    %p241 = por %p239, %p240
    %p242 = scmp.ne.s32.totalorder %s230, %s231
    %p243 = scmp.eq.s32.totalorder %s38, 1
    %p244 = por %p242, %p243
    %p246 = scmp.ne.s32.totalorder %s231, %s245
    %p247 = scmp.eq.s32.totalorder %s38, 0
    %p248 = por %p246, %p247
    %s250 = sadd.s32 %s249, 1
    %p253 = scmp.eq.s32.totalorder %s32, 1
    %p254 = scmp.ne.s32.totalorder %s249, %s251
    %p255 = scmp.eq.s32.totalorder %s32, 0
    %p256 = por %p254, %p255
    %p257 = scmp.ne.s32.totalorder %s249, %s251
    %p258 = scmp.eq.s32.totalorder %s37, 1
    %p259 = por %p257, %p258
    %p260 = scmp.ne.s32.totalorder %s251, %s252
    %p261 = scmp.eq.s32.totalorder %s37, 0
    %p262 = por %p260, %p261
    %p263 = scmp.ne.s32.totalorder %s251, %s252
    %p264 = scmp.eq.s32.totalorder %s38, 1
    %p265 = por %p263, %p264
    %p267 = scmp.ne.s32.totalorder %s252, %s266
    %p268 = scmp.eq.s32.totalorder %s38, 0
    %p269 = por %p267, %p268
    %s271 = sadd.s32 %s270, 1
    %p274 = scmp.eq.s32.totalorder %s32, 1
    %p275 = scmp.ne.s32.totalorder %s270, %s272
    %p276 = scmp.eq.s32.totalorder %s32, 0
    %p277 = por %p275, %p276
    %p278 = scmp.ne.s32.totalorder %s270, %s272
    %p279 = scmp.eq.s32.totalorder %s37, 1
    %p280 = por %p278, %p279
    %p281 = scmp.ne.s32.totalorder %s272, %s273
    %p282 = scmp.eq.s32.totalorder %s37, 0
    %p283 = por %p281, %p282
    %p284 = scmp.ne.s32.totalorder %s272, %s273
    %p285 = scmp.eq.s32.totalorder %s38, 1
    %p286 = por %p284, %p285
    %p288 = scmp.ne.s32.totalorder %s273, %s287
    %p289 = scmp.eq.s32.totalorder %s38, 0
    %p290 = por %p288, %p289
    %s292 = sadd.s32 %s291, 1
    %p295 = scmp.eq.s32.totalorder %s32, 1
    %p296 = scmp.ne.s32.totalorder %s291, %s293
    %p297 = scmp.eq.s32.totalorder %s32, 0
    %p298 = por %p296, %p297
    %p299 = scmp.ne.s32.totalorder %s291, %s293
    %p300 = scmp.eq.s32.totalorder %s37, 1
    %p301 = por %p299, %p300
    %p302 = scmp.ne.s32.totalorder %s293, %s294
    %p303 = scmp.eq.s32.totalorder %s37, 0
    %p304 = por %p302, %p303
    %p305 = scmp.ne.s32.totalorder %s293, %s294
    %p306 = scmp.eq.s32.totalorder %s38, 1
    %p307 = por %p305, %p306
    %p309 = scmp.ne.s32.totalorder %s294, %s308
    %p310 = scmp.eq.s32.totalorder %s38, 0
    %p311 = por %p309, %p310
    %s313 = sadd.s32 %s312, 1
    %p316 = scmp.eq.s32.totalorder %s32, 1
    %p317 = scmp.ne.s32.totalorder %s312, %s314
    %p318 = scmp.eq.s32.totalorder %s32, 0
    %p319 = por %p317, %p318
    %p320 = scmp.ne.s32.totalorder %s312, %s314
    %p321 = scmp.eq.s32.totalorder %s37, 1
    %p322 = por %p320, %p321
    %p323 = scmp.ne.s32.totalorder %s314, %s315
    %p324 = scmp.eq.s32.totalorder %s37, 0
    %p325 = por %p323, %p324
    %p326 = scmp.ne.s32.totalorder %s314, %s315
    %p327 = scmp.eq.s32.totalorder %s38, 1
    %p328 = por %p326, %p327
    %p330 = scmp.ne.s32.totalorder %s315, %s329
    %p331 = scmp.eq.s32.totalorder %s38, 0
    %p332 = por %p330, %p331
    %s334 = sadd.s32 %s333, 1
    %p337 = scmp.eq.s32.totalorder %s32, 1
    %p338 = scmp.ne.s32.totalorder %s333, %s335
    %p339 = scmp.eq.s32.totalorder %s32, 0
    %p340 = por %p338, %p339
    %p341 = scmp.ne.s32.totalorder %s333, %s335
    %p342 = scmp.eq.s32.totalorder %s37, 1
    %p343 = por %p341, %p342
    %p344 = scmp.ne.s32.totalorder %s335, %s336
    %p345 = scmp.eq.s32.totalorder %s37, 0
    %p346 = por %p344, %p345
    %p347 = scmp.ne.s32.totalorder %s335, %s336
    %p348 = scmp.eq.s32.totalorder %s38, 1
    %p349 = por %p347, %p348
    %p351 = scmp.ne.s32.totalorder %s336, %s350
    %p352 = scmp.eq.s32.totalorder %s38, 0
    %p353 = por %p351, %p352
    %s355 = sadd.s32 %s354, 1
    %p358 = scmp.eq.s32.totalorder %s32, 1
    %p359 = scmp.ne.s32.totalorder %s354, %s356
    %p360 = scmp.eq.s32.totalorder %s32, 0
    %p361 = por %p359, %p360
    %p362 = scmp.ne.s32.totalorder %s354, %s356
    %p363 = scmp.eq.s32.totalorder %s37, 1
    %p364 = por %p362, %p363
    %p365 = scmp.ne.s32.totalorder %s356, %s357
    %p366 = scmp.eq.s32.totalorder %s37, 0
    %p367 = por %p365, %p366
    %p368 = scmp.ne.s32.totalorder %s356, %s357
    %p369 = scmp.eq.s32.totalorder %s38, 1
    %p370 = por %p368, %p369
    %p372 = scmp.ne.s32.totalorder %s357, %s371
    %p373 = scmp.eq.s32.totalorder %s38, 0
    %p374 = por %p372, %p373
    %s376 = sadd.s32 %s375, 1
    %p379 = scmp.eq.s32.totalorder %s32, 1
    %p380 = scmp.ne.s32.totalorder %s375, %s377
    %p381 = scmp.eq.s32.totalorder %s32, 0
    %p382 = por %p380, %p381
    %p383 = scmp.ne.s32.totalorder %s375, %s377
    %p384 = scmp.eq.s32.totalorder %s37, 1
    %p385 = por %p383, %p384
    %p386 = scmp.ne.s32.totalorder %s377, %s378
    %p387 = scmp.eq.s32.totalorder %s37, 0
    %p388 = por %p386, %p387
    %p389 = scmp.ne.s32.totalorder %s377, %s378
    %p390 = scmp.eq.s32.totalorder %s38, 1
    %p391 = por %p389, %p390
    %p393 = scmp.ne.s32.totalorder %s378, %s392
    %p394 = scmp.eq.s32.totalorder %s38, 0
    %p395 = por %p393, %p394
    %s397 = sadd.s32 %s396, 1
    %p400 = scmp.eq.s32.totalorder %s32, 1
    %p401 = scmp.ne.s32.totalorder %s396, %s398
    %p402 = scmp.eq.s32.totalorder %s32, 0
    %p403 = por %p401, %p402
    %p404 = scmp.ne.s32.totalorder %s396, %s398
    %p405 = scmp.eq.s32.totalorder %s37, 1
    %p406 = por %p404, %p405
    %p407 = scmp.ne.s32.totalorder %s398, %s399
    %p408 = scmp.eq.s32.totalorder %s37, 0
    %p409 = por %p407, %p408
    %p410 = scmp.ne.s32.totalorder %s398, %s399
    %p411 = scmp.eq.s32.totalorder %s38, 1
    %p412 = por %p410, %p411
    %p414 = scmp.ne.s32.totalorder %s399, %s413
    %p415 = scmp.eq.s32.totalorder %s38, 0
    %p416 = por %p414, %p415
    %s418 = sadd.s32 %s417, 1
    %p421 = scmp.eq.s32.totalorder %s32, 1
    %p422 = scmp.ne.s32.totalorder %s417, %s419
    %p423 = scmp.eq.s32.totalorder %s32, 0
    %p424 = por %p422, %p423
    %p425 = scmp.ne.s32.totalorder %s417, %s419
    %p426 = scmp.eq.s32.totalorder %s37, 1
    %p427 = por %p425, %p426
    %p428 = scmp.ne.s32.totalorder %s419, %s420
    %p429 = scmp.eq.s32.totalorder %s37, 0
    %p430 = por %p428, %p429
    %p431 = scmp.ne.s32.totalorder %s419, %s420
    %p432 = scmp.eq.s32.totalorder %s38, 1
    %p433 = por %p431, %p432
    %p435 = scmp.ne.s32.totalorder %s420, %s434
    %p436 = scmp.eq.s32.totalorder %s38, 0
    %p437 = por %p435, %p436
    %s439 = sadd.s32 %s438, 1
    %p442 = scmp.eq.s32.totalorder %s32, 1
    %p443 = scmp.ne.s32.totalorder %s438, %s440
    %p444 = scmp.eq.s32.totalorder %s32, 0
    %p445 = por %p443, %p444
    %p446 = scmp.ne.s32.totalorder %s438, %s440
    %p447 = scmp.eq.s32.totalorder %s37, 1
    %p448 = por %p446, %p447
    %p449 = scmp.ne.s32.totalorder %s440, %s441
    %p450 = scmp.eq.s32.totalorder %s37, 0
    %p451 = por %p449, %p450
    %p452 = scmp.ne.s32.totalorder %s440, %s441
    %p453 = scmp.eq.s32.totalorder %s38, 1
    %p454 = por %p452, %p453
    %p456 = scmp.ne.s32.totalorder %s441, %s455
    %p457 = scmp.eq.s32.totalorder %s38, 0
    %p458 = por %p456, %p457
    %s460 = sadd.s32 %s459, 1
    %p463 = scmp.eq.s32.totalorder %s32, 1
    %p464 = scmp.ne.s32.totalorder %s459, %s461
    %p465 = scmp.eq.s32.totalorder %s32, 0
    %p466 = por %p464, %p465
    %p467 = scmp.ne.s32.totalorder %s459, %s461
    %p468 = scmp.eq.s32.totalorder %s37, 1
    %p469 = por %p467, %p468
    %p470 = scmp.ne.s32.totalorder %s461, %s462
    %p471 = scmp.eq.s32.totalorder %s37, 0
    %p472 = por %p470, %p471
    %p473 = scmp.ne.s32.totalorder %s461, %s462
    %p474 = scmp.eq.s32.totalorder %s38, 1
    %p475 = por %p473, %p474
    %p477 = scmp.ne.s32.totalorder %s462, %s476
    %p478 = scmp.eq.s32.totalorder %s38, 0
    %p479 = por %p477, %p478
    %s481 = sadd.s32 %s480, 1
    %p484 = scmp.eq.s32.totalorder %s32, 1
    %p485 = scmp.ne.s32.totalorder %s480, %s482
    %p486 = scmp.eq.s32.totalorder %s32, 0
    %p487 = por %p485, %p486
    %p488 = scmp.ne.s32.totalorder %s480, %s482
    %p489 = scmp.eq.s32.totalorder %s37, 1
    %p490 = por %p488, %p489
    %p491 = scmp.ne.s32.totalorder %s482, %s483
    %p492 = scmp.eq.s32.totalorder %s37, 0
    %p493 = por %p491, %p492
    %p494 = scmp.ne.s32.totalorder %s482, %s483
    %p495 = scmp.eq.s32.totalorder %s38, 1
    %p496 = por %p494, %p495
    %p498 = scmp.ne.s32.totalorder %s483, %s497
    %p499 = scmp.eq.s32.totalorder %s38, 0
    %p500 = por %p498, %p499
    %s502 = sadd.s32 %s501, 1
    %p505 = scmp.eq.s32.totalorder %s32, 1
    %p506 = scmp.ne.s32.totalorder %s501, %s503
    %p507 = scmp.eq.s32.totalorder %s32, 0
    %p508 = por %p506, %p507
    %p509 = scmp.ne.s32.totalorder %s501, %s503
    %p510 = scmp.eq.s32.totalorder %s37, 1
    %p511 = por %p509, %p510
    %p512 = scmp.ne.s32.totalorder %s503, %s504
    %p513 = scmp.eq.s32.totalorder %s37, 0
    %p514 = por %p512, %p513
    %p515 = scmp.ne.s32.totalorder %s503, %s504
    %p516 = scmp.eq.s32.totalorder %s38, 1
    %p517 = por %p515, %p516
    %p519 = scmp.ne.s32.totalorder %s504, %s518
    %p520 = scmp.eq.s32.totalorder %s38, 0
    %p521 = por %p519, %p520
    %s523 = sadd.s32 %s522, 1
    %p526 = scmp.eq.s32.totalorder %s32, 1
    %p527 = scmp.ne.s32.totalorder %s522, %s524
    %p528 = scmp.eq.s32.totalorder %s32, 0
    %p529 = por %p527, %p528
    %p530 = scmp.ne.s32.totalorder %s522, %s524
    %p531 = scmp.eq.s32.totalorder %s37, 1
    %p532 = por %p530, %p531
    %p533 = scmp.ne.s32.totalorder %s524, %s525
    %p534 = scmp.eq.s32.totalorder %s37, 0
    %p535 = por %p533, %p534
    %p536 = scmp.ne.s32.totalorder %s524, %s525
    %p537 = scmp.eq.s32.totalorder %s38, 1
    %p538 = por %p536, %p537
    %p540 = scmp.ne.s32.totalorder %s525, %s539
    %p541 = scmp.eq.s32.totalorder %s38, 0
    %p542 = por %p540, %p541
    %s544 = sadd.s32 %s543, 1
    %p547 = scmp.eq.s32.totalorder %s32, 1
    %p548 = scmp.ne.s32.totalorder %s543, %s545
    %p549 = scmp.eq.s32.totalorder %s32, 0
    %p550 = por %p548, %p549
    %p551 = scmp.ne.s32.totalorder %s543, %s545
    %p552 = scmp.eq.s32.totalorder %s37, 1
    %p553 = por %p551, %p552
    %p554 = scmp.ne.s32.totalorder %s545, %s546
    %p555 = scmp.eq.s32.totalorder %s37, 0
    %p556 = por %p554, %p555
    %p557 = scmp.ne.s32.totalorder %s545, %s546
    %p558 = scmp.eq.s32.totalorder %s38, 1
    %p559 = por %p557, %p558
    %p561 = scmp.ne.s32.totalorder %s546, %s560
    %p562 = scmp.eq.s32.totalorder %s38, 0
    %p563 = por %p561, %p562
    %s564 = ssub.s32 %s32, %s39
    %p565 = scmp.eq.s32.totalorder %s564, 0
    %s567 = sadd.s32 %s566, 1
    %s568 = scalar_select %p565, %s566, %s567
    %p571 = pneg %p565
    %p572 = scmp.eq.s32.totalorder %s32, 1
    %p573 = por %p571, %p572
    %p574 = scmp.ne.s32.totalorder %s566, %s569
    %p575 = scmp.eq.s32.totalorder %s32, 0
    %p576 = por %p574, %p575
    %p577 = scmp.ne.s32.totalorder %s566, %s569
    %p578 = scmp.eq.s32.totalorder %s37, 1
    %p579 = por %p577, %p578
    %p580 = scmp.ne.s32.totalorder %s569, %s570
    %p581 = scmp.eq.s32.totalorder %s37, 0
    %p582 = por %p580, %p581
    %p583 = scmp.ne.s32.totalorder %s569, %s570
    %p584 = scmp.eq.s32.totalorder %s38, 1
    %p585 = por %p583, %p584
    %p587 = scmp.ne.s32.totalorder %s570, %s586
    %p588 = scmp.eq.s32.totalorder %s38, 0
    %p589 = por %p587, %p588
    %s590 = ssub.s32 %s32, %s39
    %p591 = scmp.eq.s32.totalorder %s590, 0
    %s593 = sadd.s32 %s592, 1
    %s594 = scalar_select %p591, %s592, %s593
    %p597 = pneg %p591
    %p598 = scmp.eq.s32.totalorder %s32, 1
    %p599 = por %p597, %p598
    %p600 = scmp.ne.s32.totalorder %s592, %s595
    %p601 = scmp.eq.s32.totalorder %s32, 0
    %p602 = por %p600, %p601
    %p603 = scmp.ne.s32.totalorder %s592, %s595
    %p604 = scmp.eq.s32.totalorder %s37, 1
    %p605 = por %p603, %p604
    %p606 = scmp.ne.s32.totalorder %s595, %s596
    %p607 = scmp.eq.s32.totalorder %s37, 0
    %p608 = por %p606, %p607
    %p609 = scmp.ne.s32.totalorder %s595, %s596
    %p610 = scmp.eq.s32.totalorder %s38, 1
    %p611 = por %p609, %p610
    %p613 = scmp.ne.s32.totalorder %s596, %s612
    %p614 = scmp.eq.s32.totalorder %s38, 0
    %p615 = por %p613, %p614
    %p616 = scmp.le.s32.totalorder 1, %s32
    %p617 = scmp.lt.s32.totalorder %s32, 3
    %p618 = pnand %p616, %p617
    %p619 = pneg %p618
    // Predicated region
    $region9: #{xmp_forward.10} parent=5 // pred_check
      _
    $region10: #{xmp_forward.10} parent=5 // pred_check_branch
      %621 = sbr.rel (%p618) target = $region12
    $region11: #{xmp_forward.10} parent=5 // pred_region
      %s622 = ssub.s32 %s32, 1
      // Predicated region
      $region13: #{xmp_forward.10} parent=11 // pred_check
        %p623 = pneg %p157
      $region14: #{xmp_forward.10} parent=11 // pred_check_branch
        %625 = sbr.rel (%p623) target = $region16
      $region15: #{xmp_forward.10} parent=11 // pred_region
        _
      $region16: #{xmp_forward.10} parent=11 // pred_fallthru
        _
      // Predicated region
      $region17: #{xmp_forward.10} parent=11 // pred_check
        %p626 = pneg %p178
      $region18: #{xmp_forward.10} parent=11 // pred_check_branch
        %628 = sbr.rel (%p626) target = $region20
      $region19: #{xmp_forward.10} parent=11 // pred_region
        _
      $region20: #{xmp_forward.10} parent=11 // pred_fallthru
        _
      // Predicated region
      $region21: #{xmp_forward.10} parent=11 // pred_check
        %p629 = pneg %p199
      $region22: #{xmp_forward.10} parent=11 // pred_check_branch
        %631 = sbr.rel (%p629) target = $region24
      $region23: #{xmp_forward.10} parent=11 // pred_region
        _
      $region24: #{xmp_forward.10} parent=11 // pred_fallthru
        _
      // Predicated region
      $region25: #{xmp_forward.10} parent=11 // pred_check
        %p632 = pneg %p220
      $region26: #{xmp_forward.10} parent=11 // pred_check_branch
        %634 = sbr.rel (%p632) target = $region28
      $region27: #{xmp_forward.10} parent=11 // pred_region
        _
      $region28: #{xmp_forward.10} parent=11 // pred_fallthru
        _
      // Predicated region
      $region29: #{xmp_forward.10} parent=11 // pred_check
        %p635 = pneg %p241
      $region30: #{xmp_forward.10} parent=11 // pred_check_branch
        %637 = sbr.rel (%p635) target = $region32
      $region31: #{xmp_forward.10} parent=11 // pred_region
        _
      $region32: #{xmp_forward.10} parent=11 // pred_fallthru
        _
      // Predicated region
      $region33: #{xmp_forward.10} parent=11 // pred_check
        %p638 = pneg %p262
      $region34: #{xmp_forward.10} parent=11 // pred_check_branch
        %640 = sbr.rel (%p638) target = $region36
      $region35: #{xmp_forward.10} parent=11 // pred_region
        _
      $region36: #{xmp_forward.10} parent=11 // pred_fallthru
        _
      // Predicated region
      $region37: #{xmp_forward.10} parent=11 // pred_check
        %p641 = pneg %p283
      $region38: #{xmp_forward.10} parent=11 // pred_check_branch
        %643 = sbr.rel (%p641) target = $region40
      $region39: #{xmp_forward.10} parent=11 // pred_region
        _
      $region40: #{xmp_forward.10} parent=11 // pred_fallthru
        _
      // Predicated region
      $region41: #{xmp_forward.10} parent=11 // pred_check
        %p644 = pneg %p304
      $region42: #{xmp_forward.10} parent=11 // pred_check_branch
        %646 = sbr.rel (%p644) target = $region44
      $region43: #{xmp_forward.10} parent=11 // pred_region
        _
      $region44: #{xmp_forward.10} parent=11 // pred_fallthru
        _
      // Predicated region
      $region45: #{xmp_forward.10} parent=11 // pred_check
        %p647 = pneg %p325
      $region46: #{xmp_forward.10} parent=11 // pred_check_branch
        %649 = sbr.rel (%p647) target = $region48
      $region47: #{xmp_forward.10} parent=11 // pred_region
        _
      $region48: #{xmp_forward.10} parent=11 // pred_fallthru
        _
      // Predicated region
      $region49: #{xmp_forward.10} parent=11 // pred_check
        %p650 = pneg %p346
      $region50: #{xmp_forward.10} parent=11 // pred_check_branch
        %652 = sbr.rel (%p650) target = $region52
      $region51: #{xmp_forward.10} parent=11 // pred_region
        _
      $region52: #{xmp_forward.10} parent=11 // pred_fallthru
        _
      // Predicated region
      $region53: #{xmp_forward.10} parent=11 // pred_check
        %p653 = pneg %p367
      $region54: #{xmp_forward.10} parent=11 // pred_check_branch
        %655 = sbr.rel (%p653) target = $region56
      $region55: #{xmp_forward.10} parent=11 // pred_region
        _
      $region56: #{xmp_forward.10} parent=11 // pred_fallthru
        _
      // Predicated region
      $region57: #{xmp_forward.10} parent=11 // pred_check
        %p656 = pneg %p388
      $region58: #{xmp_forward.10} parent=11 // pred_check_branch
        %658 = sbr.rel (%p656) target = $region60
      $region59: #{xmp_forward.10} parent=11 // pred_region
        _
      $region60: #{xmp_forward.10} parent=11 // pred_fallthru
        _
      // Predicated region
      $region61: #{xmp_forward.10} parent=11 // pred_check
        %p659 = pneg %p409
      $region62: #{xmp_forward.10} parent=11 // pred_check_branch
        %661 = sbr.rel (%p659) target = $region64
      $region63: #{xmp_forward.10} parent=11 // pred_region
        _
      $region64: #{xmp_forward.10} parent=11 // pred_fallthru
        _
      // Predicated region
      $region65: #{xmp_forward.10} parent=11 // pred_check
        %p662 = pneg %p430
      $region66: #{xmp_forward.10} parent=11 // pred_check_branch
        %664 = sbr.rel (%p662) target = $region68
      $region67: #{xmp_forward.10} parent=11 // pred_region
        _
      $region68: #{xmp_forward.10} parent=11 // pred_fallthru
        _
      // Predicated region
      $region69: #{xmp_forward.10} parent=11 // pred_check
        %p665 = pneg %p451
      $region70: #{xmp_forward.10} parent=11 // pred_check_branch
        %667 = sbr.rel (%p665) target = $region72
      $region71: #{xmp_forward.10} parent=11 // pred_region
        _
      $region72: #{xmp_forward.10} parent=11 // pred_fallthru
        _
      // Predicated region
      $region73: #{xmp_forward.10} parent=11 // pred_check
        %p668 = pneg %p472
      $region74: #{xmp_forward.10} parent=11 // pred_check_branch
        %670 = sbr.rel (%p668) target = $region76
      $region75: #{xmp_forward.10} parent=11 // pred_region
        _
      $region76: #{xmp_forward.10} parent=11 // pred_fallthru
        _
      // Predicated region
      $region77: #{xmp_forward.10} parent=11 // pred_check
        %p671 = pneg %p493
      $region78: #{xmp_forward.10} parent=11 // pred_check_branch
        %673 = sbr.rel (%p671) target = $region80
      $region79: #{xmp_forward.10} parent=11 // pred_region
        _
      $region80: #{xmp_forward.10} parent=11 // pred_fallthru
        _
      // Predicated region
      $region81: #{xmp_forward.10} parent=11 // pred_check
        %p674 = pneg %p514
      $region82: #{xmp_forward.10} parent=11 // pred_check_branch
        %676 = sbr.rel (%p674) target = $region84
      $region83: #{xmp_forward.10} parent=11 // pred_region
        _
      $region84: #{xmp_forward.10} parent=11 // pred_fallthru
        _
      // Predicated region
      $region85: #{xmp_forward.10} parent=11 // pred_check
        %p677 = pneg %p535
      $region86: #{xmp_forward.10} parent=11 // pred_check_branch
        %679 = sbr.rel (%p677) target = $region88
      $region87: #{xmp_forward.10} parent=11 // pred_region
        _
      $region88: #{xmp_forward.10} parent=11 // pred_fallthru
        _
      // Predicated region
      $region89: #{xmp_forward.10} parent=11 // pred_check
        %p680 = pneg %p556
      $region90: #{xmp_forward.10} parent=11 // pred_check_branch
        %682 = sbr.rel (%p680) target = $region92
      $region91: #{xmp_forward.10} parent=11 // pred_region
        _
      $region92: #{xmp_forward.10} parent=11 // pred_fallthru
        _
    $region12: #{xmp_forward.10} parent=5 // pred_fallthru
      _
    %p683 = scmp.lt.s32.totalorder %s32, 2
    // Predicated region
    $region93: #{xmp_forward.10} parent=5 // pred_check
      %p684 = pneg %p683
    $region94: #{xmp_forward.10} parent=5 // pred_check_branch
      %686 = sbr.rel (%p684) target = $region96
    $region95: #{xmp_forward.10} parent=5 // pred_region
      // Predicated region
      $region97: #{xmp_forward.10} parent=95 // pred_check
        %p687 = pneg %p52
      $region98: #{xmp_forward.10} parent=95 // pred_check_branch
        %689 = sbr.rel (%p687) target = $region100
      $region99: #{xmp_forward.10} parent=95 // pred_region
        %p690 = scmp.lt.s32.totalorder %s32, 1
        %s691 = scalar_select %p690, %s32, 1
        %s692 = scalar_lea.vmem %s0, %s691
      $region100: #{xmp_forward.10} parent=95 // pred_fallthru
        _
      // Predicated region
      $region101: #{xmp_forward.10} parent=95 // pred_check
        %p693 = pneg %p78
      $region102: #{xmp_forward.10} parent=95 // pred_check_branch
        %695 = sbr.rel (%p693) target = $region104
      $region103: #{xmp_forward.10} parent=95 // pred_region
        %p696 = scmp.lt.s32.totalorder %s32, 1
        %s697 = scalar_select %p696, %s32, 1
        %s698 = smul.addr %s697, 4
        %s699 = scalar_lea.vmem %s1, %s698
      $region104: #{xmp_forward.10} parent=95 // pred_fallthru
        _
      // Predicated region
      $region105: #{xmp_forward.10} parent=95 // pred_check
        %p700 = pneg %p104
      $region106: #{xmp_forward.10} parent=95 // pred_check_branch
        %702 = sbr.rel (%p700) target = $region108
      $region107: #{xmp_forward.10} parent=95 // pred_region
        %p703 = scmp.lt.s32.totalorder %s32, 1
        %s704 = scalar_select %p703, %s32, 1
        %s705 = scalar_lea.vmem %s2, %s704
      $region108: #{xmp_forward.10} parent=95 // pred_fallthru
        _
      // Predicated region
      $region109: #{xmp_forward.10} parent=95 // pred_check
        %p706 = pneg %p130
      $region110: #{xmp_forward.10} parent=95 // pred_check_branch
        %708 = sbr.rel (%p706) target = $region112
      $region111: #{xmp_forward.10} parent=95 // pred_region
        %p709 = scmp.lt.s32.totalorder %s32, 1
        %s710 = scalar_select %p709, %s32, 1
        %s711 = smul.addr %s710, 8
        %s712 = scalar_lea.vmem %s3, %s711
      $region112: #{xmp_forward.10} parent=95 // pred_fallthru
        _
    $region96: #{xmp_forward.10} parent=5 // pred_fallthru
      _
    %p713 = scmp.le.s32.totalorder 1, %s32
    %p714 = scmp.lt.s32.totalorder %s32, 3
    %p715 = pnand %p713, %p714
    %p716 = pneg %p715
    // Predicated region
    $region113: #{xmp_forward.10} parent=5 // pred_check
      _
    $region114: #{xmp_forward.10} parent=5 // pred_check_branch
      %718 = sbr.rel (%p715) target = $region116
    $region115: #{xmp_forward.10} parent=5 // pred_region
      %s719 = ssub.s32 %s32, 1
      %p720 = scmp.lt.s32.totalorder %s37, 1
      %s721 = scalar_select %p720, %s37, 1
      %s722 = scalar_lea.vmem %s0, %s721
      %p723 = pneg %p58
      %p724 = pneg %p55
      %p725 = scmp.lt.s32.totalorder %s37, 1
      %s726 = scalar_select %p725, %s37, 1
      %s727 = smul.addr %s726, 4
      %s728 = scalar_lea.vmem %s1, %s727
      %p729 = pneg %p84
      %p730 = pneg %p81
      %p731 = scmp.lt.s32.totalorder %s37, 1
      %s732 = scalar_select %p731, %s37, 1
      %s733 = scalar_lea.vmem %s2, %s732
      %p734 = pneg %p110
      %p735 = pneg %p107
      %p736 = scmp.lt.s32.totalorder %s37, 1
      %s737 = scalar_select %p736, %s37, 1
      %s738 = smul.addr %s737, 8
      %s739 = scalar_lea.vmem %s3, %s738
      %p740 = pneg %p136
      %p741 = pneg %p133
      %p742 = pneg %p157
      %p743 = pneg %p154
      %p744 = pneg %p178
      %p745 = pneg %p175
      %p746 = pneg %p199
      %p747 = pneg %p196
      %p748 = pneg %p220
      %p749 = pneg %p217
      %p750 = pneg %p241
      %p751 = pneg %p238
      %p752 = pneg %p262
      %p753 = pneg %p259
      %p754 = pneg %p283
      %p755 = pneg %p280
      %p756 = pneg %p304
      %p757 = pneg %p301
      %p758 = pneg %p325
      %p759 = pneg %p322
      %p760 = pneg %p346
      %p761 = pneg %p343
      %p762 = pneg %p367
      %p763 = pneg %p364
      %p764 = pneg %p388
      %p765 = pneg %p385
      %p766 = pneg %p409
      %p767 = pneg %p406
      %p768 = pneg %p430
      %p769 = pneg %p427
      %p770 = pneg %p451
      %p771 = pneg %p448
      %p772 = pneg %p472
      %p773 = pneg %p469
      %p774 = pneg %p493
      %p775 = pneg %p490
      %p776 = pneg %p514
      %p777 = pneg %p511
      %p778 = pneg %p535
      %p779 = pneg %p532
      %p780 = pneg %p556
      %p781 = pneg %p553
      %p782 = pneg %p582
      %p783 = pneg %p579
      %p784 = scmp.lt.s32.totalorder %s37, 1
      %s785 = scalar_select %p784, %s37, 1
      %s786 = scalar_lea.vmem %s24, %s785
      %p787 = pneg %p608
      %p788 = pneg %p605
      %p789 = scmp.lt.s32.totalorder %s37, 1
      %s790 = scalar_select %p789, %s37, 1
      %s791 = scalar_lea.vmem %s25, %s790
      %p792 = scmp.lt.s32.totalorder %s37, 1
      %s793 = scalar_select %p792, %s37, 1
      %s794 = scalar_lea.vmem %s0, %s793
      %p795 = scmp.lt.s32.totalorder %s37, 1
      %s796 = scalar_select %p795, %s37, 1
      %s797 = smul.addr %s796, 4
      %s798 = scalar_lea.vmem %s1, %s797
      %p799 = scmp.lt.s32.totalorder %s37, 1
      %s800 = scalar_select %p799, %s37, 1
      %s801 = scalar_lea.vmem %s2, %s800
      %p802 = scmp.lt.s32.totalorder %s37, 1
      %s803 = scalar_select %p802, %s37, 1
      %s804 = smul.addr %s803, 8
      %s805 = scalar_lea.vmem %s3, %s804
      %p806 = scmp.lt.s32.totalorder %s37, 1
      %s807 = scalar_select %p806, %s37, 1
      %s808 = scalar_lea.vmem %s24, %s807
      %p809 = scmp.lt.s32.totalorder %s37, 1
      %s810 = scalar_select %p809, %s37, 1
      %s811 = scalar_lea.vmem %s25, %s810
      %v812 = vld [vmem:[%s4] sm:$0xff]
      %v813 = vld [vmem:[%s4 + $0x8] sm:$0xff]
      %v814 = vld [vmem:[%s4 + $0x10] sm:$0xff]
      %v815 = vld [vmem:[%s4 + $0x18] sm:$0xff]
      %v816 = vld [vmem:[%s5] sm:$0x1]
      %v817 = vld [vmem:[%s6] sm:$0x1]
      %v818 = vld [vmem:[%s7] sm:$0x1]
      %v819 = vld [vmem:[%s8] sm:$0xff]
      %v820 = vld [vmem:[%s8 + $0x8] sm:$0xff]
      %v821 = vld [vmem:[%s8 + $0x10] sm:$0xff]
      %v822 = vld [vmem:[%s8 + $0x18] sm:$0xff]
      %v823 = vld [vmem:[%s8 + $0x20] sm:$0xff]
      %v824 = vld [vmem:[%s8 + $0x28] sm:$0xff]
      %v825 = vld [vmem:[%s8 + $0x30] sm:$0xff]
      %v826 = vld [vmem:[%s8 + $0x38] sm:$0xff]
      %v827 = vld [vmem:[%s8 + $0x40] sm:$0xff]
      %v828 = vld [vmem:[%s8 + $0x48] sm:$0xff]
      %v829 = vld [vmem:[%s8 + $0x50] sm:$0xff]
      %v830 = vld [vmem:[%s8 + $0x58] sm:$0xff]
      %v831 = vld [vmem:[%s8 + $0x60] sm:$0xff]
      %v832 = vld [vmem:[%s8 + $0x68] sm:$0xff]
      %v833 = vld [vmem:[%s8 + $0x70] sm:$0xff]
      %v834 = vld [vmem:[%s8 + $0x78] sm:$0xff]
      %v835 = vld [vmem:[%s9] sm:$0xff]
      %v836 = vld [vmem:[%s9 + $0x8] sm:$0xff]
      %v837 = vld [vmem:[%s9 + $0x10] sm:$0xff]
      %v838 = vld [vmem:[%s9 + $0x18] sm:$0xff]
      %v839 = vld [vmem:[%s9 + $0x20] sm:$0xff]
      %v840 = vld [vmem:[%s9 + $0x28] sm:$0xff]
      %v841 = vld [vmem:[%s9 + $0x30] sm:$0xff]
      %v842 = vld [vmem:[%s9 + $0x38] sm:$0xff]
      %v843 = vld [vmem:[%s9 + $0x40] sm:$0xff]
      %v844 = vld [vmem:[%s9 + $0x48] sm:$0xff]
      %v845 = vld [vmem:[%s9 + $0x50] sm:$0xff]
      %v846 = vld [vmem:[%s9 + $0x58] sm:$0xff]
      %v847 = vld [vmem:[%s9 + $0x60] sm:$0xff]
      %v848 = vld [vmem:[%s9 + $0x68] sm:$0xff]
      %v849 = vld [vmem:[%s9 + $0x70] sm:$0xff]
      %v850 = vld [vmem:[%s9 + $0x78] sm:$0xff]
      %v851 = vld [vmem:[%s9 + $0x80] sm:$0xff]
      %v852 = vld [vmem:[%s9 + $0x88] sm:$0xff]
      %v853 = vld [vmem:[%s9 + $0x90] sm:$0xff]
      %v854 = vld [vmem:[%s9 + $0x98] sm:$0xff]
      %v855 = vld [vmem:[%s9 + $0xa0] sm:$0xff]
      %v856 = vld [vmem:[%s9 + $0xa8] sm:$0xff]
      %v857 = vld [vmem:[%s9 + $0xb0] sm:$0xff]
      %v858 = vld [vmem:[%s9 + $0xb8] sm:$0xff]
      %v859 = vld [vmem:[%s9 + $0xc0] sm:$0xff]
      %v860 = vld [vmem:[%s9 + $0xc8] sm:$0xff]
      %v861 = vld [vmem:[%s9 + $0xd0] sm:$0xff]
      %v862 = vld [vmem:[%s9 + $0xd8] sm:$0xff]
      %v863 = vld [vmem:[%s9 + $0xe0] sm:$0xff]
      %v864 = vld [vmem:[%s9 + $0xe8] sm:$0xff]
      %v865 = vld [vmem:[%s9 + $0xf0] sm:$0xff]
      %v866 = vld [vmem:[%s9 + $0xf8] sm:$0xff]
      %v867 = vld [vmem:[%s10] sm:$0xff]
      %v868 = vld [vmem:[%s10 + $0x8] sm:$0xff]
      %v869 = vld [vmem:[%s10 + $0x10] sm:$0xff]
      %v870 = vld [vmem:[%s10 + $0x18] sm:$0xff]
      %v871 = vld [vmem:[%s11] sm:$0x1]
      %v872 = vld [vmem:[%s12] sm:$0xff]
      %v873 = vld [vmem:[%s12 + $0x8] sm:$0xff]
      %v874 = vld [vmem:[%s12 + $0x10] sm:$0xff]
      %v875 = vld [vmem:[%s12 + $0x18] sm:$0xff]
      %v876 = vld [vmem:[%s12 + $0x20] sm:$0xff]
      %v877 = vld [vmem:[%s12 + $0x28] sm:$0xff]
      %v878 = vld [vmem:[%s12 + $0x30] sm:$0xff]
      %v879 = vld [vmem:[%s12 + $0x38] sm:$0xff]
      %v880 = vld [vmem:[%s13] sm:$0x1]
      %v881 = vld [vmem:[%s14] sm:$0xff]
      %v882 = vld [vmem:[%s14 + $0x8] sm:$0xff]
      %v883 = vld [vmem:[%s14 + $0x10] sm:$0xff]
      %v884 = vld [vmem:[%s14 + $0x18] sm:$0xff]
      %v885 = vld [vmem:[%s14 + $0x20] sm:$0xff]
      %v886 = vld [vmem:[%s14 + $0x28] sm:$0xff]
      %v887 = vld [vmem:[%s14 + $0x30] sm:$0xff]
      %v888 = vld [vmem:[%s14 + $0x38] sm:$0xff]
      %v889 = vld [vmem:[%s15] sm:$0x1]
      %v890 = vld [vmem:[%s16] sm:$0x1]
      %v891 = vld [vmem:[%s17] sm:$0x1]
      %v892 = vld [vmem:[%s18] sm:$0xff]
      %v893 = vld [vmem:[%s18 + $0x8] sm:$0xff]
      %v894 = vld [vmem:[%s18 + $0x10] sm:$0xff]
      %v895 = vld [vmem:[%s18 + $0x18] sm:$0xff]
      %v896 = vld [vmem:[%s18 + $0x20] sm:$0xff]
      %v897 = vld [vmem:[%s18 + $0x28] sm:$0xff]
      %v898 = vld [vmem:[%s18 + $0x30] sm:$0xff]
      %v899 = vld [vmem:[%s18 + $0x38] sm:$0xff]
      %v900 = vld [vmem:[%s19] sm:$0xff]
      %v901 = vld [vmem:[%s19 + $0x8] sm:$0xff]
      %v902 = vld [vmem:[%s19 + $0x10] sm:$0xff]
      %v903 = vld [vmem:[%s19 + $0x18] sm:$0xff]
      %v904 = vld [vmem:[%s19 + $0x20] sm:$0xff]
      %v905 = vld [vmem:[%s19 + $0x28] sm:$0xff]
      %v906 = vld [vmem:[%s19 + $0x30] sm:$0xff]
      %v907 = vld [vmem:[%s19 + $0x38] sm:$0xff]
      %v908 = vld [vmem:[%s19 + $0x40] sm:$0xff]
      %v909 = vld [vmem:[%s19 + $0x48] sm:$0xff]
      %v910 = vld [vmem:[%s19 + $0x50] sm:$0xff]
      %v911 = vld [vmem:[%s19 + $0x58] sm:$0xff]
      %v912 = vld [vmem:[%s19 + $0x60] sm:$0xff]
      %v913 = vld [vmem:[%s19 + $0x68] sm:$0xff]
      %v914 = vld [vmem:[%s19 + $0x70] sm:$0xff]
      %v915 = vld [vmem:[%s19 + $0x78] sm:$0xff]
      %v916 = vld [vmem:[%s20] sm:$0xff]
      %v917 = vld [vmem:[%s20 + $0x8] sm:$0xff]
      %v918 = vld [vmem:[%s20 + $0x10] sm:$0xff]
      %v919 = vld [vmem:[%s20 + $0x18] sm:$0xff]
      %v920 = vld [vmem:[%s21] sm:$0x1]
      %v921 = vld [vmem:[%s22] sm:$0xff]
      %v922 = vld [vmem:[%s22 + $0x8] sm:$0xff]
      %v923 = vld [vmem:[%s22 + $0x10] sm:$0xff]
      %v924 = vld [vmem:[%s22 + $0x18] sm:$0xff]
      %v925 = vld [vmem:[%s23] sm:$0x1]
      %v926 = vld [vmem:[%s794] sm:$0x1]
      %v927 = vld [vmem:[%s798] sm:$0xf]
      %v928 = vld [vmem:[%s801] sm:$0x1]
      %v929 = vld [vmem:[%s805] sm:$0xff]
      %vm930 = vcmask 261120
      %v932 = vsel %vm930, %v926, 0
      %934 = vmatpush.msra.mxu0 0.0
      %935 = vmatpush.msra.mxu0 0.0
      %936 = vmatpush.msra.mxu0 0.0
      %937 = vmatpush.msra.mxu0 0.0
      %938 = vmatpush.msra.mxu0 0.0
      %939 = vmatpush.msra.mxu0 0.0
      %940 = vmatpush.msra.mxu0 0.0
      %941 = vmatpush.msra.mxu0 0.0
      %942 = vmatpush.msra.mxu0 0.0
      %943 = vmatpush.msra.mxu0 0.0
      %944 = vmatpush.msra.mxu0 0.0
      %945 = vmatpush.msra.mxu0 0.0
      %946 = vmatpush.msra.mxu0 %v815
      %947 = vmatpush.msra.mxu0 %v814
      %948 = vmatpush.msra.mxu0 %v813
      %949 = vmatpush.msra.mxu0 %v812
      %950 = vmatmul.f32.gmra.mxu0 %v932
      %v951 = vpop.f32.mrf.mxu0
      %v952 = vadd.f32 %v816, %v951
      %953 = vdwg.mxu0
      %vm954 = vcmask 516096
      %v955 = vsel %vm954, %v952, 0.0
      %956 = vadd.xlane.f32.xlu0 %v955
      %v957 = vpop.xlane.xlu0 %956
      %v958 = vrcp.pop 64.0
      %v959 = vmul.f32 64.0, %v958
      %v960 = vsub.f32 1.0, %v959
      %v961 = vmul.f32 %v958, %v960
      %v962 = vadd.f32 %v958, %v961
      %vm963 = vweird.f32 %v958
      %v964 = vsel %vm963, %v958, %v962
      %v965 = vmul.f32 %v957, %v964
      %v966 = vsub.f32 %v952, %v965
      %v967 = vmul.f32 %v966, %v966
      %v968 = vsel %vm954, %v967, 0.0
      %969 = vadd.xlane.f32.xlu0 %v968
      %v970 = vpop.xlane.xlu0 %969
      %v971 = vmul.f32 %v970, %v964
      %v972 = vadd.f32 %v971, 1e-05
      %v973 = vrsqrt.pop %v972
      %v974 = vmul.f32 %v973, %v972
      %v975 = vmul.f32 %v974, %v973
      %v976 = vmul.f32 0.5, %v975
      %v977 = vsub.f32 1.5, %v976
      %v978 = vmul.f32 %v973, %v977
      %vm979 = vweird.f32 %v972
      %vm980 = vweird.f32 %v973
      %vm981 = vmor %vm979, %vm980
      %v982 = vsel %vm981, %v973, %v978
      %v983 = vmul.f32 %v966, %v982
      %v984 = vmul.f32 %v983, %v817
      %v985 = vadd.f32 %v984, %v818
      %vm986 = vcmask 523264
      %v988 = vsel %vm986, %v985, 0
      %990 = vmatpush.msra.mxu0 0.0
      %991 = vmatpush.msra.mxu0 0.0
      %992 = vmatpush.msra.mxu0 0.0
      %993 = vmatpush.msra.mxu0 0.0
      %994 = vmatpush.msra.mxu0 0.0
      %995 = vmatpush.msra.mxu0 0.0
      %996 = vmatpush.msra.mxu0 0.0
      %997 = vmatpush.msra.mxu0 0.0
      %998 = vmatpush.msra.mxu0 %v826
      %999 = vmatpush.msra.mxu0 %v825
      %1000 = vmatpush.msra.mxu0 %v824
      %1001 = vmatpush.msra.mxu0 %v823
      %1002 = vmatpush.msra.mxu0 %v822
      %1003 = vmatpush.msra.mxu0 %v821
      %1004 = vmatpush.msra.mxu0 %v820
      %1005 = vmatpush.msra.mxu0 %v819
      %1006 = vmatmul.f32.gmra.mxu0 %v988
      %v1007 = vpop.f32.mrf.mxu0
      %v1008 = vadd.f32 0.0, %v1007
      %1009 = vdwg.mxu0
      %v1010 = vmul.f32 %v1008, 0.25
      %1011 = vmatpush.msra.mxu0 0.0
      %1012 = vmatpush.msra.mxu0 0.0
      %1013 = vmatpush.msra.mxu0 0.0
      %1014 = vmatpush.msra.mxu0 0.0
      %1015 = vmatpush.msra.mxu0 0.0
      %1016 = vmatpush.msra.mxu0 0.0
      %1017 = vmatpush.msra.mxu0 0.0
      %1018 = vmatpush.msra.mxu0 0.0
      %1019 = vmatpush.msra.mxu0 %v842
      %1020 = vmatpush.msra.mxu0 %v841
      %1021 = vmatpush.msra.mxu0 %v840
      %1022 = vmatpush.msra.mxu0 %v839
      %1023 = vmatpush.msra.mxu0 %v838
      %1024 = vmatpush.msra.mxu0 %v837
      %1025 = vmatpush.msra.mxu0 %v836
      %1026 = vmatpush.msra.mxu0 %v835
      %1027 = vmatmul.f32.gmra.mxu0 %v988
      %v1028 = vpop.f32.mrf.mxu0
      %v1029 = vadd.f32 0.0, %v1028
      %1030 = vdwg.mxu0
      %1031 = vmatpush.msra.mxu0 0.0
      %1032 = vmatpush.msra.mxu0 0.0
      %1033 = vmatpush.msra.mxu0 0.0
      %1034 = vmatpush.msra.mxu0 0.0
      %1035 = vmatpush.msra.mxu0 0.0
      %1036 = vmatpush.msra.mxu0 0.0
      %1037 = vmatpush.msra.mxu0 0.0
      %1038 = vmatpush.msra.mxu0 0.0
      %1039 = vmatpush.msra.mxu0 %v858
      %1040 = vmatpush.msra.mxu0 %v857
      %1041 = vmatpush.msra.mxu0 %v856
      %1042 = vmatpush.msra.mxu0 %v855
      %1043 = vmatpush.msra.mxu0 %v854
      %1044 = vmatpush.msra.mxu0 %v853
      %1045 = vmatpush.msra.mxu0 %v852
      %1046 = vmatpush.msra.mxu0 %v851
      %1047 = vmatmul.f32.gmra.mxu0 %v988
      %v1048 = vpop.f32.mrf.mxu0
      %v1049 = vadd.f32 0.0, %v1048
      %1050 = vdwg.mxu0
      %v1052 = vsel %vm986, %v927, 0
      %1054 = vmatpush.msra.mxu0 0.0
      %1055 = vmatpush.msra.mxu0 0.0
      %1056 = vmatpush.msra.mxu0 0.0
      %1057 = vmatpush.msra.mxu0 0.0
      %1058 = vmatpush.msra.mxu0 0.0
      %1059 = vmatpush.msra.mxu0 0.0
      %1060 = vmatpush.msra.mxu0 0.0
      %1061 = vmatpush.msra.mxu0 0.0
      %1062 = vmatpush.msra.mxu0 %v842
      %1063 = vmatpush.msra.mxu0 %v841
      %1064 = vmatpush.msra.mxu0 %v840
      %1065 = vmatpush.msra.mxu0 %v839
      %1066 = vmatpush.msra.mxu0 %v838
      %1067 = vmatpush.msra.mxu0 %v837
      %1068 = vmatpush.msra.mxu0 %v836
      %1069 = vmatpush.msra.mxu0 %v835
      %1070 = vmatmul.f32.gmra.mxu0 %v1052
      %v1071 = vpop.f32.mrf.mxu0
      %v1072 = vadd.f32 0.0, %v1071
      %1073 = vdwg.mxu0
      %1074 = vmatpush.msra.mxu0 0.0
      %1075 = vmatpush.msra.mxu0 0.0
      %1076 = vmatpush.msra.mxu0 0.0
      %1077 = vmatpush.msra.mxu0 0.0
      %1078 = vmatpush.msra.mxu0 0.0
      %1079 = vmatpush.msra.mxu0 0.0
      %1080 = vmatpush.msra.mxu0 0.0
      %1081 = vmatpush.msra.mxu0 0.0
      %1082 = vmatpush.msra.mxu0 %v858
      %1083 = vmatpush.msra.mxu0 %v857
      %1084 = vmatpush.msra.mxu0 %v856
      %1085 = vmatpush.msra.mxu0 %v855
      %1086 = vmatpush.msra.mxu0 %v854
      %1087 = vmatpush.msra.mxu0 %v853
      %1088 = vmatpush.msra.mxu0 %v852
      %1089 = vmatpush.msra.mxu0 %v851
      %1090 = vmatmul.f32.gmra.mxu0 %v1052
      %v1091 = vpop.f32.mrf.mxu0
      %v1092 = vadd.f32 0.0, %v1091
      %1093 = vdwg.mxu0
      %v1094 = vmul.f32 %v1010, %v1029
      %vm1095 = vcmask 122880
      %v1096 = vsel %vm1095, %v1094, 0.0
      %1097 = vadd.xlane.f32.xlu0 %v1096
      %v1098 = vpop.xlane.xlu0 %1097
      %vm1099 = vcmask 130048
      %v1101 = vsel %vm1099, %v1010, 0
      %v1104 = vsel %vm1099, %v1072, 0
      %1106 = vmatpush.xpose.msra.mxu0 0.0
      %1107 = vmatpush.xpose.msra.mxu0 0.0
      %1108 = vmatpush.xpose.msra.mxu0 0.0
      %1109 = vmatpush.xpose.msra.mxu0 0.0
      %1110 = vmatpush.xpose.msra.mxu0 0.0
      %1111 = vmatpush.xpose.msra.mxu0 0.0
      %1112 = vmatpush.xpose.msra.mxu0 0.0
      %1113 = vmatpush.xpose.msra.mxu0 0.0
      %1114 = vmatpush.xpose.msra.mxu0 0.0
      %1115 = vmatpush.xpose.msra.mxu0 0.0
      %1116 = vmatpush.xpose.msra.mxu0 0.0
      %1117 = vmatpush.xpose.msra.mxu0 0.0
      %1118 = vmatpush.xpose.msra.mxu0 0.0
      %1119 = vmatpush.xpose.msra.mxu0 0.0
      %1120 = vmatpush.xpose.msra.mxu0 0.0
      %1121 = vmatpush.xpose.msra.mxu0 %v1104
      %1122 = vmatmul.f32.gmra.mxu0 %v1101
      %v1123 = vpop.f32.mrf.mxu0
      %v1124 = vadd.f32 0.0, %v1123
      %1125 = vdwg.mxu0
      %vm1126 = vcmask 24576
      %v1127 = vsel %vm1126, %v1124, -inf
      %1128 = vmax.xlane.f32.xlu0 %v1127
      %v1129 = vpop.xlane.xlu0 %1128
      %v1130 = vmax.f32 %v1098, %v1129
      %v1131 = vsub.f32 %v1098, %v1130
      %v1132 = vmul.f32 %v1131, 1.442695
      %v1133 = vpow.pop %v1132
      %v1134 = vsub.f32 %v1124, %v1130
      %v1135 = vmul.f32 %v1134, 1.442695
      %v1136 = vpow.pop %v1135
      %v1137 = vsel %vm1126, %v1136, 0.0
      %1138 = vadd.xlane.f32.xlu0 %v1137
      %v1139 = vpop.xlane.xlu0 %1138
      %v1140 = vadd.f32 %v1133, %v1139
      %v1141 = vrcp.pop %v1140
      %v1142 = vmul.f32 %v1133, %v1049
      %vm1143 = vcmask 31744
      %v1145 = vsel %vm1143, %v1136, 0
      %vm1147 = vcmask 1043456
      %v1149 = vsel %vm1147, %v1092, 0
      %1151 = vmatpush.msra.mxu0 0.0
      %1152 = vmatpush.msra.mxu0 0.0
      %1153 = vmatpush.msra.mxu0 0.0
      %1154 = vmatpush.msra.mxu0 0.0
      %1155 = vmatpush.msra.mxu0 0.0
      %1156 = vmatpush.msra.mxu0 0.0
      %1157 = vmatpush.msra.mxu0 0.0
      %1158 = vmatpush.msra.mxu0 0.0
      %1159 = vmatpush.msra.mxu0 0.0
      %1160 = vmatpush.msra.mxu0 0.0
      %1161 = vmatpush.msra.mxu0 0.0
      %1162 = vmatpush.msra.mxu0 0.0
      %1163 = vmatpush.msra.mxu0 0.0
      %1164 = vmatpush.msra.mxu0 0.0
      %1165 = vmatpush.msra.mxu0 0.0
      %1166 = vmatpush.msra.mxu0 %v1149
      %1167 = vmatmul.f32.gmra.mxu0 %v1145
      %v1168 = vpop.f32.mrf.mxu0
      %v1169 = vadd.f32 0.0, %v1168
      %1170 = vdwg.mxu0
      %v1171 = vadd.f32 %v1142, %v1169
      %v1172 = vmul.f32 %v1171, %v1141
      %1173 = vmatpush.msra.mxu0 0.0
      %1174 = vmatpush.msra.mxu0 0.0
      %1175 = vmatpush.msra.mxu0 0.0
      %1176 = vmatpush.msra.mxu0 0.0
      %1177 = vmatpush.msra.mxu0 0.0
      %1178 = vmatpush.msra.mxu0 0.0
      %1179 = vmatpush.msra.mxu0 0.0
      %1180 = vmatpush.msra.mxu0 0.0
      %1181 = vmatpush.msra.mxu0 %v834
      %1182 = vmatpush.msra.mxu0 %v833
      %1183 = vmatpush.msra.mxu0 %v832
      %1184 = vmatpush.msra.mxu0 %v831
      %1185 = vmatpush.msra.mxu0 %v830
      %1186 = vmatpush.msra.mxu0 %v829
      %1187 = vmatpush.msra.mxu0 %v828
      %1188 = vmatpush.msra.mxu0 %v827
      %1189 = vmatmul.f32.gmra.mxu0 %v988
      %v1190 = vpop.f32.mrf.mxu0
      %v1191 = vadd.f32 0.0, %v1190
      %1192 = vdwg.mxu0
      %v1193 = vmul.f32 %v1191, 0.25
      %1194 = vmatpush.msra.mxu0 0.0
      %1195 = vmatpush.msra.mxu0 0.0
      %1196 = vmatpush.msra.mxu0 0.0
      %1197 = vmatpush.msra.mxu0 0.0
      %1198 = vmatpush.msra.mxu0 0.0
      %1199 = vmatpush.msra.mxu0 0.0
      %1200 = vmatpush.msra.mxu0 0.0
      %1201 = vmatpush.msra.mxu0 0.0
      %1202 = vmatpush.msra.mxu0 %v850
      %1203 = vmatpush.msra.mxu0 %v849
      %1204 = vmatpush.msra.mxu0 %v848
      %1205 = vmatpush.msra.mxu0 %v847
      %1206 = vmatpush.msra.mxu0 %v846
      %1207 = vmatpush.msra.mxu0 %v845
      %1208 = vmatpush.msra.mxu0 %v844
      %1209 = vmatpush.msra.mxu0 %v843
      %1210 = vmatmul.f32.gmra.mxu0 %v988
      %v1211 = vpop.f32.mrf.mxu0
      %v1212 = vadd.f32 0.0, %v1211
      %1213 = vdwg.mxu0
      %1214 = vmatpush.msra.mxu0 0.0
      %1215 = vmatpush.msra.mxu0 0.0
      %1216 = vmatpush.msra.mxu0 0.0
      %1217 = vmatpush.msra.mxu0 0.0
      %1218 = vmatpush.msra.mxu0 0.0
      %1219 = vmatpush.msra.mxu0 0.0
      %1220 = vmatpush.msra.mxu0 0.0
      %1221 = vmatpush.msra.mxu0 0.0
      %1222 = vmatpush.msra.mxu0 %v866
      %1223 = vmatpush.msra.mxu0 %v865
      %1224 = vmatpush.msra.mxu0 %v864
      %1225 = vmatpush.msra.mxu0 %v863
      %1226 = vmatpush.msra.mxu0 %v862
      %1227 = vmatpush.msra.mxu0 %v861
      %1228 = vmatpush.msra.mxu0 %v860
      %1229 = vmatpush.msra.mxu0 %v859
      %1230 = vmatmul.f32.gmra.mxu0 %v988
      %v1231 = vpop.f32.mrf.mxu0
      %v1232 = vadd.f32 0.0, %v1231
      %1233 = vdwg.mxu0
      %1234 = vmatpush.msra.mxu0 0.0
      %1235 = vmatpush.msra.mxu0 0.0
      %1236 = vmatpush.msra.mxu0 0.0
      %1237 = vmatpush.msra.mxu0 0.0
      %1238 = vmatpush.msra.mxu0 0.0
      %1239 = vmatpush.msra.mxu0 0.0
      %1240 = vmatpush.msra.mxu0 0.0
      %1241 = vmatpush.msra.mxu0 0.0
      %1242 = vmatpush.msra.mxu0 %v850
      %1243 = vmatpush.msra.mxu0 %v849
      %1244 = vmatpush.msra.mxu0 %v848
      %1245 = vmatpush.msra.mxu0 %v847
      %1246 = vmatpush.msra.mxu0 %v846
      %1247 = vmatpush.msra.mxu0 %v845
      %1248 = vmatpush.msra.mxu0 %v844
      %1249 = vmatpush.msra.mxu0 %v843
      %1250 = vmatmul.f32.gmra.mxu0 %v1052
      %v1251 = vpop.f32.mrf.mxu0
      %v1252 = vadd.f32 0.0, %v1251
      %1253 = vdwg.mxu0
      %1254 = vmatpush.msra.mxu0 0.0
      %1255 = vmatpush.msra.mxu0 0.0
      %1256 = vmatpush.msra.mxu0 0.0
      %1257 = vmatpush.msra.mxu0 0.0
      %1258 = vmatpush.msra.mxu0 0.0
      %1259 = vmatpush.msra.mxu0 0.0
      %1260 = vmatpush.msra.mxu0 0.0
      %1261 = vmatpush.msra.mxu0 0.0
      %1262 = vmatpush.msra.mxu0 %v866
      %1263 = vmatpush.msra.mxu0 %v865
      %1264 = vmatpush.msra.mxu0 %v864
      %1265 = vmatpush.msra.mxu0 %v863
      %1266 = vmatpush.msra.mxu0 %v862
      %1267 = vmatpush.msra.mxu0 %v861
      %1268 = vmatpush.msra.mxu0 %v860
      %1269 = vmatpush.msra.mxu0 %v859
      %1270 = vmatmul.f32.gmra.mxu0 %v1052
      %v1271 = vpop.f32.mrf.mxu0
      %v1272 = vadd.f32 0.0, %v1271
      %1273 = vdwg.mxu0
      %v1274 = vmul.f32 %v1193, %v1212
      %v1275 = vsel %vm1095, %v1274, 0.0
      %1276 = vadd.xlane.f32.xlu0 %v1275
      %v1277 = vpop.xlane.xlu0 %1276
      %v1279 = vsel %vm1099, %v1193, 0
      %v1282 = vsel %vm1099, %v1252, 0
      %1284 = vmatpush.xpose.msra.mxu0 0.0
      %1285 = vmatpush.xpose.msra.mxu0 0.0
      %1286 = vmatpush.xpose.msra.mxu0 0.0
      %1287 = vmatpush.xpose.msra.mxu0 0.0
      %1288 = vmatpush.xpose.msra.mxu0 0.0
      %1289 = vmatpush.xpose.msra.mxu0 0.0
      %1290 = vmatpush.xpose.msra.mxu0 0.0
      %1291 = vmatpush.xpose.msra.mxu0 0.0
      %1292 = vmatpush.xpose.msra.mxu0 0.0
      %1293 = vmatpush.xpose.msra.mxu0 0.0
      %1294 = vmatpush.xpose.msra.mxu0 0.0
      %1295 = vmatpush.xpose.msra.mxu0 0.0
      %1296 = vmatpush.xpose.msra.mxu0 0.0
      %1297 = vmatpush.xpose.msra.mxu0 0.0
      %1298 = vmatpush.xpose.msra.mxu0 0.0
      %1299 = vmatpush.xpose.msra.mxu0 %v1282
      %1300 = vmatmul.f32.gmra.mxu0 %v1279
      %v1301 = vpop.f32.mrf.mxu0
      %v1302 = vadd.f32 0.0, %v1301
      %1303 = vdwg.mxu0
      %v1304 = vsel %vm1126, %v1302, -inf
      %1305 = vmax.xlane.f32.xlu0 %v1304
      %v1306 = vpop.xlane.xlu0 %1305
      %v1307 = vmax.f32 %v1277, %v1306
      %v1308 = vsub.f32 %v1277, %v1307
      %v1309 = vmul.f32 %v1308, 1.442695
      %v1310 = vpow.pop %v1309
      %v1311 = vsub.f32 %v1302, %v1307
      %v1312 = vmul.f32 %v1311, 1.442695
      %v1313 = vpow.pop %v1312
      %v1314 = vsel %vm1126, %v1313, 0.0
      %1315 = vadd.xlane.f32.xlu0 %v1314
      %v1316 = vpop.xlane.xlu0 %1315
      %v1317 = vadd.f32 %v1310, %v1316
      %v1318 = vrcp.pop %v1317
      %v1319 = vmul.f32 %v1310, %v1232
      %v1321 = vsel %vm1143, %v1313, 0
      %v1324 = vsel %vm1147, %v1272, 0
      %1326 = vmatpush.msra.mxu0 0.0
      %1327 = vmatpush.msra.mxu0 0.0
      %1328 = vmatpush.msra.mxu0 0.0
      %1329 = vmatpush.msra.mxu0 0.0
      %1330 = vmatpush.msra.mxu0 0.0
      %1331 = vmatpush.msra.mxu0 0.0
      %1332 = vmatpush.msra.mxu0 0.0
      %1333 = vmatpush.msra.mxu0 0.0
      %1334 = vmatpush.msra.mxu0 0.0
      %1335 = vmatpush.msra.mxu0 0.0
      %1336 = vmatpush.msra.mxu0 0.0
      %1337 = vmatpush.msra.mxu0 0.0
      %1338 = vmatpush.msra.mxu0 0.0
      %1339 = vmatpush.msra.mxu0 0.0
      %1340 = vmatpush.msra.mxu0 0.0
      %1341 = vmatpush.msra.mxu0 %v1324
      %1342 = vmatmul.f32.gmra.mxu0 %v1321
      %v1343 = vpop.f32.mrf.mxu0
      %v1344 = vadd.f32 0.0, %v1343
      %1345 = vdwg.mxu0
      %v1346 = vadd.f32 %v1319, %v1344
      %v1347 = vmul.f32 %v1346, %v1318
      %v1349 = vsel %vm1099, %v1347, 0
      %1351 = vmatpush.msra.mxu0 0.0
      %1352 = vmatpush.msra.mxu0 0.0
      %1353 = vmatpush.msra.mxu0 0.0
      %1354 = vmatpush.msra.mxu0 0.0
      %1355 = vmatpush.msra.mxu0 0.0
      %1356 = vmatpush.msra.mxu0 0.0
      %1357 = vmatpush.msra.mxu0 0.0
      %1358 = vmatpush.msra.mxu0 0.0
      %1359 = vmatpush.msra.mxu0 0.0
      %1360 = vmatpush.msra.mxu0 0.0
      %1361 = vmatpush.msra.mxu0 0.0
      %1362 = vmatpush.msra.mxu0 0.0
      %1363 = vmatpush.msra.mxu0 0.0
      %1364 = vmatpush.msra.mxu0 0.0
      %1365 = vmatpush.msra.mxu0 %v870
      %1366 = vmatpush.msra.mxu0 %v869
      %1367 = vmatmul.f32.gmra.mxu0 %v1349
      %v1368 = vpop.f32.mrf.mxu0
      %v1369 = vadd.f32 0.0, %v1368
      %1370 = vdwg.mxu0
      %v1372 = vsel %vm1099, %v1172, 0
      %1374 = vmatpush.msra.mxu0 0.0
      %1375 = vmatpush.msra.mxu0 0.0
      %1376 = vmatpush.msra.mxu0 0.0
      %1377 = vmatpush.msra.mxu0 0.0
      %1378 = vmatpush.msra.mxu0 0.0
      %1379 = vmatpush.msra.mxu0 0.0
      %1380 = vmatpush.msra.mxu0 0.0
      %1381 = vmatpush.msra.mxu0 0.0
      %1382 = vmatpush.msra.mxu0 0.0
      %1383 = vmatpush.msra.mxu0 0.0
      %1384 = vmatpush.msra.mxu0 0.0
      %1385 = vmatpush.msra.mxu0 0.0
      %1386 = vmatpush.msra.mxu0 0.0
      %1387 = vmatpush.msra.mxu0 0.0
      %1388 = vmatpush.msra.mxu0 %v868
      %1389 = vmatpush.msra.mxu0 %v867
      %1390 = vmatmul.f32.gmra.mxu0 %v1372
      %v1391 = vpop.f32.mrf.mxu0
      %v1392 = vadd.f32 %v1369, %v1391
      %1393 = vdwg.mxu0
      %v1394 = vadd.f32 %v1392, %v871
      %v1396 = vsel %vm986, %v1394, 0
      %1398 = vmatpush.msra.mxu0 0.0
      %1399 = vmatpush.msra.mxu0 0.0
      %1400 = vmatpush.msra.mxu0 0.0
      %1401 = vmatpush.msra.mxu0 0.0
      %1402 = vmatpush.msra.mxu0 0.0
      %1403 = vmatpush.msra.mxu0 0.0
      %1404 = vmatpush.msra.mxu0 0.0
      %1405 = vmatpush.msra.mxu0 0.0
      %1406 = vmatpush.msra.mxu0 %v879
      %1407 = vmatpush.msra.mxu0 %v878
      %1408 = vmatpush.msra.mxu0 %v877
      %1409 = vmatpush.msra.mxu0 %v876
      %1410 = vmatpush.msra.mxu0 %v875
      %1411 = vmatpush.msra.mxu0 %v874
      %1412 = vmatpush.msra.mxu0 %v873
      %1413 = vmatpush.msra.mxu0 %v872
      %1414 = vmatmul.f32.gmra.mxu0 %v1396
      %v1415 = vpop.f32.mrf.mxu0
      %v1416 = vadd.f32 0.0, %v1415
      %1417 = vdwg.mxu0
      %v1418 = vadd.f32 %v926, %v1416
      %v1419 = vadd.f32 %v1418, %v880
      %v1421 = vsel %vm986, %v928, 0
      %1423 = vmatpush.msra.mxu0 0.0
      %1424 = vmatpush.msra.mxu0 0.0
      %1425 = vmatpush.msra.mxu0 0.0
      %1426 = vmatpush.msra.mxu0 0.0
      %1427 = vmatpush.msra.mxu0 0.0
      %1428 = vmatpush.msra.mxu0 0.0
      %1429 = vmatpush.msra.mxu0 0.0
      %1430 = vmatpush.msra.mxu0 0.0
      %1431 = vmatpush.msra.mxu0 %v888
      %1432 = vmatpush.msra.mxu0 %v887
      %1433 = vmatpush.msra.mxu0 %v886
      %1434 = vmatpush.msra.mxu0 %v885
      %1435 = vmatpush.msra.mxu0 %v884
      %1436 = vmatpush.msra.mxu0 %v883
      %1437 = vmatpush.msra.mxu0 %v882
      %1438 = vmatpush.msra.mxu0 %v881
      %1439 = vmatmul.f32.gmra.mxu0 %v1421
      %v1440 = vpop.f32.mrf.mxu0
      %v1441 = vadd.f32 %v889, %v1440
      %1442 = vdwg.mxu0
      %vm1443 = vcmask 253952
      %v1444 = vsel %vm1443, %v1441, 0.0
      %1445 = vadd.xlane.f32.xlu0 %v1444
      %v1446 = vpop.xlane.xlu0 %1445
      %v1447 = vrcp.pop 32.0
      %v1448 = vmul.f32 32.0, %v1447
      %v1449 = vsub.f32 1.0, %v1448
      %v1450 = vmul.f32 %v1447, %v1449
      %v1451 = vadd.f32 %v1447, %v1450
      %vm1452 = vweird.f32 %v1447
      %v1453 = vsel %vm1452, %v1447, %v1451
      %v1454 = vmul.f32 %v1446, %v1453
      %v1455 = vsub.f32 %v1441, %v1454
      %v1456 = vmul.f32 %v1455, %v1455
      %v1457 = vsel %vm1443, %v1456, 0.0
      %1458 = vadd.xlane.f32.xlu0 %v1457
      %v1459 = vpop.xlane.xlu0 %1458
      %v1460 = vmul.f32 %v1459, %v1453
      %v1461 = vadd.f32 %v1460, 1e-05
      %v1462 = vrsqrt.pop %v1461
      %v1463 = vmul.f32 %v1462, %v1461
      %v1464 = vmul.f32 %v1463, %v1462
      %v1465 = vmul.f32 0.5, %v1464
      %v1466 = vsub.f32 1.5, %v1465
      %v1467 = vmul.f32 %v1462, %v1466
      %vm1468 = vweird.f32 %v1461
      %vm1469 = vweird.f32 %v1462
      %vm1470 = vmor %vm1468, %vm1469
      %v1471 = vsel %vm1470, %v1462, %v1467
      %v1472 = vmul.f32 %v1455, %v1471
      %v1473 = vmul.f32 %v1472, %v890
      %v1474 = vadd.f32 %v1473, %v891
      %v1476 = vsel %vm930, %v1474, 0
      %1478 = vmatpush.msra.mxu0 0.0
      %1479 = vmatpush.msra.mxu0 0.0
      %1480 = vmatpush.msra.mxu0 0.0
      %1481 = vmatpush.msra.mxu0 0.0
      %1482 = vmatpush.msra.mxu0 0.0
      %1483 = vmatpush.msra.mxu0 0.0
      %1484 = vmatpush.msra.mxu0 0.0
      %1485 = vmatpush.msra.mxu0 0.0
      %1486 = vmatpush.msra.mxu0 0.0
      %1487 = vmatpush.msra.mxu0 0.0
      %1488 = vmatpush.msra.mxu0 0.0
      %1489 = vmatpush.msra.mxu0 0.0
      %1490 = vmatpush.msra.mxu0 %v895
      %1491 = vmatpush.msra.mxu0 %v894
      %1492 = vmatpush.msra.mxu0 %v893
      %1493 = vmatpush.msra.mxu0 %v892
      %1494 = vmatmul.f32.gmra.mxu0 %v1476
      %v1495 = vpop.f32.mrf.mxu0
      %v1496 = vadd.f32 0.0, %v1495
      %1497 = vdwg.mxu0
      %v1498 = vmul.f32 %v1496, 0.25
      %1499 = vmatpush.msra.mxu0 0.0
      %1500 = vmatpush.msra.mxu0 0.0
      %1501 = vmatpush.msra.mxu0 0.0
      %1502 = vmatpush.msra.mxu0 0.0
      %1503 = vmatpush.msra.mxu0 0.0
      %1504 = vmatpush.msra.mxu0 0.0
      %1505 = vmatpush.msra.mxu0 0.0
      %1506 = vmatpush.msra.mxu0 0.0
      %1507 = vmatpush.msra.mxu0 0.0
      %1508 = vmatpush.msra.mxu0 0.0
      %1509 = vmatpush.msra.mxu0 0.0
      %1510 = vmatpush.msra.mxu0 0.0
      %1511 = vmatpush.msra.mxu0 %v903
      %1512 = vmatpush.msra.mxu0 %v902
      %1513 = vmatpush.msra.mxu0 %v901
      %1514 = vmatpush.msra.mxu0 %v900
      %1515 = vmatmul.f32.gmra.mxu0 %v1476
      %v1516 = vpop.f32.mrf.mxu0
      %v1517 = vadd.f32 0.0, %v1516
      %1518 = vdwg.mxu0
      %1519 = vmatpush.msra.mxu0 0.0
      %1520 = vmatpush.msra.mxu0 0.0
      %1521 = vmatpush.msra.mxu0 0.0
      %1522 = vmatpush.msra.mxu0 0.0
      %1523 = vmatpush.msra.mxu0 0.0
      %1524 = vmatpush.msra.mxu0 0.0
      %1525 = vmatpush.msra.mxu0 0.0
      %1526 = vmatpush.msra.mxu0 0.0
      %1527 = vmatpush.msra.mxu0 0.0
      %1528 = vmatpush.msra.mxu0 0.0
      %1529 = vmatpush.msra.mxu0 0.0
      %1530 = vmatpush.msra.mxu0 0.0
      %1531 = vmatpush.msra.mxu0 %v911
      %1532 = vmatpush.msra.mxu0 %v910
      %1533 = vmatpush.msra.mxu0 %v909
      %1534 = vmatpush.msra.mxu0 %v908
      %1535 = vmatmul.f32.gmra.mxu0 %v1476
      %v1536 = vpop.f32.mrf.mxu0
      %v1537 = vadd.f32 0.0, %v1536
      %1538 = vdwg.mxu0
      %v1540 = vsel %vm930, %v929, 0
      %1542 = vmatpush.msra.mxu0 0.0
      %1543 = vmatpush.msra.mxu0 0.0
      %1544 = vmatpush.msra.mxu0 0.0
      %1545 = vmatpush.msra.mxu0 0.0
      %1546 = vmatpush.msra.mxu0 0.0
      %1547 = vmatpush.msra.mxu0 0.0
      %1548 = vmatpush.msra.mxu0 0.0
      %1549 = vmatpush.msra.mxu0 0.0
      %1550 = vmatpush.msra.mxu0 0.0
      %1551 = vmatpush.msra.mxu0 0.0
      %1552 = vmatpush.msra.mxu0 0.0
      %1553 = vmatpush.msra.mxu0 0.0
      %1554 = vmatpush.msra.mxu0 %v903
      %1555 = vmatpush.msra.mxu0 %v902
      %1556 = vmatpush.msra.mxu0 %v901
      %1557 = vmatpush.msra.mxu0 %v900
      %1558 = vmatmul.f32.gmra.mxu0 %v1540
      %v1559 = vpop.f32.mrf.mxu0
      %v1560 = vadd.f32 0.0, %v1559
      %1561 = vdwg.mxu0
      %1562 = vmatpush.msra.mxu0 0.0
      %1563 = vmatpush.msra.mxu0 0.0
      %1564 = vmatpush.msra.mxu0 0.0
      %1565 = vmatpush.msra.mxu0 0.0
      %1566 = vmatpush.msra.mxu0 0.0
      %1567 = vmatpush.msra.mxu0 0.0
      %1568 = vmatpush.msra.mxu0 0.0
      %1569 = vmatpush.msra.mxu0 0.0
      %1570 = vmatpush.msra.mxu0 0.0
      %1571 = vmatpush.msra.mxu0 0.0
      %1572 = vmatpush.msra.mxu0 0.0
      %1573 = vmatpush.msra.mxu0 0.0
      %1574 = vmatpush.msra.mxu0 %v911
      %1575 = vmatpush.msra.mxu0 %v910
      %1576 = vmatpush.msra.mxu0 %v909
      %1577 = vmatpush.msra.mxu0 %v908
      %1578 = vmatmul.f32.gmra.mxu0 %v1540
      %v1579 = vpop.f32.mrf.mxu0
      %v1580 = vadd.f32 0.0, %v1579
      %1581 = vdwg.mxu0
      %v1582 = vmul.f32 %v1498, %v1517
      %v1583 = vsel %vm1095, %v1582, 0.0
      %1584 = vadd.xlane.f32.xlu0 %v1583
      %v1585 = vpop.xlane.xlu0 %1584
      %v1587 = vsel %vm1099, %v1498, 0
      %v1590 = vsel %vm1099, %v1560, 0
      %1592 = vmatpush.xpose.msra.mxu0 0.0
      %1593 = vmatpush.xpose.msra.mxu0 0.0
      %1594 = vmatpush.xpose.msra.mxu0 0.0
      %1595 = vmatpush.xpose.msra.mxu0 0.0
      %1596 = vmatpush.xpose.msra.mxu0 0.0
      %1597 = vmatpush.xpose.msra.mxu0 0.0
      %1598 = vmatpush.xpose.msra.mxu0 0.0
      %1599 = vmatpush.xpose.msra.mxu0 0.0
      %1600 = vmatpush.xpose.msra.mxu0 0.0
      %1601 = vmatpush.xpose.msra.mxu0 0.0
      %1602 = vmatpush.xpose.msra.mxu0 0.0
      %1603 = vmatpush.xpose.msra.mxu0 0.0
      %1604 = vmatpush.xpose.msra.mxu0 0.0
      %1605 = vmatpush.xpose.msra.mxu0 0.0
      %1606 = vmatpush.xpose.msra.mxu0 0.0
      %1607 = vmatpush.xpose.msra.mxu0 %v1590
      %1608 = vmatmul.f32.gmra.mxu0 %v1587
      %v1609 = vpop.f32.mrf.mxu0
      %v1610 = vadd.f32 0.0, %v1609
      %1611 = vdwg.mxu0
      %vm1612 = vcmask 57344
      %v1613 = vsel %vm1612, %v1610, -inf
      %1614 = vmax.xlane.f32.xlu0 %v1613
      %v1615 = vpop.xlane.xlu0 %1614
      %v1616 = vmax.f32 %v1585, %v1615
      %v1617 = vsub.f32 %v1585, %v1616
      %v1618 = vmul.f32 %v1617, 1.442695
      %v1619 = vpow.pop %v1618
      %v1620 = vsub.f32 %v1610, %v1616
      %v1621 = vmul.f32 %v1620, 1.442695
      %v1622 = vpow.pop %v1621
      %v1623 = vsel %vm1612, %v1622, 0.0
      %1624 = vadd.xlane.f32.xlu0 %v1623
      %v1625 = vpop.xlane.xlu0 %1624
      %v1626 = vadd.f32 %v1619, %v1625
      %v1627 = vrcp.pop %v1626
      %v1628 = vmul.f32 %v1619, %v1537
      %vm1629 = vcmask 64512
      %v1631 = vsel %vm1629, %v1622, 0
      %1633 = vmatpush.msra.mxu0 0.0
      %1634 = vmatpush.msra.mxu0 0.0
      %1635 = vmatpush.msra.mxu0 0.0
      %1636 = vmatpush.msra.mxu0 0.0
      %1637 = vmatpush.msra.mxu0 0.0
      %1638 = vmatpush.msra.mxu0 0.0
      %1639 = vmatpush.msra.mxu0 0.0
      %1640 = vmatpush.msra.mxu0 0.0
      %1641 = vmatpush.msra.mxu0 0.0
      %1642 = vmatpush.msra.mxu0 0.0
      %1643 = vmatpush.msra.mxu0 0.0
      %1644 = vmatpush.msra.mxu0 0.0
      %1645 = vmatpush.msra.mxu0 0.0
      %1646 = vmatpush.msra.mxu0 0.0
      %1647 = vmatpush.msra.mxu0 0.0
      %1648 = vmatpush.msra.mxu0 %v1580
      %1649 = vmatmul.f32.gmra.mxu0 %v1631
      %v1650 = vpop.f32.mrf.mxu0
      %v1651 = vadd.f32 0.0, %v1650
      %1652 = vdwg.mxu0
      %v1653 = vadd.f32 %v1628, %v1651
      %v1654 = vmul.f32 %v1653, %v1627
      %1655 = vmatpush.msra.mxu0 0.0
      %1656 = vmatpush.msra.mxu0 0.0
      %1657 = vmatpush.msra.mxu0 0.0
      %1658 = vmatpush.msra.mxu0 0.0
      %1659 = vmatpush.msra.mxu0 0.0
      %1660 = vmatpush.msra.mxu0 0.0
      %1661 = vmatpush.msra.mxu0 0.0
      %1662 = vmatpush.msra.mxu0 0.0
      %1663 = vmatpush.msra.mxu0 0.0
      %1664 = vmatpush.msra.mxu0 0.0
      %1665 = vmatpush.msra.mxu0 0.0
      %1666 = vmatpush.msra.mxu0 0.0
      %1667 = vmatpush.msra.mxu0 %v899
      %1668 = vmatpush.msra.mxu0 %v898
      %1669 = vmatpush.msra.mxu0 %v897
      %1670 = vmatpush.msra.mxu0 %v896
      %1671 = vmatmul.f32.gmra.mxu0 %v1476
      %v1672 = vpop.f32.mrf.mxu0
      %v1673 = vadd.f32 0.0, %v1672
      %1674 = vdwg.mxu0
      %v1675 = vmul.f32 %v1673, 0.25
      %1676 = vmatpush.msra.mxu0 0.0
      %1677 = vmatpush.msra.mxu0 0.0
      %1678 = vmatpush.msra.mxu0 0.0
      %1679 = vmatpush.msra.mxu0 0.0
      %1680 = vmatpush.msra.mxu0 0.0
      %1681 = vmatpush.msra.mxu0 0.0
      %1682 = vmatpush.msra.mxu0 0.0
      %1683 = vmatpush.msra.mxu0 0.0
      %1684 = vmatpush.msra.mxu0 0.0
      %1685 = vmatpush.msra.mxu0 0.0
      %1686 = vmatpush.msra.mxu0 0.0
      %1687 = vmatpush.msra.mxu0 0.0
      %1688 = vmatpush.msra.mxu0 %v907
      %1689 = vmatpush.msra.mxu0 %v906
      %1690 = vmatpush.msra.mxu0 %v905
      %1691 = vmatpush.msra.mxu0 %v904
      %1692 = vmatmul.f32.gmra.mxu0 %v1476
      %v1693 = vpop.f32.mrf.mxu0
      %v1694 = vadd.f32 0.0, %v1693
      %1695 = vdwg.mxu0
      %1696 = vmatpush.msra.mxu0 0.0
      %1697 = vmatpush.msra.mxu0 0.0
      %1698 = vmatpush.msra.mxu0 0.0
      %1699 = vmatpush.msra.mxu0 0.0
      %1700 = vmatpush.msra.mxu0 0.0
      %1701 = vmatpush.msra.mxu0 0.0
      %1702 = vmatpush.msra.mxu0 0.0
      %1703 = vmatpush.msra.mxu0 0.0
      %1704 = vmatpush.msra.mxu0 0.0
      %1705 = vmatpush.msra.mxu0 0.0
      %1706 = vmatpush.msra.mxu0 0.0
      %1707 = vmatpush.msra.mxu0 0.0
      %1708 = vmatpush.msra.mxu0 %v915
      %1709 = vmatpush.msra.mxu0 %v914
      %1710 = vmatpush.msra.mxu0 %v913
      %1711 = vmatpush.msra.mxu0 %v912
      %1712 = vmatmul.f32.gmra.mxu0 %v1476
      %v1713 = vpop.f32.mrf.mxu0
      %v1714 = vadd.f32 0.0, %v1713
      %1715 = vdwg.mxu0
      %1716 = vmatpush.msra.mxu0 0.0
      %1717 = vmatpush.msra.mxu0 0.0
      %1718 = vmatpush.msra.mxu0 0.0
      %1719 = vmatpush.msra.mxu0 0.0
      %1720 = vmatpush.msra.mxu0 0.0
      %1721 = vmatpush.msra.mxu0 0.0
      %1722 = vmatpush.msra.mxu0 0.0
      %1723 = vmatpush.msra.mxu0 0.0
      %1724 = vmatpush.msra.mxu0 0.0
      %1725 = vmatpush.msra.mxu0 0.0
      %1726 = vmatpush.msra.mxu0 0.0
      %1727 = vmatpush.msra.mxu0 0.0
      %1728 = vmatpush.msra.mxu0 %v907
      %1729 = vmatpush.msra.mxu0 %v906
      %1730 = vmatpush.msra.mxu0 %v905
      %1731 = vmatpush.msra.mxu0 %v904
      %1732 = vmatmul.f32.gmra.mxu0 %v1540
      %v1733 = vpop.f32.mrf.mxu0
      %v1734 = vadd.f32 0.0, %v1733
      %1735 = vdwg.mxu0
      %1736 = vmatpush.msra.mxu0 0.0
      %1737 = vmatpush.msra.mxu0 0.0
      %1738 = vmatpush.msra.mxu0 0.0
      %1739 = vmatpush.msra.mxu0 0.0
      %1740 = vmatpush.msra.mxu0 0.0
      %1741 = vmatpush.msra.mxu0 0.0
      %1742 = vmatpush.msra.mxu0 0.0
      %1743 = vmatpush.msra.mxu0 0.0
      %1744 = vmatpush.msra.mxu0 0.0
      %1745 = vmatpush.msra.mxu0 0.0
      %1746 = vmatpush.msra.mxu0 0.0
      %1747 = vmatpush.msra.mxu0 0.0
      %1748 = vmatpush.msra.mxu0 %v915
      %1749 = vmatpush.msra.mxu0 %v914
      %1750 = vmatpush.msra.mxu0 %v913
      %1751 = vmatpush.msra.mxu0 %v912
      %1752 = vmatmul.f32.gmra.mxu0 %v1540
      %v1753 = vpop.f32.mrf.mxu0
      %v1754 = vadd.f32 0.0, %v1753
      %1755 = vdwg.mxu0
      %v1756 = vmul.f32 %v1675, %v1694
      %v1757 = vsel %vm1095, %v1756, 0.0
      %1758 = vadd.xlane.f32.xlu0 %v1757
      %v1759 = vpop.xlane.xlu0 %1758
      %v1761 = vsel %vm1099, %v1675, 0
      %v1764 = vsel %vm1099, %v1734, 0
      %1766 = vmatpush.xpose.msra.mxu0 0.0
      %1767 = vmatpush.xpose.msra.mxu0 0.0
      %1768 = vmatpush.xpose.msra.mxu0 0.0
      %1769 = vmatpush.xpose.msra.mxu0 0.0
      %1770 = vmatpush.xpose.msra.mxu0 0.0
      %1771 = vmatpush.xpose.msra.mxu0 0.0
      %1772 = vmatpush.xpose.msra.mxu0 0.0
      %1773 = vmatpush.xpose.msra.mxu0 0.0
      %1774 = vmatpush.xpose.msra.mxu0 0.0
      %1775 = vmatpush.xpose.msra.mxu0 0.0
      %1776 = vmatpush.xpose.msra.mxu0 0.0
      %1777 = vmatpush.xpose.msra.mxu0 0.0
      %1778 = vmatpush.xpose.msra.mxu0 0.0
      %1779 = vmatpush.xpose.msra.mxu0 0.0
      %1780 = vmatpush.xpose.msra.mxu0 0.0
      %1781 = vmatpush.xpose.msra.mxu0 %v1764
      %1782 = vmatmul.f32.gmra.mxu0 %v1761
      %v1783 = vpop.f32.mrf.mxu0
      %v1784 = vadd.f32 0.0, %v1783
      %1785 = vdwg.mxu0
      %v1786 = vsel %vm1612, %v1784, -inf
      %1787 = vmax.xlane.f32.xlu0 %v1786
      %v1788 = vpop.xlane.xlu0 %1787
      %v1789 = vmax.f32 %v1759, %v1788
      %v1790 = vsub.f32 %v1759, %v1789
      %v1791 = vmul.f32 %v1790, 1.442695
      %v1792 = vpow.pop %v1791
      %v1793 = vsub.f32 %v1784, %v1789
      %v1794 = vmul.f32 %v1793, 1.442695
      %v1795 = vpow.pop %v1794
      %v1796 = vsel %vm1612, %v1795, 0.0
      %1797 = vadd.xlane.f32.xlu0 %v1796
      %v1798 = vpop.xlane.xlu0 %1797
      %v1799 = vadd.f32 %v1792, %v1798
      %v1800 = vrcp.pop %v1799
      %v1801 = vmul.f32 %v1792, %v1714
      %v1803 = vsel %vm1629, %v1795, 0
      %1805 = vmatpush.msra.mxu0 0.0
      %1806 = vmatpush.msra.mxu0 0.0
      %1807 = vmatpush.msra.mxu0 0.0
      %1808 = vmatpush.msra.mxu0 0.0
      %1809 = vmatpush.msra.mxu0 0.0
      %1810 = vmatpush.msra.mxu0 0.0
      %1811 = vmatpush.msra.mxu0 0.0
      %1812 = vmatpush.msra.mxu0 0.0
      %1813 = vmatpush.msra.mxu0 0.0
      %1814 = vmatpush.msra.mxu0 0.0
      %1815 = vmatpush.msra.mxu0 0.0
      %1816 = vmatpush.msra.mxu0 0.0
      %1817 = vmatpush.msra.mxu0 0.0
      %1818 = vmatpush.msra.mxu0 0.0
      %1819 = vmatpush.msra.mxu0 0.0
      %1820 = vmatpush.msra.mxu0 %v1754
      %1821 = vmatmul.f32.gmra.mxu0 %v1803
      %v1822 = vpop.f32.mrf.mxu0
      %v1823 = vadd.f32 0.0, %v1822
      %1824 = vdwg.mxu0
      %v1825 = vadd.f32 %v1801, %v1823
      %v1826 = vmul.f32 %v1825, %v1800
      %v1828 = vsel %vm1099, %v1826, 0
      %1830 = vmatpush.msra.mxu0 0.0
      %1831 = vmatpush.msra.mxu0 0.0
      %1832 = vmatpush.msra.mxu0 0.0
      %1833 = vmatpush.msra.mxu0 0.0
      %1834 = vmatpush.msra.mxu0 0.0
      %1835 = vmatpush.msra.mxu0 0.0
      %1836 = vmatpush.msra.mxu0 0.0
      %1837 = vmatpush.msra.mxu0 0.0
      %1838 = vmatpush.msra.mxu0 0.0
      %1839 = vmatpush.msra.mxu0 0.0
      %1840 = vmatpush.msra.mxu0 0.0
      %1841 = vmatpush.msra.mxu0 0.0
      %1842 = vmatpush.msra.mxu0 0.0
      %1843 = vmatpush.msra.mxu0 0.0
      %1844 = vmatpush.msra.mxu0 %v919
      %1845 = vmatpush.msra.mxu0 %v918
      %1846 = vmatmul.f32.gmra.mxu0 %v1828
      %v1847 = vpop.f32.mrf.mxu0
      %v1848 = vadd.f32 0.0, %v1847
      %1849 = vdwg.mxu0
      %v1851 = vsel %vm1099, %v1654, 0
      %1853 = vmatpush.msra.mxu0 0.0
      %1854 = vmatpush.msra.mxu0 0.0
      %1855 = vmatpush.msra.mxu0 0.0
      %1856 = vmatpush.msra.mxu0 0.0
      %1857 = vmatpush.msra.mxu0 0.0
      %1858 = vmatpush.msra.mxu0 0.0
      %1859 = vmatpush.msra.mxu0 0.0
      %1860 = vmatpush.msra.mxu0 0.0
      %1861 = vmatpush.msra.mxu0 0.0
      %1862 = vmatpush.msra.mxu0 0.0
      %1863 = vmatpush.msra.mxu0 0.0
      %1864 = vmatpush.msra.mxu0 0.0
      %1865 = vmatpush.msra.mxu0 0.0
      %1866 = vmatpush.msra.mxu0 0.0
      %1867 = vmatpush.msra.mxu0 %v917
      %1868 = vmatpush.msra.mxu0 %v916
      %1869 = vmatmul.f32.gmra.mxu0 %v1851
      %v1870 = vpop.f32.mrf.mxu0
      %v1871 = vadd.f32 %v1848, %v1870
      %1872 = vdwg.mxu0
      %v1873 = vadd.f32 %v1871, %v920
      %v1875 = vsel %vm930, %v1873, 0
      %1877 = vmatpush.msra.mxu0 0.0
      %1878 = vmatpush.msra.mxu0 0.0
      %1879 = vmatpush.msra.mxu0 0.0
      %1880 = vmatpush.msra.mxu0 0.0
      %1881 = vmatpush.msra.mxu0 0.0
      %1882 = vmatpush.msra.mxu0 0.0
      %1883 = vmatpush.msra.mxu0 0.0
      %1884 = vmatpush.msra.mxu0 0.0
      %1885 = vmatpush.msra.mxu0 0.0
      %1886 = vmatpush.msra.mxu0 0.0
      %1887 = vmatpush.msra.mxu0 0.0
      %1888 = vmatpush.msra.mxu0 0.0
      %1889 = vmatpush.msra.mxu0 %v924
      %1890 = vmatpush.msra.mxu0 %v923
      %1891 = vmatpush.msra.mxu0 %v922
      %1892 = vmatpush.msra.mxu0 %v921
      %1893 = vmatmul.f32.gmra.mxu0 %v1875
      %v1894 = vpop.f32.mrf.mxu0
      %v1895 = vadd.f32 0.0, %v1894
      %1896 = vdwg.mxu0
      %v1897 = vadd.f32 %v928, %v1895
      %v1898 = vadd.f32 %v1897, %v925
      %1899 = vst.msk [vmem:[%s808] sm:$0x1] %vm1443, %v1419
      %1900 = vst.msk [vmem:[%s811] sm:$0x1] %vm954, %v1898
      %p1901 = scmp.lt.s32.totalorder %s37, 1
      %s1902 = scalar_select %p1901, %s37, 1
      %s1903 = scalar_lea.vmem %s24, %s1902
      %p1904 = scmp.lt.s32.totalorder %s37, 1
      %s1905 = scalar_select %p1904, %s37, 1
      %s1906 = scalar_lea.vmem %s25, %s1905
      // Predicated region
      $region117: #{xmp_forward.10} parent=115 // pred_check
        %p1907 = pneg %p579
      $region118: #{xmp_forward.10} parent=115 // pred_check_branch
        %1909 = sbr.rel (%p1907) target = $region120
      $region119: #{xmp_forward.10} parent=115 // pred_region
        _
      $region120: #{xmp_forward.10} parent=115 // pred_fallthru
        _
      // Predicated region
      $region121: #{xmp_forward.10} parent=115 // pred_check
        %p1910 = pneg %p605
      $region122: #{xmp_forward.10} parent=115 // pred_check_branch
        %1912 = sbr.rel (%p1910) target = $region124
      $region123: #{xmp_forward.10} parent=115 // pred_region
        _
      $region124: #{xmp_forward.10} parent=115 // pred_fallthru
        _
    $region116: #{xmp_forward.10} parent=5 // pred_fallthru
      _
    %p1913 = scmp.le.s32.totalorder 2, %s32
    // Predicated region
    $region125: #{xmp_forward.10} parent=5 // pred_check
      %p1914 = pneg %p1913
    $region126: #{xmp_forward.10} parent=5 // pred_check_branch
      %1916 = sbr.rel (%p1914) target = $region128
    $region127: #{xmp_forward.10} parent=5 // pred_region
      %s1917 = ssub.s32 %s32, 2
      // Predicated region
      $region129: #{xmp_forward.10} parent=127 // pred_check
        %p1918 = pneg %p585
      $region130: #{xmp_forward.10} parent=127 // pred_check_branch
        %1920 = sbr.rel (%p1918) target = $region132
      $region131: #{xmp_forward.10} parent=127 // pred_region
        %p1921 = scmp.lt.s32.totalorder %s38, 1
        %s1922 = scalar_select %p1921, %s38, 1
        %s1923 = scalar_lea.vmem %s24, %s1922
      $region132: #{xmp_forward.10} parent=127 // pred_fallthru
        _
      // Predicated region
      $region133: #{xmp_forward.10} parent=127 // pred_check
        %p1924 = pneg %p611
      $region134: #{xmp_forward.10} parent=127 // pred_check_branch
        %1926 = sbr.rel (%p1924) target = $region136
      $region135: #{xmp_forward.10} parent=127 // pred_region
        %p1927 = scmp.lt.s32.totalorder %s38, 1
        %s1928 = scalar_select %p1927, %s38, 1
        %s1929 = scalar_lea.vmem %s25, %s1928
      $region136: #{xmp_forward.10} parent=127 // pred_fallthru
        _
    $region128: #{xmp_forward.10} parent=5 // pred_fallthru
      _
  $region6: #{xmp_forward.10} parent=0 // loop_footer
    %s36 = sadd.s32 1, %s32
  $region7: #{xmp_forward.10} parent=0 // loop_footer_branch
    %31 = sbr.rel target = $region3
  $region8: #{xmp_forward.10} parent=0 // loop_exit
    _

</llo_original>
